<compile_context>
chip_gen: v7x
topology: tpu7x:2x2x1
jax: 0.10.0
libtpu: 0.0.40
codegen_flags: <defaults>
</compile_context>

<pallas_src>
import jax
import jax.numpy as jnp
from jax.experimental import pallas as pl
from jax.experimental.pallas import tpu as pltpu

# ----------------------------- config ---------------------------------------
ENC_DIM = 32           # transformer.encoder_hidden
HALF = ENC_DIM // 2    # 16
QUART = ENC_DIM // 4   # 8
N_MEL = 16             # preprocessing.mel.n_mel_channels (small synthetic value)
DEC_DIM = 2 * ENC_DIM  # decoder_hidden after msemotts concat (enc + half + half)
N_BINS = 8             # pitch / energy quantization bins (stand-in)
VOCAB = 10
CONV_K = 5             # tve / tee / mve / postnet conv kernel size
VP_K = 3               # variance predictor conv kernel size

MXU_DTYPE = jnp.bfloat16   # MXU operand dtype (f32 accumulate); jnp.float32 for exact ref numerics

# packed text-kernel output slab: [x(DEC) | ed_emb(ENC) | uv_pred(HALF) |
#                                  ed_pred(1) | log_d(1) | p(1) | e(1) | pad]
SLAB_RAW = DEC_DIM + ENC_DIM + HALF + 4
SLAB = -(-SLAB_RAW // 128) * 128
SLAB_PAD = SLAB - SLAB_RAW
OFF_ED_EMB = DEC_DIM
OFF_UV = DEC_DIM + ENC_DIM
OFF_SCAL = DEC_DIM + ENC_DIM + HALF

VMEM_LIMIT = 48 * 1024 * 1024      # < 64 MiB physical on v7x
_CP = pltpu.CompilerParams(dimension_semantics=("parallel",),
                           vmem_limit_bytes=VMEM_LIMIT)


# ----------------------------- small helpers --------------------------------
def _relu(x):
    return jnp.maximum(x, 0.0)


def _ln(x, g, b, eps=1e-5):
    mu = jnp.mean(x, axis=-1, keepdims=True)
    var = jnp.mean(jnp.square(x - mu), axis=-1, keepdims=True)
    return (x - mu) * jax.lax.rsqrt(var + eps) * g + b


def _dot(a, b):
    # bf16 MXU operands, f32 accumulation; element-wise math stays f32.
    return jnp.dot(a.astype(MXU_DTYPE), b.astype(MXU_DTYPE),
                   preferred_element_type=jnp.float32)


def _zero_halo(xp_ref, pad):
    rows, cols = xp_ref.shape
    z = jnp.zeros((pad, cols), xp_ref.dtype)
    xp_ref[:pad, :] = z
    xp_ref[rows - pad:, :] = z


def _conv_taps(xp_ref, h, w_taps, b):
    """'same' 1-D conv over time as per-tap MXU accumulation (no im2col concat).

    xp_ref: (T+K-1, Cin) VMEM scratch whose halo rows are already zero;
    h: (T, Cin) f32; w_taps: indexable (K, Cin, Cout); b broadcastable (Cout,).
    """
    T = h.shape[0]
    K = xp_ref.shape[0] - T + 1
    pad = (K - 1) // 2
    xp_ref[pad:pad + T, :] = h                 # interior only; halo stays zero
    acc = _dot(xp_ref[0:T, :], w_taps[0])
    for k in range(1, K):
        acc = acc + _dot(xp_ref[k:k + T, :], w_taps[k])
    return acc + b


def _full_spec(a):
    nd = a.ndim
    return pl.BlockSpec(a.shape, lambda *_: (0,) * nd)


def _batch_spec(a):
    nd = a.ndim
    return pl.BlockSpec((1,) + a.shape[1:], lambda bb, *_: (bb,) + (0,) * (nd - 1))


# ----------------------------- text-resolution mega kernel ------------------
_TEXT_WEIGHT_NAMES = (
    "enc_w", "enc_b", "enc_g", "enc_bg",
    "tb_cw", "tb_cb", "tb_g", "tb_bg",
    "tb_l1w", "tb_l1b", "tve_l2w", "tve_l2b", "tee_l2w", "tee_l2b",
    "mve_c1w", "mve_c1b", "mve_c2w", "mve_c2b", "mve_g", "mve_bg",
    "ede_w", "ede_b",
    "vp_c1w", "vp_c1b", "vp_g1", "vp_bg1",
    "vp_c2w", "vp_c2b", "vp_g2", "vp_bg2", "vp_lw", "vp_lb",
)


def _text_kernel(lens_ref,
                 emb_ref, mels_ref, eds_ref, emo_ref, embadd_ref,
                 enc_w, enc_b, enc_g, enc_bg,
                 tb_cw, tb_cb, tb_g, tb_bg,
                 tb_l1w, tb_l1b, tve_l2w, tve_l2b, tee_l2w, tee_l2b,
                 mve_c1w, mve_c1b, mve_c2w, mve_c2b, mve_g, mve_bg,
                 ede_w, ede_b,
                 vp_c1w, vp_c1b, vp_g1, vp_bg1,
                 vp_c2w, vp_c2b, vp_g2, vp_bg2, vp_lw, vp_lb,
                 slab_ref, uvm_ref,
                 xp_tb, xp_m1, xp_m2, xp_v1, xp_v2):
    b = pl.program_id(0)
    T = emb_ref.shape[1]

    # zero only the conv halos, once per invocation (interiors overwritten per conv)
    for xp, kk in ((xp_tb, CONV_K), (xp_m1, CONV_K), (xp_m2, CONV_K),
                   (xp_v1, VP_K), (xp_v2, VP_K)):
        _zero_halo(xp, (kk - 1) // 2)

    # keep mask built in-kernel from prefetched src_lens scalar
    keep = (jax.lax.broadcasted_iota(jnp.int32, (T, 1), 0)
            < lens_ref[b]).astype(jnp.float32)

    # ---- encoder block  TODO(synk): Encoder source not provided; stand-in ----
    enc = _relu(_dot(emb_ref[0], enc_w[...]) + enc_b[...])
    enc = _ln(enc, enc_g[...], enc_bg[...]) * keep                  # (T, E)

    # ---- mel_variation_encoder (conv, conv, LN, dropout=id, mean over frames) ----
    h = _conv_taps(xp_m1, mels_ref[0], mve_c1w, mve_c1b[...])       # (Tm, Q)
    h = _conv_taps(xp_m2, h, mve_c2w, mve_c2b[...])                 # (Tm, H)
    h = _ln(h, mve_g[...], mve_bg[...])
    uv_mean = jnp.mean(h, axis=0, keepdims=True)                    # (1, H)
    uvm_ref[0] = uv_mean

    # ---- text_variation_encoder + text_ed_embedding (stacked first conv) ----
    hvt = _relu(_conv_taps(xp_tb, enc, tb_cw, tb_cb[...]))          # (T, 2H)
    hv = _ln(hvt[:, :HALF], tb_g[0], tb_bg[0])
    he = _ln(hvt[:, HALF:], tb_g[1], tb_bg[1])
    uv_pred = _dot(_relu(_dot(hv, tb_l1w[0]) + tb_l1b[0]),
                   tve_l2w[...]) + tve_l2b[...]                     # (T, H)
    z_e = _relu(_dot(he, tb_l1w[1]) + tb_l1b[1])
    ed_pred = jax.nn.sigmoid(
        jnp.sum(z_e * tee_l2w[...], axis=-1, keepdims=True) + tee_l2b[...])  # (T, 1)

    # ---- ed_embedding (Linear(1,E)+Tanh) + msemotts concat ----
    ed_emb = jnp.tanh(eds_ref[0] * ede_w[...] + ede_b[...])         # (T, E)
    x_comb = jnp.concatenate(
        [ed_emb + enc,
         jnp.broadcast_to(uv_mean, (T, HALF)),
         jnp.broadcast_to(emo_ref[0], (T, HALF))], axis=-1)         # (T, DEC_DIM)

    # ---- variance predictors (dur/pitch/energy) -- no block-diagonal zeros ----
    vpad = (VP_K - 1) // 2
    xp_v1[vpad:vpad + T, :] = x_comb           # shared conv1 input, padded once
    preds = []
    for g in range(3):
        w1 = vp_c1w[g]                                              # (K, D, D)
        h1 = _dot(xp_v1[0:T, :], w1[0])
        for k in range(1, VP_K):
            h1 = h1 + _dot(xp_v1[k:k + T, :], w1[k])
        h1 = _ln(_relu(h1 + vp_c1b[g]), vp_g1[g], vp_bg1[g])        # (T, D)
        h2 = _relu(_conv_taps(xp_v2, h1, vp_c2w[g], vp_c2b[g]))
        h2 = _ln(h2, vp_g2[g], vp_bg2[g])
        preds.append(
            (jnp.sum(h2 * vp_lw[g], axis=-1, keepdims=True) + vp_lb[g]) * keep)

    # pitch/energy target embeddings (gathered in glue) are added after the
    # predictors, exactly like the reference adaptor stand-in
    x_out = x_comb + embadd_ref[0]                                  # (T, DEC_DIM)

    pieces = [x_out, ed_emb, uv_pred, ed_pred] + preds
    if SLAB_PAD:
        pieces.append(jnp.zeros((T, SLAB_PAD), jnp.float32))
    slab_ref[0] = jnp.concatenate(pieces, axis=-1)                  # lane-dense (T, 128)


def text_stage(kp, emb, mels, new_eds, emotion, embadd, src_lens):
    B, T, E = emb.shape
    Tm, M = mels.shape[1], mels.shape[2]
    emotion3 = emotion[:, None, :]                                  # (B, 1, H)
    batch_inputs = [emb, mels, new_eds, emotion3, embadd]
    weights = [kp[n] for n in _TEXT_WEIGHT_NAMES]
    grid_spec = pltpu.PrefetchScalarGridSpec(
        num_scalar_prefetch=1,
        grid=(B,),
        in_specs=[_batch_spec(a) for a in batch_inputs]
        + [_full_spec(w) for w in weights],
        out_specs=(pl.BlockSpec((1, T, SLAB), lambda bb, *_: (bb, 0, 0)),
                   pl.BlockSpec((1, 1, HALF), lambda bb, *_: (bb, 0, 0))),
        scratch_shapes=[
            pltpu.VMEM((T + CONV_K - 1, E), jnp.float32),
            pltpu.VMEM((Tm + CONV_K - 1, M), jnp.float32),
            pltpu.VMEM((Tm + CONV_K - 1, QUART), jnp.float32),
            pltpu.VMEM((T + VP_K - 1, DEC_DIM), jnp.float32),
            pltpu.VMEM((T + VP_K - 1, DEC_DIM), jnp.float32),
        ])
    slab, uv_mean = pl.pallas_call(
        _text_kernel,
        grid_spec=grid_spec,
        out_shape=(jax.ShapeDtypeStruct((B, T, SLAB), jnp.float32),
                   jax.ShapeDtypeStruct((B, 1, HALF), jnp.float32)),
        compiler_params=_CP,
    )(src_lens, *batch_inputs, *weights)
    return slab, uv_mean


# ----------------------------- mel-resolution kernel ------------------------
_MEL_WEIGHT_NAMES = ("dec_w", "dec_b", "dec_g", "dec_bg",
                     "mel_w", "mel_b", "pn_w", "pn_b")


def _mel_kernel(mlens_ref, x_ref,
                dec_w, dec_b, dec_g, dec_bg, mel_w, mel_b, pn_w, pn_b,
                out_ref, xp_ref):
    b = pl.program_id(0)
    Tm = x_ref.shape[1]
    _zero_halo(xp_ref, (CONV_K - 1) // 2)
    keep = (jax.lax.broadcasted_iota(jnp.int32, (Tm, 1), 0)
            < mlens_ref[b]).astype(jnp.float32)

    # ---- decoder block + mel_linear  TODO(synk): Decoder source not provided ----
    h = _relu(_dot(x_ref[0], dec_w[...]) + dec_b[...])
    h = _ln(h, dec_g[...], dec_bg[...]) * keep
    mel = _dot(h, mel_w[...]) + mel_b[...]                          # (Tm, N_MEL)

    # ---- PostNet (BatchNorm1d eval == identity, TODO(synk)) + residual ----
    p = mel
    for i in range(5):
        p = _conv_taps(xp_ref, p, pn_w[i], pn_b[i])
        if i < 4:
            p = jnp.tanh(p)
    out_ref[0] = jnp.concatenate([mel, p + mel], axis=-1)           # packed slab


def mel_stage(kp, x, mel_lens):
    B, Tm, D = x.shape
    weights = [kp[n] for n in _MEL_WEIGHT_NAMES]
    grid_spec = pltpu.PrefetchScalarGridSpec(
        num_scalar_prefetch=1,
        grid=(B,),
        in_specs=[_batch_spec(x)] + [_full_spec(w) for w in weights],
        out_specs=pl.BlockSpec((1, Tm, 2 * N_MEL), lambda bb, *_: (bb, 0, 0)),
        scratch_shapes=[pltpu.VMEM((Tm + CONV_K - 1, N_MEL), jnp.float32)])
    return pl.pallas_call(
        _mel_kernel,
        grid_spec=grid_spec,
        out_shape=jax.ShapeDtypeStruct((B, Tm, 2 * N_MEL), jnp.float32),
        compiler_params=_CP,
    )(mel_lens, x, *weights)


# ----------------------------- parameters -----------------------------------
def init_params(key):
    ks = iter(jax.random.split(key, 64))

    def w(*shape, s=0.1):
        return s * jax.random.normal(next(ks), shape, jnp.float32)

    def zeros(*shape):
        return jnp.zeros(shape, jnp.float32)

    def ones(*shape):
        return jnp.ones(shape, jnp.float32)

    p = {
        "word_emb": w(VOCAB, ENC_DIM),
        "enc_lin_w": w(ENC_DIM, ENC_DIM), "enc_lin_b": zeros(ENC_DIM),
        "enc_ln_g": ones(ENC_DIM), "enc_ln_b": zeros(ENC_DIM),
        "tve_conv_w": w(CONV_K, ENC_DIM, HALF), "tve_conv_b": zeros(HALF),
        "tve_ln_g": ones(HALF), "tve_ln_b": zeros(HALF),
        "tve_l1_w": w(HALF, HALF), "tve_l1_b": zeros(HALF),
        "tve_l2_w": w(HALF, HALF), "tve_l2_b": zeros(HALF),
        "mve_c1_w": w(CONV_K, N_MEL, QUART), "mve_c1_b": zeros(QUART),
        "mve_c2_w": w(CONV_K, QUART, HALF), "mve_c2_b": zeros(HALF),
        "mve_ln_g": ones(HALF), "mve_ln_b": zeros(HALF),
        "ede_w": w(1, ENC_DIM), "ede_b": zeros(ENC_DIM),
        "tee_conv_w": w(CONV_K, ENC_DIM, HALF), "tee_conv_b": zeros(HALF),
        "tee_ln_g": ones(HALF), "tee_ln_b": zeros(HALF),
        "tee_l1_w": w(HALF, HALF), "tee_l1_b": zeros(HALF),
        "tee_l2_w": w(HALF, 1), "tee_l2_b": zeros(1),
        "el_emb": w(4, HALF),
        "pitch_emb": w(N_BINS, DEC_DIM),
        "energy_emb": w(N_BINS, DEC_DIM),
        "dec_lin_w": w(DEC_DIM, DEC_DIM), "dec_lin_b": zeros(DEC_DIM),
        "dec_ln_g": ones(DEC_DIM), "dec_ln_b": zeros(DEC_DIM),
        "mel_w": w(DEC_DIM, N_MEL), "mel_b": zeros(N_MEL),
    }
    for name in ("dur", "pitch", "energy"):
        p[f"vp_{name}_c1_w"] = w(VP_K, DEC_DIM, DEC_DIM)
        p[f"vp_{name}_c1_b"] = zeros(DEC_DIM)
        p[f"vp_{name}_ln1_g"] = ones(DEC_DIM)
        p[f"vp_{name}_ln1_b"] = zeros(DEC_DIM)
        p[f"vp_{name}_c2_w"] = w(VP_K, DEC_DIM, DEC_DIM)
        p[f"vp_{name}_c2_b"] = zeros(DEC_DIM)
        p[f"vp_{name}_ln2_g"] = ones(DEC_DIM)
        p[f"vp_{name}_ln2_b"] = zeros(DEC_DIM)
        p[f"vp_{name}_lin_w"] = w(DEC_DIM, 1)
        p[f"vp_{name}_lin_b"] = zeros(1)
    for i in range(1, 6):
        p[f"pn_c{i}_w"] = w(CONV_K, N_MEL, N_MEL)
        p[f"pn_c{i}_b"] = zeros(N_MEL)
    return p


def prepare_params(p):
    """One-time repack of the weights into the fused-kernel layouts.

    TODO(synk): real PyTorch Conv1d weights are (Cout, Cin, K); transpose them
    to tap-major (K, Cin, Cout) before calling this when loading a checkpoint.
    """
    E, H, Q, D, M = ENC_DIM, HALF, QUART, DEC_DIM, N_MEL
    names = ("dur", "pitch", "energy")

    def mx(x):                              # MXU-operand weights -> bf16 once
        return x.astype(MXU_DTYPE)

    kp = {
        "word_emb": p["word_emb"], "el_emb": p["el_emb"],
        "pitch_emb": p["pitch_emb"], "energy_emb": p["energy_emb"],
        # encoder block
        "enc_w": mx(p["enc_lin_w"]), "enc_b": p["enc_lin_b"].reshape(1, E),
        "enc_g": p["enc_ln_g"].reshape(1, E), "enc_bg": p["enc_ln_b"].reshape(1, E),
        # text branch: tve + tee first convs stacked along Cout (shared input)
        "tb_cw": mx(jnp.concatenate([p["tve_conv_w"], p["tee_conv_w"]], axis=-1)),
        "tb_cb": jnp.concatenate([p["tve_conv_b"], p["tee_conv_b"]]).reshape(1, 2 * H),
        "tb_g": jnp.stack([p["tve_ln_g"], p["tee_ln_g"]]),
        "tb_bg": jnp.stack([p["tve_ln_b"], p["tee_ln_b"]]),
        "tb_l1w": mx(jnp.stack([p["tve_l1_w"], p["tee_l1_w"]])),
        "tb_l1b": jnp.stack([p["tve_l1_b"], p["tee_l1_b"]]),
        "tve_l2w": mx(p["tve_l2_w"]), "tve_l2b": p["tve_l2_b"].reshape(1, H),
        "tee_l2w": p["tee_l2_w"].reshape(1, H),     # used as mul+reduce (f32)
        "tee_l2b": p["tee_l2_b"].reshape(1, 1),
        # mel variation encoder
        "mve_c1w": mx(p["mve_c1_w"]), "mve_c1b": p["mve_c1_b"].reshape(1, Q),
        "mve_c2w": mx(p["mve_c2_w"]), "mve_c2b": p["mve_c2_b"].reshape(1, H),
        "mve_g": p["mve_ln_g"].reshape(1, H), "mve_bg": p["mve_ln_b"].reshape(1, H),
        # ed embedding (Linear(1, E) + Tanh)
        "ede_w": p["ede_w"].reshape(1, E), "ede_b": p["ede_b"].reshape(1, E),
        # decoder + mel_linear
        "dec_w": mx(p["dec_lin_w"]), "dec_b": p["dec_lin_b"].reshape(1, D),
        "dec_g": p["dec_ln_g"].reshape(1, D), "dec_bg": p["dec_ln_b"].reshape(1, D),
        "mel_w": mx(p["mel_w"]), "mel_b": p["mel_b"].reshape(1, M),
        # variance predictors stacked along a leading predictor axis (no zeros)
        "vp_c1w": mx(jnp.stack([p[f"vp_{n}_c1_w"] for n in names])),
        "vp_c1b": jnp.stack([p[f"vp_{n}_c1_b"] for n in names]),
        "vp_g1": jnp.stack([p[f"vp_{n}_ln1_g"] for n in names]),
        "vp_bg1": jnp.stack([p[f"vp_{n}_ln1_b"] for n in names]),
        "vp_c2w": mx(jnp.stack([p[f"vp_{n}_c2_w"] for n in names])),
        "vp_c2b": jnp.stack([p[f"vp_{n}_c2_b"] for n in names]),
        "vp_g2": jnp.stack([p[f"vp_{n}_ln2_g"] for n in names]),
        "vp_bg2": jnp.stack([p[f"vp_{n}_ln2_b"] for n in names]),
        "vp_lw": jnp.stack([p[f"vp_{n}_lin_w"][:, 0] for n in names]),
        "vp_lb": jnp.stack([p[f"vp_{n}_lin_b"] for n in names]),
        # postnet convs stacked (5, K, M, M)
        "pn_w": mx(jnp.stack([p[f"pn_c{i}_w"] for i in range(1, 6)])),
        "pn_b": jnp.stack([p[f"pn_c{i}_b"] for i in range(1, 6)]),
    }
    return kp


# ----------------------------- glue (plain JAX) ------------------------------
def get_mask_from_lengths(lengths, max_len):
    ids = jnp.arange(max_len)
    return ids[None, :] >= lengths[:, None]          # True on padded positions


def length_regulate(x, durations, mel_lens, max_mel_len):
    # data-dependent gather: stays in plain JAX (not expressible with static BlockSpecs)
    B, T, C = x.shape

    def one(xb, db, lb):
        cum = jnp.cumsum(db)
        pos = jnp.arange(max_mel_len)
        idx = jnp.clip(jnp.searchsorted(cum, pos, side="right"), 0, T - 1)
        out = xb[idx]
        return jnp.where((pos < lb)[:, None], out, 0.0)

    return jax.vmap(one)(x, durations, mel_lens)


# ----------------------------- forward ---------------------------------------
def fastspeech2_forward(kp, speakers, texts, src_lens, max_src_len,
                        mels, mel_lens, max_mel_len,
                        p_targets, e_targets, d_targets, eds, els):
    del speakers, max_src_len  # multi_speaker=False => speaker_emb is None
    B, T = texts.shape
    src_masks = get_mask_from_lengths(src_lens, T)
    mel_masks = get_mask_from_lengths(mel_lens, max_mel_len)

    # gathers stay as glue
    emb = kp["word_emb"][texts]                                       # (B, T, E)
    new_eds = jnp.take_along_axis(
        eds, jnp.broadcast_to(els[:, None, None], (B, T, 1)), axis=2)  # eds[bool_list]
    emotion = kp["el_emb"][els]                                       # (B, HALF)
    bins = jnp.linspace(-1.0, 1.0, N_BINS - 1)
    p_idx = jnp.searchsorted(bins, p_targets)
    e_idx = jnp.searchsorted(bins, e_targets)
    embadd = kp["pitch_emb"][p_idx] + kp["energy_emb"][e_idx]         # (B, T, DEC)

    # --- fused text-resolution kernel (encoder + mve + branches + adaptor preds) ---
    slab, uv_mean = text_stage(kp, emb, mels, new_eds, emotion, embadd,
                               src_lens.astype(jnp.int32))
    x = slab[:, :, :DEC_DIM]
    ed_emb = slab[:, :, OFF_ED_EMB:OFF_ED_EMB + ENC_DIM]
    uv_predictions = slab[:, :, OFF_UV:OFF_UV + HALF]
    ed_predictions = slab[:, :, OFF_SCAL:OFF_SCAL + 1]
    log_d_pred = slab[:, :, OFF_SCAL + 1]
    p_pred = slab[:, :, OFF_SCAL + 2]
    e_pred = slab[:, :, OFF_SCAL + 3]
    uv_embedding = jnp.broadcast_to(uv_mean, (B, T, HALF))

    # length regulator (training path uses duration targets); glue gather
    x = length_regulate(x, d_targets, mel_lens, max_mel_len)
    d_rounded = d_targets

    # --- fused mel-resolution kernel (decoder + mel_linear + postnet + residual) ---
    out2 = mel_stage(kp, x, mel_lens.astype(jnp.int32))
    mel_out = out2[:, :, :N_MEL]
    postnet_out = out2[:, :, N_MEL:]

    return (mel_out, postnet_out, uv_embedding, uv_predictions, ed_emb,
            ed_predictions, p_pred, e_pred, log_d_pred, d_rounded,
            src_masks, mel_masks, src_lens, mel_lens)


# ----------------------------- main ------------------------------------------
if __name__ == "__main__":
    key = jax.random.PRNGKey(0)
    k0, kt, km, ke, kpt, ket = jax.random.split(key, 6)
    params = init_params(k0)
    kparams = prepare_params(params)

    B, T = 2, 8
    speakers = jnp.zeros((B,), jnp.int32)
    texts = jax.random.randint(kt, (B, T), 0, VOCAB, dtype=jnp.int32)
    src_lens = jnp.array([8, 6], jnp.int32)
    max_src_len = T

    d_targets = (jnp.arange(T)[None, :] < src_lens[:, None]).astype(jnp.int32)
    mel_lens = jnp.sum(d_targets, axis=1)
    max_mel_len = T
    mels = jax.random.normal(km, (B, max_mel_len, N_MEL), jnp.float32)

    p_targets = jax.random.normal(kpt, (B, T), jnp.float32)
    e_targets = jax.random.normal(ket, (B, T), jnp.float32)
    eds = jax.random.uniform(ke, (B, T, 12), jnp.float32)
    els = jnp.array([1, 3], jnp.int32)

    outs = fastspeech2_forward(kparams, speakers, texts, src_lens, max_src_len,
                               mels, mel_lens, max_mel_len,
                               p_targets, e_targets, d_targets, eds, els)
    jax.block_until_ready(outs)
    assert outs[0].shape == (B, max_mel_len, N_MEL)
    assert outs[1].shape == (B, max_mel_len, N_MEL)
    assert outs[3].shape == (B, T, HALF)
    assert outs[8].shape == (B, T)
    print("KERNEL_OK")
</pallas_src>

<mosaic_0001>
module attributes {stable_mosaic.version = 11 : i64} {
  func.func @_text_kernel(%arg0: i32, %arg1: memref<2xi32, #tpu.memory_space<smem>>, %arg2: memref<1x8x32xf32, #tpu.memory_space<vmem>>, %arg3: memref<1x8x16xf32, #tpu.memory_space<vmem>>, %arg4: memref<1x8x1xf32, #tpu.memory_space<vmem>>, %arg5: memref<1x1x16xf32, #tpu.memory_space<vmem>>, %arg6: memref<1x8x64xf32, #tpu.memory_space<vmem>>, %arg7: memref<32x32xbf16, #tpu.memory_space<vmem>>, %arg8: memref<1x32xf32, #tpu.memory_space<vmem>>, %arg9: memref<1x32xf32, #tpu.memory_space<vmem>>, %arg10: memref<1x32xf32, #tpu.memory_space<vmem>>, %arg11: memref<5x32x32xbf16, #tpu.memory_space<vmem>>, %arg12: memref<1x32xf32, #tpu.memory_space<vmem>>, %arg13: memref<2x16xf32, #tpu.memory_space<vmem>>, %arg14: memref<2x16xf32, #tpu.memory_space<vmem>>, %arg15: memref<2x16x16xbf16, #tpu.memory_space<vmem>>, %arg16: memref<2x16xf32, #tpu.memory_space<vmem>>, %arg17: memref<16x16xbf16, #tpu.memory_space<vmem>>, %arg18: memref<1x16xf32, #tpu.memory_space<vmem>>, %arg19: memref<1x16xf32, #tpu.memory_space<vmem>>, %arg20: memref<1x1xf32, #tpu.memory_space<vmem>>, %arg21: memref<5x16x8xbf16, #tpu.memory_space<vmem>>, %arg22: memref<1x8xf32, #tpu.memory_space<vmem>>, %arg23: memref<5x8x16xbf16, #tpu.memory_space<vmem>>, %arg24: memref<1x16xf32, #tpu.memory_space<vmem>>, %arg25: memref<1x16xf32, #tpu.memory_space<vmem>>, %arg26: memref<1x16xf32, #tpu.memory_space<vmem>>, %arg27: memref<1x32xf32, #tpu.memory_space<vmem>>, %arg28: memref<1x32xf32, #tpu.memory_space<vmem>>, %arg29: memref<3x3x64x64xbf16, #tpu.memory_space<vmem>>, %arg30: memref<3x64xf32, #tpu.memory_space<vmem>>, %arg31: memref<3x64xf32, #tpu.memory_space<vmem>>, %arg32: memref<3x64xf32, #tpu.memory_space<vmem>>, %arg33: memref<3x3x64x64xbf16, #tpu.memory_space<vmem>>, %arg34: memref<3x64xf32, #tpu.memory_space<vmem>>, %arg35: memref<3x64xf32, #tpu.memory_space<vmem>>, %arg36: memref<3x64xf32, #tpu.memory_space<vmem>>, %arg37: memref<3x64xf32, #tpu.memory_space<vmem>>, %arg38: memref<3x1xf32, #tpu.memory_space<vmem>>, %arg39: memref<1x8x128xf32, #tpu.memory_space<vmem>>, %arg40: memref<1x1x16xf32, #tpu.memory_space<vmem>>, %arg41: memref<12x32xf32, #tpu.memory_space<vmem>>, %arg42: memref<12x16xf32, #tpu.memory_space<vmem>>, %arg43: memref<12x8xf32, #tpu.memory_space<vmem>>, %arg44: memref<10x64xf32, #tpu.memory_space<vmem>>, %arg45: memref<10x64xf32, #tpu.memory_space<vmem>>) attributes {dimension_semantics = [#tpu.dimension_semantics<parallel>], iteration_bounds = array<i64: 2>, scalar_prefetch = 1 : i64, scratch_operands = 5 : i64, tpu.core_type = #tpu.core_type<tc>, window_params = [{transform_indices = @transform_0, window_bounds = array<i64: 1, 8, 32>}, {transform_indices = @transform_1, window_bounds = array<i64: 1, 8, 16>}, {transform_indices = @transform_2, window_bounds = array<i64: 1, 8, 1>}, {transform_indices = @transform_3, window_bounds = array<i64: 1, 1, 16>}, {transform_indices = @transform_4, window_bounds = array<i64: 1, 8, 64>}, {pipeline_mode = #tpu.pipeline_mode<synchronous>, transform_indices = @transform_5, window_bounds = array<i64: 32, 32>}, {pipeline_mode = #tpu.pipeline_mode<synchronous>, transform_indices = @transform_6, window_bounds = array<i64: 1, 32>}, {pipeline_mode = #tpu.pipeline_mode<synchronous>, transform_indices = @transform_7, window_bounds = array<i64: 1, 32>}, {pipeline_mode = #tpu.pipeline_mode<synchronous>, transform_indices = @transform_8, window_bounds = array<i64: 1, 32>}, {pipeline_mode = #tpu.pipeline_mode<synchronous>, transform_indices = @transform_9, window_bounds = array<i64: 5, 32, 32>}, {pipeline_mode = #tpu.pipeline_mode<synchronous>, transform_indices = @transform_10, window_bounds = array<i64: 1, 32>}, {pipeline_mode = #tpu.pipeline_mode<synchronous>, transform_indices = @transform_11, window_bounds = array<i64: 2, 16>}, {pipeline_mode = #tpu.pipeline_mode<synchronous>, transform_indices = @transform_12, window_bounds = array<i64: 2, 16>}, {pipeline_mode = #tpu.pipeline_mode<synchronous>, transform_indices = @transform_13, window_bounds = array<i64: 2, 16, 16>}, {pipeline_mode = #tpu.pipeline_mode<synchronous>, transform_indices = @transform_14, window_bounds = array<i64: 2, 16>}, {pipeline_mode = #tpu.pipeline_mode<synchronous>, transform_indices = @transform_15, window_bounds = array<i64: 16, 16>}, {pipeline_mode = #tpu.pipeline_mode<synchronous>, transform_indices = @transform_16, window_bounds = array<i64: 1, 16>}, {pipeline_mode = #tpu.pipeline_mode<synchronous>, transform_indices = @transform_17, window_bounds = array<i64: 1, 16>}, {pipeline_mode = #tpu.pipeline_mode<synchronous>, transform_indices = @transform_18, window_bounds = array<i64: 1, 1>}, {pipeline_mode = #tpu.pipeline_mode<synchronous>, transform_indices = @transform_19, window_bounds = array<i64: 5, 16, 8>}, {pipeline_mode = #tpu.pipeline_mode<synchronous>, transform_indices = @transform_20, window_bounds = array<i64: 1, 8>}, {pipeline_mode = #tpu.pipeline_mode<synchronous>, transform_indices = @transform_21, window_bounds = array<i64: 5, 8, 16>}, {pipeline_mode = #tpu.pipeline_mode<synchronous>, transform_indices = @transform_22, window_bounds = array<i64: 1, 16>}, {pipeline_mode = #tpu.pipeline_mode<synchronous>, transform_indices = @transform_23, window_bounds = array<i64: 1, 16>}, {pipeline_mode = #tpu.pipeline_mode<synchronous>, transform_indices = @transform_24, window_bounds = array<i64: 1, 16>}, {pipeline_mode = #tpu.pipeline_mode<synchronous>, transform_indices = @transform_25, window_bounds = array<i64: 1, 32>}, {pipeline_mode = #tpu.pipeline_mode<synchronous>, transform_indices = @transform_26, window_bounds = array<i64: 1, 32>}, {pipeline_mode = #tpu.pipeline_mode<synchronous>, transform_indices = @transform_27, window_bounds = array<i64: 3, 3, 64, 64>}, {pipeline_mode = #tpu.pipeline_mode<synchronous>, transform_indices = @transform_28, window_bounds = array<i64: 3, 64>}, {pipeline_mode = #tpu.pipeline_mode<synchronous>, transform_indices = @transform_29, window_bounds = array<i64: 3, 64>}, {pipeline_mode = #tpu.pipeline_mode<synchronous>, transform_indices = @transform_30, window_bounds = array<i64: 3, 64>}, {pipeline_mode = #tpu.pipeline_mode<synchronous>, transform_indices = @transform_31, window_bounds = array<i64: 3, 3, 64, 64>}, {pipeline_mode = #tpu.pipeline_mode<synchronous>, transform_indices = @transform_32, window_bounds = array<i64: 3, 64>}, {pipeline_mode = #tpu.pipeline_mode<synchronous>, transform_indices = @transform_33, window_bounds = array<i64: 3, 64>}, {pipeline_mode = #tpu.pipeline_mode<synchronous>, transform_indices = @transform_34, window_bounds = array<i64: 3, 64>}, {pipeline_mode = #tpu.pipeline_mode<synchronous>, transform_indices = @transform_35, window_bounds = array<i64: 3, 64>}, {pipeline_mode = #tpu.pipeline_mode<synchronous>, transform_indices = @transform_36, window_bounds = array<i64: 3, 1>}, {transform_indices = @transform_37, window_bounds = array<i64: 1, 8, 128>}, {transform_indices = @transform_38, window_bounds = array<i64: 1, 1, 16>}]} {
    %cst = arith.constant 0.000000e+00 : f32
    %0 = vector.broadcast %cst : f32 to vector<2x32xf32>
    %c0 = arith.constant 0 : index
    %c0_0 = arith.constant 0 : index
    %1 = vector.load %arg41[%c0, %c0_0] : memref<12x32xf32, #tpu.memory_space<vmem>>, vector<2x32xf32>
    tpu.vector_store %arg41[%c0, %c0_0], %0 {strides = array<i32>} : memref<12x32xf32, #tpu.memory_space<vmem>>, vector<2x32xf32>,
    %c10 = arith.constant 10 : index
    %c0_1 = arith.constant 0 : index
    %2 = vector.load %arg41[%c10, %c0_1] : memref<12x32xf32, #tpu.memory_space<vmem>>, vector<2x32xf32>
    tpu.vector_store %arg41[%c10, %c0_1], %0 {strides = array<i32>} : memref<12x32xf32, #tpu.memory_space<vmem>>, vector<2x32xf32>,
    %cst_2 = arith.constant 0.000000e+00 : f32
    %3 = vector.broadcast %cst_2 : f32 to vector<2x16xf32>
    %c0_3 = arith.constant 0 : index
    %c0_4 = arith.constant 0 : index
    %4 = vector.load %arg42[%c0_3, %c0_4] : memref<12x16xf32, #tpu.memory_space<vmem>>, vector<2x16xf32>
    tpu.vector_store %arg42[%c0_3, %c0_4], %3 {strides = array<i32>} : memref<12x16xf32, #tpu.memory_space<vmem>>, vector<2x16xf32>,
    %c10_5 = arith.constant 10 : index
    %c0_6 = arith.constant 0 : index
    %5 = vector.load %arg42[%c10_5, %c0_6] : memref<12x16xf32, #tpu.memory_space<vmem>>, vector<2x16xf32>
    tpu.vector_store %arg42[%c10_5, %c0_6], %3 {strides = array<i32>} : memref<12x16xf32, #tpu.memory_space<vmem>>, vector<2x16xf32>,
    %cst_7 = arith.constant 0.000000e+00 : f32
    %6 = vector.broadcast %cst_7 : f32 to vector<2x8xf32>
    %c0_8 = arith.constant 0 : index
    %c0_9 = arith.constant 0 : index
    %7 = vector.load %arg43[%c0_8, %c0_9] : memref<12x8xf32, #tpu.memory_space<vmem>>, vector<2x8xf32>
    tpu.vector_store %arg43[%c0_8, %c0_9], %6 {strides = array<i32>} : memref<12x8xf32, #tpu.memory_space<vmem>>, vector<2x8xf32>,
    %c10_10 = arith.constant 10 : index
    %c0_11 = arith.constant 0 : index
    %8 = vector.load %arg43[%c10_10, %c0_11] : memref<12x8xf32, #tpu.memory_space<vmem>>, vector<2x8xf32>
    tpu.vector_store %arg43[%c10_10, %c0_11], %6 {strides = array<i32>} : memref<12x8xf32, #tpu.memory_space<vmem>>, vector<2x8xf32>,
    %cst_12 = arith.constant 0.000000e+00 : f32
    %9 = vector.broadcast %cst_12 : f32 to vector<1x64xf32>
    %c0_13 = arith.constant 0 : index
    %c0_14 = arith.constant 0 : index
    %10 = vector.load %arg44[%c0_13, %c0_14] : memref<10x64xf32, #tpu.memory_space<vmem>>, vector<1x64xf32>
    tpu.vector_store %arg44[%c0_13, %c0_14], %9 {strides = array<i32>} : memref<10x64xf32, #tpu.memory_space<vmem>>, vector<1x64xf32>,
    %c9 = arith.constant 9 : index
    %c0_15 = arith.constant 0 : index
    %11 = vector.load %arg44[%c9, %c0_15] : memref<10x64xf32, #tpu.memory_space<vmem>>, vector<1x64xf32>
    tpu.vector_store %arg44[%c9, %c0_15], %9 {strides = array<i32>} : memref<10x64xf32, #tpu.memory_space<vmem>>, vector<1x64xf32>,
    %cst_16 = arith.constant 0.000000e+00 : f32
    %12 = vector.broadcast %cst_16 : f32 to vector<1x64xf32>
    %c0_17 = arith.constant 0 : index
    %c0_18 = arith.constant 0 : index
    %13 = vector.load %arg45[%c0_17, %c0_18] : memref<10x64xf32, #tpu.memory_space<vmem>>, vector<1x64xf32>
    tpu.vector_store %arg45[%c0_17, %c0_18], %12 {strides = array<i32>} : memref<10x64xf32, #tpu.memory_space<vmem>>, vector<1x64xf32>,
    %c9_19 = arith.constant 9 : index
    %c0_20 = arith.constant 0 : index
    %14 = vector.load %arg45[%c9_19, %c0_20] : memref<10x64xf32, #tpu.memory_space<vmem>>, vector<1x64xf32>
    tpu.vector_store %arg45[%c9_19, %c0_20], %12 {strides = array<i32>} : memref<10x64xf32, #tpu.memory_space<vmem>>, vector<1x64xf32>,
    %15 = tpu.iota {dimensions = array<i32: 0>} : vector<8x1xi32>
    %16 = arith.index_cast %arg0 : i32 to index
    %17 = memref.load %arg1[%16] : memref<2xi32, #tpu.memory_space<smem>>
    %18 = vector.broadcast %17 : i32 to vector<8x1xi32>
    %19 = arith.cmpi slt, %15, %18 : vector<8x1xi32>
    %20 = arith.extui %19 : vector<8x1xi1> to vector<8x1xi32>
    %21 = arith.sitofp %20 : vector<8x1xi32> to vector<8x1xf32>
    %c0_21 = arith.constant 0 : index
    %c0_22 = arith.constant 0 : index
    %c0_23 = arith.constant 0 : index
    %22 = vector.load %arg2[%c0_21, %c0_22, %c0_23] : memref<1x8x32xf32, #tpu.memory_space<vmem>>, vector<1x8x32xf32>
    %23 = vector.shape_cast %22 : vector<1x8x32xf32> to vector<8x32xf32>
    %c0_24 = arith.constant 0 : index
    %c0_25 = arith.constant 0 : index
    %24 = vector.load %arg7[%c0_24, %c0_25] : memref<32x32xbf16, #tpu.memory_space<vmem>>, vector<32x32xbf16>
    %25 = arith.truncf %23 : vector<8x32xf32> to vector<8x32xbf16>
    %cst_26 = arith.constant dense<0.000000e+00> : vector<8x32xf32>
    %26 = tpu.matmul %25, %24, %cst_26 {dimension_numbers = #tpu.dot_dimension_numbers<[1], [0], [0], [1], [0, 0, 1, 1], [], []>} : vector<8x32xbf16>, vector<32x32xbf16>, vector<8x32xf32> -> vector<8x32xf32>
    %c0_27 = arith.constant 0 : index
    %c0_28 = arith.constant 0 : index
    %27 = vector.load %arg8[%c0_27, %c0_28] : memref<1x32xf32, #tpu.memory_space<vmem>>, vector<1x32xf32>
    %28 = vector.broadcast %27 : vector<1x32xf32> to vector<8x32xf32>
    %29 = arith.addf %26, %28 : vector<8x32xf32>
    %cst_29 = arith.constant 0.000000e+00 : f32
    %30 = vector.broadcast %cst_29 : f32 to vector<8x32xf32>
    %31 = arith.maximumf %29, %30 : vector<8x32xf32>
    %c0_30 = arith.constant 0 : index
    %c0_31 = arith.constant 0 : index
    %32 = vector.load %arg9[%c0_30, %c0_31] : memref<1x32xf32, #tpu.memory_space<vmem>>, vector<1x32xf32>
    %c0_32 = arith.constant 0 : index
    %c0_33 = arith.constant 0 : index
    %33 = vector.load %arg10[%c0_32, %c0_33] : memref<1x32xf32, #tpu.memory_space<vmem>>, vector<1x32xf32>
    %cst_34 = arith.constant dense<0.000000e+00> : vector<8xf32>
    %34 = vector.multi_reduction <add>, %31, %cst_34 [1] : vector<8x32xf32> to vector<8xf32>
    %35 = vector.shape_cast %34 : vector<8xf32> to vector<8x1xf32>
    %cst_35 = arith.constant 3.200000e+01 : f32
    %36 = vector.broadcast %cst_35 : f32 to vector<8x1xf32>
    %37 = arith.divf %35, %36 : vector<8x1xf32>
    %38 = vector.broadcast %37 : vector<8x1xf32> to vector<8x32xf32>
    %39 = arith.subf %31, %38 : vector<8x32xf32>
    %40 = arith.mulf %39, %39 : vector<8x32xf32>
    %cst_36 = arith.constant dense<0.000000e+00> : vector<8xf32>
    %41 = vector.multi_reduction <add>, %40, %cst_36 [1] : vector<8x32xf32> to vector<8xf32>
    %42 = vector.shape_cast %41 : vector<8xf32> to vector<8x1xf32>
    %cst_37 = arith.constant 3.200000e+01 : f32
    %43 = vector.broadcast %cst_37 : f32 to vector<8x1xf32>
    %44 = arith.divf %42, %43 : vector<8x1xf32>
    %45 = vector.broadcast %37 : vector<8x1xf32> to vector<8x32xf32>
    %46 = arith.subf %31, %45 : vector<8x32xf32>
    %cst_38 = arith.constant 9.99999974E-6 : f32
    %47 = vector.broadcast %cst_38 : f32 to vector<8x1xf32>
    %48 = arith.addf %44, %47 : vector<8x1xf32>
    %49 = math.rsqrt %48 : vector<8x1xf32>
    %50 = vector.broadcast %49 : vector<8x1xf32> to vector<8x32xf32>
    %51 = arith.mulf %46, %50 : vector<8x32xf32>
    %52 = vector.broadcast %32 : vector<1x32xf32> to vector<8x32xf32>
    %53 = arith.mulf %51, %52 : vector<8x32xf32>
    %54 = vector.broadcast %33 : vector<1x32xf32> to vector<8x32xf32>
    %55 = arith.addf %53, %54 : vector<8x32xf32>
    %56 = vector.broadcast %21 : vector<8x1xf32> to vector<8x32xf32>
    %57 = arith.mulf %55, %56 : vector<8x32xf32>
    %c0_39 = arith.constant 0 : index
    %c0_40 = arith.constant 0 : index
    %c0_41 = arith.constant 0 : index
    %58 = vector.load %arg3[%c0_39, %c0_40, %c0_41] : memref<1x8x16xf32, #tpu.memory_space<vmem>>, vector<1x8x16xf32>
    %59 = vector.shape_cast %58 : vector<1x8x16xf32> to vector<8x16xf32>
    %c0_42 = arith.constant 0 : index
    %c0_43 = arith.constant 0 : index
    %60 = vector.load %arg22[%c0_42, %c0_43] : memref<1x8xf32, #tpu.memory_space<vmem>>, vector<1x8xf32>
    %c2 = arith.constant 2 : index
    %c0_44 = arith.constant 0 : index
    %61 = vector.load %arg42[%c2, %c0_44] : memref<12x16xf32, #tpu.memory_space<vmem>>, vector<8x16xf32>
    tpu.vector_store %arg42[%c2, %c0_44], %59 {strides = array<i32>} : memref<12x16xf32, #tpu.memory_space<vmem>>, vector<8x16xf32>,
    %c0_45 = arith.constant 0 : index
    %c0_46 = arith.constant 0 : index
    %62 = vector.load %arg42[%c0_45, %c0_46] : memref<12x16xf32, #tpu.memory_space<vmem>>, vector<8x16xf32>
    %c0_47 = arith.constant 0 : index
    %c0_48 = arith.constant 0 : index
    %c0_49 = arith.constant 0 : index
    %63 = vector.load %arg21[%c0_47, %c0_48, %c0_49] : memref<5x16x8xbf16, #tpu.memory_space<vmem>>, vector<1x16x8xbf16>
    %64 = vector.shape_cast %63 : vector<1x16x8xbf16> to vector<16x8xbf16>
    %65 = arith.truncf %62 : vector<8x16xf32> to vector<8x16xbf16>
    %cst_50 = arith.constant dense<0.000000e+00> : vector<8x8xf32>
    %66 = tpu.matmul %65, %64, %cst_50 {dimension_numbers = #tpu.dot_dimension_numbers<[1], [0], [0], [1], [0, 0, 1, 1], [], []>} : vector<8x16xbf16>, vector<16x8xbf16>, vector<8x8xf32> -> vector<8x8xf32>
    %c1 = arith.constant 1 : index
    %c0_51 = arith.constant 0 : index
    %67 = vector.load %arg42[%c1, %c0_51] : memref<12x16xf32, #tpu.memory_space<vmem>>, vector<8x16xf32>
    %c1_52 = arith.constant 1 : index
    %c0_53 = arith.constant 0 : index
    %c0_54 = arith.constant 0 : index
    %68 = vector.load %arg21[%c1_52, %c0_53, %c0_54] : memref<5x16x8xbf16, #tpu.memory_space<vmem>>, vector<1x16x8xbf16>
    %69 = vector.shape_cast %68 : vector<1x16x8xbf16> to vector<16x8xbf16>
    %70 = arith.truncf %67 : vector<8x16xf32> to vector<8x16xbf16>
    %cst_55 = arith.constant dense<0.000000e+00> : vector<8x8xf32>
    %71 = tpu.matmul %70, %69, %cst_55 {dimension_numbers = #tpu.dot_dimension_numbers<[1], [0], [0], [1], [0, 0, 1, 1], [], []>} : vector<8x16xbf16>, vector<16x8xbf16>, vector<8x8xf32> -> vector<8x8xf32>
    %72 = arith.addf %66, %71 : vector<8x8xf32>
    %c2_56 = arith.constant 2 : index
    %c0_57 = arith.constant 0 : index
    %73 = vector.load %arg42[%c2_56, %c0_57] : memref<12x16xf32, #tpu.memory_space<vmem>>, vector<8x16xf32>
    %c2_58 = arith.constant 2 : index
    %c0_59 = arith.constant 0 : index
    %c0_60 = arith.constant 0 : index
    %74 = vector.load %arg21[%c2_58, %c0_59, %c0_60] : memref<5x16x8xbf16, #tpu.memory_space<vmem>>, vector<1x16x8xbf16>
    %75 = vector.shape_cast %74 : vector<1x16x8xbf16> to vector<16x8xbf16>
    %76 = arith.truncf %73 : vector<8x16xf32> to vector<8x16xbf16>
    %cst_61 = arith.constant dense<0.000000e+00> : vector<8x8xf32>
    %77 = tpu.matmul %76, %75, %cst_61 {dimension_numbers = #tpu.dot_dimension_numbers<[1], [0], [0], [1], [0, 0, 1, 1], [], []>} : vector<8x16xbf16>, vector<16x8xbf16>, vector<8x8xf32> -> vector<8x8xf32>
    %78 = arith.addf %72, %77 : vector<8x8xf32>
    %c3 = arith.constant 3 : index
    %c0_62 = arith.constant 0 : index
    %79 = vector.load %arg42[%c3, %c0_62] : memref<12x16xf32, #tpu.memory_space<vmem>>, vector<8x16xf32>
    %c3_63 = arith.constant 3 : index
    %c0_64 = arith.constant 0 : index
    %c0_65 = arith.constant 0 : index
    %80 = vector.load %arg21[%c3_63, %c0_64, %c0_65] : memref<5x16x8xbf16, #tpu.memory_space<vmem>>, vector<1x16x8xbf16>
    %81 = vector.shape_cast %80 : vector<1x16x8xbf16> to vector<16x8xbf16>
    %82 = arith.truncf %79 : vector<8x16xf32> to vector<8x16xbf16>
    %cst_66 = arith.constant dense<0.000000e+00> : vector<8x8xf32>
    %83 = tpu.matmul %82, %81, %cst_66 {dimension_numbers = #tpu.dot_dimension_numbers<[1], [0], [0], [1], [0, 0, 1, 1], [], []>} : vector<8x16xbf16>, vector<16x8xbf16>, vector<8x8xf32> -> vector<8x8xf32>
    %84 = arith.addf %78, %83 : vector<8x8xf32>
    %c4 = arith.constant 4 : index
    %c0_67 = arith.constant 0 : index
    %85 = vector.load %arg42[%c4, %c0_67] : memref<12x16xf32, #tpu.memory_space<vmem>>, vector<8x16xf32>
    %c4_68 = arith.constant 4 : index
    %c0_69 = arith.constant 0 : index
    %c0_70 = arith.constant 0 : index
    %86 = vector.load %arg21[%c4_68, %c0_69, %c0_70] : memref<5x16x8xbf16, #tpu.memory_space<vmem>>, vector<1x16x8xbf16>
    %87 = vector.shape_cast %86 : vector<1x16x8xbf16> to vector<16x8xbf16>
    %88 = arith.truncf %85 : vector<8x16xf32> to vector<8x16xbf16>
    %cst_71 = arith.constant dense<0.000000e+00> : vector<8x8xf32>
    %89 = tpu.matmul %88, %87, %cst_71 {dimension_numbers = #tpu.dot_dimension_numbers<[1], [0], [0], [1], [0, 0, 1, 1], [], []>} : vector<8x16xbf16>, vector<16x8xbf16>, vector<8x8xf32> -> vector<8x8xf32>
    %90 = arith.addf %84, %89 : vector<8x8xf32>
    %91 = vector.broadcast %60 : vector<1x8xf32> to vector<8x8xf32>
    %92 = arith.addf %90, %91 : vector<8x8xf32>
    %c0_72 = arith.constant 0 : index
    %c0_73 = arith.constant 0 : index
    %93 = vector.load %arg24[%c0_72, %c0_73] : memref<1x16xf32, #tpu.memory_space<vmem>>, vector<1x16xf32>
    %c2_74 = arith.constant 2 : index
    %c0_75 = arith.constant 0 : index
    %94 = vector.load %arg43[%c2_74, %c0_75] : memref<12x8xf32, #tpu.memory_space<vmem>>, vector<8x8xf32>
    tpu.vector_store %arg43[%c2_74, %c0_75], %92 {strides = array<i32>} : memref<12x8xf32, #tpu.memory_space<vmem>>, vector<8x8xf32>,
    %c0_76 = arith.constant 0 : index
    %c0_77 = arith.constant 0 : index
    %95 = vector.load %arg43[%c0_76, %c0_77] : memref<12x8xf32, #tpu.memory_space<vmem>>, vector<8x8xf32>
    %c0_78 = arith.constant 0 : index
    %c0_79 = arith.constant 0 : index
    %c0_80 = arith.constant 0 : index
    %96 = vector.load %arg23[%c0_78, %c0_79, %c0_80] : memref<5x8x16xbf16, #tpu.memory_space<vmem>>, vector<1x8x16xbf16>
    %97 = vector.shape_cast %96 : vector<1x8x16xbf16> to vector<8x16xbf16>
    %98 = arith.truncf %95 : vector<8x8xf32> to vector<8x8xbf16>
    %cst_81 = arith.constant dense<0.000000e+00> : vector<8x16xf32>
    %99 = tpu.matmul %98, %97, %cst_81 {dimension_numbers = #tpu.dot_dimension_numbers<[1], [0], [0], [1], [0, 0, 1, 1], [], []>} : vector<8x8xbf16>, vector<8x16xbf16>, vector<8x16xf32> -> vector<8x16xf32>
    %c1_82 = arith.constant 1 : index
    %c0_83 = arith.constant 0 : index
    %100 = vector.load %arg43[%c1_82, %c0_83] : memref<12x8xf32, #tpu.memory_space<vmem>>, vector<8x8xf32>
    %c1_84 = arith.constant 1 : index
    %c0_85 = arith.constant 0 : index
    %c0_86 = arith.constant 0 : index
    %101 = vector.load %arg23[%c1_84, %c0_85, %c0_86] : memref<5x8x16xbf16, #tpu.memory_space<vmem>>, vector<1x8x16xbf16>
    %102 = vector.shape_cast %101 : vector<1x8x16xbf16> to vector<8x16xbf16>
    %103 = arith.truncf %100 : vector<8x8xf32> to vector<8x8xbf16>
    %cst_87 = arith.constant dense<0.000000e+00> : vector<8x16xf32>
    %104 = tpu.matmul %103, %102, %cst_87 {dimension_numbers = #tpu.dot_dimension_numbers<[1], [0], [0], [1], [0, 0, 1, 1], [], []>} : vector<8x8xbf16>, vector<8x16xbf16>, vector<8x16xf32> -> vector<8x16xf32>
    %105 = arith.addf %99, %104 : vector<8x16xf32>
    %c2_88 = arith.constant 2 : index
    %c0_89 = arith.constant 0 : index
    %106 = vector.load %arg43[%c2_88, %c0_89] : memref<12x8xf32, #tpu.memory_space<vmem>>, vector<8x8xf32>
    %c2_90 = arith.constant 2 : index
    %c0_91 = arith.constant 0 : index
    %c0_92 = arith.constant 0 : index
    %107 = vector.load %arg23[%c2_90, %c0_91, %c0_92] : memref<5x8x16xbf16, #tpu.memory_space<vmem>>, vector<1x8x16xbf16>
    %108 = vector.shape_cast %107 : vector<1x8x16xbf16> to vector<8x16xbf16>
    %109 = arith.truncf %106 : vector<8x8xf32> to vector<8x8xbf16>
    %cst_93 = arith.constant dense<0.000000e+00> : vector<8x16xf32>
    %110 = tpu.matmul %109, %108, %cst_93 {dimension_numbers = #tpu.dot_dimension_numbers<[1], [0], [0], [1], [0, 0, 1, 1], [], []>} : vector<8x8xbf16>, vector<8x16xbf16>, vector<8x16xf32> -> vector<8x16xf32>
    %111 = arith.addf %105, %110 : vector<8x16xf32>
    %c3_94 = arith.constant 3 : index
    %c0_95 = arith.constant 0 : index
    %112 = vector.load %arg43[%c3_94, %c0_95] : memref<12x8xf32, #tpu.memory_space<vmem>>, vector<8x8xf32>
    %c3_96 = arith.constant 3 : index
    %c0_97 = arith.constant 0 : index
    %c0_98 = arith.constant 0 : index
    %113 = vector.load %arg23[%c3_96, %c0_97, %c0_98] : memref<5x8x16xbf16, #tpu.memory_space<vmem>>, vector<1x8x16xbf16>
    %114 = vector.shape_cast %113 : vector<1x8x16xbf16> to vector<8x16xbf16>
    %115 = arith.truncf %112 : vector<8x8xf32> to vector<8x8xbf16>
    %cst_99 = arith.constant dense<0.000000e+00> : vector<8x16xf32>
    %116 = tpu.matmul %115, %114, %cst_99 {dimension_numbers = #tpu.dot_dimension_numbers<[1], [0], [0], [1], [0, 0, 1, 1], [], []>} : vector<8x8xbf16>, vector<8x16xbf16>, vector<8x16xf32> -> vector<8x16xf32>
    %117 = arith.addf %111, %116 : vector<8x16xf32>
    %c4_100 = arith.constant 4 : index
    %c0_101 = arith.constant 0 : index
    %118 = vector.load %arg43[%c4_100, %c0_101] : memref<12x8xf32, #tpu.memory_space<vmem>>, vector<8x8xf32>
    %c4_102 = arith.constant 4 : index
    %c0_103 = arith.constant 0 : index
    %c0_104 = arith.constant 0 : index
    %119 = vector.load %arg23[%c4_102, %c0_103, %c0_104] : memref<5x8x16xbf16, #tpu.memory_space<vmem>>, vector<1x8x16xbf16>
    %120 = vector.shape_cast %119 : vector<1x8x16xbf16> to vector<8x16xbf16>
    %121 = arith.truncf %118 : vector<8x8xf32> to vector<8x8xbf16>
    %cst_105 = arith.constant dense<0.000000e+00> : vector<8x16xf32>
    %122 = tpu.matmul %121, %120, %cst_105 {dimension_numbers = #tpu.dot_dimension_numbers<[1], [0], [0], [1], [0, 0, 1, 1], [], []>} : vector<8x8xbf16>, vector<8x16xbf16>, vector<8x16xf32> -> vector<8x16xf32>
    %123 = arith.addf %117, %122 : vector<8x16xf32>
    %124 = vector.broadcast %93 : vector<1x16xf32> to vector<8x16xf32>
    %125 = arith.addf %123, %124 : vector<8x16xf32>
    %c0_106 = arith.constant 0 : index
    %c0_107 = arith.constant 0 : index
    %126 = vector.load %arg25[%c0_106, %c0_107] : memref<1x16xf32, #tpu.memory_space<vmem>>, vector<1x16xf32>
    %c0_108 = arith.constant 0 : index
    %c0_109 = arith.constant 0 : index
    %127 = vector.load %arg26[%c0_108, %c0_109] : memref<1x16xf32, #tpu.memory_space<vmem>>, vector<1x16xf32>
    %cst_110 = arith.constant dense<0.000000e+00> : vector<8xf32>
    %128 = vector.multi_reduction <add>, %125, %cst_110 [1] : vector<8x16xf32> to vector<8xf32>
    %129 = vector.shape_cast %128 : vector<8xf32> to vector<8x1xf32>
    %cst_111 = arith.constant 1.600000e+01 : f32
    %130 = vector.broadcast %cst_111 : f32 to vector<8x1xf32>
    %131 = arith.divf %129, %130 : vector<8x1xf32>
    %132 = vector.broadcast %131 : vector<8x1xf32> to vector<8x16xf32>
    %133 = arith.subf %125, %132 : vector<8x16xf32>
    %134 = arith.mulf %133, %133 : vector<8x16xf32>
    %cst_112 = arith.constant dense<0.000000e+00> : vector<8xf32>
    %135 = vector.multi_reduction <add>, %134, %cst_112 [1] : vector<8x16xf32> to vector<8xf32>
    %136 = vector.shape_cast %135 : vector<8xf32> to vector<8x1xf32>
    %cst_113 = arith.constant 1.600000e+01 : f32
    %137 = vector.broadcast %cst_113 : f32 to vector<8x1xf32>
    %138 = arith.divf %136, %137 : vector<8x1xf32>
    %139 = vector.broadcast %131 : vector<8x1xf32> to vector<8x16xf32>
    %140 = arith.subf %125, %139 : vector<8x16xf32>
    %cst_114 = arith.constant 9.99999974E-6 : f32
    %141 = vector.broadcast %cst_114 : f32 to vector<8x1xf32>
    %142 = arith.addf %138, %141 : vector<8x1xf32>
    %143 = math.rsqrt %142 : vector<8x1xf32>
    %144 = vector.broadcast %143 : vector<8x1xf32> to vector<8x16xf32>
    %145 = arith.mulf %140, %144 : vector<8x16xf32>
    %146 = vector.broadcast %126 : vector<1x16xf32> to vector<8x16xf32>
    %147 = arith.mulf %145, %146 : vector<8x16xf32>
    %148 = vector.broadcast %127 : vector<1x16xf32> to vector<8x16xf32>
    %149 = arith.addf %147, %148 : vector<8x16xf32>
    %cst_115 = arith.constant dense<0.000000e+00> : vector<16xf32>
    %150 = vector.multi_reduction <add>, %149, %cst_115 [0] : vector<8x16xf32> to vector<16xf32>
    %151 = vector.shape_cast %150 : vector<16xf32> to vector<1x16xf32>
    %cst_116 = arith.constant 8.000000e+00 : f32
    %152 = vector.broadcast %cst_116 : f32 to vector<1x16xf32>
    %153 = arith.divf %151, %152 : vector<1x16xf32>
    %c0_117 = arith.constant 0 : index
    %c0_118 = arith.constant 0 : index
    %c0_119 = arith.constant 0 : index
    %154 = vector.load %arg40[%c0_117, %c0_118, %c0_119] : memref<1x1x16xf32, #tpu.memory_space<vmem>>, vector<1x1x16xf32>
    %155 = vector.shape_cast %154 : vector<1x1x16xf32> to vector<1x16xf32>
    %156 = vector.shape_cast %153 : vector<1x16xf32> to vector<1x1x16xf32>
    tpu.vector_store %arg40[%c0_117, %c0_118, %c0_119], %156 {strides = array<i32>} : memref<1x1x16xf32, #tpu.memory_space<vmem>>, vector<1x1x16xf32>,
    %c0_120 = arith.constant 0 : index
    %c0_121 = arith.constant 0 : index
    %157 = vector.load %arg12[%c0_120, %c0_121] : memref<1x32xf32, #tpu.memory_space<vmem>>, vector<1x32xf32>
    %c2_122 = arith.constant 2 : index
    %c0_123 = arith.constant 0 : index
    %158 = vector.load %arg41[%c2_122, %c0_123] : memref<12x32xf32, #tpu.memory_space<vmem>>, vector<8x32xf32>
    tpu.vector_store %arg41[%c2_122, %c0_123], %57 {strides = array<i32>} : memref<12x32xf32, #tpu.memory_space<vmem>>, vector<8x32xf32>,
    %c0_124 = arith.constant 0 : index
    %c0_125 = arith.constant 0 : index
    %159 = vector.load %arg41[%c0_124, %c0_125] : memref<12x32xf32, #tpu.memory_space<vmem>>, vector<8x32xf32>
    %c0_126 = arith.constant 0 : index
    %c0_127 = arith.constant 0 : index
    %c0_128 = arith.constant 0 : index
    %160 = vector.load %arg11[%c0_126, %c0_127, %c0_128] : memref<5x32x32xbf16, #tpu.memory_space<vmem>>, vector<1x32x32xbf16>
    %161 = vector.shape_cast %160 : vector<1x32x32xbf16> to vector<32x32xbf16>
    %162 = arith.truncf %159 : vector<8x32xf32> to vector<8x32xbf16>
    %cst_129 = arith.constant dense<0.000000e+00> : vector<8x32xf32>
    %163 = tpu.matmul %162, %161, %cst_129 {dimension_numbers = #tpu.dot_dimension_numbers<[1], [0], [0], [1], [0, 0, 1, 1], [], []>} : vector<8x32xbf16>, vector<32x32xbf16>, vector<8x32xf32> -> vector<8x32xf32>
    %c1_130 = arith.constant 1 : index
    %c0_131 = arith.constant 0 : index
    %164 = vector.load %arg41[%c1_130, %c0_131] : memref<12x32xf32, #tpu.memory_space<vmem>>, vector<8x32xf32>
    %c1_132 = arith.constant 1 : index
    %c0_133 = arith.constant 0 : index
    %c0_134 = arith.constant 0 : index
    %165 = vector.load %arg11[%c1_132, %c0_133, %c0_134] : memref<5x32x32xbf16, #tpu.memory_space<vmem>>, vector<1x32x32xbf16>
    %166 = vector.shape_cast %165 : vector<1x32x32xbf16> to vector<32x32xbf16>
    %167 = arith.truncf %164 : vector<8x32xf32> to vector<8x32xbf16>
    %cst_135 = arith.constant dense<0.000000e+00> : vector<8x32xf32>
    %168 = tpu.matmul %167, %166, %cst_135 {dimension_numbers = #tpu.dot_dimension_numbers<[1], [0], [0], [1], [0, 0, 1, 1], [], []>} : vector<8x32xbf16>, vector<32x32xbf16>, vector<8x32xf32> -> vector<8x32xf32>
    %169 = arith.addf %163, %168 : vector<8x32xf32>
    %c2_136 = arith.constant 2 : index
    %c0_137 = arith.constant 0 : index
    %170 = vector.load %arg41[%c2_136, %c0_137] : memref<12x32xf32, #tpu.memory_space<vmem>>, vector<8x32xf32>
    %c2_138 = arith.constant 2 : index
    %c0_139 = arith.constant 0 : index
    %c0_140 = arith.constant 0 : index
    %171 = vector.load %arg11[%c2_138, %c0_139, %c0_140] : memref<5x32x32xbf16, #tpu.memory_space<vmem>>, vector<1x32x32xbf16>
    %172 = vector.shape_cast %171 : vector<1x32x32xbf16> to vector<32x32xbf16>
    %173 = arith.truncf %170 : vector<8x32xf32> to vector<8x32xbf16>
    %cst_141 = arith.constant dense<0.000000e+00> : vector<8x32xf32>
    %174 = tpu.matmul %173, %172, %cst_141 {dimension_numbers = #tpu.dot_dimension_numbers<[1], [0], [0], [1], [0, 0, 1, 1], [], []>} : vector<8x32xbf16>, vector<32x32xbf16>, vector<8x32xf32> -> vector<8x32xf32>
    %175 = arith.addf %169, %174 : vector<8x32xf32>
    %c3_142 = arith.constant 3 : index
    %c0_143 = arith.constant 0 : index
    %176 = vector.load %arg41[%c3_142, %c0_143] : memref<12x32xf32, #tpu.memory_space<vmem>>, vector<8x32xf32>
    %c3_144 = arith.constant 3 : index
    %c0_145 = arith.constant 0 : index
    %c0_146 = arith.constant 0 : index
    %177 = vector.load %arg11[%c3_144, %c0_145, %c0_146] : memref<5x32x32xbf16, #tpu.memory_space<vmem>>, vector<1x32x32xbf16>
    %178 = vector.shape_cast %177 : vector<1x32x32xbf16> to vector<32x32xbf16>
    %179 = arith.truncf %176 : vector<8x32xf32> to vector<8x32xbf16>
    %cst_147 = arith.constant dense<0.000000e+00> : vector<8x32xf32>
    %180 = tpu.matmul %179, %178, %cst_147 {dimension_numbers = #tpu.dot_dimension_numbers<[1], [0], [0], [1], [0, 0, 1, 1], [], []>} : vector<8x32xbf16>, vector<32x32xbf16>, vector<8x32xf32> -> vector<8x32xf32>
    %181 = arith.addf %175, %180 : vector<8x32xf32>
    %c4_148 = arith.constant 4 : index
    %c0_149 = arith.constant 0 : index
    %182 = vector.load %arg41[%c4_148, %c0_149] : memref<12x32xf32, #tpu.memory_space<vmem>>, vector<8x32xf32>
    %c4_150 = arith.constant 4 : index
    %c0_151 = arith.constant 0 : index
    %c0_152 = arith.constant 0 : index
    %183 = vector.load %arg11[%c4_150, %c0_151, %c0_152] : memref<5x32x32xbf16, #tpu.memory_space<vmem>>, vector<1x32x32xbf16>
    %184 = vector.shape_cast %183 : vector<1x32x32xbf16> to vector<32x32xbf16>
    %185 = arith.truncf %182 : vector<8x32xf32> to vector<8x32xbf16>
    %cst_153 = arith.constant dense<0.000000e+00> : vector<8x32xf32>
    %186 = tpu.matmul %185, %184, %cst_153 {dimension_numbers = #tpu.dot_dimension_numbers<[1], [0], [0], [1], [0, 0, 1, 1], [], []>} : vector<8x32xbf16>, vector<32x32xbf16>, vector<8x32xf32> -> vector<8x32xf32>
    %187 = arith.addf %181, %186 : vector<8x32xf32>
    %188 = vector.broadcast %157 : vector<1x32xf32> to vector<8x32xf32>
    %189 = arith.addf %187, %188 : vector<8x32xf32>
    %cst_154 = arith.constant 0.000000e+00 : f32
    %190 = vector.broadcast %cst_154 : f32 to vector<8x32xf32>
    %191 = arith.maximumf %189, %190 : vector<8x32xf32>
    %192 = vector.extract_strided_slice %191 {offsets = [0, 0], sizes = [8, 16], strides = [1, 1]} : vector<8x32xf32> to vector<8x16xf32>
    %c0_155 = arith.constant 0 : index
    %c0_156 = arith.constant 0 : index
    %193 = vector.load %arg13[%c0_155, %c0_156] : memref<2x16xf32, #tpu.memory_space<vmem>>, vector<1x16xf32>
    %194 = vector.shape_cast %193 : vector<1x16xf32> to vector<16xf32>
    %c0_157 = arith.constant 0 : index
    %c0_158 = arith.constant 0 : index
    %195 = vector.load %arg14[%c0_157, %c0_158] : memref<2x16xf32, #tpu.memory_space<vmem>>, vector<1x16xf32>
    %196 = vector.shape_cast %195 : vector<1x16xf32> to vector<16xf32>
    %cst_159 = arith.constant dense<0.000000e+00> : vector<8xf32>
    %197 = vector.multi_reduction <add>, %192, %cst_159 [1] : vector<8x16xf32> to vector<8xf32>
    %198 = vector.shape_cast %197 : vector<8xf32> to vector<8x1xf32>
    %cst_160 = arith.constant 1.600000e+01 : f32
    %199 = vector.broadcast %cst_160 : f32 to vector<8x1xf32>
    %200 = arith.divf %198, %199 : vector<8x1xf32>
    %201 = vector.broadcast %200 : vector<8x1xf32> to vector<8x16xf32>
    %202 = arith.subf %192, %201 : vector<8x16xf32>
    %203 = arith.mulf %202, %202 : vector<8x16xf32>
    %cst_161 = arith.constant dense<0.000000e+00> : vector<8xf32>
    %204 = vector.multi_reduction <add>, %203, %cst_161 [1] : vector<8x16xf32> to vector<8xf32>
    %205 = vector.shape_cast %204 : vector<8xf32> to vector<8x1xf32>
    %cst_162 = arith.constant 1.600000e+01 : f32
    %206 = vector.broadcast %cst_162 : f32 to vector<8x1xf32>
    %207 = arith.divf %205, %206 : vector<8x1xf32>
    %208 = vector.broadcast %200 : vector<8x1xf32> to vector<8x16xf32>
    %209 = arith.subf %192, %208 : vector<8x16xf32>
    %cst_163 = arith.constant 9.99999974E-6 : f32
    %210 = vector.broadcast %cst_163 : f32 to vector<8x1xf32>
    %211 = arith.addf %207, %210 : vector<8x1xf32>
    %212 = math.rsqrt %211 : vector<8x1xf32>
    %213 = vector.broadcast %212 : vector<8x1xf32> to vector<8x16xf32>
    %214 = arith.mulf %209, %213 : vector<8x16xf32>
    %215 = vector.shape_cast %194 : vector<16xf32> to vector<1x16xf32>
    %216 = vector.broadcast %215 : vector<1x16xf32> to vector<8x16xf32>
    %217 = arith.mulf %214, %216 : vector<8x16xf32>
    %218 = vector.shape_cast %196 : vector<16xf32> to vector<1x16xf32>
    %219 = vector.broadcast %218 : vector<1x16xf32> to vector<8x16xf32>
    %220 = arith.addf %217, %219 : vector<8x16xf32>
    %221 = vector.extract_strided_slice %191 {offsets = [0, 16], sizes = [8, 16], strides = [1, 1]} : vector<8x32xf32> to vector<8x16xf32>
    %c1_164 = arith.constant 1 : index
    %c0_165 = arith.constant 0 : index
    %222 = vector.load %arg13[%c1_164, %c0_165] : memref<2x16xf32, #tpu.memory_space<vmem>>, vector<1x16xf32>
    %223 = vector.shape_cast %222 : vector<1x16xf32> to vector<16xf32>
    %c1_166 = arith.constant 1 : index
    %c0_167 = arith.constant 0 : index
    %224 = vector.load %arg14[%c1_166, %c0_167] : memref<2x16xf32, #tpu.memory_space<vmem>>, vector<1x16xf32>
    %225 = vector.shape_cast %224 : vector<1x16xf32> to vector<16xf32>
    %cst_168 = arith.constant dense<0.000000e+00> : vector<8xf32>
    %226 = vector.multi_reduction <add>, %221, %cst_168 [1] : vector<8x16xf32> to vector<8xf32>
    %227 = vector.shape_cast %226 : vector<8xf32> to vector<8x1xf32>
    %cst_169 = arith.constant 1.600000e+01 : f32
    %228 = vector.broadcast %cst_169 : f32 to vector<8x1xf32>
    %229 = arith.divf %227, %228 : vector<8x1xf32>
    %230 = vector.broadcast %229 : vector<8x1xf32> to vector<8x16xf32>
    %231 = arith.subf %221, %230 : vector<8x16xf32>
    %232 = arith.mulf %231, %231 : vector<8x16xf32>
    %cst_170 = arith.constant dense<0.000000e+00> : vector<8xf32>
    %233 = vector.multi_reduction <add>, %232, %cst_170 [1] : vector<8x16xf32> to vector<8xf32>
    %234 = vector.shape_cast %233 : vector<8xf32> to vector<8x1xf32>
    %cst_171 = arith.constant 1.600000e+01 : f32
    %235 = vector.broadcast %cst_171 : f32 to vector<8x1xf32>
    %236 = arith.divf %234, %235 : vector<8x1xf32>
    %237 = vector.broadcast %229 : vector<8x1xf32> to vector<8x16xf32>
    %238 = arith.subf %221, %237 : vector<8x16xf32>
    %cst_172 = arith.constant 9.99999974E-6 : f32
    %239 = vector.broadcast %cst_172 : f32 to vector<8x1xf32>
    %240 = arith.addf %236, %239 : vector<8x1xf32>
    %241 = math.rsqrt %240 : vector<8x1xf32>
    %242 = vector.broadcast %241 : vector<8x1xf32> to vector<8x16xf32>
    %243 = arith.mulf %238, %242 : vector<8x16xf32>
    %244 = vector.shape_cast %223 : vector<16xf32> to vector<1x16xf32>
    %245 = vector.broadcast %244 : vector<1x16xf32> to vector<8x16xf32>
    %246 = arith.mulf %243, %245 : vector<8x16xf32>
    %247 = vector.shape_cast %225 : vector<16xf32> to vector<1x16xf32>
    %248 = vector.broadcast %247 : vector<1x16xf32> to vector<8x16xf32>
    %249 = arith.addf %246, %248 : vector<8x16xf32>
    %c0_173 = arith.constant 0 : index
    %c0_174 = arith.constant 0 : index
    %c0_175 = arith.constant 0 : index
    %250 = vector.load %arg15[%c0_173, %c0_174, %c0_175] : memref<2x16x16xbf16, #tpu.memory_space<vmem>>, vector<1x16x16xbf16>
    %251 = vector.shape_cast %250 : vector<1x16x16xbf16> to vector<16x16xbf16>
    %252 = arith.truncf %220 : vector<8x16xf32> to vector<8x16xbf16>
    %cst_176 = arith.constant dense<0.000000e+00> : vector<8x16xf32>
    %253 = tpu.matmul %252, %251, %cst_176 {dimension_numbers = #tpu.dot_dimension_numbers<[1], [0], [0], [1], [0, 0, 1, 1], [], []>} : vector<8x16xbf16>, vector<16x16xbf16>, vector<8x16xf32> -> vector<8x16xf32>
    %c0_177 = arith.constant 0 : index
    %c0_178 = arith.constant 0 : index
    %254 = vector.load %arg16[%c0_177, %c0_178] : memref<2x16xf32, #tpu.memory_space<vmem>>, vector<1x16xf32>
    %255 = vector.shape_cast %254 : vector<1x16xf32> to vector<16xf32>
    %256 = vector.shape_cast %255 : vector<16xf32> to vector<1x16xf32>
    %257 = vector.broadcast %256 : vector<1x16xf32> to vector<8x16xf32>
    %258 = arith.addf %253, %257 : vector<8x16xf32>
    %cst_179 = arith.constant 0.000000e+00 : f32
    %259 = vector.broadcast %cst_179 : f32 to vector<8x16xf32>
    %260 = arith.maximumf %258, %259 : vector<8x16xf32>
    %c0_180 = arith.constant 0 : index
    %c0_181 = arith.constant 0 : index
    %261 = vector.load %arg17[%c0_180, %c0_181] : memref<16x16xbf16, #tpu.memory_space<vmem>>, vector<16x16xbf16>
    %262 = arith.truncf %260 : vector<8x16xf32> to vector<8x16xbf16>
    %cst_182 = arith.constant dense<0.000000e+00> : vector<8x16xf32>
    %263 = tpu.matmul %262, %261, %cst_182 {dimension_numbers = #tpu.dot_dimension_numbers<[1], [0], [0], [1], [0, 0, 1, 1], [], []>} : vector<8x16xbf16>, vector<16x16xbf16>, vector<8x16xf32> -> vector<8x16xf32>
    %c0_183 = arith.constant 0 : index
    %c0_184 = arith.constant 0 : index
    %264 = vector.load %arg18[%c0_183, %c0_184] : memref<1x16xf32, #tpu.memory_space<vmem>>, vector<1x16xf32>
    %265 = vector.broadcast %264 : vector<1x16xf32> to vector<8x16xf32>
    %266 = arith.addf %263, %265 : vector<8x16xf32>
    %c1_185 = arith.constant 1 : index
    %c0_186 = arith.constant 0 : index
    %c0_187 = arith.constant 0 : index
    %267 = vector.load %arg15[%c1_185, %c0_186, %c0_187] : memref<2x16x16xbf16, #tpu.memory_space<vmem>>, vector<1x16x16xbf16>
    %268 = vector.shape_cast %267 : vector<1x16x16xbf16> to vector<16x16xbf16>
    %269 = arith.truncf %249 : vector<8x16xf32> to vector<8x16xbf16>
    %cst_188 = arith.constant dense<0.000000e+00> : vector<8x16xf32>
    %270 = tpu.matmul %269, %268, %cst_188 {dimension_numbers = #tpu.dot_dimension_numbers<[1], [0], [0], [1], [0, 0, 1, 1], [], []>} : vector<8x16xbf16>, vector<16x16xbf16>, vector<8x16xf32> -> vector<8x16xf32>
    %c1_189 = arith.constant 1 : index
    %c0_190 = arith.constant 0 : index
    %271 = vector.load %arg16[%c1_189, %c0_190] : memref<2x16xf32, #tpu.memory_space<vmem>>, vector<1x16xf32>
    %272 = vector.shape_cast %271 : vector<1x16xf32> to vector<16xf32>
    %273 = vector.shape_cast %272 : vector<16xf32> to vector<1x16xf32>
    %274 = vector.broadcast %273 : vector<1x16xf32> to vector<8x16xf32>
    %275 = arith.addf %270, %274 : vector<8x16xf32>
    %cst_191 = arith.constant 0.000000e+00 : f32
    %276 = vector.broadcast %cst_191 : f32 to vector<8x16xf32>
    %277 = arith.maximumf %275, %276 : vector<8x16xf32>
    %c0_192 = arith.constant 0 : index
    %c0_193 = arith.constant 0 : index
    %278 = vector.load %arg19[%c0_192, %c0_193] : memref<1x16xf32, #tpu.memory_space<vmem>>, vector<1x16xf32>
    %279 = vector.broadcast %278 : vector<1x16xf32> to vector<8x16xf32>
    %280 = arith.mulf %277, %279 : vector<8x16xf32>
    %cst_194 = arith.constant dense<0.000000e+00> : vector<8xf32>
    %281 = vector.multi_reduction <add>, %280, %cst_194 [1] : vector<8x16xf32> to vector<8xf32>
    %282 = vector.shape_cast %281 : vector<8xf32> to vector<8x1xf32>
    %c0_195 = arith.constant 0 : index
    %c0_196 = arith.constant 0 : index
    %283 = vector.load %arg20[%c0_195, %c0_196] : memref<1x1xf32, #tpu.memory_space<vmem>>, vector<1x1xf32>
    %284 = vector.broadcast %283 : vector<1x1xf32> to vector<8x1xf32>
    %285 = arith.addf %282, %284 : vector<8x1xf32>
    %286 = arith.negf %285 : vector<8x1xf32>
    %287 = math.exp %286 : vector<8x1xf32>
    %cst_197 = arith.constant 1.000000e+00 : f32
    %288 = vector.broadcast %cst_197 : f32 to vector<8x1xf32>
    %289 = arith.addf %288, %287 : vector<8x1xf32>
    %290 = arith.divf %288, %289 : vector<8x1xf32>
    %c0_198 = arith.constant 0 : index
    %c0_199 = arith.constant 0 : index
    %c0_200 = arith.constant 0 : index
    %291 = vector.load %arg4[%c0_198, %c0_199, %c0_200] : memref<1x8x1xf32, #tpu.memory_space<vmem>>, vector<1x8x1xf32>
    %292 = vector.shape_cast %291 : vector<1x8x1xf32> to vector<8x1xf32>
    %c0_201 = arith.constant 0 : index
    %c0_202 = arith.constant 0 : index
    %293 = vector.load %arg27[%c0_201, %c0_202] : memref<1x32xf32, #tpu.memory_space<vmem>>, vector<1x32xf32>
    %294 = vector.broadcast %292 : vector<8x1xf32> to vector<8x32xf32>
    %295 = vector.broadcast %293 : vector<1x32xf32> to vector<8x32xf32>
    %296 = arith.mulf %294, %295 : vector<8x32xf32>
    %c0_203 = arith.constant 0 : index
    %c0_204 = arith.constant 0 : index
    %297 = vector.load %arg28[%c0_203, %c0_204] : memref<1x32xf32, #tpu.memory_space<vmem>>, vector<1x32xf32>
    %298 = vector.broadcast %297 : vector<1x32xf32> to vector<8x32xf32>
    %299 = arith.addf %296, %298 : vector<8x32xf32>
    %300 = math.tanh %299 : vector<8x32xf32>
    %301 = arith.addf %300, %57 : vector<8x32xf32>
    %302 = vector.shape_cast %153 : vector<1x16xf32> to vector<1x16xf32>
    %303 = vector.broadcast %302 : vector<1x16xf32> to vector<8x16xf32>
    %c0_205 = arith.constant 0 : index
    %c0_206 = arith.constant 0 : index
    %c0_207 = arith.constant 0 : index
    %304 = vector.load %arg5[%c0_205, %c0_206, %c0_207] : memref<1x1x16xf32, #tpu.memory_space<vmem>>, vector<1x1x16xf32>
    %305 = vector.shape_cast %304 : vector<1x1x16xf32> to vector<1x16xf32>
    %306 = vector.shape_cast %305 : vector<1x16xf32> to vector<1x16xf32>
    %307 = vector.broadcast %306 : vector<1x16xf32> to vector<8x16xf32>
    %308 = tpu.concatenate %301, %303, %307 in 1 : vector<8x32xf32>, vector<8x16xf32>, vector<8x16xf32> -> vector<8x64xf32>
    %c1_208 = arith.constant 1 : index
    %c0_209 = arith.constant 0 : index
    %309 = vector.load %arg44[%c1_208, %c0_209] : memref<10x64xf32, #tpu.memory_space<vmem>>, vector<8x64xf32>
    tpu.vector_store %arg44[%c1_208, %c0_209], %308 {strides = array<i32>} : memref<10x64xf32, #tpu.memory_space<vmem>>, vector<8x64xf32>,
    %c0_210 = arith.constant 0 : index
    %c0_211 = arith.constant 0 : index
    %c0_212 = arith.constant 0 : index
    %c0_213 = arith.constant 0 : index
    %310 = vector.load %arg29[%c0_210, %c0_211, %c0_212, %c0_213] : memref<3x3x64x64xbf16, #tpu.memory_space<vmem>>, vector<1x3x64x64xbf16>
    %311 = vector.shape_cast %310 : vector<1x3x64x64xbf16> to vector<3x64x64xbf16>
    %c0_214 = arith.constant 0 : index
    %c0_215 = arith.constant 0 : index
    %312 = vector.load %arg44[%c0_214, %c0_215] : memref<10x64xf32, #tpu.memory_space<vmem>>, vector<8x64xf32>
    %313 = vector.extract_strided_slice %311 {offsets = [0, 0, 0], sizes = [1, 64, 64], strides = [1, 1, 1]} : vector<3x64x64xbf16> to vector<1x64x64xbf16>
    %314 = vector.shape_cast %313 : vector<1x64x64xbf16> to vector<64x64xbf16>
    %315 = arith.truncf %312 : vector<8x64xf32> to vector<8x64xbf16>
    %cst_216 = arith.constant dense<0.000000e+00> : vector<8x64xf32>
    %316 = tpu.matmul %315, %314, %cst_216 {dimension_numbers = #tpu.dot_dimension_numbers<[1], [0], [0], [1], [0, 0, 1, 1], [], []>} : vector<8x64xbf16>, vector<64x64xbf16>, vector<8x64xf32> -> vector<8x64xf32>
    %c1_217 = arith.constant 1 : index
    %c0_218 = arith.constant 0 : index
    %317 = vector.load %arg44[%c1_217, %c0_218] : memref<10x64xf32, #tpu.memory_space<vmem>>, vector<8x64xf32>
    %318 = vector.extract_strided_slice %311 {offsets = [1, 0, 0], sizes = [1, 64, 64], strides = [1, 1, 1]} : vector<3x64x64xbf16> to vector<1x64x64xbf16>
    %319 = vector.shape_cast %318 : vector<1x64x64xbf16> to vector<64x64xbf16>
    %320 = arith.truncf %317 : vector<8x64xf32> to vector<8x64xbf16>
    %cst_219 = arith.constant dense<0.000000e+00> : vector<8x64xf32>
    %321 = tpu.matmul %320, %319, %cst_219 {dimension_numbers = #tpu.dot_dimension_numbers<[1], [0], [0], [1], [0, 0, 1, 1], [], []>} : vector<8x64xbf16>, vector<64x64xbf16>, vector<8x64xf32> -> vector<8x64xf32>
    %322 = arith.addf %316, %321 : vector<8x64xf32>
    %c2_220 = arith.constant 2 : index
    %c0_221 = arith.constant 0 : index
    %323 = vector.load %arg44[%c2_220, %c0_221] : memref<10x64xf32, #tpu.memory_space<vmem>>, vector<8x64xf32>
    %324 = vector.extract_strided_slice %311 {offsets = [2, 0, 0], sizes = [1, 64, 64], strides = [1, 1, 1]} : vector<3x64x64xbf16> to vector<1x64x64xbf16>
    %325 = vector.shape_cast %324 : vector<1x64x64xbf16> to vector<64x64xbf16>
    %326 = arith.truncf %323 : vector<8x64xf32> to vector<8x64xbf16>
    %cst_222 = arith.constant dense<0.000000e+00> : vector<8x64xf32>
    %327 = tpu.matmul %326, %325, %cst_222 {dimension_numbers = #tpu.dot_dimension_numbers<[1], [0], [0], [1], [0, 0, 1, 1], [], []>} : vector<8x64xbf16>, vector<64x64xbf16>, vector<8x64xf32> -> vector<8x64xf32>
    %328 = arith.addf %322, %327 : vector<8x64xf32>
    %c0_223 = arith.constant 0 : index
    %c0_224 = arith.constant 0 : index
    %329 = vector.load %arg30[%c0_223, %c0_224] : memref<3x64xf32, #tpu.memory_space<vmem>>, vector<1x64xf32>
    %330 = vector.shape_cast %329 : vector<1x64xf32> to vector<64xf32>
    %331 = vector.shape_cast %330 : vector<64xf32> to vector<1x64xf32>
    %332 = vector.broadcast %331 : vector<1x64xf32> to vector<8x64xf32>
    %333 = arith.addf %328, %332 : vector<8x64xf32>
    %cst_225 = arith.constant 0.000000e+00 : f32
    %334 = vector.broadcast %cst_225 : f32 to vector<8x64xf32>
    %335 = arith.maximumf %333, %334 : vector<8x64xf32>
    %c0_226 = arith.constant 0 : index
    %c0_227 = arith.constant 0 : index
    %336 = vector.load %arg31[%c0_226, %c0_227] : memref<3x64xf32, #tpu.memory_space<vmem>>, vector<1x64xf32>
    %337 = vector.shape_cast %336 : vector<1x64xf32> to vector<64xf32>
    %c0_228 = arith.constant 0 : index
    %c0_229 = arith.constant 0 : index
    %338 = vector.load %arg32[%c0_228, %c0_229] : memref<3x64xf32, #tpu.memory_space<vmem>>, vector<1x64xf32>
    %339 = vector.shape_cast %338 : vector<1x64xf32> to vector<64xf32>
    %cst_230 = arith.constant dense<0.000000e+00> : vector<8xf32>
    %340 = vector.multi_reduction <add>, %335, %cst_230 [1] : vector<8x64xf32> to vector<8xf32>
    %341 = vector.shape_cast %340 : vector<8xf32> to vector<8x1xf32>
    %cst_231 = arith.constant 6.400000e+01 : f32
    %342 = vector.broadcast %cst_231 : f32 to vector<8x1xf32>
    %343 = arith.divf %341, %342 : vector<8x1xf32>
    %344 = vector.broadcast %343 : vector<8x1xf32> to vector<8x64xf32>
    %345 = arith.subf %335, %344 : vector<8x64xf32>
    %346 = arith.mulf %345, %345 : vector<8x64xf32>
    %cst_232 = arith.constant dense<0.000000e+00> : vector<8xf32>
    %347 = vector.multi_reduction <add>, %346, %cst_232 [1] : vector<8x64xf32> to vector<8xf32>
    %348 = vector.shape_cast %347 : vector<8xf32> to vector<8x1xf32>
    %cst_233 = arith.constant 6.400000e+01 : f32
    %349 = vector.broadcast %cst_233 : f32 to vector<8x1xf32>
    %350 = arith.divf %348, %349 : vector<8x1xf32>
    %351 = vector.broadcast %343 : vector<8x1xf32> to vector<8x64xf32>
    %352 = arith.subf %335, %351 : vector<8x64xf32>
    %cst_234 = arith.constant 9.99999974E-6 : f32
    %353 = vector.broadcast %cst_234 : f32 to vector<8x1xf32>
    %354 = arith.addf %350, %353 : vector<8x1xf32>
    %355 = math.rsqrt %354 : vector<8x1xf32>
    %356 = vector.broadcast %355 : vector<8x1xf32> to vector<8x64xf32>
    %357 = arith.mulf %352, %356 : vector<8x64xf32>
    %358 = vector.shape_cast %337 : vector<64xf32> to vector<1x64xf32>
    %359 = vector.broadcast %358 : vector<1x64xf32> to vector<8x64xf32>
    %360 = arith.mulf %357, %359 : vector<8x64xf32>
    %361 = vector.shape_cast %339 : vector<64xf32> to vector<1x64xf32>
    %362 = vector.broadcast %361 : vector<1x64xf32> to vector<8x64xf32>
    %363 = arith.addf %360, %362 : vector<8x64xf32>
    %c0_235 = arith.constant 0 : index
    %c0_236 = arith.constant 0 : index
    %c0_237 = arith.constant 0 : index
    %c0_238 = arith.constant 0 : index
    %364 = vector.load %arg33[%c0_235, %c0_236, %c0_237, %c0_238] : memref<3x3x64x64xbf16, #tpu.memory_space<vmem>>, vector<1x3x64x64xbf16>
    %365 = vector.shape_cast %364 : vector<1x3x64x64xbf16> to vector<3x64x64xbf16>
    %c0_239 = arith.constant 0 : index
    %c0_240 = arith.constant 0 : index
    %366 = vector.load %arg34[%c0_239, %c0_240] : memref<3x64xf32, #tpu.memory_space<vmem>>, vector<1x64xf32>
    %367 = vector.shape_cast %366 : vector<1x64xf32> to vector<64xf32>
    %c1_241 = arith.constant 1 : index
    %c0_242 = arith.constant 0 : index
    %368 = vector.load %arg45[%c1_241, %c0_242] : memref<10x64xf32, #tpu.memory_space<vmem>>, vector<8x64xf32>
    tpu.vector_store %arg45[%c1_241, %c0_242], %363 {strides = array<i32>} : memref<10x64xf32, #tpu.memory_space<vmem>>, vector<8x64xf32>,
    %c0_243 = arith.constant 0 : index
    %c0_244 = arith.constant 0 : index
    %369 = vector.load %arg45[%c0_243, %c0_244] : memref<10x64xf32, #tpu.memory_space<vmem>>, vector<8x64xf32>
    %370 = vector.extract_strided_slice %365 {offsets = [0, 0, 0], sizes = [1, 64, 64], strides = [1, 1, 1]} : vector<3x64x64xbf16> to vector<1x64x64xbf16>
    %371 = vector.shape_cast %370 : vector<1x64x64xbf16> to vector<64x64xbf16>
    %372 = arith.truncf %369 : vector<8x64xf32> to vector<8x64xbf16>
    %cst_245 = arith.constant dense<0.000000e+00> : vector<8x64xf32>
    %373 = tpu.matmul %372, %371, %cst_245 {dimension_numbers = #tpu.dot_dimension_numbers<[1], [0], [0], [1], [0, 0, 1, 1], [], []>} : vector<8x64xbf16>, vector<64x64xbf16>, vector<8x64xf32> -> vector<8x64xf32>
    %c1_246 = arith.constant 1 : index
    %c0_247 = arith.constant 0 : index
    %374 = vector.load %arg45[%c1_246, %c0_247] : memref<10x64xf32, #tpu.memory_space<vmem>>, vector<8x64xf32>
    %375 = vector.extract_strided_slice %365 {offsets = [1, 0, 0], sizes = [1, 64, 64], strides = [1, 1, 1]} : vector<3x64x64xbf16> to vector<1x64x64xbf16>
    %376 = vector.shape_cast %375 : vector<1x64x64xbf16> to vector<64x64xbf16>
    %377 = arith.truncf %374 : vector<8x64xf32> to vector<8x64xbf16>
    %cst_248 = arith.constant dense<0.000000e+00> : vector<8x64xf32>
    %378 = tpu.matmul %377, %376, %cst_248 {dimension_numbers = #tpu.dot_dimension_numbers<[1], [0], [0], [1], [0, 0, 1, 1], [], []>} : vector<8x64xbf16>, vector<64x64xbf16>, vector<8x64xf32> -> vector<8x64xf32>
    %379 = arith.addf %373, %378 : vector<8x64xf32>
    %c2_249 = arith.constant 2 : index
    %c0_250 = arith.constant 0 : index
    %380 = vector.load %arg45[%c2_249, %c0_250] : memref<10x64xf32, #tpu.memory_space<vmem>>, vector<8x64xf32>
    %381 = vector.extract_strided_slice %365 {offsets = [2, 0, 0], sizes = [1, 64, 64], strides = [1, 1, 1]} : vector<3x64x64xbf16> to vector<1x64x64xbf16>
    %382 = vector.shape_cast %381 : vector<1x64x64xbf16> to vector<64x64xbf16>
    %383 = arith.truncf %380 : vector<8x64xf32> to vector<8x64xbf16>
    %cst_251 = arith.constant dense<0.000000e+00> : vector<8x64xf32>
    %384 = tpu.matmul %383, %382, %cst_251 {dimension_numbers = #tpu.dot_dimension_numbers<[1], [0], [0], [1], [0, 0, 1, 1], [], []>} : vector<8x64xbf16>, vector<64x64xbf16>, vector<8x64xf32> -> vector<8x64xf32>
    %385 = arith.addf %379, %384 : vector<8x64xf32>
    %386 = vector.shape_cast %367 : vector<64xf32> to vector<1x64xf32>
    %387 = vector.broadcast %386 : vector<1x64xf32> to vector<8x64xf32>
    %388 = arith.addf %385, %387 : vector<8x64xf32>
    %cst_252 = arith.constant 0.000000e+00 : f32
    %389 = vector.broadcast %cst_252 : f32 to vector<8x64xf32>
    %390 = arith.maximumf %388, %389 : vector<8x64xf32>
    %c0_253 = arith.constant 0 : index
    %c0_254 = arith.constant 0 : index
    %391 = vector.load %arg35[%c0_253, %c0_254] : memref<3x64xf32, #tpu.memory_space<vmem>>, vector<1x64xf32>
    %392 = vector.shape_cast %391 : vector<1x64xf32> to vector<64xf32>
    %c0_255 = arith.constant 0 : index
    %c0_256 = arith.constant 0 : index
    %393 = vector.load %arg36[%c0_255, %c0_256] : memref<3x64xf32, #tpu.memory_space<vmem>>, vector<1x64xf32>
    %394 = vector.shape_cast %393 : vector<1x64xf32> to vector<64xf32>
    %cst_257 = arith.constant dense<0.000000e+00> : vector<8xf32>
    %395 = vector.multi_reduction <add>, %390, %cst_257 [1] : vector<8x64xf32> to vector<8xf32>
    %396 = vector.shape_cast %395 : vector<8xf32> to vector<8x1xf32>
    %cst_258 = arith.constant 6.400000e+01 : f32
    %397 = vector.broadcast %cst_258 : f32 to vector<8x1xf32>
    %398 = arith.divf %396, %397 : vector<8x1xf32>
    %399 = vector.broadcast %398 : vector<8x1xf32> to vector<8x64xf32>
    %400 = arith.subf %390, %399 : vector<8x64xf32>
    %401 = arith.mulf %400, %400 : vector<8x64xf32>
    %cst_259 = arith.constant dense<0.000000e+00> : vector<8xf32>
    %402 = vector.multi_reduction <add>, %401, %cst_259 [1] : vector<8x64xf32> to vector<8xf32>
    %403 = vector.shape_cast %402 : vector<8xf32> to vector<8x1xf32>
    %cst_260 = arith.constant 6.400000e+01 : f32
    %404 = vector.broadcast %cst_260 : f32 to vector<8x1xf32>
    %405 = arith.divf %403, %404 : vector<8x1xf32>
    %406 = vector.broadcast %398 : vector<8x1xf32> to vector<8x64xf32>
    %407 = arith.subf %390, %406 : vector<8x64xf32>
    %cst_261 = arith.constant 9.99999974E-6 : f32
    %408 = vector.broadcast %cst_261 : f32 to vector<8x1xf32>
    %409 = arith.addf %405, %408 : vector<8x1xf32>
    %410 = math.rsqrt %409 : vector<8x1xf32>
    %411 = vector.broadcast %410 : vector<8x1xf32> to vector<8x64xf32>
    %412 = arith.mulf %407, %411 : vector<8x64xf32>
    %413 = vector.shape_cast %392 : vector<64xf32> to vector<1x64xf32>
    %414 = vector.broadcast %413 : vector<1x64xf32> to vector<8x64xf32>
    %415 = arith.mulf %412, %414 : vector<8x64xf32>
    %416 = vector.shape_cast %394 : vector<64xf32> to vector<1x64xf32>
    %417 = vector.broadcast %416 : vector<1x64xf32> to vector<8x64xf32>
    %418 = arith.addf %415, %417 : vector<8x64xf32>
    %c0_262 = arith.constant 0 : index
    %c0_263 = arith.constant 0 : index
    %419 = vector.load %arg37[%c0_262, %c0_263] : memref<3x64xf32, #tpu.memory_space<vmem>>, vector<1x64xf32>
    %420 = vector.shape_cast %419 : vector<1x64xf32> to vector<64xf32>
    %421 = vector.shape_cast %420 : vector<64xf32> to vector<1x64xf32>
    %422 = vector.broadcast %421 : vector<1x64xf32> to vector<8x64xf32>
    %423 = arith.mulf %418, %422 : vector<8x64xf32>
    %cst_264 = arith.constant dense<0.000000e+00> : vector<8xf32>
    %424 = vector.multi_reduction <add>, %423, %cst_264 [1] : vector<8x64xf32> to vector<8xf32>
    %425 = vector.shape_cast %424 : vector<8xf32> to vector<8x1xf32>
    %c0_265 = arith.constant 0 : index
    %c0_266 = arith.constant 0 : index
    %426 = vector.load %arg38[%c0_265, %c0_266] : memref<3x1xf32, #tpu.memory_space<vmem>>, vector<1x1xf32>
    %427 = vector.shape_cast %426 : vector<1x1xf32> to vector<1xf32>
    %428 = vector.shape_cast %427 : vector<1xf32> to vector<1x1xf32>
    %429 = vector.broadcast %428 : vector<1x1xf32> to vector<8x1xf32>
    %430 = arith.addf %425, %429 : vector<8x1xf32>
    %431 = arith.mulf %430, %21 : vector<8x1xf32>
    %c1_267 = arith.constant 1 : index
    %c0_268 = arith.constant 0 : index
    %c0_269 = arith.constant 0 : index
    %c0_270 = arith.constant 0 : index
    %432 = vector.load %arg29[%c1_267, %c0_268, %c0_269, %c0_270] : memref<3x3x64x64xbf16, #tpu.memory_space<vmem>>, vector<1x3x64x64xbf16>
    %433 = vector.shape_cast %432 : vector<1x3x64x64xbf16> to vector<3x64x64xbf16>
    %c0_271 = arith.constant 0 : index
    %c0_272 = arith.constant 0 : index
    %434 = vector.load %arg44[%c0_271, %c0_272] : memref<10x64xf32, #tpu.memory_space<vmem>>, vector<8x64xf32>
    %435 = vector.extract_strided_slice %433 {offsets = [0, 0, 0], sizes = [1, 64, 64], strides = [1, 1, 1]} : vector<3x64x64xbf16> to vector<1x64x64xbf16>
    %436 = vector.shape_cast %435 : vector<1x64x64xbf16> to vector<64x64xbf16>
    %437 = arith.truncf %434 : vector<8x64xf32> to vector<8x64xbf16>
    %cst_273 = arith.constant dense<0.000000e+00> : vector<8x64xf32>
    %438 = tpu.matmul %437, %436, %cst_273 {dimension_numbers = #tpu.dot_dimension_numbers<[1], [0], [0], [1], [0, 0, 1, 1], [], []>} : vector<8x64xbf16>, vector<64x64xbf16>, vector<8x64xf32> -> vector<8x64xf32>
    %c1_274 = arith.constant 1 : index
    %c0_275 = arith.constant 0 : index
    %439 = vector.load %arg44[%c1_274, %c0_275] : memref<10x64xf32, #tpu.memory_space<vmem>>, vector<8x64xf32>
    %440 = vector.extract_strided_slice %433 {offsets = [1, 0, 0], sizes = [1, 64, 64], strides = [1, 1, 1]} : vector<3x64x64xbf16> to vector<1x64x64xbf16>
    %441 = vector.shape_cast %440 : vector<1x64x64xbf16> to vector<64x64xbf16>
    %442 = arith.truncf %439 : vector<8x64xf32> to vector<8x64xbf16>
    %cst_276 = arith.constant dense<0.000000e+00> : vector<8x64xf32>
    %443 = tpu.matmul %442, %441, %cst_276 {dimension_numbers = #tpu.dot_dimension_numbers<[1], [0], [0], [1], [0, 0, 1, 1], [], []>} : vector<8x64xbf16>, vector<64x64xbf16>, vector<8x64xf32> -> vector<8x64xf32>
    %444 = arith.addf %438, %443 : vector<8x64xf32>
    %c2_277 = arith.constant 2 : index
    %c0_278 = arith.constant 0 : index
    %445 = vector.load %arg44[%c2_277, %c0_278] : memref<10x64xf32, #tpu.memory_space<vmem>>, vector<8x64xf32>
    %446 = vector.extract_strided_slice %433 {offsets = [2, 0, 0], sizes = [1, 64, 64], strides = [1, 1, 1]} : vector<3x64x64xbf16> to vector<1x64x64xbf16>
    %447 = vector.shape_cast %446 : vector<1x64x64xbf16> to vector<64x64xbf16>
    %448 = arith.truncf %445 : vector<8x64xf32> to vector<8x64xbf16>
    %cst_279 = arith.constant dense<0.000000e+00> : vector<8x64xf32>
    %449 = tpu.matmul %448, %447, %cst_279 {dimension_numbers = #tpu.dot_dimension_numbers<[1], [0], [0], [1], [0, 0, 1, 1], [], []>} : vector<8x64xbf16>, vector<64x64xbf16>, vector<8x64xf32> -> vector<8x64xf32>
    %450 = arith.addf %444, %449 : vector<8x64xf32>
    %c1_280 = arith.constant 1 : index
    %c0_281 = arith.constant 0 : index
    %451 = vector.load %arg30[%c1_280, %c0_281] : memref<3x64xf32, #tpu.memory_space<vmem>>, vector<1x64xf32>
    %452 = vector.shape_cast %451 : vector<1x64xf32> to vector<64xf32>
    %453 = vector.shape_cast %452 : vector<64xf32> to vector<1x64xf32>
    %454 = vector.broadcast %453 : vector<1x64xf32> to vector<8x64xf32>
    %455 = arith.addf %450, %454 : vector<8x64xf32>
    %cst_282 = arith.constant 0.000000e+00 : f32
    %456 = vector.broadcast %cst_282 : f32 to vector<8x64xf32>
    %457 = arith.maximumf %455, %456 : vector<8x64xf32>
    %c1_283 = arith.constant 1 : index
    %c0_284 = arith.constant 0 : index
    %458 = vector.load %arg31[%c1_283, %c0_284] : memref<3x64xf32, #tpu.memory_space<vmem>>, vector<1x64xf32>
    %459 = vector.shape_cast %458 : vector<1x64xf32> to vector<64xf32>
    %c1_285 = arith.constant 1 : index
    %c0_286 = arith.constant 0 : index
    %460 = vector.load %arg32[%c1_285, %c0_286] : memref<3x64xf32, #tpu.memory_space<vmem>>, vector<1x64xf32>
    %461 = vector.shape_cast %460 : vector<1x64xf32> to vector<64xf32>
    %cst_287 = arith.constant dense<0.000000e+00> : vector<8xf32>
    %462 = vector.multi_reduction <add>, %457, %cst_287 [1] : vector<8x64xf32> to vector<8xf32>
    %463 = vector.shape_cast %462 : vector<8xf32> to vector<8x1xf32>
    %cst_288 = arith.constant 6.400000e+01 : f32
    %464 = vector.broadcast %cst_288 : f32 to vector<8x1xf32>
    %465 = arith.divf %463, %464 : vector<8x1xf32>
    %466 = vector.broadcast %465 : vector<8x1xf32> to vector<8x64xf32>
    %467 = arith.subf %457, %466 : vector<8x64xf32>
    %468 = arith.mulf %467, %467 : vector<8x64xf32>
    %cst_289 = arith.constant dense<0.000000e+00> : vector<8xf32>
    %469 = vector.multi_reduction <add>, %468, %cst_289 [1] : vector<8x64xf32> to vector<8xf32>
    %470 = vector.shape_cast %469 : vector<8xf32> to vector<8x1xf32>
    %cst_290 = arith.constant 6.400000e+01 : f32
    %471 = vector.broadcast %cst_290 : f32 to vector<8x1xf32>
    %472 = arith.divf %470, %471 : vector<8x1xf32>
    %473 = vector.broadcast %465 : vector<8x1xf32> to vector<8x64xf32>
    %474 = arith.subf %457, %473 : vector<8x64xf32>
    %cst_291 = arith.constant 9.99999974E-6 : f32
    %475 = vector.broadcast %cst_291 : f32 to vector<8x1xf32>
    %476 = arith.addf %472, %475 : vector<8x1xf32>
    %477 = math.rsqrt %476 : vector<8x1xf32>
    %478 = vector.broadcast %477 : vector<8x1xf32> to vector<8x64xf32>
    %479 = arith.mulf %474, %478 : vector<8x64xf32>
    %480 = vector.shape_cast %459 : vector<64xf32> to vector<1x64xf32>
    %481 = vector.broadcast %480 : vector<1x64xf32> to vector<8x64xf32>
    %482 = arith.mulf %479, %481 : vector<8x64xf32>
    %483 = vector.shape_cast %461 : vector<64xf32> to vector<1x64xf32>
    %484 = vector.broadcast %483 : vector<1x64xf32> to vector<8x64xf32>
    %485 = arith.addf %482, %484 : vector<8x64xf32>
    %c1_292 = arith.constant 1 : index
    %c0_293 = arith.constant 0 : index
    %c0_294 = arith.constant 0 : index
    %c0_295 = arith.constant 0 : index
    %486 = vector.load %arg33[%c1_292, %c0_293, %c0_294, %c0_295] : memref<3x3x64x64xbf16, #tpu.memory_space<vmem>>, vector<1x3x64x64xbf16>
    %487 = vector.shape_cast %486 : vector<1x3x64x64xbf16> to vector<3x64x64xbf16>
    %c1_296 = arith.constant 1 : index
    %c0_297 = arith.constant 0 : index
    %488 = vector.load %arg34[%c1_296, %c0_297] : memref<3x64xf32, #tpu.memory_space<vmem>>, vector<1x64xf32>
    %489 = vector.shape_cast %488 : vector<1x64xf32> to vector<64xf32>
    %c1_298 = arith.constant 1 : index
    %c0_299 = arith.constant 0 : index
    %490 = vector.load %arg45[%c1_298, %c0_299] : memref<10x64xf32, #tpu.memory_space<vmem>>, vector<8x64xf32>
    tpu.vector_store %arg45[%c1_298, %c0_299], %485 {strides = array<i32>} : memref<10x64xf32, #tpu.memory_space<vmem>>, vector<8x64xf32>,
    %c0_300 = arith.constant 0 : index
    %c0_301 = arith.constant 0 : index
    %491 = vector.load %arg45[%c0_300, %c0_301] : memref<10x64xf32, #tpu.memory_space<vmem>>, vector<8x64xf32>
    %492 = vector.extract_strided_slice %487 {offsets = [0, 0, 0], sizes = [1, 64, 64], strides = [1, 1, 1]} : vector<3x64x64xbf16> to vector<1x64x64xbf16>
    %493 = vector.shape_cast %492 : vector<1x64x64xbf16> to vector<64x64xbf16>
    %494 = arith.truncf %491 : vector<8x64xf32> to vector<8x64xbf16>
    %cst_302 = arith.constant dense<0.000000e+00> : vector<8x64xf32>
    %495 = tpu.matmul %494, %493, %cst_302 {dimension_numbers = #tpu.dot_dimension_numbers<[1], [0], [0], [1], [0, 0, 1, 1], [], []>} : vector<8x64xbf16>, vector<64x64xbf16>, vector<8x64xf32> -> vector<8x64xf32>
    %c1_303 = arith.constant 1 : index
    %c0_304 = arith.constant 0 : index
    %496 = vector.load %arg45[%c1_303, %c0_304] : memref<10x64xf32, #tpu.memory_space<vmem>>, vector<8x64xf32>
    %497 = vector.extract_strided_slice %487 {offsets = [1, 0, 0], sizes = [1, 64, 64], strides = [1, 1, 1]} : vector<3x64x64xbf16> to vector<1x64x64xbf16>
    %498 = vector.shape_cast %497 : vector<1x64x64xbf16> to vector<64x64xbf16>
    %499 = arith.truncf %496 : vector<8x64xf32> to vector<8x64xbf16>
    %cst_305 = arith.constant dense<0.000000e+00> : vector<8x64xf32>
    %500 = tpu.matmul %499, %498, %cst_305 {dimension_numbers = #tpu.dot_dimension_numbers<[1], [0], [0], [1], [0, 0, 1, 1], [], []>} : vector<8x64xbf16>, vector<64x64xbf16>, vector<8x64xf32> -> vector<8x64xf32>
    %501 = arith.addf %495, %500 : vector<8x64xf32>
    %c2_306 = arith.constant 2 : index
    %c0_307 = arith.constant 0 : index
    %502 = vector.load %arg45[%c2_306, %c0_307] : memref<10x64xf32, #tpu.memory_space<vmem>>, vector<8x64xf32>
    %503 = vector.extract_strided_slice %487 {offsets = [2, 0, 0], sizes = [1, 64, 64], strides = [1, 1, 1]} : vector<3x64x64xbf16> to vector<1x64x64xbf16>
    %504 = vector.shape_cast %503 : vector<1x64x64xbf16> to vector<64x64xbf16>
    %505 = arith.truncf %502 : vector<8x64xf32> to vector<8x64xbf16>
    %cst_308 = arith.constant dense<0.000000e+00> : vector<8x64xf32>
    %506 = tpu.matmul %505, %504, %cst_308 {dimension_numbers = #tpu.dot_dimension_numbers<[1], [0], [0], [1], [0, 0, 1, 1], [], []>} : vector<8x64xbf16>, vector<64x64xbf16>, vector<8x64xf32> -> vector<8x64xf32>
    %507 = arith.addf %501, %506 : vector<8x64xf32>
    %508 = vector.shape_cast %489 : vector<64xf32> to vector<1x64xf32>
    %509 = vector.broadcast %508 : vector<1x64xf32> to vector<8x64xf32>
    %510 = arith.addf %507, %509 : vector<8x64xf32>
    %cst_309 = arith.constant 0.000000e+00 : f32
    %511 = vector.broadcast %cst_309 : f32 to vector<8x64xf32>
    %512 = arith.maximumf %510, %511 : vector<8x64xf32>
    %c1_310 = arith.constant 1 : index
    %c0_311 = arith.constant 0 : index
    %513 = vector.load %arg35[%c1_310, %c0_311] : memref<3x64xf32, #tpu.memory_space<vmem>>, vector<1x64xf32>
    %514 = vector.shape_cast %513 : vector<1x64xf32> to vector<64xf32>
    %c1_312 = arith.constant 1 : index
    %c0_313 = arith.constant 0 : index
    %515 = vector.load %arg36[%c1_312, %c0_313] : memref<3x64xf32, #tpu.memory_space<vmem>>, vector<1x64xf32>
    %516 = vector.shape_cast %515 : vector<1x64xf32> to vector<64xf32>
    %cst_314 = arith.constant dense<0.000000e+00> : vector<8xf32>
    %517 = vector.multi_reduction <add>, %512, %cst_314 [1] : vector<8x64xf32> to vector<8xf32>
    %518 = vector.shape_cast %517 : vector<8xf32> to vector<8x1xf32>
    %cst_315 = arith.constant 6.400000e+01 : f32
    %519 = vector.broadcast %cst_315 : f32 to vector<8x1xf32>
    %520 = arith.divf %518, %519 : vector<8x1xf32>
    %521 = vector.broadcast %520 : vector<8x1xf32> to vector<8x64xf32>
    %522 = arith.subf %512, %521 : vector<8x64xf32>
    %523 = arith.mulf %522, %522 : vector<8x64xf32>
    %cst_316 = arith.constant dense<0.000000e+00> : vector<8xf32>
    %524 = vector.multi_reduction <add>, %523, %cst_316 [1] : vector<8x64xf32> to vector<8xf32>
    %525 = vector.shape_cast %524 : vector<8xf32> to vector<8x1xf32>
    %cst_317 = arith.constant 6.400000e+01 : f32
    %526 = vector.broadcast %cst_317 : f32 to vector<8x1xf32>
    %527 = arith.divf %525, %526 : vector<8x1xf32>
    %528 = vector.broadcast %520 : vector<8x1xf32> to vector<8x64xf32>
    %529 = arith.subf %512, %528 : vector<8x64xf32>
    %cst_318 = arith.constant 9.99999974E-6 : f32
    %530 = vector.broadcast %cst_318 : f32 to vector<8x1xf32>
    %531 = arith.addf %527, %530 : vector<8x1xf32>
    %532 = math.rsqrt %531 : vector<8x1xf32>
    %533 = vector.broadcast %532 : vector<8x1xf32> to vector<8x64xf32>
    %534 = arith.mulf %529, %533 : vector<8x64xf32>
    %535 = vector.shape_cast %514 : vector<64xf32> to vector<1x64xf32>
    %536 = vector.broadcast %535 : vector<1x64xf32> to vector<8x64xf32>
    %537 = arith.mulf %534, %536 : vector<8x64xf32>
    %538 = vector.shape_cast %516 : vector<64xf32> to vector<1x64xf32>
    %539 = vector.broadcast %538 : vector<1x64xf32> to vector<8x64xf32>
    %540 = arith.addf %537, %539 : vector<8x64xf32>
    %c1_319 = arith.constant 1 : index
    %c0_320 = arith.constant 0 : index
    %541 = vector.load %arg37[%c1_319, %c0_320] : memref<3x64xf32, #tpu.memory_space<vmem>>, vector<1x64xf32>
    %542 = vector.shape_cast %541 : vector<1x64xf32> to vector<64xf32>
    %543 = vector.shape_cast %542 : vector<64xf32> to vector<1x64xf32>
    %544 = vector.broadcast %543 : vector<1x64xf32> to vector<8x64xf32>
    %545 = arith.mulf %540, %544 : vector<8x64xf32>
    %cst_321 = arith.constant dense<0.000000e+00> : vector<8xf32>
    %546 = vector.multi_reduction <add>, %545, %cst_321 [1] : vector<8x64xf32> to vector<8xf32>
    %547 = vector.shape_cast %546 : vector<8xf32> to vector<8x1xf32>
    %c1_322 = arith.constant 1 : index
    %c0_323 = arith.constant 0 : index
    %548 = vector.load %arg38[%c1_322, %c0_323] : memref<3x1xf32, #tpu.memory_space<vmem>>, vector<1x1xf32>
    %549 = vector.shape_cast %548 : vector<1x1xf32> to vector<1xf32>
    %550 = vector.shape_cast %549 : vector<1xf32> to vector<1x1xf32>
    %551 = vector.broadcast %550 : vector<1x1xf32> to vector<8x1xf32>
    %552 = arith.addf %547, %551 : vector<8x1xf32>
    %553 = arith.mulf %552, %21 : vector<8x1xf32>
    %c2_324 = arith.constant 2 : index
    %c0_325 = arith.constant 0 : index
    %c0_326 = arith.constant 0 : index
    %c0_327 = arith.constant 0 : index
    %554 = vector.load %arg29[%c2_324, %c0_325, %c0_326, %c0_327] : memref<3x3x64x64xbf16, #tpu.memory_space<vmem>>, vector<1x3x64x64xbf16>
    %555 = vector.shape_cast %554 : vector<1x3x64x64xbf16> to vector<3x64x64xbf16>
    %c0_328 = arith.constant 0 : index
    %c0_329 = arith.constant 0 : index
    %556 = vector.load %arg44[%c0_328, %c0_329] : memref<10x64xf32, #tpu.memory_space<vmem>>, vector<8x64xf32>
    %557 = vector.extract_strided_slice %555 {offsets = [0, 0, 0], sizes = [1, 64, 64], strides = [1, 1, 1]} : vector<3x64x64xbf16> to vector<1x64x64xbf16>
    %558 = vector.shape_cast %557 : vector<1x64x64xbf16> to vector<64x64xbf16>
    %559 = arith.truncf %556 : vector<8x64xf32> to vector<8x64xbf16>
    %cst_330 = arith.constant dense<0.000000e+00> : vector<8x64xf32>
    %560 = tpu.matmul %559, %558, %cst_330 {dimension_numbers = #tpu.dot_dimension_numbers<[1], [0], [0], [1], [0, 0, 1, 1], [], []>} : vector<8x64xbf16>, vector<64x64xbf16>, vector<8x64xf32> -> vector<8x64xf32>
    %c1_331 = arith.constant 1 : index
    %c0_332 = arith.constant 0 : index
    %561 = vector.load %arg44[%c1_331, %c0_332] : memref<10x64xf32, #tpu.memory_space<vmem>>, vector<8x64xf32>
    %562 = vector.extract_strided_slice %555 {offsets = [1, 0, 0], sizes = [1, 64, 64], strides = [1, 1, 1]} : vector<3x64x64xbf16> to vector<1x64x64xbf16>
    %563 = vector.shape_cast %562 : vector<1x64x64xbf16> to vector<64x64xbf16>
    %564 = arith.truncf %561 : vector<8x64xf32> to vector<8x64xbf16>
    %cst_333 = arith.constant dense<0.000000e+00> : vector<8x64xf32>
    %565 = tpu.matmul %564, %563, %cst_333 {dimension_numbers = #tpu.dot_dimension_numbers<[1], [0], [0], [1], [0, 0, 1, 1], [], []>} : vector<8x64xbf16>, vector<64x64xbf16>, vector<8x64xf32> -> vector<8x64xf32>
    %566 = arith.addf %560, %565 : vector<8x64xf32>
    %c2_334 = arith.constant 2 : index
    %c0_335 = arith.constant 0 : index
    %567 = vector.load %arg44[%c2_334, %c0_335] : memref<10x64xf32, #tpu.memory_space<vmem>>, vector<8x64xf32>
    %568 = vector.extract_strided_slice %555 {offsets = [2, 0, 0], sizes = [1, 64, 64], strides = [1, 1, 1]} : vector<3x64x64xbf16> to vector<1x64x64xbf16>
    %569 = vector.shape_cast %568 : vector<1x64x64xbf16> to vector<64x64xbf16>
    %570 = arith.truncf %567 : vector<8x64xf32> to vector<8x64xbf16>
    %cst_336 = arith.constant dense<0.000000e+00> : vector<8x64xf32>
    %571 = tpu.matmul %570, %569, %cst_336 {dimension_numbers = #tpu.dot_dimension_numbers<[1], [0], [0], [1], [0, 0, 1, 1], [], []>} : vector<8x64xbf16>, vector<64x64xbf16>, vector<8x64xf32> -> vector<8x64xf32>
    %572 = arith.addf %566, %571 : vector<8x64xf32>
    %c2_337 = arith.constant 2 : index
    %c0_338 = arith.constant 0 : index
    %573 = vector.load %arg30[%c2_337, %c0_338] : memref<3x64xf32, #tpu.memory_space<vmem>>, vector<1x64xf32>
    %574 = vector.shape_cast %573 : vector<1x64xf32> to vector<64xf32>
    %575 = vector.shape_cast %574 : vector<64xf32> to vector<1x64xf32>
    %576 = vector.broadcast %575 : vector<1x64xf32> to vector<8x64xf32>
    %577 = arith.addf %572, %576 : vector<8x64xf32>
    %cst_339 = arith.constant 0.000000e+00 : f32
    %578 = vector.broadcast %cst_339 : f32 to vector<8x64xf32>
    %579 = arith.maximumf %577, %578 : vector<8x64xf32>
    %c2_340 = arith.constant 2 : index
    %c0_341 = arith.constant 0 : index
    %580 = vector.load %arg31[%c2_340, %c0_341] : memref<3x64xf32, #tpu.memory_space<vmem>>, vector<1x64xf32>
    %581 = vector.shape_cast %580 : vector<1x64xf32> to vector<64xf32>
    %c2_342 = arith.constant 2 : index
    %c0_343 = arith.constant 0 : index
    %582 = vector.load %arg32[%c2_342, %c0_343] : memref<3x64xf32, #tpu.memory_space<vmem>>, vector<1x64xf32>
    %583 = vector.shape_cast %582 : vector<1x64xf32> to vector<64xf32>
    %cst_344 = arith.constant dense<0.000000e+00> : vector<8xf32>
    %584 = vector.multi_reduction <add>, %579, %cst_344 [1] : vector<8x64xf32> to vector<8xf32>
    %585 = vector.shape_cast %584 : vector<8xf32> to vector<8x1xf32>
    %cst_345 = arith.constant 6.400000e+01 : f32
    %586 = vector.broadcast %cst_345 : f32 to vector<8x1xf32>
    %587 = arith.divf %585, %586 : vector<8x1xf32>
    %588 = vector.broadcast %587 : vector<8x1xf32> to vector<8x64xf32>
    %589 = arith.subf %579, %588 : vector<8x64xf32>
    %590 = arith.mulf %589, %589 : vector<8x64xf32>
    %cst_346 = arith.constant dense<0.000000e+00> : vector<8xf32>
    %591 = vector.multi_reduction <add>, %590, %cst_346 [1] : vector<8x64xf32> to vector<8xf32>
    %592 = vector.shape_cast %591 : vector<8xf32> to vector<8x1xf32>
    %cst_347 = arith.constant 6.400000e+01 : f32
    %593 = vector.broadcast %cst_347 : f32 to vector<8x1xf32>
    %594 = arith.divf %592, %593 : vector<8x1xf32>
    %595 = vector.broadcast %587 : vector<8x1xf32> to vector<8x64xf32>
    %596 = arith.subf %579, %595 : vector<8x64xf32>
    %cst_348 = arith.constant 9.99999974E-6 : f32
    %597 = vector.broadcast %cst_348 : f32 to vector<8x1xf32>
    %598 = arith.addf %594, %597 : vector<8x1xf32>
    %599 = math.rsqrt %598 : vector<8x1xf32>
    %600 = vector.broadcast %599 : vector<8x1xf32> to vector<8x64xf32>
    %601 = arith.mulf %596, %600 : vector<8x64xf32>
    %602 = vector.shape_cast %581 : vector<64xf32> to vector<1x64xf32>
    %603 = vector.broadcast %602 : vector<1x64xf32> to vector<8x64xf32>
    %604 = arith.mulf %601, %603 : vector<8x64xf32>
    %605 = vector.shape_cast %583 : vector<64xf32> to vector<1x64xf32>
    %606 = vector.broadcast %605 : vector<1x64xf32> to vector<8x64xf32>
    %607 = arith.addf %604, %606 : vector<8x64xf32>
    %c2_349 = arith.constant 2 : index
    %c0_350 = arith.constant 0 : index
    %c0_351 = arith.constant 0 : index
    %c0_352 = arith.constant 0 : index
    %608 = vector.load %arg33[%c2_349, %c0_350, %c0_351, %c0_352] : memref<3x3x64x64xbf16, #tpu.memory_space<vmem>>, vector<1x3x64x64xbf16>
    %609 = vector.shape_cast %608 : vector<1x3x64x64xbf16> to vector<3x64x64xbf16>
    %c2_353 = arith.constant 2 : index
    %c0_354 = arith.constant 0 : index
    %610 = vector.load %arg34[%c2_353, %c0_354] : memref<3x64xf32, #tpu.memory_space<vmem>>, vector<1x64xf32>
    %611 = vector.shape_cast %610 : vector<1x64xf32> to vector<64xf32>
    %c1_355 = arith.constant 1 : index
    %c0_356 = arith.constant 0 : index
    %612 = vector.load %arg45[%c1_355, %c0_356] : memref<10x64xf32, #tpu.memory_space<vmem>>, vector<8x64xf32>
    tpu.vector_store %arg45[%c1_355, %c0_356], %607 {strides = array<i32>} : memref<10x64xf32, #tpu.memory_space<vmem>>, vector<8x64xf32>,
    %c0_357 = arith.constant 0 : index
    %c0_358 = arith.constant 0 : index
    %613 = vector.load %arg45[%c0_357, %c0_358] : memref<10x64xf32, #tpu.memory_space<vmem>>, vector<8x64xf32>
    %614 = vector.extract_strided_slice %609 {offsets = [0, 0, 0], sizes = [1, 64, 64], strides = [1, 1, 1]} : vector<3x64x64xbf16> to vector<1x64x64xbf16>
    %615 = vector.shape_cast %614 : vector<1x64x64xbf16> to vector<64x64xbf16>
    %616 = arith.truncf %613 : vector<8x64xf32> to vector<8x64xbf16>
    %cst_359 = arith.constant dense<0.000000e+00> : vector<8x64xf32>
    %617 = tpu.matmul %616, %615, %cst_359 {dimension_numbers = #tpu.dot_dimension_numbers<[1], [0], [0], [1], [0, 0, 1, 1], [], []>} : vector<8x64xbf16>, vector<64x64xbf16>, vector<8x64xf32> -> vector<8x64xf32>
    %c1_360 = arith.constant 1 : index
    %c0_361 = arith.constant 0 : index
    %618 = vector.load %arg45[%c1_360, %c0_361] : memref<10x64xf32, #tpu.memory_space<vmem>>, vector<8x64xf32>
    %619 = vector.extract_strided_slice %609 {offsets = [1, 0, 0], sizes = [1, 64, 64], strides = [1, 1, 1]} : vector<3x64x64xbf16> to vector<1x64x64xbf16>
    %620 = vector.shape_cast %619 : vector<1x64x64xbf16> to vector<64x64xbf16>
    %621 = arith.truncf %618 : vector<8x64xf32> to vector<8x64xbf16>
    %cst_362 = arith.constant dense<0.000000e+00> : vector<8x64xf32>
    %622 = tpu.matmul %621, %620, %cst_362 {dimension_numbers = #tpu.dot_dimension_numbers<[1], [0], [0], [1], [0, 0, 1, 1], [], []>} : vector<8x64xbf16>, vector<64x64xbf16>, vector<8x64xf32> -> vector<8x64xf32>
    %623 = arith.addf %617, %622 : vector<8x64xf32>
    %c2_363 = arith.constant 2 : index
    %c0_364 = arith.constant 0 : index
    %624 = vector.load %arg45[%c2_363, %c0_364] : memref<10x64xf32, #tpu.memory_space<vmem>>, vector<8x64xf32>
    %625 = vector.extract_strided_slice %609 {offsets = [2, 0, 0], sizes = [1, 64, 64], strides = [1, 1, 1]} : vector<3x64x64xbf16> to vector<1x64x64xbf16>
    %626 = vector.shape_cast %625 : vector<1x64x64xbf16> to vector<64x64xbf16>
    %627 = arith.truncf %624 : vector<8x64xf32> to vector<8x64xbf16>
    %cst_365 = arith.constant dense<0.000000e+00> : vector<8x64xf32>
    %628 = tpu.matmul %627, %626, %cst_365 {dimension_numbers = #tpu.dot_dimension_numbers<[1], [0], [0], [1], [0, 0, 1, 1], [], []>} : vector<8x64xbf16>, vector<64x64xbf16>, vector<8x64xf32> -> vector<8x64xf32>
    %629 = arith.addf %623, %628 : vector<8x64xf32>
    %630 = vector.shape_cast %611 : vector<64xf32> to vector<1x64xf32>
    %631 = vector.broadcast %630 : vector<1x64xf32> to vector<8x64xf32>
    %632 = arith.addf %629, %631 : vector<8x64xf32>
    %cst_366 = arith.constant 0.000000e+00 : f32
    %633 = vector.broadcast %cst_366 : f32 to vector<8x64xf32>
    %634 = arith.maximumf %632, %633 : vector<8x64xf32>
    %c2_367 = arith.constant 2 : index
    %c0_368 = arith.constant 0 : index
    %635 = vector.load %arg35[%c2_367, %c0_368] : memref<3x64xf32, #tpu.memory_space<vmem>>, vector<1x64xf32>
    %636 = vector.shape_cast %635 : vector<1x64xf32> to vector<64xf32>
    %c2_369 = arith.constant 2 : index
    %c0_370 = arith.constant 0 : index
    %637 = vector.load %arg36[%c2_369, %c0_370] : memref<3x64xf32, #tpu.memory_space<vmem>>, vector<1x64xf32>
    %638 = vector.shape_cast %637 : vector<1x64xf32> to vector<64xf32>
    %cst_371 = arith.constant dense<0.000000e+00> : vector<8xf32>
    %639 = vector.multi_reduction <add>, %634, %cst_371 [1] : vector<8x64xf32> to vector<8xf32>
    %640 = vector.shape_cast %639 : vector<8xf32> to vector<8x1xf32>
    %cst_372 = arith.constant 6.400000e+01 : f32
    %641 = vector.broadcast %cst_372 : f32 to vector<8x1xf32>
    %642 = arith.divf %640, %641 : vector<8x1xf32>
    %643 = vector.broadcast %642 : vector<8x1xf32> to vector<8x64xf32>
    %644 = arith.subf %634, %643 : vector<8x64xf32>
    %645 = arith.mulf %644, %644 : vector<8x64xf32>
    %cst_373 = arith.constant dense<0.000000e+00> : vector<8xf32>
    %646 = vector.multi_reduction <add>, %645, %cst_373 [1] : vector<8x64xf32> to vector<8xf32>
    %647 = vector.shape_cast %646 : vector<8xf32> to vector<8x1xf32>
    %cst_374 = arith.constant 6.400000e+01 : f32
    %648 = vector.broadcast %cst_374 : f32 to vector<8x1xf32>
    %649 = arith.divf %647, %648 : vector<8x1xf32>
    %650 = vector.broadcast %642 : vector<8x1xf32> to vector<8x64xf32>
    %651 = arith.subf %634, %650 : vector<8x64xf32>
    %cst_375 = arith.constant 9.99999974E-6 : f32
    %652 = vector.broadcast %cst_375 : f32 to vector<8x1xf32>
    %653 = arith.addf %649, %652 : vector<8x1xf32>
    %654 = math.rsqrt %653 : vector<8x1xf32>
    %655 = vector.broadcast %654 : vector<8x1xf32> to vector<8x64xf32>
    %656 = arith.mulf %651, %655 : vector<8x64xf32>
    %657 = vector.shape_cast %636 : vector<64xf32> to vector<1x64xf32>
    %658 = vector.broadcast %657 : vector<1x64xf32> to vector<8x64xf32>
    %659 = arith.mulf %656, %658 : vector<8x64xf32>
    %660 = vector.shape_cast %638 : vector<64xf32> to vector<1x64xf32>
    %661 = vector.broadcast %660 : vector<1x64xf32> to vector<8x64xf32>
    %662 = arith.addf %659, %661 : vector<8x64xf32>
    %c2_376 = arith.constant 2 : index
    %c0_377 = arith.constant 0 : index
    %663 = vector.load %arg37[%c2_376, %c0_377] : memref<3x64xf32, #tpu.memory_space<vmem>>, vector<1x64xf32>
    %664 = vector.shape_cast %663 : vector<1x64xf32> to vector<64xf32>
    %665 = vector.shape_cast %664 : vector<64xf32> to vector<1x64xf32>
    %666 = vector.broadcast %665 : vector<1x64xf32> to vector<8x64xf32>
    %667 = arith.mulf %662, %666 : vector<8x64xf32>
    %cst_378 = arith.constant dense<0.000000e+00> : vector<8xf32>
    %668 = vector.multi_reduction <add>, %667, %cst_378 [1] : vector<8x64xf32> to vector<8xf32>
    %669 = vector.shape_cast %668 : vector<8xf32> to vector<8x1xf32>
    %c2_379 = arith.constant 2 : index
    %c0_380 = arith.constant 0 : index
    %670 = vector.load %arg38[%c2_379, %c0_380] : memref<3x1xf32, #tpu.memory_space<vmem>>, vector<1x1xf32>
    %671 = vector.shape_cast %670 : vector<1x1xf32> to vector<1xf32>
    %672 = vector.shape_cast %671 : vector<1xf32> to vector<1x1xf32>
    %673 = vector.broadcast %672 : vector<1x1xf32> to vector<8x1xf32>
    %674 = arith.addf %669, %673 : vector<8x1xf32>
    %675 = arith.mulf %674, %21 : vector<8x1xf32>
    %c0_381 = arith.constant 0 : index
    %c0_382 = arith.constant 0 : index
    %c0_383 = arith.constant 0 : index
    %676 = vector.load %arg6[%c0_381, %c0_382, %c0_383] : memref<1x8x64xf32, #tpu.memory_space<vmem>>, vector<1x8x64xf32>
    %677 = vector.shape_cast %676 : vector<1x8x64xf32> to vector<8x64xf32>
    %678 = arith.addf %308, %677 : vector<8x64xf32>
    %cst_384 = arith.constant 0.000000e+00 : f32
    %679 = vector.broadcast %cst_384 : f32 to vector<8x12xf32>
    %680 = tpu.concatenate %678, %300, %266, %290, %431, %553, %675, %679 in 1 : vector<8x64xf32>, vector<8x32xf32>, vector<8x16xf32>, vector<8x1xf32>, vector<8x1xf32>, vector<8x1xf32>, vector<8x1xf32>, vector<8x12xf32> -> vector<8x128xf32>
    %c0_385 = arith.constant 0 : index
    %c0_386 = arith.constant 0 : index
    %c0_387 = arith.constant 0 : index
    %681 = vector.load %arg39[%c0_385, %c0_386, %c0_387] : memref<1x8x128xf32, #tpu.memory_space<vmem>>, vector<1x8x128xf32>
    %682 = vector.shape_cast %681 : vector<1x8x128xf32> to vector<8x128xf32>
    %683 = vector.shape_cast %680 : vector<8x128xf32> to vector<1x8x128xf32>
    tpu.vector_store %arg39[%c0_385, %c0_386, %c0_387], %683 {strides = array<i32>} : memref<1x8x128xf32, #tpu.memory_space<vmem>>, vector<1x8x128xf32>,
    return
  }
  func.func @transform_0(%arg0: i32, %arg1: memref<2xi32, #tpu.memory_space<smem>>) -> (i32, i32, i32) {
    %c0_i32 = arith.constant 0 : i32
    %c0_i32_0 = arith.constant 0 : i32
    %c0_i32_1 = arith.constant 0 : i32
    return %arg0, %c0_i32, %c0_i32_0 : i32, i32, i32
  }
  func.func @transform_1(%arg0: i32, %arg1: memref<2xi32, #tpu.memory_space<smem>>) -> (i32, i32, i32) {
    %c0_i32 = arith.constant 0 : i32
    %c0_i32_0 = arith.constant 0 : i32
    %c0_i32_1 = arith.constant 0 : i32
    return %arg0, %c0_i32, %c0_i32_0 : i32, i32, i32
  }
  func.func @transform_2(%arg0: i32, %arg1: memref<2xi32, #tpu.memory_space<smem>>) -> (i32, i32, i32) {
    %c0_i32 = arith.constant 0 : i32
    %c0_i32_0 = arith.constant 0 : i32
    %c0_i32_1 = arith.constant 0 : i32
    return %arg0, %c0_i32, %c0_i32_0 : i32, i32, i32
  }
  func.func @transform_3(%arg0: i32, %arg1: memref<2xi32, #tpu.memory_space<smem>>) -> (i32, i32, i32) {
    %c0_i32 = arith.constant 0 : i32
    %c0_i32_0 = arith.constant 0 : i32
    %c0_i32_1 = arith.constant 0 : i32
    return %arg0, %c0_i32, %c0_i32_0 : i32, i32, i32
  }
  func.func @transform_4(%arg0: i32, %arg1: memref<2xi32, #tpu.memory_space<smem>>) -> (i32, i32, i32) {
    %c0_i32 = arith.constant 0 : i32
    %c0_i32_0 = arith.constant 0 : i32
    %c0_i32_1 = arith.constant 0 : i32
    return %arg0, %c0_i32, %c0_i32_0 : i32, i32, i32
  }
  func.func @transform_5(%arg0: i32, %arg1: memref<2xi32, #tpu.memory_space<smem>>) -> (i32, i32) {
    %c0_i32 = arith.constant 0 : i32
    %c0_i32_0 = arith.constant 0 : i32
    %c0_i32_1 = arith.constant 0 : i32
    return %c0_i32, %c0_i32_0 : i32, i32
  }
  func.func @transform_6(%arg0: i32, %arg1: memref<2xi32, #tpu.memory_space<smem>>) -> (i32, i32) {
    %c0_i32 = arith.constant 0 : i32
    %c0_i32_0 = arith.constant 0 : i32
    %c0_i32_1 = arith.constant 0 : i32
    return %c0_i32, %c0_i32_0 : i32, i32
  }
  func.func @transform_7(%arg0: i32, %arg1: memref<2xi32, #tpu.memory_space<smem>>) -> (i32, i32) {
    %c0_i32 = arith.constant 0 : i32
    %c0_i32_0 = arith.constant 0 : i32
    %c0_i32_1 = arith.constant 0 : i32
    return %c0_i32, %c0_i32_0 : i32, i32
  }
  func.func @transform_8(%arg0: i32, %arg1: memref<2xi32, #tpu.memory_space<smem>>) -> (i32, i32) {
    %c0_i32 = arith.constant 0 : i32
    %c0_i32_0 = arith.constant 0 : i32
    %c0_i32_1 = arith.constant 0 : i32
    return %c0_i32, %c0_i32_0 : i32, i32
  }
  func.func @transform_9(%arg0: i32, %arg1: memref<2xi32, #tpu.memory_space<smem>>) -> (i32, i32, i32) {
    %c0_i32 = arith.constant 0 : i32
    %c0_i32_0 = arith.constant 0 : i32
    %c0_i32_1 = arith.constant 0 : i32
    %c0_i32_2 = arith.constant 0 : i32
    return %c0_i32, %c0_i32_0, %c0_i32_1 : i32, i32, i32
  }
  func.func @transform_10(%arg0: i32, %arg1: memref<2xi32, #tpu.memory_space<smem>>) -> (i32, i32) {
    %c0_i32 = arith.constant 0 : i32
    %c0_i32_0 = arith.constant 0 : i32
    %c0_i32_1 = arith.constant 0 : i32
    return %c0_i32, %c0_i32_0 : i32, i32
  }
  func.func @transform_11(%arg0: i32, %arg1: memref<2xi32, #tpu.memory_space<smem>>) -> (i32, i32) {
    %c0_i32 = arith.constant 0 : i32
    %c0_i32_0 = arith.constant 0 : i32
    %c0_i32_1 = arith.constant 0 : i32
    return %c0_i32, %c0_i32_0 : i32, i32
  }
  func.func @transform_12(%arg0: i32, %arg1: memref<2xi32, #tpu.memory_space<smem>>) -> (i32, i32) {
    %c0_i32 = arith.constant 0 : i32
    %c0_i32_0 = arith.constant 0 : i32
    %c0_i32_1 = arith.constant 0 : i32
    return %c0_i32, %c0_i32_0 : i32, i32
  }
  func.func @transform_13(%arg0: i32, %arg1: memref<2xi32, #tpu.memory_space<smem>>) -> (i32, i32, i32) {
    %c0_i32 = arith.constant 0 : i32
    %c0_i32_0 = arith.constant 0 : i32
    %c0_i32_1 = arith.constant 0 : i32
    %c0_i32_2 = arith.constant 0 : i32
    return %c0_i32, %c0_i32_0, %c0_i32_1 : i32, i32, i32
  }
  func.func @transform_14(%arg0: i32, %arg1: memref<2xi32, #tpu.memory_space<smem>>) -> (i32, i32) {
    %c0_i32 = arith.constant 0 : i32
    %c0_i32_0 = arith.constant 0 : i32
    %c0_i32_1 = arith.constant 0 : i32
    return %c0_i32, %c0_i32_0 : i32, i32
  }
  func.func @transform_15(%arg0: i32, %arg1: memref<2xi32, #tpu.memory_space<smem>>) -> (i32, i32) {
    %c0_i32 = arith.constant 0 : i32
    %c0_i32_0 = arith.constant 0 : i32
    %c0_i32_1 = arith.constant 0 : i32
    return %c0_i32, %c0_i32_0 : i32, i32
  }
  func.func @transform_16(%arg0: i32, %arg1: memref<2xi32, #tpu.memory_space<smem>>) -> (i32, i32) {
    %c0_i32 = arith.constant 0 : i32
    %c0_i32_0 = arith.constant 0 : i32
    %c0_i32_1 = arith.constant 0 : i32
    return %c0_i32, %c0_i32_0 : i32, i32
  }
  func.func @transform_17(%arg0: i32, %arg1: memref<2xi32, #tpu.memory_space<smem>>) -> (i32, i32) {
    %c0_i32 = arith.constant 0 : i32
    %c0_i32_0 = arith.constant 0 : i32
    %c0_i32_1 = arith.constant 0 : i32
    return %c0_i32, %c0_i32_0 : i32, i32
  }
  func.func @transform_18(%arg0: i32, %arg1: memref<2xi32, #tpu.memory_space<smem>>) -> (i32, i32) {
    %c0_i32 = arith.constant 0 : i32
    %c0_i32_0 = arith.constant 0 : i32
    %c0_i32_1 = arith.constant 0 : i32
    return %c0_i32, %c0_i32_0 : i32, i32
  }
  func.func @transform_19(%arg0: i32, %arg1: memref<2xi32, #tpu.memory_space<smem>>) -> (i32, i32, i32) {
    %c0_i32 = arith.constant 0 : i32
    %c0_i32_0 = arith.constant 0 : i32
    %c0_i32_1 = arith.constant 0 : i32
    %c0_i32_2 = arith.constant 0 : i32
    return %c0_i32, %c0_i32_0, %c0_i32_1 : i32, i32, i32
  }
  func.func @transform_20(%arg0: i32, %arg1: memref<2xi32, #tpu.memory_space<smem>>) -> (i32, i32) {
    %c0_i32 = arith.constant 0 : i32
    %c0_i32_0 = arith.constant 0 : i32
    %c0_i32_1 = arith.constant 0 : i32
    return %c0_i32, %c0_i32_0 : i32, i32
  }
  func.func @transform_21(%arg0: i32, %arg1: memref<2xi32, #tpu.memory_space<smem>>) -> (i32, i32, i32) {
    %c0_i32 = arith.constant 0 : i32
    %c0_i32_0 = arith.constant 0 : i32
    %c0_i32_1 = arith.constant 0 : i32
    %c0_i32_2 = arith.constant 0 : i32
    return %c0_i32, %c0_i32_0, %c0_i32_1 : i32, i32, i32
  }
  func.func @transform_22(%arg0: i32, %arg1: memref<2xi32, #tpu.memory_space<smem>>) -> (i32, i32) {
    %c0_i32 = arith.constant 0 : i32
    %c0_i32_0 = arith.constant 0 : i32
    %c0_i32_1 = arith.constant 0 : i32
    return %c0_i32, %c0_i32_0 : i32, i32
  }
  func.func @transform_23(%arg0: i32, %arg1: memref<2xi32, #tpu.memory_space<smem>>) -> (i32, i32) {
    %c0_i32 = arith.constant 0 : i32
    %c0_i32_0 = arith.constant 0 : i32
    %c0_i32_1 = arith.constant 0 : i32
    return %c0_i32, %c0_i32_0 : i32, i32
  }
  func.func @transform_24(%arg0: i32, %arg1: memref<2xi32, #tpu.memory_space<smem>>) -> (i32, i32) {
    %c0_i32 = arith.constant 0 : i32
    %c0_i32_0 = arith.constant 0 : i32
    %c0_i32_1 = arith.constant 0 : i32
    return %c0_i32, %c0_i32_0 : i32, i32
  }
  func.func @transform_25(%arg0: i32, %arg1: memref<2xi32, #tpu.memory_space<smem>>) -> (i32, i32) {
    %c0_i32 = arith.constant 0 : i32
    %c0_i32_0 = arith.constant 0 : i32
    %c0_i32_1 = arith.constant 0 : i32
    return %c0_i32, %c0_i32_0 : i32, i32
  }
  func.func @transform_26(%arg0: i32, %arg1: memref<2xi32, #tpu.memory_space<smem>>) -> (i32, i32) {
    %c0_i32 = arith.constant 0 : i32
    %c0_i32_0 = arith.constant 0 : i32
    %c0_i32_1 = arith.constant 0 : i32
    return %c0_i32, %c0_i32_0 : i32, i32
  }
  func.func @transform_27(%arg0: i32, %arg1: memref<2xi32, #tpu.memory_space<smem>>) -> (i32, i32, i32, i32) {
    %c0_i32 = arith.constant 0 : i32
    %c0_i32_0 = arith.constant 0 : i32
    %c0_i32_1 = arith.constant 0 : i32
    %c0_i32_2 = arith.constant 0 : i32
    %c0_i32_3 = arith.constant 0 : i32
    return %c0_i32, %c0_i32_0, %c0_i32_1, %c0_i32_2 : i32, i32, i32, i32
  }
  func.func @transform_28(%arg0: i32, %arg1: memref<2xi32, #tpu.memory_space<smem>>) -> (i32, i32) {
    %c0_i32 = arith.constant 0 : i32
    %c0_i32_0 = arith.constant 0 : i32
    %c0_i32_1 = arith.constant 0 : i32
    return %c0_i32, %c0_i32_0 : i32, i32
  }
  func.func @transform_29(%arg0: i32, %arg1: memref<2xi32, #tpu.memory_space<smem>>) -> (i32, i32) {
    %c0_i32 = arith.constant 0 : i32
    %c0_i32_0 = arith.constant 0 : i32
    %c0_i32_1 = arith.constant 0 : i32
    return %c0_i32, %c0_i32_0 : i32, i32
  }
  func.func @transform_30(%arg0: i32, %arg1: memref<2xi32, #tpu.memory_space<smem>>) -> (i32, i32) {
    %c0_i32 = arith.constant 0 : i32
    %c0_i32_0 = arith.constant 0 : i32
    %c0_i32_1 = arith.constant 0 : i32
    return %c0_i32, %c0_i32_0 : i32, i32
  }
  func.func @transform_31(%arg0: i32, %arg1: memref<2xi32, #tpu.memory_space<smem>>) -> (i32, i32, i32, i32) {
    %c0_i32 = arith.constant 0 : i32
    %c0_i32_0 = arith.constant 0 : i32
    %c0_i32_1 = arith.constant 0 : i32
    %c0_i32_2 = arith.constant 0 : i32
    %c0_i32_3 = arith.constant 0 : i32
    return %c0_i32, %c0_i32_0, %c0_i32_1, %c0_i32_2 : i32, i32, i32, i32
  }
  func.func @transform_32(%arg0: i32, %arg1: memref<2xi32, #tpu.memory_space<smem>>) -> (i32, i32) {
    %c0_i32 = arith.constant 0 : i32
    %c0_i32_0 = arith.constant 0 : i32
    %c0_i32_1 = arith.constant 0 : i32
    return %c0_i32, %c0_i32_0 : i32, i32
  }
  func.func @transform_33(%arg0: i32, %arg1: memref<2xi32, #tpu.memory_space<smem>>) -> (i32, i32) {
    %c0_i32 = arith.constant 0 : i32
    %c0_i32_0 = arith.constant 0 : i32
    %c0_i32_1 = arith.constant 0 : i32
    return %c0_i32, %c0_i32_0 : i32, i32
  }
  func.func @transform_34(%arg0: i32, %arg1: memref<2xi32, #tpu.memory_space<smem>>) -> (i32, i32) {
    %c0_i32 = arith.constant 0 : i32
    %c0_i32_0 = arith.constant 0 : i32
    %c0_i32_1 = arith.constant 0 : i32
    return %c0_i32, %c0_i32_0 : i32, i32
  }
  func.func @transform_35(%arg0: i32, %arg1: memref<2xi32, #tpu.memory_space<smem>>) -> (i32, i32) {
    %c0_i32 = arith.constant 0 : i32
    %c0_i32_0 = arith.constant 0 : i32
    %c0_i32_1 = arith.constant 0 : i32
    return %c0_i32, %c0_i32_0 : i32, i32
  }
  func.func @transform_36(%arg0: i32, %arg1: memref<2xi32, #tpu.memory_space<smem>>) -> (i32, i32) {
    %c0_i32 = arith.constant 0 : i32
    %c0_i32_0 = arith.constant 0 : i32
    %c0_i32_1 = arith.constant 0 : i32
    return %c0_i32, %c0_i32_0 : i32, i32
  }
  func.func @transform_37(%arg0: i32, %arg1: memref<2xi32, #tpu.memory_space<smem>>) -> (i32, i32, i32) {
    %c0_i32 = arith.constant 0 : i32
    %c0_i32_0 = arith.constant 0 : i32
    %c0_i32_1 = arith.constant 0 : i32
    return %arg0, %c0_i32, %c0_i32_0 : i32, i32, i32
  }
  func.func @transform_38(%arg0: i32, %arg1: memref<2xi32, #tpu.memory_space<smem>>) -> (i32, i32, i32) {
    %c0_i32 = arith.constant 0 : i32
    %c0_i32_0 = arith.constant 0 : i32
    %c0_i32_1 = arith.constant 0 : i32
    return %arg0, %c0_i32, %c0_i32_0 : i32, i32, i32
  }
}

</mosaic_0001>

<llo_original>
// kernel: tpu_custom_call.1
$region0: #{tpu_custom_call.1}
  #allocation0 [shape = 'u32[]', space=smem, size = 0x4, offset = 0x4, fixed_abs, tag = 'smem constant byte address 0x4 - core index']
  #allocation1 [shape = 'u32[144,128]{1,0:T(1,128)}', space=vmem, size = 0x12000, scoped, tag = 'internal scratch']
  #allocation2 [shape = 'f32[12,32]{1,0:T(8,128)}', space=vmem, size = 0x2000, scoped, tag = 'scratch operand']
  #allocation3 [shape = 'f32[12,16]{1,0:T(8,128)}', space=vmem, size = 0x2000, scoped, tag = 'scratch operand']
  #allocation4 [shape = 'f32[12,8]{1,0:T(8,128)}', space=vmem, size = 0x2000, scoped, tag = 'scratch operand']
  #allocation5 [shape = 'f32[10,64]{1,0:T(8,128)}', space=vmem, size = 0x2000, scoped, tag = 'scratch operand']
  #allocation6 [shape = 'f32[10,64]{1,0:T(8,128)}', space=vmem, size = 0x2000, scoped, tag = 'scratch operand']
  #allocation7 [shape = 's32[1]{0}', space=sflag, size = 0x4, scoped, tag = 'scoped memory for tpu_custom_call.1']
  #allocation8 [shape = 'u8[512]{0}', space=smem, size = 0x200, scoped, tag = 'prefetched SMEM operand 0']
  #allocation9 [shape = 'f32[1,1]{1,0:T(1,128)S(1)}', space=vmem, size = 0x200, scoped, tag = 'scoped memory for tpu_custom_call.1']
  %s0 = inlined_call_operand.smem [shape: u32[40], index: -1, kind: input, shape index: {}]
  %s1 = sld [smem:[%s0]]
  %s2 = scalar_lea.smem %s0, 1
  %s3 = sld [smem:[%s2]]
  %s4 = scalar_lea.smem %s0, 2
  %s5 = sld [smem:[%s4]]
  %s6 = scalar_lea.smem %s0, 3
  %s7 = sld [smem:[%s6]]
  %s8 = scalar_lea.smem %s0, 4
  %s9 = sld [smem:[%s8]]
  %s10 = scalar_lea.smem %s0, 5
  %s11 = sld [smem:[%s10]]
  %s12 = scalar_lea.smem %s0, 6
  %s13 = sld [smem:[%s12]]
  %s14 = scalar_lea.smem %s0, 7
  %s15 = sld [smem:[%s14]]
  %s16 = scalar_lea.smem %s0, 8
  %s17 = sld [smem:[%s16]]
  %s18 = scalar_lea.smem %s0, 9
  %s19 = sld [smem:[%s18]]
  %s20 = scalar_lea.smem %s0, 10
  %s21 = sld [smem:[%s20]]
  %s22 = scalar_lea.smem %s0, 11
  %s23 = sld [smem:[%s22]]
  %s24 = scalar_lea.smem %s0, 12
  %s25 = sld [smem:[%s24]]
  %s26 = scalar_lea.smem %s0, 13
  %s27 = sld [smem:[%s26]]
  %s28 = scalar_lea.smem %s0, 14
  %s29 = sld [smem:[%s28]]
  %s30 = scalar_lea.smem %s0, 15
  %s31 = sld [smem:[%s30]]
  %s32 = scalar_lea.smem %s0, 16
  %s33 = sld [smem:[%s32]]
  %s34 = scalar_lea.smem %s0, 17
  %s35 = sld [smem:[%s34]]
  %s36 = scalar_lea.smem %s0, 18
  %s37 = sld [smem:[%s36]]
  %s38 = scalar_lea.smem %s0, 19
  %s39 = sld [smem:[%s38]]
  %s40 = scalar_lea.smem %s0, 20
  %s41 = sld [smem:[%s40]]
  %s42 = scalar_lea.smem %s0, 21
  %s43 = sld [smem:[%s42]]
  %s44 = scalar_lea.smem %s0, 22
  %s45 = sld [smem:[%s44]]
  %s46 = scalar_lea.smem %s0, 23
  %s47 = sld [smem:[%s46]]
  %s48 = scalar_lea.smem %s0, 24
  %s49 = sld [smem:[%s48]]
  %s50 = scalar_lea.smem %s0, 25
  %s51 = sld [smem:[%s50]]
  %s52 = scalar_lea.smem %s0, 26
  %s53 = sld [smem:[%s52]]
  %s54 = scalar_lea.smem %s0, 27
  %s55 = sld [smem:[%s54]]
  %s56 = scalar_lea.smem %s0, 28
  %s57 = sld [smem:[%s56]]
  %s58 = scalar_lea.smem %s0, 29
  %s59 = sld [smem:[%s58]]
  %s60 = scalar_lea.smem %s0, 30
  %s61 = sld [smem:[%s60]]
  %s62 = scalar_lea.smem %s0, 31
  %s63 = sld [smem:[%s62]]
  %s64 = scalar_lea.smem %s0, 32
  %s65 = sld [smem:[%s64]]
  %s66 = scalar_lea.smem %s0, 33
  %s67 = sld [smem:[%s66]]
  %s68 = scalar_lea.smem %s0, 34
  %s69 = sld [smem:[%s68]]
  %s70 = scalar_lea.smem %s0, 35
  %s71 = sld [smem:[%s70]]
  %s72 = scalar_lea.smem %s0, 36
  %s73 = sld [smem:[%s72]]
  %s74 = scalar_lea.smem %s0, 37
  %s75 = sld [smem:[%s74]]
  %s76 = scalar_lea.smem %s0, 38
  %s77 = sld [smem:[%s76]]
  %s78 = scalar_lea.smem %s0, 39
  %s79 = sld [smem:[%s78]]
  %80 = xla_tuple %s77, %s79
  %s81 = sld [smem:[#allocation0]]
  $region265: #{tpu_custom_call.1} parent=0
    _
  %s83 = ssub.s32 1, %s81
  %s84 = scalar_select 0, %s83, %s81
  %s85 = sshll.u32 %s1, 4
  %s86 = int_to_ptr.vmem [resolvable:$true] %s85
  %88 = dma.vmem_to_smem %s86, 16, [#allocation8], [#allocation7]
  %v89 = vstv %s39
  %90 = vst [vmem:[#allocation9] sm:$0x1] %v89
  %91 = dma.done [#allocation7], 16
  %92 = sfence
  $region1: #{tpu_custom_call.1} parent=0
    #allocation10 [shape = 'u8[8192]{0}', space=vmem, size = 0x2000, scoped, tag = 'input window, operand 1']
    #allocation11 [shape = 's32[2]{0}', space=sflag, size = 0x8, scoped, tag = 'scoped memory for tpu_custom_call.1']
    #allocation12 [shape = 's32[2]{0}', space=sflag, size = 0x8, scoped, tag = 'scoped memory for tpu_custom_call.1']
    #allocation13 [shape = 'u8[8192]{0}', space=vmem, size = 0x2000, scoped, tag = 'input window, operand 2']
    #allocation14 [shape = 's32[2]{0}', space=sflag, size = 0x8, scoped, tag = 'scoped memory for tpu_custom_call.1']
    #allocation15 [shape = 'u8[1024]{0}', space=vmem, size = 0x400, scoped, tag = 'input window, operand 4']
    #allocation16 [shape = 'u8[8192]{0}', space=vmem, size = 0x2000, scoped, tag = 'input window, operand 5']
    #allocation17 [shape = 's32[2]{0}', space=sflag, size = 0x8, scoped, tag = 'scoped memory for tpu_custom_call.1']
    #allocation18 [shape = 'u8[8192]{0}', space=vmem, size = 0x2000, scoped, tag = 'input window, operand 6, single buffered']
    #allocation19 [shape = 'u8[512]{0}', space=vmem, size = 0x400, scoped, tag = 'input window, operand 7, single buffered']
    #allocation20 [shape = 's32[1]{0}', space=sflag, size = 0x4, scoped, tag = 'scoped memory for tpu_custom_call.1']
    #allocation21 [shape = 'u8[512]{0}', space=vmem, size = 0x400, scoped, tag = 'input window, operand 8, single buffered']
    #allocation22 [shape = 'u8[512]{0}', space=vmem, size = 0x400, scoped, tag = 'input window, operand 9, single buffered']
    #allocation23 [shape = 's32[1]{0}', space=sflag, size = 0x4, scoped, tag = 'scoped memory for tpu_custom_call.1']
    #allocation24 [shape = 'u8[512]{0}', space=vmem, size = 0x400, scoped, tag = 'input window, operand 11, single buffered']
    #allocation25 [shape = 'u8[1024]{0}', space=vmem, size = 0x400, scoped, tag = 'input window, operand 12, single buffered']
    #allocation26 [shape = 's32[1]{0}', space=sflag, size = 0x4, scoped, tag = 'scoped memory for tpu_custom_call.1']
    #allocation27 [shape = 'u8[1024]{0}', space=vmem, size = 0x400, scoped, tag = 'input window, operand 13, single buffered']
    #allocation28 [shape = 'u8[1024]{0}', space=vmem, size = 0x400, scoped, tag = 'input window, operand 15, single buffered']
    #allocation29 [shape = 's32[1]{0}', space=sflag, size = 0x4, scoped, tag = 'scoped memory for tpu_custom_call.1']
    #allocation30 [shape = 'u8[512]{0}', space=vmem, size = 0x400, scoped, tag = 'input window, operand 17, single buffered']
    #allocation31 [shape = 'u8[512]{0}', space=vmem, size = 0x400, scoped, tag = 'input window, operand 18, single buffered']
    #allocation32 [shape = 's32[1]{0}', space=sflag, size = 0x4, scoped, tag = 'scoped memory for tpu_custom_call.1']
    #allocation33 [shape = 'u8[512]{0}', space=vmem, size = 0x400, scoped, tag = 'input window, operand 21, single buffered']
    #allocation34 [shape = 'u8[512]{0}', space=vmem, size = 0x400, scoped, tag = 'input window, operand 23, single buffered']
    #allocation35 [shape = 's32[1]{0}', space=sflag, size = 0x4, scoped, tag = 'scoped memory for tpu_custom_call.1']
    #allocation36 [shape = 'u8[512]{0}', space=vmem, size = 0x400, scoped, tag = 'input window, operand 24, single buffered']
    #allocation37 [shape = 'u8[147456]{0}', space=vmem, size = 0x24000, scoped, tag = 'input window, operand 28, single buffered']
    #allocation38 [shape = 's32[1]{0}', space=sflag, size = 0x4, scoped, tag = 'scoped memory for tpu_custom_call.1']
    #allocation39 [shape = 'u8[147456]{0}', space=vmem, size = 0x24000, scoped, tag = 'input window, operand 32, single buffered']
    #allocation40 [shape = 'u8[8192]{0}', space=vmem, size = 0x2000, scoped, tag = 'output window, operand 0']
    #allocation41 [shape = 'u8[1024]{0}', space=vmem, size = 0x400, scoped, tag = 'output window, operand 1']
    #allocation42 [shape = 's32[2]{0}', space=sflag, size = 0x8, scoped, tag = 'scoped memory for tpu_custom_call.1']
    %93 = vsyncpa [#allocation11], 0
    %s94 = scalar_lea.sflag [#allocation11], 1
    %95 = vsyncpa %s94, 0
    %96 = vsyncpa [#allocation14], 0
    %s97 = scalar_lea.sflag [#allocation14], 1
    %98 = vsyncpa %s97, 0
    %99 = vsyncpa [#allocation17], 0
    %s100 = scalar_lea.sflag [#allocation17], 1
    %101 = vsyncpa %s100, 0
    %102 = vsyncpa [#allocation20], 0
    %103 = vsyncpa [#allocation23], 0
    %104 = vsyncpa [#allocation26], 0
    %105 = vsyncpa [#allocation29], 0
    %106 = vsyncpa [#allocation32], 0
    %107 = vsyncpa [#allocation35], 0
    %108 = vsyncpa [#allocation38], 0
    %109 = vsyncpa [#allocation12], 0
    %s110 = scalar_lea.sflag [#allocation12], 1
    %111 = vsyncpa %s110, 0
    %112 = vsyncpa [#allocation42], 0
    %s113 = scalar_lea.sflag [#allocation42], 1
    %114 = vsyncpa %s113, 0
    loop: start=0, step=1, limit=4
    $region2: #{tpu_custom_call.1} parent=1 // loop_pre_header
      _
    $region3: #{tpu_custom_call.1} parent=1 // loop_header
      %s116 = sphi 0, %s120
      %p117 = scmp.ge.s32.totalorder %s116, 4
      %s126 = sphi 0, %s128
      %s129 = sphi 0, %s126
      %s130 = sphi 0, %s129
      %s146 = sphi 0, %s130
      %s152 = sphi 0, %s154
      %s155 = sphi 0, %s152
      %s156 = sphi 0, %s155
      %s172 = sphi 0, %s156
      %s178 = sphi 0, %s180
      %s181 = sphi 0, %s178
      %s182 = sphi 0, %s181
      %s198 = sphi 0, %s182
      %s204 = sphi 0, %s206
      %s207 = sphi 0, %s204
      %s208 = sphi 0, %s207
      %s224 = sphi 0, %s208
      %s230 = sphi 0, %s232
      %s233 = sphi 0, %s230
      %s234 = sphi 0, %s233
      %s250 = sphi 0, %s234
      %s254 = sphi 0, %s254
      %s256 = sphi 0, %s254
      %s257 = sphi 0, %s256
      %s271 = sphi 0, %s257
      %s275 = sphi 0, %s275
      %s277 = sphi 0, %s275
      %s278 = sphi 0, %s277
      %s292 = sphi 0, %s278
      %s296 = sphi 0, %s296
      %s298 = sphi 0, %s296
      %s299 = sphi 0, %s298
      %s313 = sphi 0, %s299
      %s317 = sphi 0, %s317
      %s319 = sphi 0, %s317
      %s320 = sphi 0, %s319
      %s334 = sphi 0, %s320
      %s338 = sphi 0, %s338
      %s340 = sphi 0, %s338
      %s341 = sphi 0, %s340
      %s355 = sphi 0, %s341
      %s359 = sphi 0, %s359
      %s361 = sphi 0, %s359
      %s362 = sphi 0, %s361
      %s376 = sphi 0, %s362
      %s380 = sphi 0, %s380
      %s382 = sphi 0, %s380
      %s383 = sphi 0, %s382
      %s397 = sphi 0, %s383
      %s401 = sphi 0, %s401
      %s403 = sphi 0, %s401
      %s404 = sphi 0, %s403
      %s418 = sphi 0, %s404
      %s422 = sphi 0, %s422
      %s424 = sphi 0, %s422
      %s425 = sphi 0, %s424
      %s439 = sphi 0, %s425
      %s443 = sphi 0, %s443
      %s445 = sphi 0, %s443
      %s446 = sphi 0, %s445
      %s460 = sphi 0, %s446
      %s464 = sphi 0, %s464
      %s466 = sphi 0, %s464
      %s467 = sphi 0, %s466
      %s481 = sphi 0, %s467
      %s485 = sphi 0, %s485
      %s487 = sphi 0, %s485
      %s488 = sphi 0, %s487
      %s502 = sphi 0, %s488
      %s506 = sphi 0, %s506
      %s508 = sphi 0, %s506
      %s509 = sphi 0, %s508
      %s523 = sphi 0, %s509
      %s527 = sphi 0, %s527
      %s529 = sphi 0, %s527
      %s530 = sphi 0, %s529
      %s544 = sphi 0, %s530
      %s548 = sphi 0, %s548
      %s550 = sphi 0, %s548
      %s551 = sphi 0, %s550
      %s565 = sphi 0, %s551
      %s569 = sphi 0, %s569
      %s571 = sphi 0, %s569
      %s572 = sphi 0, %s571
      %s586 = sphi 0, %s572
      %s590 = sphi 0, %s590
      %s592 = sphi 0, %s590
      %s593 = sphi 0, %s592
      %s607 = sphi 0, %s593
      %s611 = sphi 0, %s611
      %s613 = sphi 0, %s611
      %s614 = sphi 0, %s613
      %s628 = sphi 0, %s614
      %s632 = sphi 0, %s632
      %s634 = sphi 0, %s632
      %s635 = sphi 0, %s634
      %s649 = sphi 0, %s635
      %s653 = sphi 0, %s653
      %s655 = sphi 0, %s653
      %s656 = sphi 0, %s655
      %s670 = sphi 0, %s656
      %s674 = sphi 0, %s674
      %s676 = sphi 0, %s674
      %s677 = sphi 0, %s676
      %s691 = sphi 0, %s677
      %s695 = sphi 0, %s695
      %s697 = sphi 0, %s695
      %s698 = sphi 0, %s697
      %s712 = sphi 0, %s698
      %s716 = sphi 0, %s716
      %s718 = sphi 0, %s716
      %s719 = sphi 0, %s718
      %s733 = sphi 0, %s719
      %s737 = sphi 0, %s737
      %s739 = sphi 0, %s737
      %s740 = sphi 0, %s739
      %s754 = sphi 0, %s740
      %s758 = sphi 0, %s758
      %s760 = sphi 0, %s758
      %s761 = sphi 0, %s760
      %s775 = sphi 0, %s761
      %s779 = sphi 0, %s779
      %s781 = sphi 0, %s779
      %s782 = sphi 0, %s781
      %s796 = sphi 0, %s782
      %s800 = sphi 0, %s800
      %s802 = sphi 0, %s800
      %s803 = sphi 0, %s802
      %s817 = sphi 0, %s803
      %s821 = sphi 0, %s821
      %s823 = sphi 0, %s821
      %s824 = sphi 0, %s823
      %s838 = sphi 0, %s824
      %s842 = sphi 0, %s842
      %s844 = sphi 0, %s842
      %s845 = sphi 0, %s844
      %s859 = sphi 0, %s845
      %s863 = sphi 0, %s863
      %s865 = sphi 0, %s863
      %s866 = sphi 0, %s865
      %s880 = sphi 0, %s866
      %s884 = sphi 0, %s884
      %s886 = sphi 0, %s884
      %s887 = sphi 0, %s886
      %s901 = sphi 0, %s887
      %s905 = sphi 0, %s905
      %s907 = sphi 0, %s905
      %s908 = sphi 0, %s907
      %s922 = sphi 0, %s908
      %s928 = sphi 0, %s930
      %s931 = sphi 0, %s928
      %s932 = sphi 0, %s931
      %s948 = sphi 0, %s932
      %s954 = sphi 0, %s956
      %s957 = sphi 0, %s954
      %s958 = sphi 0, %s957
      %s974 = sphi 0, %s958
    $region4: #{tpu_custom_call.1} parent=1 // loop_header_branch
      %119 = sbr.rel (%p117) target = $region8
    $region5: #{tpu_custom_call.1} parent=1 // loop_body
      %s121 = ssub.s32 %s116, 1
      %s122 = ssub.s32 %s116, 2
      %s123 = sadd.s32 %s116, 1
      %s124 = ssub.s32 %s116, %s123
      %p125 = scmp.eq.s32.totalorder %s124, 0
      %s127 = sadd.s32 %s126, 1
      %s128 = scalar_select %p125, %s126, %s127
      %p131 = pneg %p125
      %p132 = scmp.eq.s32.totalorder %s116, 1
      %p133 = por %p131, %p132
      %p134 = scmp.ne.s32.totalorder %s126, %s129
      %p135 = scmp.eq.s32.totalorder %s116, 0
      %p136 = por %p134, %p135
      %p137 = scmp.ne.s32.totalorder %s126, %s129
      %p138 = scmp.eq.s32.totalorder %s121, 1
      %p139 = por %p137, %p138
      %p140 = scmp.ne.s32.totalorder %s129, %s130
      %p141 = scmp.eq.s32.totalorder %s121, 0
      %p142 = por %p140, %p141
      %p143 = scmp.ne.s32.totalorder %s129, %s130
      %p144 = scmp.eq.s32.totalorder %s122, 1
      %p145 = por %p143, %p144
      %p147 = scmp.ne.s32.totalorder %s130, %s146
      %p148 = scmp.eq.s32.totalorder %s122, 0
      %p149 = por %p147, %p148
      %s150 = ssub.s32 %s116, %s123
      %p151 = scmp.eq.s32.totalorder %s150, 0
      %s153 = sadd.s32 %s152, 1
      %s154 = scalar_select %p151, %s152, %s153
      %p157 = pneg %p151
      %p158 = scmp.eq.s32.totalorder %s116, 1
      %p159 = por %p157, %p158
      %p160 = scmp.ne.s32.totalorder %s152, %s155
      %p161 = scmp.eq.s32.totalorder %s116, 0
      %p162 = por %p160, %p161
      %p163 = scmp.ne.s32.totalorder %s152, %s155
      %p164 = scmp.eq.s32.totalorder %s121, 1
      %p165 = por %p163, %p164
      %p166 = scmp.ne.s32.totalorder %s155, %s156
      %p167 = scmp.eq.s32.totalorder %s121, 0
      %p168 = por %p166, %p167
      %p169 = scmp.ne.s32.totalorder %s155, %s156
      %p170 = scmp.eq.s32.totalorder %s122, 1
      %p171 = por %p169, %p170
      %p173 = scmp.ne.s32.totalorder %s156, %s172
      %p174 = scmp.eq.s32.totalorder %s122, 0
      %p175 = por %p173, %p174
      %s176 = ssub.s32 %s116, %s123
      %p177 = scmp.eq.s32.totalorder %s176, 0
      %s179 = sadd.s32 %s178, 1
      %s180 = scalar_select %p177, %s178, %s179
      %p183 = pneg %p177
      %p184 = scmp.eq.s32.totalorder %s116, 1
      %p185 = por %p183, %p184
      %p186 = scmp.ne.s32.totalorder %s178, %s181
      %p187 = scmp.eq.s32.totalorder %s116, 0
      %p188 = por %p186, %p187
      %p189 = scmp.ne.s32.totalorder %s178, %s181
      %p190 = scmp.eq.s32.totalorder %s121, 1
      %p191 = por %p189, %p190
      %p192 = scmp.ne.s32.totalorder %s181, %s182
      %p193 = scmp.eq.s32.totalorder %s121, 0
      %p194 = por %p192, %p193
      %p195 = scmp.ne.s32.totalorder %s181, %s182
      %p196 = scmp.eq.s32.totalorder %s122, 1
      %p197 = por %p195, %p196
      %p199 = scmp.ne.s32.totalorder %s182, %s198
      %p200 = scmp.eq.s32.totalorder %s122, 0
      %p201 = por %p199, %p200
      %s202 = ssub.s32 %s116, %s123
      %p203 = scmp.eq.s32.totalorder %s202, 0
      %s205 = sadd.s32 %s204, 1
      %s206 = scalar_select %p203, %s204, %s205
      %p209 = pneg %p203
      %p210 = scmp.eq.s32.totalorder %s116, 1
      %p211 = por %p209, %p210
      %p212 = scmp.ne.s32.totalorder %s204, %s207
      %p213 = scmp.eq.s32.totalorder %s116, 0
      %p214 = por %p212, %p213
      %p215 = scmp.ne.s32.totalorder %s204, %s207
      %p216 = scmp.eq.s32.totalorder %s121, 1
      %p217 = por %p215, %p216
      %p218 = scmp.ne.s32.totalorder %s207, %s208
      %p219 = scmp.eq.s32.totalorder %s121, 0
      %p220 = por %p218, %p219
      %p221 = scmp.ne.s32.totalorder %s207, %s208
      %p222 = scmp.eq.s32.totalorder %s122, 1
      %p223 = por %p221, %p222
      %p225 = scmp.ne.s32.totalorder %s208, %s224
      %p226 = scmp.eq.s32.totalorder %s122, 0
      %p227 = por %p225, %p226
      %s228 = ssub.s32 %s116, %s123
      %p229 = scmp.eq.s32.totalorder %s228, 0
      %s231 = sadd.s32 %s230, 1
      %s232 = scalar_select %p229, %s230, %s231
      %p235 = pneg %p229
      %p236 = scmp.eq.s32.totalorder %s116, 1
      %p237 = por %p235, %p236
      %p238 = scmp.ne.s32.totalorder %s230, %s233
      %p239 = scmp.eq.s32.totalorder %s116, 0
      %p240 = por %p238, %p239
      %p241 = scmp.ne.s32.totalorder %s230, %s233
      %p242 = scmp.eq.s32.totalorder %s121, 1
      %p243 = por %p241, %p242
      %p244 = scmp.ne.s32.totalorder %s233, %s234
      %p245 = scmp.eq.s32.totalorder %s121, 0
      %p246 = por %p244, %p245
      %p247 = scmp.ne.s32.totalorder %s233, %s234
      %p248 = scmp.eq.s32.totalorder %s122, 1
      %p249 = por %p247, %p248
      %p251 = scmp.ne.s32.totalorder %s234, %s250
      %p252 = scmp.eq.s32.totalorder %s122, 0
      %p253 = por %p251, %p252
      %s255 = sadd.s32 %s254, 1
      %p258 = scmp.eq.s32.totalorder %s116, 1
      %p259 = scmp.ne.s32.totalorder %s254, %s256
      %p260 = scmp.eq.s32.totalorder %s116, 0
      %p261 = por %p259, %p260
      %p262 = scmp.ne.s32.totalorder %s254, %s256
      %p263 = scmp.eq.s32.totalorder %s121, 1
      %p264 = por %p262, %p263
      %p265 = scmp.ne.s32.totalorder %s256, %s257
      %p266 = scmp.eq.s32.totalorder %s121, 0
      %p267 = por %p265, %p266
      %p268 = scmp.ne.s32.totalorder %s256, %s257
      %p269 = scmp.eq.s32.totalorder %s122, 1
      %p270 = por %p268, %p269
      %p272 = scmp.ne.s32.totalorder %s257, %s271
      %p273 = scmp.eq.s32.totalorder %s122, 0
      %p274 = por %p272, %p273
      %s276 = sadd.s32 %s275, 1
      %p279 = scmp.eq.s32.totalorder %s116, 1
      %p280 = scmp.ne.s32.totalorder %s275, %s277
      %p281 = scmp.eq.s32.totalorder %s116, 0
      %p282 = por %p280, %p281
      %p283 = scmp.ne.s32.totalorder %s275, %s277
      %p284 = scmp.eq.s32.totalorder %s121, 1
      %p285 = por %p283, %p284
      %p286 = scmp.ne.s32.totalorder %s277, %s278
      %p287 = scmp.eq.s32.totalorder %s121, 0
      %p288 = por %p286, %p287
      %p289 = scmp.ne.s32.totalorder %s277, %s278
      %p290 = scmp.eq.s32.totalorder %s122, 1
      %p291 = por %p289, %p290
      %p293 = scmp.ne.s32.totalorder %s278, %s292
      %p294 = scmp.eq.s32.totalorder %s122, 0
      %p295 = por %p293, %p294
      %s297 = sadd.s32 %s296, 1
      %p300 = scmp.eq.s32.totalorder %s116, 1
      %p301 = scmp.ne.s32.totalorder %s296, %s298
      %p302 = scmp.eq.s32.totalorder %s116, 0
      %p303 = por %p301, %p302
      %p304 = scmp.ne.s32.totalorder %s296, %s298
      %p305 = scmp.eq.s32.totalorder %s121, 1
      %p306 = por %p304, %p305
      %p307 = scmp.ne.s32.totalorder %s298, %s299
      %p308 = scmp.eq.s32.totalorder %s121, 0
      %p309 = por %p307, %p308
      %p310 = scmp.ne.s32.totalorder %s298, %s299
      %p311 = scmp.eq.s32.totalorder %s122, 1
      %p312 = por %p310, %p311
      %p314 = scmp.ne.s32.totalorder %s299, %s313
      %p315 = scmp.eq.s32.totalorder %s122, 0
      %p316 = por %p314, %p315
      %s318 = sadd.s32 %s317, 1
      %p321 = scmp.eq.s32.totalorder %s116, 1
      %p322 = scmp.ne.s32.totalorder %s317, %s319
      %p323 = scmp.eq.s32.totalorder %s116, 0
      %p324 = por %p322, %p323
      %p325 = scmp.ne.s32.totalorder %s317, %s319
      %p326 = scmp.eq.s32.totalorder %s121, 1
      %p327 = por %p325, %p326
      %p328 = scmp.ne.s32.totalorder %s319, %s320
      %p329 = scmp.eq.s32.totalorder %s121, 0
      %p330 = por %p328, %p329
      %p331 = scmp.ne.s32.totalorder %s319, %s320
      %p332 = scmp.eq.s32.totalorder %s122, 1
      %p333 = por %p331, %p332
      %p335 = scmp.ne.s32.totalorder %s320, %s334
      %p336 = scmp.eq.s32.totalorder %s122, 0
      %p337 = por %p335, %p336
      %s339 = sadd.s32 %s338, 1
      %p342 = scmp.eq.s32.totalorder %s116, 1
      %p343 = scmp.ne.s32.totalorder %s338, %s340
      %p344 = scmp.eq.s32.totalorder %s116, 0
      %p345 = por %p343, %p344
      %p346 = scmp.ne.s32.totalorder %s338, %s340
      %p347 = scmp.eq.s32.totalorder %s121, 1
      %p348 = por %p346, %p347
      %p349 = scmp.ne.s32.totalorder %s340, %s341
      %p350 = scmp.eq.s32.totalorder %s121, 0
      %p351 = por %p349, %p350
      %p352 = scmp.ne.s32.totalorder %s340, %s341
      %p353 = scmp.eq.s32.totalorder %s122, 1
      %p354 = por %p352, %p353
      %p356 = scmp.ne.s32.totalorder %s341, %s355
      %p357 = scmp.eq.s32.totalorder %s122, 0
      %p358 = por %p356, %p357
      %s360 = sadd.s32 %s359, 1
      %p363 = scmp.eq.s32.totalorder %s116, 1
      %p364 = scmp.ne.s32.totalorder %s359, %s361
      %p365 = scmp.eq.s32.totalorder %s116, 0
      %p366 = por %p364, %p365
      %p367 = scmp.ne.s32.totalorder %s359, %s361
      %p368 = scmp.eq.s32.totalorder %s121, 1
      %p369 = por %p367, %p368
      %p370 = scmp.ne.s32.totalorder %s361, %s362
      %p371 = scmp.eq.s32.totalorder %s121, 0
      %p372 = por %p370, %p371
      %p373 = scmp.ne.s32.totalorder %s361, %s362
      %p374 = scmp.eq.s32.totalorder %s122, 1
      %p375 = por %p373, %p374
      %p377 = scmp.ne.s32.totalorder %s362, %s376
      %p378 = scmp.eq.s32.totalorder %s122, 0
      %p379 = por %p377, %p378
      %s381 = sadd.s32 %s380, 1
      %p384 = scmp.eq.s32.totalorder %s116, 1
      %p385 = scmp.ne.s32.totalorder %s380, %s382
      %p386 = scmp.eq.s32.totalorder %s116, 0
      %p387 = por %p385, %p386
      %p388 = scmp.ne.s32.totalorder %s380, %s382
      %p389 = scmp.eq.s32.totalorder %s121, 1
      %p390 = por %p388, %p389
      %p391 = scmp.ne.s32.totalorder %s382, %s383
      %p392 = scmp.eq.s32.totalorder %s121, 0
      %p393 = por %p391, %p392
      %p394 = scmp.ne.s32.totalorder %s382, %s383
      %p395 = scmp.eq.s32.totalorder %s122, 1
      %p396 = por %p394, %p395
      %p398 = scmp.ne.s32.totalorder %s383, %s397
      %p399 = scmp.eq.s32.totalorder %s122, 0
      %p400 = por %p398, %p399
      %s402 = sadd.s32 %s401, 1
      %p405 = scmp.eq.s32.totalorder %s116, 1
      %p406 = scmp.ne.s32.totalorder %s401, %s403
      %p407 = scmp.eq.s32.totalorder %s116, 0
      %p408 = por %p406, %p407
      %p409 = scmp.ne.s32.totalorder %s401, %s403
      %p410 = scmp.eq.s32.totalorder %s121, 1
      %p411 = por %p409, %p410
      %p412 = scmp.ne.s32.totalorder %s403, %s404
      %p413 = scmp.eq.s32.totalorder %s121, 0
      %p414 = por %p412, %p413
      %p415 = scmp.ne.s32.totalorder %s403, %s404
      %p416 = scmp.eq.s32.totalorder %s122, 1
      %p417 = por %p415, %p416
      %p419 = scmp.ne.s32.totalorder %s404, %s418
      %p420 = scmp.eq.s32.totalorder %s122, 0
      %p421 = por %p419, %p420
      %s423 = sadd.s32 %s422, 1
      %p426 = scmp.eq.s32.totalorder %s116, 1
      %p427 = scmp.ne.s32.totalorder %s422, %s424
      %p428 = scmp.eq.s32.totalorder %s116, 0
      %p429 = por %p427, %p428
      %p430 = scmp.ne.s32.totalorder %s422, %s424
      %p431 = scmp.eq.s32.totalorder %s121, 1
      %p432 = por %p430, %p431
      %p433 = scmp.ne.s32.totalorder %s424, %s425
      %p434 = scmp.eq.s32.totalorder %s121, 0
      %p435 = por %p433, %p434
      %p436 = scmp.ne.s32.totalorder %s424, %s425
      %p437 = scmp.eq.s32.totalorder %s122, 1
      %p438 = por %p436, %p437
      %p440 = scmp.ne.s32.totalorder %s425, %s439
      %p441 = scmp.eq.s32.totalorder %s122, 0
      %p442 = por %p440, %p441
      %s444 = sadd.s32 %s443, 1
      %p447 = scmp.eq.s32.totalorder %s116, 1
      %p448 = scmp.ne.s32.totalorder %s443, %s445
      %p449 = scmp.eq.s32.totalorder %s116, 0
      %p450 = por %p448, %p449
      %p451 = scmp.ne.s32.totalorder %s443, %s445
      %p452 = scmp.eq.s32.totalorder %s121, 1
      %p453 = por %p451, %p452
      %p454 = scmp.ne.s32.totalorder %s445, %s446
      %p455 = scmp.eq.s32.totalorder %s121, 0
      %p456 = por %p454, %p455
      %p457 = scmp.ne.s32.totalorder %s445, %s446
      %p458 = scmp.eq.s32.totalorder %s122, 1
      %p459 = por %p457, %p458
      %p461 = scmp.ne.s32.totalorder %s446, %s460
      %p462 = scmp.eq.s32.totalorder %s122, 0
      %p463 = por %p461, %p462
      %s465 = sadd.s32 %s464, 1
      %p468 = scmp.eq.s32.totalorder %s116, 1
      %p469 = scmp.ne.s32.totalorder %s464, %s466
      %p470 = scmp.eq.s32.totalorder %s116, 0
      %p471 = por %p469, %p470
      %p472 = scmp.ne.s32.totalorder %s464, %s466
      %p473 = scmp.eq.s32.totalorder %s121, 1
      %p474 = por %p472, %p473
      %p475 = scmp.ne.s32.totalorder %s466, %s467
      %p476 = scmp.eq.s32.totalorder %s121, 0
      %p477 = por %p475, %p476
      %p478 = scmp.ne.s32.totalorder %s466, %s467
      %p479 = scmp.eq.s32.totalorder %s122, 1
      %p480 = por %p478, %p479
      %p482 = scmp.ne.s32.totalorder %s467, %s481
      %p483 = scmp.eq.s32.totalorder %s122, 0
      %p484 = por %p482, %p483
      %s486 = sadd.s32 %s485, 1
      %p489 = scmp.eq.s32.totalorder %s116, 1
      %p490 = scmp.ne.s32.totalorder %s485, %s487
      %p491 = scmp.eq.s32.totalorder %s116, 0
      %p492 = por %p490, %p491
      %p493 = scmp.ne.s32.totalorder %s485, %s487
      %p494 = scmp.eq.s32.totalorder %s121, 1
      %p495 = por %p493, %p494
      %p496 = scmp.ne.s32.totalorder %s487, %s488
      %p497 = scmp.eq.s32.totalorder %s121, 0
      %p498 = por %p496, %p497
      %p499 = scmp.ne.s32.totalorder %s487, %s488
      %p500 = scmp.eq.s32.totalorder %s122, 1
      %p501 = por %p499, %p500
      %p503 = scmp.ne.s32.totalorder %s488, %s502
      %p504 = scmp.eq.s32.totalorder %s122, 0
      %p505 = por %p503, %p504
      %s507 = sadd.s32 %s506, 1
      %p510 = scmp.eq.s32.totalorder %s116, 1
      %p511 = scmp.ne.s32.totalorder %s506, %s508
      %p512 = scmp.eq.s32.totalorder %s116, 0
      %p513 = por %p511, %p512
      %p514 = scmp.ne.s32.totalorder %s506, %s508
      %p515 = scmp.eq.s32.totalorder %s121, 1
      %p516 = por %p514, %p515
      %p517 = scmp.ne.s32.totalorder %s508, %s509
      %p518 = scmp.eq.s32.totalorder %s121, 0
      %p519 = por %p517, %p518
      %p520 = scmp.ne.s32.totalorder %s508, %s509
      %p521 = scmp.eq.s32.totalorder %s122, 1
      %p522 = por %p520, %p521
      %p524 = scmp.ne.s32.totalorder %s509, %s523
      %p525 = scmp.eq.s32.totalorder %s122, 0
      %p526 = por %p524, %p525
      %s528 = sadd.s32 %s527, 1
      %p531 = scmp.eq.s32.totalorder %s116, 1
      %p532 = scmp.ne.s32.totalorder %s527, %s529
      %p533 = scmp.eq.s32.totalorder %s116, 0
      %p534 = por %p532, %p533
      %p535 = scmp.ne.s32.totalorder %s527, %s529
      %p536 = scmp.eq.s32.totalorder %s121, 1
      %p537 = por %p535, %p536
      %p538 = scmp.ne.s32.totalorder %s529, %s530
      %p539 = scmp.eq.s32.totalorder %s121, 0
      %p540 = por %p538, %p539
      %p541 = scmp.ne.s32.totalorder %s529, %s530
      %p542 = scmp.eq.s32.totalorder %s122, 1
      %p543 = por %p541, %p542
      %p545 = scmp.ne.s32.totalorder %s530, %s544
      %p546 = scmp.eq.s32.totalorder %s122, 0
      %p547 = por %p545, %p546
      %s549 = sadd.s32 %s548, 1
      %p552 = scmp.eq.s32.totalorder %s116, 1
      %p553 = scmp.ne.s32.totalorder %s548, %s550
      %p554 = scmp.eq.s32.totalorder %s116, 0
      %p555 = por %p553, %p554
      %p556 = scmp.ne.s32.totalorder %s548, %s550
      %p557 = scmp.eq.s32.totalorder %s121, 1
      %p558 = por %p556, %p557
      %p559 = scmp.ne.s32.totalorder %s550, %s551
      %p560 = scmp.eq.s32.totalorder %s121, 0
      %p561 = por %p559, %p560
      %p562 = scmp.ne.s32.totalorder %s550, %s551
      %p563 = scmp.eq.s32.totalorder %s122, 1
      %p564 = por %p562, %p563
      %p566 = scmp.ne.s32.totalorder %s551, %s565
      %p567 = scmp.eq.s32.totalorder %s122, 0
      %p568 = por %p566, %p567
      %s570 = sadd.s32 %s569, 1
      %p573 = scmp.eq.s32.totalorder %s116, 1
      %p574 = scmp.ne.s32.totalorder %s569, %s571
      %p575 = scmp.eq.s32.totalorder %s116, 0
      %p576 = por %p574, %p575
      %p577 = scmp.ne.s32.totalorder %s569, %s571
      %p578 = scmp.eq.s32.totalorder %s121, 1
      %p579 = por %p577, %p578
      %p580 = scmp.ne.s32.totalorder %s571, %s572
      %p581 = scmp.eq.s32.totalorder %s121, 0
      %p582 = por %p580, %p581
      %p583 = scmp.ne.s32.totalorder %s571, %s572
      %p584 = scmp.eq.s32.totalorder %s122, 1
      %p585 = por %p583, %p584
      %p587 = scmp.ne.s32.totalorder %s572, %s586
      %p588 = scmp.eq.s32.totalorder %s122, 0
      %p589 = por %p587, %p588
      %s591 = sadd.s32 %s590, 1
      %p594 = scmp.eq.s32.totalorder %s116, 1
      %p595 = scmp.ne.s32.totalorder %s590, %s592
      %p596 = scmp.eq.s32.totalorder %s116, 0
      %p597 = por %p595, %p596
      %p598 = scmp.ne.s32.totalorder %s590, %s592
      %p599 = scmp.eq.s32.totalorder %s121, 1
      %p600 = por %p598, %p599
      %p601 = scmp.ne.s32.totalorder %s592, %s593
      %p602 = scmp.eq.s32.totalorder %s121, 0
      %p603 = por %p601, %p602
      %p604 = scmp.ne.s32.totalorder %s592, %s593
      %p605 = scmp.eq.s32.totalorder %s122, 1
      %p606 = por %p604, %p605
      %p608 = scmp.ne.s32.totalorder %s593, %s607
      %p609 = scmp.eq.s32.totalorder %s122, 0
      %p610 = por %p608, %p609
      %s612 = sadd.s32 %s611, 1
      %p615 = scmp.eq.s32.totalorder %s116, 1
      %p616 = scmp.ne.s32.totalorder %s611, %s613
      %p617 = scmp.eq.s32.totalorder %s116, 0
      %p618 = por %p616, %p617
      %p619 = scmp.ne.s32.totalorder %s611, %s613
      %p620 = scmp.eq.s32.totalorder %s121, 1
      %p621 = por %p619, %p620
      %p622 = scmp.ne.s32.totalorder %s613, %s614
      %p623 = scmp.eq.s32.totalorder %s121, 0
      %p624 = por %p622, %p623
      %p625 = scmp.ne.s32.totalorder %s613, %s614
      %p626 = scmp.eq.s32.totalorder %s122, 1
      %p627 = por %p625, %p626
      %p629 = scmp.ne.s32.totalorder %s614, %s628
      %p630 = scmp.eq.s32.totalorder %s122, 0
      %p631 = por %p629, %p630
      %s633 = sadd.s32 %s632, 1
      %p636 = scmp.eq.s32.totalorder %s116, 1
      %p637 = scmp.ne.s32.totalorder %s632, %s634
      %p638 = scmp.eq.s32.totalorder %s116, 0
      %p639 = por %p637, %p638
      %p640 = scmp.ne.s32.totalorder %s632, %s634
      %p641 = scmp.eq.s32.totalorder %s121, 1
      %p642 = por %p640, %p641
      %p643 = scmp.ne.s32.totalorder %s634, %s635
      %p644 = scmp.eq.s32.totalorder %s121, 0
      %p645 = por %p643, %p644
      %p646 = scmp.ne.s32.totalorder %s634, %s635
      %p647 = scmp.eq.s32.totalorder %s122, 1
      %p648 = por %p646, %p647
      %p650 = scmp.ne.s32.totalorder %s635, %s649
      %p651 = scmp.eq.s32.totalorder %s122, 0
      %p652 = por %p650, %p651
      %s654 = sadd.s32 %s653, 1
      %p657 = scmp.eq.s32.totalorder %s116, 1
      %p658 = scmp.ne.s32.totalorder %s653, %s655
      %p659 = scmp.eq.s32.totalorder %s116, 0
      %p660 = por %p658, %p659
      %p661 = scmp.ne.s32.totalorder %s653, %s655
      %p662 = scmp.eq.s32.totalorder %s121, 1
      %p663 = por %p661, %p662
      %p664 = scmp.ne.s32.totalorder %s655, %s656
      %p665 = scmp.eq.s32.totalorder %s121, 0
      %p666 = por %p664, %p665
      %p667 = scmp.ne.s32.totalorder %s655, %s656
      %p668 = scmp.eq.s32.totalorder %s122, 1
      %p669 = por %p667, %p668
      %p671 = scmp.ne.s32.totalorder %s656, %s670
      %p672 = scmp.eq.s32.totalorder %s122, 0
      %p673 = por %p671, %p672
      %s675 = sadd.s32 %s674, 1
      %p678 = scmp.eq.s32.totalorder %s116, 1
      %p679 = scmp.ne.s32.totalorder %s674, %s676
      %p680 = scmp.eq.s32.totalorder %s116, 0
      %p681 = por %p679, %p680
      %p682 = scmp.ne.s32.totalorder %s674, %s676
      %p683 = scmp.eq.s32.totalorder %s121, 1
      %p684 = por %p682, %p683
      %p685 = scmp.ne.s32.totalorder %s676, %s677
      %p686 = scmp.eq.s32.totalorder %s121, 0
      %p687 = por %p685, %p686
      %p688 = scmp.ne.s32.totalorder %s676, %s677
      %p689 = scmp.eq.s32.totalorder %s122, 1
      %p690 = por %p688, %p689
      %p692 = scmp.ne.s32.totalorder %s677, %s691
      %p693 = scmp.eq.s32.totalorder %s122, 0
      %p694 = por %p692, %p693
      %s696 = sadd.s32 %s695, 1
      %p699 = scmp.eq.s32.totalorder %s116, 1
      %p700 = scmp.ne.s32.totalorder %s695, %s697
      %p701 = scmp.eq.s32.totalorder %s116, 0
      %p702 = por %p700, %p701
      %p703 = scmp.ne.s32.totalorder %s695, %s697
      %p704 = scmp.eq.s32.totalorder %s121, 1
      %p705 = por %p703, %p704
      %p706 = scmp.ne.s32.totalorder %s697, %s698
      %p707 = scmp.eq.s32.totalorder %s121, 0
      %p708 = por %p706, %p707
      %p709 = scmp.ne.s32.totalorder %s697, %s698
      %p710 = scmp.eq.s32.totalorder %s122, 1
      %p711 = por %p709, %p710
      %p713 = scmp.ne.s32.totalorder %s698, %s712
      %p714 = scmp.eq.s32.totalorder %s122, 0
      %p715 = por %p713, %p714
      %s717 = sadd.s32 %s716, 1
      %p720 = scmp.eq.s32.totalorder %s116, 1
      %p721 = scmp.ne.s32.totalorder %s716, %s718
      %p722 = scmp.eq.s32.totalorder %s116, 0
      %p723 = por %p721, %p722
      %p724 = scmp.ne.s32.totalorder %s716, %s718
      %p725 = scmp.eq.s32.totalorder %s121, 1
      %p726 = por %p724, %p725
      %p727 = scmp.ne.s32.totalorder %s718, %s719
      %p728 = scmp.eq.s32.totalorder %s121, 0
      %p729 = por %p727, %p728
      %p730 = scmp.ne.s32.totalorder %s718, %s719
      %p731 = scmp.eq.s32.totalorder %s122, 1
      %p732 = por %p730, %p731
      %p734 = scmp.ne.s32.totalorder %s719, %s733
      %p735 = scmp.eq.s32.totalorder %s122, 0
      %p736 = por %p734, %p735
      %s738 = sadd.s32 %s737, 1
      %p741 = scmp.eq.s32.totalorder %s116, 1
      %p742 = scmp.ne.s32.totalorder %s737, %s739
      %p743 = scmp.eq.s32.totalorder %s116, 0
      %p744 = por %p742, %p743
      %p745 = scmp.ne.s32.totalorder %s737, %s739
      %p746 = scmp.eq.s32.totalorder %s121, 1
      %p747 = por %p745, %p746
      %p748 = scmp.ne.s32.totalorder %s739, %s740
      %p749 = scmp.eq.s32.totalorder %s121, 0
      %p750 = por %p748, %p749
      %p751 = scmp.ne.s32.totalorder %s739, %s740
      %p752 = scmp.eq.s32.totalorder %s122, 1
      %p753 = por %p751, %p752
      %p755 = scmp.ne.s32.totalorder %s740, %s754
      %p756 = scmp.eq.s32.totalorder %s122, 0
      %p757 = por %p755, %p756
      %s759 = sadd.s32 %s758, 1
      %p762 = scmp.eq.s32.totalorder %s116, 1
      %p763 = scmp.ne.s32.totalorder %s758, %s760
      %p764 = scmp.eq.s32.totalorder %s116, 0
      %p765 = por %p763, %p764
      %p766 = scmp.ne.s32.totalorder %s758, %s760
      %p767 = scmp.eq.s32.totalorder %s121, 1
      %p768 = por %p766, %p767
      %p769 = scmp.ne.s32.totalorder %s760, %s761
      %p770 = scmp.eq.s32.totalorder %s121, 0
      %p771 = por %p769, %p770
      %p772 = scmp.ne.s32.totalorder %s760, %s761
      %p773 = scmp.eq.s32.totalorder %s122, 1
      %p774 = por %p772, %p773
      %p776 = scmp.ne.s32.totalorder %s761, %s775
      %p777 = scmp.eq.s32.totalorder %s122, 0
      %p778 = por %p776, %p777
      %s780 = sadd.s32 %s779, 1
      %p783 = scmp.eq.s32.totalorder %s116, 1
      %p784 = scmp.ne.s32.totalorder %s779, %s781
      %p785 = scmp.eq.s32.totalorder %s116, 0
      %p786 = por %p784, %p785
      %p787 = scmp.ne.s32.totalorder %s779, %s781
      %p788 = scmp.eq.s32.totalorder %s121, 1
      %p789 = por %p787, %p788
      %p790 = scmp.ne.s32.totalorder %s781, %s782
      %p791 = scmp.eq.s32.totalorder %s121, 0
      %p792 = por %p790, %p791
      %p793 = scmp.ne.s32.totalorder %s781, %s782
      %p794 = scmp.eq.s32.totalorder %s122, 1
      %p795 = por %p793, %p794
      %p797 = scmp.ne.s32.totalorder %s782, %s796
      %p798 = scmp.eq.s32.totalorder %s122, 0
      %p799 = por %p797, %p798
      %s801 = sadd.s32 %s800, 1
      %p804 = scmp.eq.s32.totalorder %s116, 1
      %p805 = scmp.ne.s32.totalorder %s800, %s802
      %p806 = scmp.eq.s32.totalorder %s116, 0
      %p807 = por %p805, %p806
      %p808 = scmp.ne.s32.totalorder %s800, %s802
      %p809 = scmp.eq.s32.totalorder %s121, 1
      %p810 = por %p808, %p809
      %p811 = scmp.ne.s32.totalorder %s802, %s803
      %p812 = scmp.eq.s32.totalorder %s121, 0
      %p813 = por %p811, %p812
      %p814 = scmp.ne.s32.totalorder %s802, %s803
      %p815 = scmp.eq.s32.totalorder %s122, 1
      %p816 = por %p814, %p815
      %p818 = scmp.ne.s32.totalorder %s803, %s817
      %p819 = scmp.eq.s32.totalorder %s122, 0
      %p820 = por %p818, %p819
      %s822 = sadd.s32 %s821, 1
      %p825 = scmp.eq.s32.totalorder %s116, 1
      %p826 = scmp.ne.s32.totalorder %s821, %s823
      %p827 = scmp.eq.s32.totalorder %s116, 0
      %p828 = por %p826, %p827
      %p829 = scmp.ne.s32.totalorder %s821, %s823
      %p830 = scmp.eq.s32.totalorder %s121, 1
      %p831 = por %p829, %p830
      %p832 = scmp.ne.s32.totalorder %s823, %s824
      %p833 = scmp.eq.s32.totalorder %s121, 0
      %p834 = por %p832, %p833
      %p835 = scmp.ne.s32.totalorder %s823, %s824
      %p836 = scmp.eq.s32.totalorder %s122, 1
      %p837 = por %p835, %p836
      %p839 = scmp.ne.s32.totalorder %s824, %s838
      %p840 = scmp.eq.s32.totalorder %s122, 0
      %p841 = por %p839, %p840
      %s843 = sadd.s32 %s842, 1
      %p846 = scmp.eq.s32.totalorder %s116, 1
      %p847 = scmp.ne.s32.totalorder %s842, %s844
      %p848 = scmp.eq.s32.totalorder %s116, 0
      %p849 = por %p847, %p848
      %p850 = scmp.ne.s32.totalorder %s842, %s844
      %p851 = scmp.eq.s32.totalorder %s121, 1
      %p852 = por %p850, %p851
      %p853 = scmp.ne.s32.totalorder %s844, %s845
      %p854 = scmp.eq.s32.totalorder %s121, 0
      %p855 = por %p853, %p854
      %p856 = scmp.ne.s32.totalorder %s844, %s845
      %p857 = scmp.eq.s32.totalorder %s122, 1
      %p858 = por %p856, %p857
      %p860 = scmp.ne.s32.totalorder %s845, %s859
      %p861 = scmp.eq.s32.totalorder %s122, 0
      %p862 = por %p860, %p861
      %s864 = sadd.s32 %s863, 1
      %p867 = scmp.eq.s32.totalorder %s116, 1
      %p868 = scmp.ne.s32.totalorder %s863, %s865
      %p869 = scmp.eq.s32.totalorder %s116, 0
      %p870 = por %p868, %p869
      %p871 = scmp.ne.s32.totalorder %s863, %s865
      %p872 = scmp.eq.s32.totalorder %s121, 1
      %p873 = por %p871, %p872
      %p874 = scmp.ne.s32.totalorder %s865, %s866
      %p875 = scmp.eq.s32.totalorder %s121, 0
      %p876 = por %p874, %p875
      %p877 = scmp.ne.s32.totalorder %s865, %s866
      %p878 = scmp.eq.s32.totalorder %s122, 1
      %p879 = por %p877, %p878
      %p881 = scmp.ne.s32.totalorder %s866, %s880
      %p882 = scmp.eq.s32.totalorder %s122, 0
      %p883 = por %p881, %p882
      %s885 = sadd.s32 %s884, 1
      %p888 = scmp.eq.s32.totalorder %s116, 1
      %p889 = scmp.ne.s32.totalorder %s884, %s886
      %p890 = scmp.eq.s32.totalorder %s116, 0
      %p891 = por %p889, %p890
      %p892 = scmp.ne.s32.totalorder %s884, %s886
      %p893 = scmp.eq.s32.totalorder %s121, 1
      %p894 = por %p892, %p893
      %p895 = scmp.ne.s32.totalorder %s886, %s887
      %p896 = scmp.eq.s32.totalorder %s121, 0
      %p897 = por %p895, %p896
      %p898 = scmp.ne.s32.totalorder %s886, %s887
      %p899 = scmp.eq.s32.totalorder %s122, 1
      %p900 = por %p898, %p899
      %p902 = scmp.ne.s32.totalorder %s887, %s901
      %p903 = scmp.eq.s32.totalorder %s122, 0
      %p904 = por %p902, %p903
      %s906 = sadd.s32 %s905, 1
      %p909 = scmp.eq.s32.totalorder %s116, 1
      %p910 = scmp.ne.s32.totalorder %s905, %s907
      %p911 = scmp.eq.s32.totalorder %s116, 0
      %p912 = por %p910, %p911
      %p913 = scmp.ne.s32.totalorder %s905, %s907
      %p914 = scmp.eq.s32.totalorder %s121, 1
      %p915 = por %p913, %p914
      %p916 = scmp.ne.s32.totalorder %s907, %s908
      %p917 = scmp.eq.s32.totalorder %s121, 0
      %p918 = por %p916, %p917
      %p919 = scmp.ne.s32.totalorder %s907, %s908
      %p920 = scmp.eq.s32.totalorder %s122, 1
      %p921 = por %p919, %p920
      %p923 = scmp.ne.s32.totalorder %s908, %s922
      %p924 = scmp.eq.s32.totalorder %s122, 0
      %p925 = por %p923, %p924
      %s926 = ssub.s32 %s116, %s123
      %p927 = scmp.eq.s32.totalorder %s926, 0
      %s929 = sadd.s32 %s928, 1
      %s930 = scalar_select %p927, %s928, %s929
      %p933 = pneg %p927
      %p934 = scmp.eq.s32.totalorder %s116, 1
      %p935 = por %p933, %p934
      %p936 = scmp.ne.s32.totalorder %s928, %s931
      %p937 = scmp.eq.s32.totalorder %s116, 0
      %p938 = por %p936, %p937
      %p939 = scmp.ne.s32.totalorder %s928, %s931
      %p940 = scmp.eq.s32.totalorder %s121, 1
      %p941 = por %p939, %p940
      %p942 = scmp.ne.s32.totalorder %s931, %s932
      %p943 = scmp.eq.s32.totalorder %s121, 0
      %p944 = por %p942, %p943
      %p945 = scmp.ne.s32.totalorder %s931, %s932
      %p946 = scmp.eq.s32.totalorder %s122, 1
      %p947 = por %p945, %p946
      %p949 = scmp.ne.s32.totalorder %s932, %s948
      %p950 = scmp.eq.s32.totalorder %s122, 0
      %p951 = por %p949, %p950
      %s952 = ssub.s32 %s116, %s123
      %p953 = scmp.eq.s32.totalorder %s952, 0
      %s955 = sadd.s32 %s954, 1
      %s956 = scalar_select %p953, %s954, %s955
      %p959 = pneg %p953
      %p960 = scmp.eq.s32.totalorder %s116, 1
      %p961 = por %p959, %p960
      %p962 = scmp.ne.s32.totalorder %s954, %s957
      %p963 = scmp.eq.s32.totalorder %s116, 0
      %p964 = por %p962, %p963
      %p965 = scmp.ne.s32.totalorder %s954, %s957
      %p966 = scmp.eq.s32.totalorder %s121, 1
      %p967 = por %p965, %p966
      %p968 = scmp.ne.s32.totalorder %s957, %s958
      %p969 = scmp.eq.s32.totalorder %s121, 0
      %p970 = por %p968, %p969
      %p971 = scmp.ne.s32.totalorder %s957, %s958
      %p972 = scmp.eq.s32.totalorder %s122, 1
      %p973 = por %p971, %p972
      %p975 = scmp.ne.s32.totalorder %s958, %s974
      %p976 = scmp.eq.s32.totalorder %s122, 0
      %p977 = por %p975, %p976
      %p978 = scmp.le.s32.totalorder 1, %s116
      %p979 = scmp.lt.s32.totalorder %s116, 3
      %p980 = pnand %p978, %p979
      %p981 = pneg %p980
      // Predicated region
      $region9: #{tpu_custom_call.1} parent=5 // pred_check
        _
      $region10: #{tpu_custom_call.1} parent=5 // pred_check_branch
        %983 = sbr.rel (%p980) target = $region12
      $region11: #{tpu_custom_call.1} parent=5 // pred_region
        %s984 = ssub.s32 %s116, 1
        // Predicated region
        $region13: #{tpu_custom_call.1} parent=11 // pred_check
          %p985 = pneg %p267
        $region14: #{tpu_custom_call.1} parent=11 // pred_check_branch
          %987 = sbr.rel (%p985) target = $region16
        $region15: #{tpu_custom_call.1} parent=11 // pred_region
          %s989 = ssub.s32 256, 256
          %990 = vsyncadd [#allocation17], %s989
          %s991 = sshll.u32 [#allocation18], 4
          %s992 = int_to_ptr.vmem [resolvable:$true] %s991
          %997 = dma.hbm_to_vmem [thread:$0]  %s13, 256, %s992, [#allocation17], 64, 64, 4
        $region16: #{tpu_custom_call.1} parent=11 // pred_fallthru
          _
        // Predicated region
        $region17: #{tpu_custom_call.1} parent=11 // pred_check
          %p998 = pneg %p288
        $region18: #{tpu_custom_call.1} parent=11 // pred_check_branch
          %1000 = sbr.rel (%p998) target = $region20
        $region19: #{tpu_custom_call.1} parent=11 // pred_region
          %s1002 = ssub.s32 16, 16
          %1003 = vsyncadd [#allocation20], %s1002
          %s1005 = sshll.u32 [#allocation19], 4
          %s1006 = int_to_ptr.vmem [resolvable:$true] %s1005
          %1008 = dma.hbm_to_vmem [thread:$0]  %s15, 16, %s1006, [#allocation20]
        $region20: #{tpu_custom_call.1} parent=11 // pred_fallthru
          _
        // Predicated region
        $region21: #{tpu_custom_call.1} parent=11 // pred_check
          %p1009 = pneg %p309
        $region22: #{tpu_custom_call.1} parent=11 // pred_check_branch
          %1011 = sbr.rel (%p1009) target = $region24
        $region23: #{tpu_custom_call.1} parent=11 // pred_region
          %s1013 = ssub.s32 16, 16
          %1014 = vsyncadd [#allocation20], %s1013
          %s1016 = sshll.u32 [#allocation21], 4
          %s1017 = int_to_ptr.vmem [resolvable:$true] %s1016
          %1019 = dma.hbm_to_vmem [thread:$0]  %s17, 16, %s1017, [#allocation20]
        $region24: #{tpu_custom_call.1} parent=11 // pred_fallthru
          _
        // Predicated region
        $region25: #{tpu_custom_call.1} parent=11 // pred_check
          %p1020 = pneg %p330
        $region26: #{tpu_custom_call.1} parent=11 // pred_check_branch
          %1022 = sbr.rel (%p1020) target = $region28
        $region27: #{tpu_custom_call.1} parent=11 // pred_region
          %s1024 = ssub.s32 16, 16
          %1025 = vsyncadd [#allocation23], %s1024
          %s1027 = sshll.u32 [#allocation22], 4
          %s1028 = int_to_ptr.vmem [resolvable:$true] %s1027
          %1030 = dma.hbm_to_vmem [thread:$0]  %s19, 16, %s1028, [#allocation23]
        $region28: #{tpu_custom_call.1} parent=11 // pred_fallthru
          _
        // Predicated region
        $region29: #{tpu_custom_call.1} parent=11 // pred_check
          %p1031 = pneg %p351
        $region30: #{tpu_custom_call.1} parent=11 // pred_check_branch
          %1033 = sbr.rel (%p1031) target = $region32
        $region31: #{tpu_custom_call.1} parent=11 // pred_region
          _
        $region32: #{tpu_custom_call.1} parent=11 // pred_fallthru
          _
        // Predicated region
        $region33: #{tpu_custom_call.1} parent=11 // pred_check
          %p1034 = pneg %p372
        $region34: #{tpu_custom_call.1} parent=11 // pred_check_branch
          %1036 = sbr.rel (%p1034) target = $region36
        $region35: #{tpu_custom_call.1} parent=11 // pred_region
          %s1038 = ssub.s32 16, 16
          %1039 = vsyncadd [#allocation23], %s1038
          %s1041 = sshll.u32 [#allocation24], 4
          %s1042 = int_to_ptr.vmem [resolvable:$true] %s1041
          %1044 = dma.hbm_to_vmem [thread:$0]  %s23, 16, %s1042, [#allocation23]
        $region36: #{tpu_custom_call.1} parent=11 // pred_fallthru
          _
        // Predicated region
        $region37: #{tpu_custom_call.1} parent=11 // pred_check
          %p1045 = pneg %p393
        $region38: #{tpu_custom_call.1} parent=11 // pred_check_branch
          %1047 = sbr.rel (%p1045) target = $region40
        $region39: #{tpu_custom_call.1} parent=11 // pred_region
          %s1049 = ssub.s32 32, 32
          %1050 = vsyncadd [#allocation26], %s1049
          %s1052 = sshll.u32 [#allocation25], 4
          %s1053 = int_to_ptr.vmem [resolvable:$true] %s1052
          %1055 = dma.hbm_to_vmem [thread:$0]  %s25, 32, %s1053, [#allocation26]
        $region40: #{tpu_custom_call.1} parent=11 // pred_fallthru
          _
        // Predicated region
        $region41: #{tpu_custom_call.1} parent=11 // pred_check
          %p1056 = pneg %p414
        $region42: #{tpu_custom_call.1} parent=11 // pred_check_branch
          %1058 = sbr.rel (%p1056) target = $region44
        $region43: #{tpu_custom_call.1} parent=11 // pred_region
          %s1060 = ssub.s32 32, 32
          %1061 = vsyncadd [#allocation26], %s1060
          %s1063 = sshll.u32 [#allocation27], 4
          %s1064 = int_to_ptr.vmem [resolvable:$true] %s1063
          %1066 = dma.hbm_to_vmem [thread:$0]  %s27, 32, %s1064, [#allocation26]
        $region44: #{tpu_custom_call.1} parent=11 // pred_fallthru
          _
        // Predicated region
        $region45: #{tpu_custom_call.1} parent=11 // pred_check
          %p1067 = pneg %p435
        $region46: #{tpu_custom_call.1} parent=11 // pred_check_branch
          %1069 = sbr.rel (%p1067) target = $region48
        $region47: #{tpu_custom_call.1} parent=11 // pred_region
          _
        $region48: #{tpu_custom_call.1} parent=11 // pred_fallthru
          _
        // Predicated region
        $region49: #{tpu_custom_call.1} parent=11 // pred_check
          %p1070 = pneg %p456
        $region50: #{tpu_custom_call.1} parent=11 // pred_check_branch
          %1072 = sbr.rel (%p1070) target = $region52
        $region51: #{tpu_custom_call.1} parent=11 // pred_region
          %s1074 = ssub.s32 32, 32
          %1075 = vsyncadd [#allocation29], %s1074
          %s1077 = sshll.u32 [#allocation28], 4
          %s1078 = int_to_ptr.vmem [resolvable:$true] %s1077
          %1080 = dma.hbm_to_vmem [thread:$0]  %s31, 32, %s1078, [#allocation29]
        $region52: #{tpu_custom_call.1} parent=11 // pred_fallthru
          _
        // Predicated region
        $region53: #{tpu_custom_call.1} parent=11 // pred_check
          %p1081 = pneg %p477
        $region54: #{tpu_custom_call.1} parent=11 // pred_check_branch
          %1083 = sbr.rel (%p1081) target = $region56
        $region55: #{tpu_custom_call.1} parent=11 // pred_region
          _
        $region56: #{tpu_custom_call.1} parent=11 // pred_fallthru
          _
        // Predicated region
        $region57: #{tpu_custom_call.1} parent=11 // pred_check
          %p1084 = pneg %p498
        $region58: #{tpu_custom_call.1} parent=11 // pred_check_branch
          %1086 = sbr.rel (%p1084) target = $region60
        $region59: #{tpu_custom_call.1} parent=11 // pred_region
          %s1088 = ssub.s32 16, 16
          %1089 = vsyncadd [#allocation29], %s1088
          %s1091 = sshll.u32 [#allocation30], 4
          %s1092 = int_to_ptr.vmem [resolvable:$true] %s1091
          %1094 = dma.hbm_to_vmem [thread:$0]  %s35, 16, %s1092, [#allocation29]
        $region60: #{tpu_custom_call.1} parent=11 // pred_fallthru
          _
        // Predicated region
        $region61: #{tpu_custom_call.1} parent=11 // pred_check
          %p1095 = pneg %p519
        $region62: #{tpu_custom_call.1} parent=11 // pred_check_branch
          %1097 = sbr.rel (%p1095) target = $region64
        $region63: #{tpu_custom_call.1} parent=11 // pred_region
          %s1099 = ssub.s32 16, 16
          %1100 = vsyncadd [#allocation32], %s1099
          %s1102 = sshll.u32 [#allocation31], 4
          %s1103 = int_to_ptr.vmem [resolvable:$true] %s1102
          %1105 = dma.hbm_to_vmem [thread:$0]  %s37, 16, %s1103, [#allocation32]
        $region64: #{tpu_custom_call.1} parent=11 // pred_fallthru
          _
        // Predicated region
        $region65: #{tpu_custom_call.1} parent=11 // pred_check
          %p1106 = pneg %p540
        $region66: #{tpu_custom_call.1} parent=11 // pred_check_branch
          %1108 = sbr.rel (%p1106) target = $region68
        $region67: #{tpu_custom_call.1} parent=11 // pred_region
          _
        $region68: #{tpu_custom_call.1} parent=11 // pred_fallthru
          _
        // Predicated region
        $region69: #{tpu_custom_call.1} parent=11 // pred_check
          %p1109 = pneg %p561
        $region70: #{tpu_custom_call.1} parent=11 // pred_check_branch
          %1111 = sbr.rel (%p1109) target = $region72
        $region71: #{tpu_custom_call.1} parent=11 // pred_region
          _
        $region72: #{tpu_custom_call.1} parent=11 // pred_fallthru
          _
        // Predicated region
        $region73: #{tpu_custom_call.1} parent=11 // pred_check
          %p1112 = pneg %p582
        $region74: #{tpu_custom_call.1} parent=11 // pred_check_branch
          %1114 = sbr.rel (%p1112) target = $region76
        $region75: #{tpu_custom_call.1} parent=11 // pred_region
          %s1116 = ssub.s32 16, 16
          %1117 = vsyncadd [#allocation32], %s1116
          %s1119 = sshll.u32 [#allocation33], 4
          %s1120 = int_to_ptr.vmem [resolvable:$true] %s1119
          %1122 = dma.hbm_to_vmem [thread:$0]  %s43, 16, %s1120, [#allocation32]
        $region76: #{tpu_custom_call.1} parent=11 // pred_fallthru
          _
        // Predicated region
        $region77: #{tpu_custom_call.1} parent=11 // pred_check
          %p1123 = pneg %p603
        $region78: #{tpu_custom_call.1} parent=11 // pred_check_branch
          %1125 = sbr.rel (%p1123) target = $region80
        $region79: #{tpu_custom_call.1} parent=11 // pred_region
          _
        $region80: #{tpu_custom_call.1} parent=11 // pred_fallthru
          _
        // Predicated region
        $region81: #{tpu_custom_call.1} parent=11 // pred_check
          %p1126 = pneg %p624
        $region82: #{tpu_custom_call.1} parent=11 // pred_check_branch
          %1128 = sbr.rel (%p1126) target = $region84
        $region83: #{tpu_custom_call.1} parent=11 // pred_region
          %s1130 = ssub.s32 16, 16
          %1131 = vsyncadd [#allocation35], %s1130
          %s1133 = sshll.u32 [#allocation34], 4
          %s1134 = int_to_ptr.vmem [resolvable:$true] %s1133
          %1136 = dma.hbm_to_vmem [thread:$0]  %s47, 16, %s1134, [#allocation35]
        $region84: #{tpu_custom_call.1} parent=11 // pred_fallthru
          _
        // Predicated region
        $region85: #{tpu_custom_call.1} parent=11 // pred_check
          %p1137 = pneg %p645
        $region86: #{tpu_custom_call.1} parent=11 // pred_check_branch
          %1139 = sbr.rel (%p1137) target = $region88
        $region87: #{tpu_custom_call.1} parent=11 // pred_region
          %s1141 = ssub.s32 16, 16
          %1142 = vsyncadd [#allocation35], %s1141
          %s1144 = sshll.u32 [#allocation36], 4
          %s1145 = int_to_ptr.vmem [resolvable:$true] %s1144
          %1147 = dma.hbm_to_vmem [thread:$0]  %s49, 16, %s1145, [#allocation35]
        $region88: #{tpu_custom_call.1} parent=11 // pred_fallthru
          _
        // Predicated region
        $region89: #{tpu_custom_call.1} parent=11 // pred_check
          %p1148 = pneg %p666
        $region90: #{tpu_custom_call.1} parent=11 // pred_check_branch
          %1150 = sbr.rel (%p1148) target = $region92
        $region91: #{tpu_custom_call.1} parent=11 // pred_region
          _
        $region92: #{tpu_custom_call.1} parent=11 // pred_fallthru
          _
        // Predicated region
        $region93: #{tpu_custom_call.1} parent=11 // pred_check
          %p1151 = pneg %p687
        $region94: #{tpu_custom_call.1} parent=11 // pred_check_branch
          %1153 = sbr.rel (%p1151) target = $region96
        $region95: #{tpu_custom_call.1} parent=11 // pred_region
          _
        $region96: #{tpu_custom_call.1} parent=11 // pred_fallthru
          _
        // Predicated region
        $region97: #{tpu_custom_call.1} parent=11 // pred_check
          %p1154 = pneg %p708
        $region98: #{tpu_custom_call.1} parent=11 // pred_check_branch
          %1156 = sbr.rel (%p1154) target = $region100
        $region99: #{tpu_custom_call.1} parent=11 // pred_region
          _
        $region100: #{tpu_custom_call.1} parent=11 // pred_fallthru
          _
        // Predicated region
        $region101: #{tpu_custom_call.1} parent=11 // pred_check
          %p1157 = pneg %p729
        $region102: #{tpu_custom_call.1} parent=11 // pred_check_branch
          %1159 = sbr.rel (%p1157) target = $region104
        $region103: #{tpu_custom_call.1} parent=11 // pred_region
          %s1161 = ssub.s32 4608, 4608
          %1162 = vsyncadd [#allocation38], %s1161
          %s1163 = sshll.u32 [#allocation37], 4
          %s1164 = int_to_ptr.vmem [resolvable:$true] %s1163
          %1169 = dma.hbm_to_vmem [thread:$0]  %s57, 4608, %s1164, [#allocation38], 64, 64, 4
        $region104: #{tpu_custom_call.1} parent=11 // pred_fallthru
          _
        // Predicated region
        $region105: #{tpu_custom_call.1} parent=11 // pred_check
          %p1170 = pneg %p750
        $region106: #{tpu_custom_call.1} parent=11 // pred_check_branch
          %1172 = sbr.rel (%p1170) target = $region108
        $region107: #{tpu_custom_call.1} parent=11 // pred_region
          _
        $region108: #{tpu_custom_call.1} parent=11 // pred_fallthru
          _
        // Predicated region
        $region109: #{tpu_custom_call.1} parent=11 // pred_check
          %p1173 = pneg %p771
        $region110: #{tpu_custom_call.1} parent=11 // pred_check_branch
          %1175 = sbr.rel (%p1173) target = $region112
        $region111: #{tpu_custom_call.1} parent=11 // pred_region
          _
        $region112: #{tpu_custom_call.1} parent=11 // pred_fallthru
          _
        // Predicated region
        $region113: #{tpu_custom_call.1} parent=11 // pred_check
          %p1176 = pneg %p792
        $region114: #{tpu_custom_call.1} parent=11 // pred_check_branch
          %1178 = sbr.rel (%p1176) target = $region116
        $region115: #{tpu_custom_call.1} parent=11 // pred_region
          _
        $region116: #{tpu_custom_call.1} parent=11 // pred_fallthru
          _
        // Predicated region
        $region117: #{tpu_custom_call.1} parent=11 // pred_check
          %p1179 = pneg %p813
        $region118: #{tpu_custom_call.1} parent=11 // pred_check_branch
          %1181 = sbr.rel (%p1179) target = $region120
        $region119: #{tpu_custom_call.1} parent=11 // pred_region
          %s1183 = ssub.s32 4608, 4608
          %1184 = vsyncadd [#allocation38], %s1183
          %s1185 = sshll.u32 [#allocation39], 4
          %s1186 = int_to_ptr.vmem [resolvable:$true] %s1185
          %1191 = dma.hbm_to_vmem [thread:$0]  %s65, 4608, %s1186, [#allocation38], 64, 64, 4
        $region120: #{tpu_custom_call.1} parent=11 // pred_fallthru
          _
        // Predicated region
        $region121: #{tpu_custom_call.1} parent=11 // pred_check
          %p1192 = pneg %p834
        $region122: #{tpu_custom_call.1} parent=11 // pred_check_branch
          %1194 = sbr.rel (%p1192) target = $region124
        $region123: #{tpu_custom_call.1} parent=11 // pred_region
          _
        $region124: #{tpu_custom_call.1} parent=11 // pred_fallthru
          _
        // Predicated region
        $region125: #{tpu_custom_call.1} parent=11 // pred_check
          %p1195 = pneg %p855
        $region126: #{tpu_custom_call.1} parent=11 // pred_check_branch
          %1197 = sbr.rel (%p1195) target = $region128
        $region127: #{tpu_custom_call.1} parent=11 // pred_region
          _
        $region128: #{tpu_custom_call.1} parent=11 // pred_fallthru
          _
        // Predicated region
        $region129: #{tpu_custom_call.1} parent=11 // pred_check
          %p1198 = pneg %p876
        $region130: #{tpu_custom_call.1} parent=11 // pred_check_branch
          %1200 = sbr.rel (%p1198) target = $region132
        $region131: #{tpu_custom_call.1} parent=11 // pred_region
          _
        $region132: #{tpu_custom_call.1} parent=11 // pred_fallthru
          _
        // Predicated region
        $region133: #{tpu_custom_call.1} parent=11 // pred_check
          %p1201 = pneg %p897
        $region134: #{tpu_custom_call.1} parent=11 // pred_check_branch
          %1203 = sbr.rel (%p1201) target = $region136
        $region135: #{tpu_custom_call.1} parent=11 // pred_region
          _
        $region136: #{tpu_custom_call.1} parent=11 // pred_fallthru
          _
        // Predicated region
        $region137: #{tpu_custom_call.1} parent=11 // pred_check
          %p1204 = pneg %p918
        $region138: #{tpu_custom_call.1} parent=11 // pred_check_branch
          %1206 = sbr.rel (%p1204) target = $region140
        $region139: #{tpu_custom_call.1} parent=11 // pred_region
          _
        $region140: #{tpu_custom_call.1} parent=11 // pred_fallthru
          _
      $region12: #{tpu_custom_call.1} parent=5 // pred_fallthru
        _
      %p1207 = scmp.lt.s32.totalorder %s116, 2
      // Predicated region
      $region141: #{tpu_custom_call.1} parent=5 // pred_check
        %p1208 = pneg %p1207
      $region142: #{tpu_custom_call.1} parent=5 // pred_check_branch
        %1210 = sbr.rel (%p1208) target = $region144
      $region143: #{tpu_custom_call.1} parent=5 // pred_region
        // Predicated region
        $region145: #{tpu_custom_call.1} parent=143 // pred_check
          %p1211 = pneg %p136
        $region146: #{tpu_custom_call.1} parent=143 // pred_check_branch
          %1213 = sbr.rel (%p1211) target = $region148
        $region147: #{tpu_custom_call.1} parent=143 // pred_region
          %s1214 = sand.u32 %s126, 1
          %s1215 = scalar_lea.sflag [#allocation11], %s1214
          %s1216 = sand.u32 %s126, 1
          %s1217 = smul.addr %s1216, 8
          %s1218 = scalar_lea.vmem [#allocation10], %s1217
          %s1220 = ssub.s32 128, 128
          %1221 = vsyncadd %s1215, %s1220
          %s1222 = smul.addr %s116, 128
          %s1223 = scalar_lea.hbm %s3, %s1222
          %s1225 = sshll.u32 %s1218, 4
          %s1226 = int_to_ptr.vmem [resolvable:$true] %s1225
          %1228 = dma.hbm_to_vmem [thread:$0]  %s1223, 128, %s1226, %s1215
        $region148: #{tpu_custom_call.1} parent=143 // pred_fallthru
          _
        // Predicated region
        $region149: #{tpu_custom_call.1} parent=143 // pred_check
          %p1229 = pneg %p162
        $region150: #{tpu_custom_call.1} parent=143 // pred_check_branch
          %1231 = sbr.rel (%p1229) target = $region152
        $region151: #{tpu_custom_call.1} parent=143 // pred_region
          %s1232 = sand.u32 %s116, 1
          %s1233 = scalar_lea.sflag [#allocation14], %s1232
          %s1234 = sand.u32 %s152, 1
          %s1235 = smul.addr %s1234, 8
          %s1236 = scalar_lea.vmem [#allocation13], %s1235
          %s1238 = ssub.s32 128, 128
          %1239 = vsyncadd %s1233, %s1238
          %s1240 = smul.addr %s116, 128
          %s1241 = scalar_lea.hbm %s5, %s1240
          %s1243 = sshll.u32 %s1236, 4
          %s1244 = int_to_ptr.vmem [resolvable:$true] %s1243
          %1246 = dma.hbm_to_vmem [thread:$0]  %s1241, 128, %s1244, %s1233
        $region152: #{tpu_custom_call.1} parent=143 // pred_fallthru
          _
        // Predicated region
        $region153: #{tpu_custom_call.1} parent=143 // pred_check
          %p1247 = pneg %p188
        $region154: #{tpu_custom_call.1} parent=143 // pred_check_branch
          %1249 = sbr.rel (%p1247) target = $region156
        $region155: #{tpu_custom_call.1} parent=143 // pred_region
          %p1250 = scmp.lt.s32.totalorder %s116, 1
          %s1251 = scalar_select %p1250, %s116, 1
          %s1252 = smul.addr %s1251, 8
          %s1253 = scalar_lea.vmem %s7, %s1252
        $region156: #{tpu_custom_call.1} parent=143 // pred_fallthru
          _
        // Predicated region
        $region157: #{tpu_custom_call.1} parent=143 // pred_check
          %p1254 = pneg %p214
        $region158: #{tpu_custom_call.1} parent=143 // pred_check_branch
          %1256 = sbr.rel (%p1254) target = $region160
        $region159: #{tpu_custom_call.1} parent=143 // pred_region
          %s1257 = sand.u32 %s116, 1
          %s1258 = scalar_lea.sflag [#allocation14], %s1257
          %s1259 = sand.u32 %s204, 1
          %s1260 = scalar_lea.vmem [#allocation15], %s1259
          %s1262 = ssub.s32 16, 16
          %1263 = vsyncadd %s1258, %s1262
          %s1264 = smul.addr %s116, 16
          %s1265 = scalar_lea.hbm %s9, %s1264
          %s1267 = sshll.u32 %s1260, 4
          %s1268 = int_to_ptr.vmem [resolvable:$true] %s1267
          %1270 = dma.hbm_to_vmem [thread:$0]  %s1265, 16, %s1268, %s1258
        $region160: #{tpu_custom_call.1} parent=143 // pred_fallthru
          _
        // Predicated region
        $region161: #{tpu_custom_call.1} parent=143 // pred_check
          %p1271 = pneg %p240
        $region162: #{tpu_custom_call.1} parent=143 // pred_check_branch
          %1273 = sbr.rel (%p1271) target = $region164
        $region163: #{tpu_custom_call.1} parent=143 // pred_region
          %s1274 = sand.u32 %s116, 1
          %s1275 = scalar_lea.sflag [#allocation17], %s1274
          %s1276 = sand.u32 %s230, 1
          %s1277 = smul.addr %s1276, 8
          %s1278 = scalar_lea.vmem [#allocation16], %s1277
          %s1280 = ssub.s32 128, 128
          %1281 = vsyncadd %s1275, %s1280
          %s1282 = smul.addr %s116, 128
          %s1283 = scalar_lea.hbm %s11, %s1282
          %s1285 = sshll.u32 %s1278, 4
          %s1286 = int_to_ptr.vmem [resolvable:$true] %s1285
          %1288 = dma.hbm_to_vmem [thread:$0]  %s1283, 128, %s1286, %s1275
        $region164: #{tpu_custom_call.1} parent=143 // pred_fallthru
          _
      $region144: #{tpu_custom_call.1} parent=5 // pred_fallthru
        _
      %p1289 = scmp.le.s32.totalorder 1, %s116
      %p1290 = scmp.lt.s32.totalorder %s116, 3
      %p1291 = pnand %p1289, %p1290
      %p1292 = pneg %p1291
      // Predicated region
      $region165: #{tpu_custom_call.1} parent=5 // pred_check
        _
      $region166: #{tpu_custom_call.1} parent=5 // pred_check_branch
        %1294 = sbr.rel (%p1291) target = $region168
      $region167: #{tpu_custom_call.1} parent=5 // pred_region
        %s1295 = ssub.s32 %s116, 1
        %s1296 = sand.u32 %s129, 1
        %s1297 = scalar_lea.sflag [#allocation11], %s1296
        %s1298 = sand.u32 %s129, 1
        %s1299 = smul.addr %s1298, 8
        %s1300 = scalar_lea.vmem [#allocation10], %s1299
        // Predicated region
        $region169: #{tpu_custom_call.1} parent=167 // pred_check
          %p1301 = pneg %p142
        $region170: #{tpu_custom_call.1} parent=167 // pred_check_branch
          %1303 = sbr.rel (%p1301) target = $region172
        $region171: #{tpu_custom_call.1} parent=167 // pred_region
          %1304 = dma.done %s1297, 128
        $region172: #{tpu_custom_call.1} parent=167 // pred_fallthru
          _
        %s1305 = sand.u32 %s121, 1
        %s1306 = scalar_lea.sflag [#allocation14], %s1305
        %s1307 = sand.u32 %s155, 1
        %s1308 = smul.addr %s1307, 8
        %s1309 = scalar_lea.vmem [#allocation13], %s1308
        // Predicated region
        $region173: #{tpu_custom_call.1} parent=167 // pred_check
          %p1310 = pneg %p168
        $region174: #{tpu_custom_call.1} parent=167 // pred_check_branch
          %1312 = sbr.rel (%p1310) target = $region176
        $region175: #{tpu_custom_call.1} parent=167 // pred_region
          %1313 = dma.done %s1306, 128
        $region176: #{tpu_custom_call.1} parent=167 // pred_fallthru
          _
        %s1314 = sand.u32 %s121, 1
        %s1315 = scalar_lea.sflag [#allocation14], %s1314
        %s1316 = sand.u32 %s207, 1
        %s1317 = scalar_lea.vmem [#allocation15], %s1316
        // Predicated region
        $region177: #{tpu_custom_call.1} parent=167 // pred_check
          %p1318 = pneg %p220
        $region178: #{tpu_custom_call.1} parent=167 // pred_check_branch
          %1320 = sbr.rel (%p1318) target = $region180
        $region179: #{tpu_custom_call.1} parent=167 // pred_region
          %1321 = dma.done %s1315, 16
        $region180: #{tpu_custom_call.1} parent=167 // pred_fallthru
          _
        %s1322 = sand.u32 %s121, 1
        %s1323 = scalar_lea.sflag [#allocation17], %s1322
        %s1324 = sand.u32 %s233, 1
        %s1325 = smul.addr %s1324, 8
        %s1326 = scalar_lea.vmem [#allocation16], %s1325
        // Predicated region
        $region181: #{tpu_custom_call.1} parent=167 // pred_check
          %p1327 = pneg %p246
        $region182: #{tpu_custom_call.1} parent=167 // pred_check_branch
          %1329 = sbr.rel (%p1327) target = $region184
        $region183: #{tpu_custom_call.1} parent=167 // pred_region
          %1330 = dma.done %s1323, 128
        $region184: #{tpu_custom_call.1} parent=167 // pred_fallthru
          _
        // Predicated region
        $region185: #{tpu_custom_call.1} parent=167 // pred_check
          %p1331 = pneg %p267
        $region186: #{tpu_custom_call.1} parent=167 // pred_check_branch
          %1333 = sbr.rel (%p1331) target = $region188
        $region187: #{tpu_custom_call.1} parent=167 // pred_region
          %1334 = dma.done [#allocation17], 256
        $region188: #{tpu_custom_call.1} parent=167 // pred_fallthru
          _
        // Predicated region
        $region189: #{tpu_custom_call.1} parent=167 // pred_check
          %p1335 = pneg %p288
        $region190: #{tpu_custom_call.1} parent=167 // pred_check_branch
          %1337 = sbr.rel (%p1335) target = $region192
        $region191: #{tpu_custom_call.1} parent=167 // pred_region
          %1338 = dma.done [#allocation20], 16
        $region192: #{tpu_custom_call.1} parent=167 // pred_fallthru
          _
        // Predicated region
        $region193: #{tpu_custom_call.1} parent=167 // pred_check
          %p1339 = pneg %p309
        $region194: #{tpu_custom_call.1} parent=167 // pred_check_branch
          %1341 = sbr.rel (%p1339) target = $region196
        $region195: #{tpu_custom_call.1} parent=167 // pred_region
          %1342 = dma.done [#allocation20], 16
        $region196: #{tpu_custom_call.1} parent=167 // pred_fallthru
          _
        // Predicated region
        $region197: #{tpu_custom_call.1} parent=167 // pred_check
          %p1343 = pneg %p330
        $region198: #{tpu_custom_call.1} parent=167 // pred_check_branch
          %1345 = sbr.rel (%p1343) target = $region200
        $region199: #{tpu_custom_call.1} parent=167 // pred_region
          %1346 = dma.done [#allocation23], 16
        $region200: #{tpu_custom_call.1} parent=167 // pred_fallthru
          _
        // Predicated region
        $region201: #{tpu_custom_call.1} parent=167 // pred_check
          %p1347 = pneg %p372
        $region202: #{tpu_custom_call.1} parent=167 // pred_check_branch
          %1349 = sbr.rel (%p1347) target = $region204
        $region203: #{tpu_custom_call.1} parent=167 // pred_region
          %1350 = dma.done [#allocation23], 16
        $region204: #{tpu_custom_call.1} parent=167 // pred_fallthru
          _
        // Predicated region
        $region205: #{tpu_custom_call.1} parent=167 // pred_check
          %p1351 = pneg %p393
        $region206: #{tpu_custom_call.1} parent=167 // pred_check_branch
          %1353 = sbr.rel (%p1351) target = $region208
        $region207: #{tpu_custom_call.1} parent=167 // pred_region
          %1354 = dma.done [#allocation26], 32
        $region208: #{tpu_custom_call.1} parent=167 // pred_fallthru
          _
        // Predicated region
        $region209: #{tpu_custom_call.1} parent=167 // pred_check
          %p1355 = pneg %p414
        $region210: #{tpu_custom_call.1} parent=167 // pred_check_branch
          %1357 = sbr.rel (%p1355) target = $region212
        $region211: #{tpu_custom_call.1} parent=167 // pred_region
          %1358 = dma.done [#allocation26], 32
        $region212: #{tpu_custom_call.1} parent=167 // pred_fallthru
          _
        // Predicated region
        $region213: #{tpu_custom_call.1} parent=167 // pred_check
          %p1359 = pneg %p456
        $region214: #{tpu_custom_call.1} parent=167 // pred_check_branch
          %1361 = sbr.rel (%p1359) target = $region216
        $region215: #{tpu_custom_call.1} parent=167 // pred_region
          %1362 = dma.done [#allocation29], 32
        $region216: #{tpu_custom_call.1} parent=167 // pred_fallthru
          _
        // Predicated region
        $region217: #{tpu_custom_call.1} parent=167 // pred_check
          %p1363 = pneg %p498
        $region218: #{tpu_custom_call.1} parent=167 // pred_check_branch
          %1365 = sbr.rel (%p1363) target = $region220
        $region219: #{tpu_custom_call.1} parent=167 // pred_region
          %1366 = dma.done [#allocation29], 16
        $region220: #{tpu_custom_call.1} parent=167 // pred_fallthru
          _
        // Predicated region
        $region221: #{tpu_custom_call.1} parent=167 // pred_check
          %p1367 = pneg %p519
        $region222: #{tpu_custom_call.1} parent=167 // pred_check_branch
          %1369 = sbr.rel (%p1367) target = $region224
        $region223: #{tpu_custom_call.1} parent=167 // pred_region
          %1370 = dma.done [#allocation32], 16
        $region224: #{tpu_custom_call.1} parent=167 // pred_fallthru
          _
        // Predicated region
        $region225: #{tpu_custom_call.1} parent=167 // pred_check
          %p1371 = pneg %p582
        $region226: #{tpu_custom_call.1} parent=167 // pred_check_branch
          %1373 = sbr.rel (%p1371) target = $region228
        $region227: #{tpu_custom_call.1} parent=167 // pred_region
          %1374 = dma.done [#allocation32], 16
        $region228: #{tpu_custom_call.1} parent=167 // pred_fallthru
          _
        // Predicated region
        $region229: #{tpu_custom_call.1} parent=167 // pred_check
          %p1375 = pneg %p624
        $region230: #{tpu_custom_call.1} parent=167 // pred_check_branch
          %1377 = sbr.rel (%p1375) target = $region232
        $region231: #{tpu_custom_call.1} parent=167 // pred_region
          %1378 = dma.done [#allocation35], 16
        $region232: #{tpu_custom_call.1} parent=167 // pred_fallthru
          _
        // Predicated region
        $region233: #{tpu_custom_call.1} parent=167 // pred_check
          %p1379 = pneg %p645
        $region234: #{tpu_custom_call.1} parent=167 // pred_check_branch
          %1381 = sbr.rel (%p1379) target = $region236
        $region235: #{tpu_custom_call.1} parent=167 // pred_region
          %1382 = dma.done [#allocation35], 16
        $region236: #{tpu_custom_call.1} parent=167 // pred_fallthru
          _
        // Predicated region
        $region237: #{tpu_custom_call.1} parent=167 // pred_check
          %p1383 = pneg %p729
        $region238: #{tpu_custom_call.1} parent=167 // pred_check_branch
          %1385 = sbr.rel (%p1383) target = $region240
        $region239: #{tpu_custom_call.1} parent=167 // pred_region
          %1386 = dma.done [#allocation38], 4608
        $region240: #{tpu_custom_call.1} parent=167 // pred_fallthru
          _
        // Predicated region
        $region241: #{tpu_custom_call.1} parent=167 // pred_check
          %p1387 = pneg %p813
        $region242: #{tpu_custom_call.1} parent=167 // pred_check_branch
          %1389 = sbr.rel (%p1387) target = $region244
        $region243: #{tpu_custom_call.1} parent=167 // pred_region
          %1390 = dma.done [#allocation38], 4608
        $region244: #{tpu_custom_call.1} parent=167 // pred_fallthru
          _
        %s1391 = sand.u32 %s129, 1
        %s1392 = scalar_lea.sflag [#allocation11], %s1391
        %s1393 = sand.u32 %s129, 1
        %s1394 = smul.addr %s1393, 8
        %s1395 = scalar_lea.vmem [#allocation10], %s1394
        %p1396 = pneg %p142
        %p1397 = pneg %p139
        %s1398 = sand.u32 %s121, 1
        %s1399 = scalar_lea.sflag [#allocation14], %s1398
        %s1400 = sand.u32 %s155, 1
        %s1401 = smul.addr %s1400, 8
        %s1402 = scalar_lea.vmem [#allocation13], %s1401
        %p1403 = pneg %p168
        %p1404 = pneg %p165
        %p1405 = scmp.lt.s32.totalorder %s121, 1
        %s1406 = scalar_select %p1405, %s121, 1
        %s1407 = smul.addr %s1406, 8
        %s1408 = scalar_lea.vmem %s7, %s1407
        %p1409 = pneg %p194
        %p1410 = pneg %p191
        %s1411 = sand.u32 %s121, 1
        %s1412 = scalar_lea.sflag [#allocation14], %s1411
        %s1413 = sand.u32 %s207, 1
        %s1414 = scalar_lea.vmem [#allocation15], %s1413
        %p1415 = pneg %p220
        %p1416 = pneg %p217
        %s1417 = sand.u32 %s121, 1
        %s1418 = scalar_lea.sflag [#allocation17], %s1417
        %s1419 = sand.u32 %s233, 1
        %s1420 = smul.addr %s1419, 8
        %s1421 = scalar_lea.vmem [#allocation16], %s1420
        %p1422 = pneg %p246
        %p1423 = pneg %p243
        %p1424 = pneg %p267
        %p1425 = pneg %p264
        %p1426 = pneg %p288
        %p1427 = pneg %p285
        %p1428 = pneg %p309
        %p1429 = pneg %p306
        %p1430 = pneg %p330
        %p1431 = pneg %p327
        %p1432 = pneg %p351
        %p1433 = pneg %p348
        %p1434 = pneg %p372
        %p1435 = pneg %p369
        %p1436 = pneg %p393
        %p1437 = pneg %p390
        %p1438 = pneg %p414
        %p1439 = pneg %p411
        %p1440 = pneg %p435
        %p1441 = pneg %p432
        %p1442 = pneg %p456
        %p1443 = pneg %p453
        %p1444 = pneg %p477
        %p1445 = pneg %p474
        %p1446 = pneg %p498
        %p1447 = pneg %p495
        %p1448 = pneg %p519
        %p1449 = pneg %p516
        %p1450 = pneg %p540
        %p1451 = pneg %p537
        %p1452 = pneg %p561
        %p1453 = pneg %p558
        %p1454 = pneg %p582
        %p1455 = pneg %p579
        %p1456 = pneg %p603
        %p1457 = pneg %p600
        %p1458 = pneg %p624
        %p1459 = pneg %p621
        %p1460 = pneg %p645
        %p1461 = pneg %p642
        %p1462 = pneg %p666
        %p1463 = pneg %p663
        %p1464 = pneg %p687
        %p1465 = pneg %p684
        %p1466 = pneg %p708
        %p1467 = pneg %p705
        %p1468 = pneg %p729
        %p1469 = pneg %p726
        %p1470 = pneg %p750
        %p1471 = pneg %p747
        %p1472 = pneg %p771
        %p1473 = pneg %p768
        %p1474 = pneg %p792
        %p1475 = pneg %p789
        %p1476 = pneg %p813
        %p1477 = pneg %p810
        %p1478 = pneg %p834
        %p1479 = pneg %p831
        %p1480 = pneg %p855
        %p1481 = pneg %p852
        %p1482 = pneg %p876
        %p1483 = pneg %p873
        %p1484 = pneg %p897
        %p1485 = pneg %p894
        %p1486 = pneg %p918
        %p1487 = pneg %p915
        %p1488 = pneg %p944
        %p1489 = pneg %p941
        %s1490 = sand.u32 %s931, 1
        %s1491 = scalar_lea.sflag [#allocation12], %s1490
        %s1492 = sand.u32 %s931, 1
        %s1493 = smul.addr %s1492, 8
        %s1494 = scalar_lea.vmem [#allocation40], %s1493
        %p1495 = pneg %p970
        %p1496 = pneg %p967
        %s1497 = sand.u32 %s957, 1
        %s1498 = scalar_lea.sflag [#allocation42], %s1497
        %s1499 = sand.u32 %s957, 1
        %s1500 = scalar_lea.vmem [#allocation41], %s1499
        %p1501 = scmp.lt.s32.totalorder %s121, 1
        %s1502 = scalar_select %p1501, %s121, 1
        %s1503 = smul.addr %s1502, 8
        %s1504 = scalar_lea.vmem %s7, %s1503
        %vm1506 = vcmask 254976
        %1507 = vst.msk [vmem:[#allocation2] sm:$0x3] %vm1506, 0.0
        %1508 = vst.msk [vmem:[#allocation2 + $0xa] sm:$0x3] %vm1506, 0.0
        %vm1509 = vcmask 123904
        %1510 = vst.msk [vmem:[#allocation3] sm:$0x3] %vm1509, 0.0
        %1511 = vst.msk [vmem:[#allocation3 + $0xa] sm:$0x3] %vm1509, 0.0
        %vm1512 = vcmask 58368
        %1513 = vst.msk [vmem:[#allocation4] sm:$0x3] %vm1512, 0.0
        %1514 = vst.msk [vmem:[#allocation4 + $0xa] sm:$0x3] %vm1512, 0.0
        %vm1515 = vcmask 516096
        %1516 = vst.msk [vmem:[#allocation5] sm:$0x1] %vm1515, 0.0
        %1517 = vst.msk [vmem:[#allocation5 + $0x9] sm:$0x1] %vm1515, 0.0
        %1518 = vst.msk [vmem:[#allocation6] sm:$0x1] %vm1515, 0.0
        %1519 = vst.msk [vmem:[#allocation6 + $0x9] sm:$0x1] %vm1515, 0.0
        %v1520 = vlaneseq
        %v1521 = vshrl.u32 %v1520, 7
        %s1522 = sld [smem:[#allocation8 + %s121]]
        %v1523 = vstv %s1522
        %vm1524 = vcmp.lt.s32.totalorder %v1521, %v1523
        %v1525 = vsel %vm1524, 1, 0
        %v1526 = vcvt.s32.f32 %v1525
        %v1527 = vld [vmem:[%s1300] sm:$0xff]
        %v1528 = vld [vmem:[#allocation18] sm:$0xf]
        %v1529 = vld [vmem:[#allocation18 + $0x4] sm:$0xf]
        %v1530 = vld [vmem:[#allocation18 + $0x8] sm:$0xf]
        %v1531 = vld [vmem:[#allocation18 + $0xc] sm:$0xf]
        %v1532 = vpack.c.bf16 %v1527, %v1527
        %v1533 = vld [vmem:[#allocation19] sm:$0x1]
        %v1535 = vlaneseq
        %v1536 = vshrl.u32 %v1535, 7
        %v1537 = vsub.s32 0, %v1536
        %v1538 = vrot.slane %v1533, %v1537
        %v1544 = vunpack.c.l.b16 %v1528
        %v1545 = vunpack.c.l.b16 %v1529
        %v1546 = vunpack.c.l.b16 %v1530
        %v1547 = vunpack.c.l.b16 %v1531
        %v1548 = vpack.c.b16 %v1545, %v1544
        %v1549 = vpack.c.b16 %v1547, %v1546
        %vm1552 = vcmask 261120
        %v1554 = vsel %vm1552, %v1532, 0
        %1556 = vmatprep.subr.bf16.mxu0 0
        %1557 = vmatpush1.bf16.msra.mxu0 %v1548
        %1558 = vmatprep.subr.bf16.mxu0 0
        %1559 = vmatpush1.bf16.msra.mxu0 %v1549
        %1560 = vmatprep.subr.bf16.mxu0 0
        %1561 = vmatpush1.bf16.msra.mxu0 0
        %1562 = vmatprep.subr.bf16.mxu0 0
        %1563 = vmatpush1.bf16.msra.mxu0 0
        %1564 = vmatprep.subr.bf16.mxu0 0
        %1565 = vmatpush1.bf16.msra.mxu0 0
        %1566 = vmatprep.subr.bf16.mxu0 0
        %1567 = vmatpush1.bf16.msra.mxu0 0
        %1568 = vmatprep.subr.bf16.mxu0 0
        %1569 = vmatpush1.bf16.msra.mxu0 0
        %1570 = vmatprep.subr.bf16.mxu0 0
        %1571 = vmatpush1.bf16.msra.mxu0 0
        %1572 = vmatprep.subr.bf16.mxu0 0
        %1573 = vmatpush1.bf16.msra.mxu0 0
        %1574 = vmatprep.subr.bf16.mxu0 0
        %1575 = vmatpush1.bf16.msra.mxu0 0
        %1576 = vmatprep.subr.bf16.mxu0 0
        %1577 = vmatpush1.bf16.msra.mxu0 0
        %1578 = vmatprep.subr.bf16.mxu0 0
        %1579 = vmatpush1.bf16.msra.mxu0 0
        %1580 = vmatprep.subr.bf16.mxu0 0
        %1581 = vmatpush1.bf16.msra.mxu0 0
        %1582 = vmatprep.subr.bf16.mxu0 0
        %1583 = vmatpush1.bf16.msra.mxu0 0
        %1584 = vmatprep.subr.bf16.mxu0 0
        %1585 = vmatpush1.bf16.msra.mxu0 0
        %1586 = vmatprep.subr.bf16.mxu0 0
        %1587 = vmatpush1.bf16.msra.mxu0 0
        %1588 = vmatprep.mubr.bf16.mxu0 0
        %1589 = vmatmul.mubr.bf16.gmra.mrb[0].mxu0 %v1554
        %v1590 = vpop.f32.mrb[0].mxu0
        %v1591 = vadd.f32 %v1538, %v1590
        %v1592 = vpop.f32.mrb[0].mxu0
        %v1593 = vpop.f32.mrb[0].mxu0
        %v1594 = vpop.f32.mrb[0].mxu0
        %1595 = vdwg.mxu0
        %v1596 = vmax.f32 %v1591, 0.0
        %v1597 = vld [vmem:[#allocation21] sm:$0x1]
        %v1598 = vld [vmem:[#allocation22] sm:$0x1]
        %v1599 = vsel %vm1552, %v1596, 0.0
        %1600 = vadd.xlane.f32.xlu0 %v1599
        %v1601 = vpop.xlane.xlu0 %1600
        %v1602 = vrcp.pop 32.0
        %v1603 = vmul.f32 %v1601, %v1602
        %v1604 = vsub.f32 %v1596, %v1603
        %v1605 = vmul.f32 %v1604, %v1604
        %v1606 = vsel %vm1552, %v1605, 0.0
        %1607 = vadd.xlane.f32.xlu0 %v1606
        %v1608 = vpop.xlane.xlu0 %1607
        %v1609 = vmul.f32 %v1608, %v1602
        %v1610 = vadd.f32 %v1609, 1e-05
        %v1611 = vrsqrt.pop %v1610
        %v1612 = vmul.f32 %v1604, %v1611
        %v1614 = vlaneseq
        %v1615 = vshrl.u32 %v1614, 7
        %v1616 = vsub.s32 0, %v1615
        %v1617 = vrot.slane %v1597, %v1616
        %v1619 = vmul.f32 %v1612, %v1617
        %v1621 = vlaneseq
        %v1622 = vshrl.u32 %v1621, 7
        %v1623 = vsub.s32 0, %v1622
        %v1624 = vrot.slane %v1598, %v1623
        %v1626 = vadd.f32 %v1619, %v1624
        %v1627 = vmul.f32 %v1626, %v1526
        %v1628 = vld [vmem:[%s1309] sm:$0xff]
        %v1629 = vld [vmem:[#allocation33] sm:$0x1]
        %vm1630 = vcmask 130048
        %1631 = vst.msk [vmem:[#allocation3 + $0x2] sm:$0xff] %vm1630, %v1628
        %v1632 = vld [vmem:[#allocation3] sm:$0xff]
        %v1633 = vld [vmem:[%s41] sm:$0xf]
        %v1634 = vld [vmem:[%s41 + $0x4] sm:$0xf]
        %v1635 = vpack.c.bf16 %v1632, %v1632
        %v1636 = vld [vmem:[#allocation3 + $0x1] sm:$0xff]
        %s1637 = scalar_lea.vmem %s41, 8
        %v1638 = vld [vmem:[%s1637] sm:$0xf]
        %v1639 = vld [vmem:[%s1637 + $0x4] sm:$0xf]
        %v1640 = vpack.c.bf16 %v1636, %v1636
        %v1643 = vunpack.c.l.b16 %v1638
        %v1644 = vunpack.c.l.b16 %v1639
        %v1645 = vpack.c.b16 %v1644, %v1643
        %v1648 = vsel %vm1630, %v1640, 0
        %1650 = vmatprep.subr.bf16.mxu0 0
        %1651 = vmatpush1.bf16.msra.mxu0 %v1645
        %1652 = vmatprep.subr.bf16.mxu0 0
        %1653 = vmatpush1.bf16.msra.mxu0 0
        %1654 = vmatprep.subr.bf16.mxu0 0
        %1655 = vmatpush1.bf16.msra.mxu0 0
        %1656 = vmatprep.subr.bf16.mxu0 0
        %1657 = vmatpush1.bf16.msra.mxu0 0
        %1658 = vmatprep.subr.bf16.mxu0 0
        %1659 = vmatpush1.bf16.msra.mxu0 0
        %1660 = vmatprep.subr.bf16.mxu0 0
        %1661 = vmatpush1.bf16.msra.mxu0 0
        %1662 = vmatprep.subr.bf16.mxu0 0
        %1663 = vmatpush1.bf16.msra.mxu0 0
        %1664 = vmatprep.subr.bf16.mxu0 0
        %1665 = vmatpush1.bf16.msra.mxu0 0
        %1666 = vmatprep.subr.bf16.mxu0 0
        %1667 = vmatpush1.bf16.msra.mxu0 0
        %1668 = vmatprep.subr.bf16.mxu0 0
        %1669 = vmatpush1.bf16.msra.mxu0 0
        %1670 = vmatprep.subr.bf16.mxu0 0
        %1671 = vmatpush1.bf16.msra.mxu0 0
        %1672 = vmatprep.subr.bf16.mxu0 0
        %1673 = vmatpush1.bf16.msra.mxu0 0
        %1674 = vmatprep.subr.bf16.mxu0 0
        %1675 = vmatpush1.bf16.msra.mxu0 0
        %1676 = vmatprep.subr.bf16.mxu0 0
        %1677 = vmatpush1.bf16.msra.mxu0 0
        %1678 = vmatprep.subr.bf16.mxu0 0
        %1679 = vmatpush1.bf16.msra.mxu0 0
        %1680 = vmatprep.subr.bf16.mxu0 0
        %1681 = vmatpush1.bf16.msra.mxu0 0
        %1682 = vmatprep.mubr.bf16.mxu0 0
        %1683 = vmatmul.mubr.bf16.gmra.mrb[0].mxu0 %v1648
        %v1684 = vpop.f32.mrb[0].mxu0
        %v1685 = vadd.f32 0.0, %v1684
        %v1686 = vpop.f32.mrb[0].mxu0
        %v1687 = vpop.f32.mrb[0].mxu0
        %v1688 = vpop.f32.mrb[0].mxu0
        %1689 = vdwg.mxu0
        %v1692 = vunpack.c.l.b16 %v1633
        %v1693 = vunpack.c.l.b16 %v1634
        %v1694 = vpack.c.b16 %v1693, %v1692
        %v1697 = vsel %vm1630, %v1635, 0
        %1699 = vmatprep.subr.bf16.mxu0 0
        %1700 = vmatpush1.bf16.msra.mxu0 %v1694
        %1701 = vmatprep.subr.bf16.mxu0 0
        %1702 = vmatpush1.bf16.msra.mxu0 0
        %1703 = vmatprep.subr.bf16.mxu0 0
        %1704 = vmatpush1.bf16.msra.mxu0 0
        %1705 = vmatprep.subr.bf16.mxu0 0
        %1706 = vmatpush1.bf16.msra.mxu0 0
        %1707 = vmatprep.subr.bf16.mxu0 0
        %1708 = vmatpush1.bf16.msra.mxu0 0
        %1709 = vmatprep.subr.bf16.mxu0 0
        %1710 = vmatpush1.bf16.msra.mxu0 0
        %1711 = vmatprep.subr.bf16.mxu0 0
        %1712 = vmatpush1.bf16.msra.mxu0 0
        %1713 = vmatprep.subr.bf16.mxu0 0
        %1714 = vmatpush1.bf16.msra.mxu0 0
        %1715 = vmatprep.subr.bf16.mxu0 0
        %1716 = vmatpush1.bf16.msra.mxu0 0
        %1717 = vmatprep.subr.bf16.mxu0 0
        %1718 = vmatpush1.bf16.msra.mxu0 0
        %1719 = vmatprep.subr.bf16.mxu0 0
        %1720 = vmatpush1.bf16.msra.mxu0 0
        %1721 = vmatprep.subr.bf16.mxu0 0
        %1722 = vmatpush1.bf16.msra.mxu0 0
        %1723 = vmatprep.subr.bf16.mxu0 0
        %1724 = vmatpush1.bf16.msra.mxu0 0
        %1725 = vmatprep.subr.bf16.mxu0 0
        %1726 = vmatpush1.bf16.msra.mxu0 0
        %1727 = vmatprep.subr.bf16.mxu0 0
        %1728 = vmatpush1.bf16.msra.mxu0 0
        %1729 = vmatprep.subr.bf16.mxu0 0
        %1730 = vmatpush1.bf16.msra.mxu0 0
        %1731 = vmatprep.mubr.bf16.mxu0 0
        %1732 = vmatmul.mubr.bf16.gmra.mrb[0].mxu0 %v1697
        %v1733 = vpop.f32.mrb[0].mxu0
        %v1734 = vadd.f32 %v1685, %v1733
        %v1735 = vpop.f32.mrb[0].mxu0
        %v1736 = vpop.f32.mrb[0].mxu0
        %v1737 = vpop.f32.mrb[0].mxu0
        %1738 = vdwg.mxu0
        %v1739 = vld [vmem:[#allocation3 + $0x2] sm:$0xff]
        %s1740 = scalar_lea.vmem %s41, 16
        %v1741 = vld [vmem:[%s1740] sm:$0xf]
        %v1742 = vld [vmem:[%s1740 + $0x4] sm:$0xf]
        %v1743 = vpack.c.bf16 %v1739, %v1739
        %v1746 = vunpack.c.l.b16 %v1741
        %v1747 = vunpack.c.l.b16 %v1742
        %v1748 = vpack.c.b16 %v1747, %v1746
        %v1751 = vsel %vm1630, %v1743, 0
        %1753 = vmatprep.subr.bf16.mxu0 0
        %1754 = vmatpush1.bf16.msra.mxu0 %v1748
        %1755 = vmatprep.subr.bf16.mxu0 0
        %1756 = vmatpush1.bf16.msra.mxu0 0
        %1757 = vmatprep.subr.bf16.mxu0 0
        %1758 = vmatpush1.bf16.msra.mxu0 0
        %1759 = vmatprep.subr.bf16.mxu0 0
        %1760 = vmatpush1.bf16.msra.mxu0 0
        %1761 = vmatprep.subr.bf16.mxu0 0
        %1762 = vmatpush1.bf16.msra.mxu0 0
        %1763 = vmatprep.subr.bf16.mxu0 0
        %1764 = vmatpush1.bf16.msra.mxu0 0
        %1765 = vmatprep.subr.bf16.mxu0 0
        %1766 = vmatpush1.bf16.msra.mxu0 0
        %1767 = vmatprep.subr.bf16.mxu0 0
        %1768 = vmatpush1.bf16.msra.mxu0 0
        %1769 = vmatprep.subr.bf16.mxu0 0
        %1770 = vmatpush1.bf16.msra.mxu0 0
        %1771 = vmatprep.subr.bf16.mxu0 0
        %1772 = vmatpush1.bf16.msra.mxu0 0
        %1773 = vmatprep.subr.bf16.mxu0 0
        %1774 = vmatpush1.bf16.msra.mxu0 0
        %1775 = vmatprep.subr.bf16.mxu0 0
        %1776 = vmatpush1.bf16.msra.mxu0 0
        %1777 = vmatprep.subr.bf16.mxu0 0
        %1778 = vmatpush1.bf16.msra.mxu0 0
        %1779 = vmatprep.subr.bf16.mxu0 0
        %1780 = vmatpush1.bf16.msra.mxu0 0
        %1781 = vmatprep.subr.bf16.mxu0 0
        %1782 = vmatpush1.bf16.msra.mxu0 0
        %1783 = vmatprep.subr.bf16.mxu0 0
        %1784 = vmatpush1.bf16.msra.mxu0 0
        %1785 = vmatprep.mubr.bf16.mxu0 0
        %1786 = vmatmul.mubr.bf16.gmra.mrb[0].mxu0 %v1751
        %v1787 = vpop.f32.mrb[0].mxu0
        %v1788 = vadd.f32 0.0, %v1787
        %v1789 = vpop.f32.mrb[0].mxu0
        %v1790 = vpop.f32.mrb[0].mxu0
        %v1791 = vpop.f32.mrb[0].mxu0
        %1792 = vdwg.mxu0
        %v1793 = vadd.f32 %v1734, %v1788
        %v1794 = vld [vmem:[#allocation3 + $0x3] sm:$0xff]
        %s1795 = scalar_lea.vmem %s41, 24
        %v1796 = vld [vmem:[%s1795] sm:$0xf]
        %v1797 = vld [vmem:[%s1795 + $0x4] sm:$0xf]
        %v1798 = vpack.c.bf16 %v1794, %v1794
        %v1801 = vunpack.c.l.b16 %v1796
        %v1802 = vunpack.c.l.b16 %v1797
        %v1803 = vpack.c.b16 %v1802, %v1801
        %v1806 = vsel %vm1630, %v1798, 0
        %1808 = vmatprep.subr.bf16.mxu0 0
        %1809 = vmatpush1.bf16.msra.mxu0 %v1803
        %1810 = vmatprep.subr.bf16.mxu0 0
        %1811 = vmatpush1.bf16.msra.mxu0 0
        %1812 = vmatprep.subr.bf16.mxu0 0
        %1813 = vmatpush1.bf16.msra.mxu0 0
        %1814 = vmatprep.subr.bf16.mxu0 0
        %1815 = vmatpush1.bf16.msra.mxu0 0
        %1816 = vmatprep.subr.bf16.mxu0 0
        %1817 = vmatpush1.bf16.msra.mxu0 0
        %1818 = vmatprep.subr.bf16.mxu0 0
        %1819 = vmatpush1.bf16.msra.mxu0 0
        %1820 = vmatprep.subr.bf16.mxu0 0
        %1821 = vmatpush1.bf16.msra.mxu0 0
        %1822 = vmatprep.subr.bf16.mxu0 0
        %1823 = vmatpush1.bf16.msra.mxu0 0
        %1824 = vmatprep.subr.bf16.mxu0 0
        %1825 = vmatpush1.bf16.msra.mxu0 0
        %1826 = vmatprep.subr.bf16.mxu0 0
        %1827 = vmatpush1.bf16.msra.mxu0 0
        %1828 = vmatprep.subr.bf16.mxu0 0
        %1829 = vmatpush1.bf16.msra.mxu0 0
        %1830 = vmatprep.subr.bf16.mxu0 0
        %1831 = vmatpush1.bf16.msra.mxu0 0
        %1832 = vmatprep.subr.bf16.mxu0 0
        %1833 = vmatpush1.bf16.msra.mxu0 0
        %1834 = vmatprep.subr.bf16.mxu0 0
        %1835 = vmatpush1.bf16.msra.mxu0 0
        %1836 = vmatprep.subr.bf16.mxu0 0
        %1837 = vmatpush1.bf16.msra.mxu0 0
        %1838 = vmatprep.subr.bf16.mxu0 0
        %1839 = vmatpush1.bf16.msra.mxu0 0
        %1840 = vmatprep.mubr.bf16.mxu0 0
        %1841 = vmatmul.mubr.bf16.gmra.mrb[0].mxu0 %v1806
        %v1842 = vpop.f32.mrb[0].mxu0
        %v1843 = vadd.f32 0.0, %v1842
        %v1844 = vpop.f32.mrb[0].mxu0
        %v1845 = vpop.f32.mrb[0].mxu0
        %v1846 = vpop.f32.mrb[0].mxu0
        %1847 = vdwg.mxu0
        %v1848 = vadd.f32 %v1793, %v1843
        %v1849 = vld [vmem:[#allocation3 + $0x4] sm:$0xff]
        %s1850 = scalar_lea.vmem %s41, 32
        %v1851 = vld [vmem:[%s1850] sm:$0xf]
        %v1852 = vld [vmem:[%s1850 + $0x4] sm:$0xf]
        %v1853 = vpack.c.bf16 %v1849, %v1849
        %v1856 = vunpack.c.l.b16 %v1851
        %v1857 = vunpack.c.l.b16 %v1852
        %v1858 = vpack.c.b16 %v1857, %v1856
        %v1861 = vsel %vm1630, %v1853, 0
        %1863 = vmatprep.subr.bf16.mxu0 0
        %1864 = vmatpush1.bf16.msra.mxu0 %v1858
        %1865 = vmatprep.subr.bf16.mxu0 0
        %1866 = vmatpush1.bf16.msra.mxu0 0
        %1867 = vmatprep.subr.bf16.mxu0 0
        %1868 = vmatpush1.bf16.msra.mxu0 0
        %1869 = vmatprep.subr.bf16.mxu0 0
        %1870 = vmatpush1.bf16.msra.mxu0 0
        %1871 = vmatprep.subr.bf16.mxu0 0
        %1872 = vmatpush1.bf16.msra.mxu0 0
        %1873 = vmatprep.subr.bf16.mxu0 0
        %1874 = vmatpush1.bf16.msra.mxu0 0
        %1875 = vmatprep.subr.bf16.mxu0 0
        %1876 = vmatpush1.bf16.msra.mxu0 0
        %1877 = vmatprep.subr.bf16.mxu0 0
        %1878 = vmatpush1.bf16.msra.mxu0 0
        %1879 = vmatprep.subr.bf16.mxu0 0
        %1880 = vmatpush1.bf16.msra.mxu0 0
        %1881 = vmatprep.subr.bf16.mxu0 0
        %1882 = vmatpush1.bf16.msra.mxu0 0
        %1883 = vmatprep.subr.bf16.mxu0 0
        %1884 = vmatpush1.bf16.msra.mxu0 0
        %1885 = vmatprep.subr.bf16.mxu0 0
        %1886 = vmatpush1.bf16.msra.mxu0 0
        %1887 = vmatprep.subr.bf16.mxu0 0
        %1888 = vmatpush1.bf16.msra.mxu0 0
        %1889 = vmatprep.subr.bf16.mxu0 0
        %1890 = vmatpush1.bf16.msra.mxu0 0
        %1891 = vmatprep.subr.bf16.mxu0 0
        %1892 = vmatpush1.bf16.msra.mxu0 0
        %1893 = vmatprep.subr.bf16.mxu0 0
        %1894 = vmatpush1.bf16.msra.mxu0 0
        %1895 = vmatprep.mubr.bf16.mxu0 0
        %1896 = vmatmul.mubr.bf16.gmra.mrb[0].mxu0 %v1861
        %v1897 = vpop.f32.mrb[0].mxu0
        %v1898 = vadd.f32 0.0, %v1897
        %v1899 = vpop.f32.mrb[0].mxu0
        %v1900 = vpop.f32.mrb[0].mxu0
        %v1901 = vpop.f32.mrb[0].mxu0
        %1902 = vdwg.mxu0
        %v1903 = vadd.f32 %v1848, %v1898
        %v1905 = vlaneseq
        %v1906 = vshrl.u32 %v1905, 7
        %v1907 = vsub.s32 0, %v1906
        %v1908 = vrot.slane %v1629, %v1907
        %v1910 = vadd.f32 %v1903, %v1908
        %v1911 = vld [vmem:[#allocation34] sm:$0x1]
        %vm1912 = vcmask 64512
        %1913 = vst.msk [vmem:[#allocation4 + $0x2] sm:$0xff] %vm1912, %v1910
        %v1914 = vld [vmem:[#allocation4] sm:$0xff]
        %v1915 = vld [vmem:[%s45] sm:$0xf]
        %v1916 = vpack.c.bf16 %v1914, %v1914
        %v1917 = vld [vmem:[#allocation4 + $0x1] sm:$0xff]
        %s1918 = scalar_lea.vmem %s45, 4
        %v1919 = vld [vmem:[%s1918] sm:$0xf]
        %v1920 = vpack.c.bf16 %v1917, %v1917
        %v1922 = vsel %vm1912, %v1920, 0
        %vm1924 = vcmask 1043456
        %v1926 = vsel %vm1924, %v1919, 0
        %1928 = vmatprep.subr.bf16.mxu0 0
        %1929 = vmatpush1.bf16.msra.mxu0 %v1926
        %1930 = vmatprep.subr.bf16.mxu0 0
        %1931 = vmatpush1.bf16.msra.mxu0 0
        %1932 = vmatprep.subr.bf16.mxu0 0
        %1933 = vmatpush1.bf16.msra.mxu0 0
        %1934 = vmatprep.subr.bf16.mxu0 0
        %1935 = vmatpush1.bf16.msra.mxu0 0
        %1936 = vmatprep.subr.bf16.mxu0 0
        %1937 = vmatpush1.bf16.msra.mxu0 0
        %1938 = vmatprep.subr.bf16.mxu0 0
        %1939 = vmatpush1.bf16.msra.mxu0 0
        %1940 = vmatprep.subr.bf16.mxu0 0
        %1941 = vmatpush1.bf16.msra.mxu0 0
        %1942 = vmatprep.subr.bf16.mxu0 0
        %1943 = vmatpush1.bf16.msra.mxu0 0
        %1944 = vmatprep.subr.bf16.mxu0 0
        %1945 = vmatpush1.bf16.msra.mxu0 0
        %1946 = vmatprep.subr.bf16.mxu0 0
        %1947 = vmatpush1.bf16.msra.mxu0 0
        %1948 = vmatprep.subr.bf16.mxu0 0
        %1949 = vmatpush1.bf16.msra.mxu0 0
        %1950 = vmatprep.subr.bf16.mxu0 0
        %1951 = vmatpush1.bf16.msra.mxu0 0
        %1952 = vmatprep.subr.bf16.mxu0 0
        %1953 = vmatpush1.bf16.msra.mxu0 0
        %1954 = vmatprep.subr.bf16.mxu0 0
        %1955 = vmatpush1.bf16.msra.mxu0 0
        %1956 = vmatprep.subr.bf16.mxu0 0
        %1957 = vmatpush1.bf16.msra.mxu0 0
        %1958 = vmatprep.subr.bf16.mxu0 0
        %1959 = vmatpush1.bf16.msra.mxu0 0
        %1960 = vmatprep.mubr.bf16.mxu0 0
        %1961 = vmatmul.mubr.bf16.gmra.mrb[0].mxu0 %v1922
        %v1962 = vpop.f32.mrb[0].mxu0
        %v1963 = vadd.f32 0.0, %v1962
        %v1964 = vpop.f32.mrb[0].mxu0
        %v1965 = vpop.f32.mrb[0].mxu0
        %v1966 = vpop.f32.mrb[0].mxu0
        %1967 = vdwg.mxu0
        %v1969 = vsel %vm1912, %v1916, 0
        %v1972 = vsel %vm1924, %v1915, 0
        %1974 = vmatprep.subr.bf16.mxu0 0
        %1975 = vmatpush1.bf16.msra.mxu0 %v1972
        %1976 = vmatprep.subr.bf16.mxu0 0
        %1977 = vmatpush1.bf16.msra.mxu0 0
        %1978 = vmatprep.subr.bf16.mxu0 0
        %1979 = vmatpush1.bf16.msra.mxu0 0
        %1980 = vmatprep.subr.bf16.mxu0 0
        %1981 = vmatpush1.bf16.msra.mxu0 0
        %1982 = vmatprep.subr.bf16.mxu0 0
        %1983 = vmatpush1.bf16.msra.mxu0 0
        %1984 = vmatprep.subr.bf16.mxu0 0
        %1985 = vmatpush1.bf16.msra.mxu0 0
        %1986 = vmatprep.subr.bf16.mxu0 0
        %1987 = vmatpush1.bf16.msra.mxu0 0
        %1988 = vmatprep.subr.bf16.mxu0 0
        %1989 = vmatpush1.bf16.msra.mxu0 0
        %1990 = vmatprep.subr.bf16.mxu0 0
        %1991 = vmatpush1.bf16.msra.mxu0 0
        %1992 = vmatprep.subr.bf16.mxu0 0
        %1993 = vmatpush1.bf16.msra.mxu0 0
        %1994 = vmatprep.subr.bf16.mxu0 0
        %1995 = vmatpush1.bf16.msra.mxu0 0
        %1996 = vmatprep.subr.bf16.mxu0 0
        %1997 = vmatpush1.bf16.msra.mxu0 0
        %1998 = vmatprep.subr.bf16.mxu0 0
        %1999 = vmatpush1.bf16.msra.mxu0 0
        %2000 = vmatprep.subr.bf16.mxu0 0
        %2001 = vmatpush1.bf16.msra.mxu0 0
        %2002 = vmatprep.subr.bf16.mxu0 0
        %2003 = vmatpush1.bf16.msra.mxu0 0
        %2004 = vmatprep.subr.bf16.mxu0 0
        %2005 = vmatpush1.bf16.msra.mxu0 0
        %2006 = vmatprep.mubr.bf16.mxu0 0
        %2007 = vmatmul.mubr.bf16.gmra.mrb[0].mxu0 %v1969
        %v2008 = vpop.f32.mrb[0].mxu0
        %v2009 = vadd.f32 %v1963, %v2008
        %v2010 = vpop.f32.mrb[0].mxu0
        %v2011 = vpop.f32.mrb[0].mxu0
        %v2012 = vpop.f32.mrb[0].mxu0
        %2013 = vdwg.mxu0
        %v2014 = vld [vmem:[#allocation4 + $0x2] sm:$0xff]
        %s2015 = scalar_lea.vmem %s45, 8
        %v2016 = vld [vmem:[%s2015] sm:$0xf]
        %v2017 = vpack.c.bf16 %v2014, %v2014
        %v2019 = vsel %vm1912, %v2017, 0
        %v2022 = vsel %vm1924, %v2016, 0
        %2024 = vmatprep.subr.bf16.mxu0 0
        %2025 = vmatpush1.bf16.msra.mxu0 %v2022
        %2026 = vmatprep.subr.bf16.mxu0 0
        %2027 = vmatpush1.bf16.msra.mxu0 0
        %2028 = vmatprep.subr.bf16.mxu0 0
        %2029 = vmatpush1.bf16.msra.mxu0 0
        %2030 = vmatprep.subr.bf16.mxu0 0
        %2031 = vmatpush1.bf16.msra.mxu0 0
        %2032 = vmatprep.subr.bf16.mxu0 0
        %2033 = vmatpush1.bf16.msra.mxu0 0
        %2034 = vmatprep.subr.bf16.mxu0 0
        %2035 = vmatpush1.bf16.msra.mxu0 0
        %2036 = vmatprep.subr.bf16.mxu0 0
        %2037 = vmatpush1.bf16.msra.mxu0 0
        %2038 = vmatprep.subr.bf16.mxu0 0
        %2039 = vmatpush1.bf16.msra.mxu0 0
        %2040 = vmatprep.subr.bf16.mxu0 0
        %2041 = vmatpush1.bf16.msra.mxu0 0
        %2042 = vmatprep.subr.bf16.mxu0 0
        %2043 = vmatpush1.bf16.msra.mxu0 0
        %2044 = vmatprep.subr.bf16.mxu0 0
        %2045 = vmatpush1.bf16.msra.mxu0 0
        %2046 = vmatprep.subr.bf16.mxu0 0
        %2047 = vmatpush1.bf16.msra.mxu0 0
        %2048 = vmatprep.subr.bf16.mxu0 0
        %2049 = vmatpush1.bf16.msra.mxu0 0
        %2050 = vmatprep.subr.bf16.mxu0 0
        %2051 = vmatpush1.bf16.msra.mxu0 0
        %2052 = vmatprep.subr.bf16.mxu0 0
        %2053 = vmatpush1.bf16.msra.mxu0 0
        %2054 = vmatprep.subr.bf16.mxu0 0
        %2055 = vmatpush1.bf16.msra.mxu0 0
        %2056 = vmatprep.mubr.bf16.mxu0 0
        %2057 = vmatmul.mubr.bf16.gmra.mrb[0].mxu0 %v2019
        %v2058 = vpop.f32.mrb[0].mxu0
        %v2059 = vadd.f32 0.0, %v2058
        %v2060 = vpop.f32.mrb[0].mxu0
        %v2061 = vpop.f32.mrb[0].mxu0
        %v2062 = vpop.f32.mrb[0].mxu0
        %2063 = vdwg.mxu0
        %v2064 = vadd.f32 %v2009, %v2059
        %v2065 = vld [vmem:[#allocation4 + $0x3] sm:$0xff]
        %s2066 = scalar_lea.vmem %s45, 12
        %v2067 = vld [vmem:[%s2066] sm:$0xf]
        %v2068 = vpack.c.bf16 %v2065, %v2065
        %v2070 = vsel %vm1912, %v2068, 0
        %v2073 = vsel %vm1924, %v2067, 0
        %2075 = vmatprep.subr.bf16.mxu0 0
        %2076 = vmatpush1.bf16.msra.mxu0 %v2073
        %2077 = vmatprep.subr.bf16.mxu0 0
        %2078 = vmatpush1.bf16.msra.mxu0 0
        %2079 = vmatprep.subr.bf16.mxu0 0
        %2080 = vmatpush1.bf16.msra.mxu0 0
        %2081 = vmatprep.subr.bf16.mxu0 0
        %2082 = vmatpush1.bf16.msra.mxu0 0
        %2083 = vmatprep.subr.bf16.mxu0 0
        %2084 = vmatpush1.bf16.msra.mxu0 0
        %2085 = vmatprep.subr.bf16.mxu0 0
        %2086 = vmatpush1.bf16.msra.mxu0 0
        %2087 = vmatprep.subr.bf16.mxu0 0
        %2088 = vmatpush1.bf16.msra.mxu0 0
        %2089 = vmatprep.subr.bf16.mxu0 0
        %2090 = vmatpush1.bf16.msra.mxu0 0
        %2091 = vmatprep.subr.bf16.mxu0 0
        %2092 = vmatpush1.bf16.msra.mxu0 0
        %2093 = vmatprep.subr.bf16.mxu0 0
        %2094 = vmatpush1.bf16.msra.mxu0 0
        %2095 = vmatprep.subr.bf16.mxu0 0
        %2096 = vmatpush1.bf16.msra.mxu0 0
        %2097 = vmatprep.subr.bf16.mxu0 0
        %2098 = vmatpush1.bf16.msra.mxu0 0
        %2099 = vmatprep.subr.bf16.mxu0 0
        %2100 = vmatpush1.bf16.msra.mxu0 0
        %2101 = vmatprep.subr.bf16.mxu0 0
        %2102 = vmatpush1.bf16.msra.mxu0 0
        %2103 = vmatprep.subr.bf16.mxu0 0
        %2104 = vmatpush1.bf16.msra.mxu0 0
        %2105 = vmatprep.subr.bf16.mxu0 0
        %2106 = vmatpush1.bf16.msra.mxu0 0
        %2107 = vmatprep.mubr.bf16.mxu0 0
        %2108 = vmatmul.mubr.bf16.gmra.mrb[0].mxu0 %v2070
        %v2109 = vpop.f32.mrb[0].mxu0
        %v2110 = vadd.f32 0.0, %v2109
        %v2111 = vpop.f32.mrb[0].mxu0
        %v2112 = vpop.f32.mrb[0].mxu0
        %v2113 = vpop.f32.mrb[0].mxu0
        %2114 = vdwg.mxu0
        %v2115 = vadd.f32 %v2064, %v2110
        %v2116 = vld [vmem:[#allocation4 + $0x4] sm:$0xff]
        %s2117 = scalar_lea.vmem %s45, 16
        %v2118 = vld [vmem:[%s2117] sm:$0xf]
        %v2119 = vpack.c.bf16 %v2116, %v2116
        %v2121 = vsel %vm1912, %v2119, 0
        %v2124 = vsel %vm1924, %v2118, 0
        %2126 = vmatprep.subr.bf16.mxu0 0
        %2127 = vmatpush1.bf16.msra.mxu0 %v2124
        %2128 = vmatprep.subr.bf16.mxu0 0
        %2129 = vmatpush1.bf16.msra.mxu0 0
        %2130 = vmatprep.subr.bf16.mxu0 0
        %2131 = vmatpush1.bf16.msra.mxu0 0
        %2132 = vmatprep.subr.bf16.mxu0 0
        %2133 = vmatpush1.bf16.msra.mxu0 0
        %2134 = vmatprep.subr.bf16.mxu0 0
        %2135 = vmatpush1.bf16.msra.mxu0 0
        %2136 = vmatprep.subr.bf16.mxu0 0
        %2137 = vmatpush1.bf16.msra.mxu0 0
        %2138 = vmatprep.subr.bf16.mxu0 0
        %2139 = vmatpush1.bf16.msra.mxu0 0
        %2140 = vmatprep.subr.bf16.mxu0 0
        %2141 = vmatpush1.bf16.msra.mxu0 0
        %2142 = vmatprep.subr.bf16.mxu0 0
        %2143 = vmatpush1.bf16.msra.mxu0 0
        %2144 = vmatprep.subr.bf16.mxu0 0
        %2145 = vmatpush1.bf16.msra.mxu0 0
        %2146 = vmatprep.subr.bf16.mxu0 0
        %2147 = vmatpush1.bf16.msra.mxu0 0
        %2148 = vmatprep.subr.bf16.mxu0 0
        %2149 = vmatpush1.bf16.msra.mxu0 0
        %2150 = vmatprep.subr.bf16.mxu0 0
        %2151 = vmatpush1.bf16.msra.mxu0 0
        %2152 = vmatprep.subr.bf16.mxu0 0
        %2153 = vmatpush1.bf16.msra.mxu0 0
        %2154 = vmatprep.subr.bf16.mxu0 0
        %2155 = vmatpush1.bf16.msra.mxu0 0
        %2156 = vmatprep.subr.bf16.mxu0 0
        %2157 = vmatpush1.bf16.msra.mxu0 0
        %2158 = vmatprep.mubr.bf16.mxu0 0
        %2159 = vmatmul.mubr.bf16.gmra.mrb[0].mxu0 %v2121
        %v2160 = vpop.f32.mrb[0].mxu0
        %v2161 = vadd.f32 0.0, %v2160
        %v2162 = vpop.f32.mrb[0].mxu0
        %v2163 = vpop.f32.mrb[0].mxu0
        %v2164 = vpop.f32.mrb[0].mxu0
        %2165 = vdwg.mxu0
        %v2166 = vadd.f32 %v2115, %v2161
        %v2168 = vlaneseq
        %v2169 = vshrl.u32 %v2168, 7
        %v2170 = vsub.s32 0, %v2169
        %v2171 = vrot.slane %v1911, %v2170
        %v2173 = vadd.f32 %v2166, %v2171
        %v2174 = vld [vmem:[#allocation36] sm:$0x1]
        %v2175 = vld [vmem:[%s51] sm:$0x1]
        %v2176 = vsel %vm1630, %v2173, 0.0
        %2177 = vadd.xlane.f32.xlu0 %v2176
        %v2178 = vpop.xlane.xlu0 %2177
        %v2179 = vrcp.pop 16.0
        %v2180 = vmul.f32 %v2178, %v2179
        %v2181 = vsub.f32 %v2173, %v2180
        %v2182 = vmul.f32 %v2181, %v2181
        %v2183 = vsel %vm1630, %v2182, 0.0
        %2184 = vadd.xlane.f32.xlu0 %v2183
        %v2185 = vpop.xlane.xlu0 %2184
        %v2186 = vmul.f32 %v2185, %v2179
        %v2187 = vadd.f32 %v2186, 1e-05
        %v2188 = vrsqrt.pop %v2187
        %v2189 = vmul.f32 %v2181, %v2188
        %v2191 = vlaneseq
        %v2192 = vshrl.u32 %v2191, 7
        %v2193 = vsub.s32 0, %v2192
        %v2194 = vrot.slane %v2174, %v2193
        %v2196 = vmul.f32 %v2189, %v2194
        %v2198 = vlaneseq
        %v2199 = vshrl.u32 %v2198, 7
        %v2200 = vsub.s32 0, %v2199
        %v2201 = vrot.slane %v2175, %v2200
        %v2203 = vadd.f32 %v2196, %v2201
        %v2204 = vsel %vm1630, %v2203, 0.0
        %v2205 = vrot.slane %v2204, 4
        %v2206 = vadd.f32 %v2204, %v2205
        %v2207 = vrot.slane %v2206, 2
        %v2208 = vadd.f32 %v2206, %v2207
        %v2209 = vrot.slane %v2208, 1
        %v2210 = vadd.f32 %v2208, %v2209
        %v2211 = vrcp.pop 8.0
        %v2212 = vmul.f32 %v2210, %v2211
        %vm2213 = vcmask 122880
        %2214 = vst.msk [vmem:[%s1500] sm:$0x1] %vm2213, %v2212
        %v2215 = vld [vmem:[#allocation24] sm:$0x1]
        %2216 = vst.msk [vmem:[#allocation2 + $0x2] sm:$0xff] %vm1552, %v1627
        %v2217 = vld [vmem:[#allocation2] sm:$0xff]
        %v2218 = vld [vmem:[%s21] sm:$0xf]
        %v2219 = vld [vmem:[%s21 + $0x4] sm:$0xf]
        %v2220 = vld [vmem:[%s21 + $0x8] sm:$0xf]
        %v2221 = vld [vmem:[%s21 + $0xc] sm:$0xf]
        %v2222 = vpack.c.bf16 %v2217, %v2217
        %v2223 = vld [vmem:[#allocation2 + $0x1] sm:$0xff]
        %s2224 = scalar_lea.vmem %s21, 16
        %v2225 = vld [vmem:[%s2224] sm:$0xf]
        %v2226 = vld [vmem:[%s2224 + $0x4] sm:$0xf]
        %v2227 = vld [vmem:[%s2224 + $0x8] sm:$0xf]
        %v2228 = vld [vmem:[%s2224 + $0xc] sm:$0xf]
        %v2229 = vpack.c.bf16 %v2223, %v2223
        %v2234 = vunpack.c.l.b16 %v2225
        %v2235 = vunpack.c.l.b16 %v2226
        %v2236 = vunpack.c.l.b16 %v2227
        %v2237 = vunpack.c.l.b16 %v2228
        %v2238 = vpack.c.b16 %v2235, %v2234
        %v2239 = vpack.c.b16 %v2237, %v2236
        %v2243 = vsel %vm1552, %v2229, 0
        %2245 = vmatprep.subr.bf16.mxu0 0
        %2246 = vmatpush1.bf16.msra.mxu0 %v2238
        %2247 = vmatprep.subr.bf16.mxu0 0
        %2248 = vmatpush1.bf16.msra.mxu0 %v2239
        %2249 = vmatprep.subr.bf16.mxu0 0
        %2250 = vmatpush1.bf16.msra.mxu0 0
        %2251 = vmatprep.subr.bf16.mxu0 0
        %2252 = vmatpush1.bf16.msra.mxu0 0
        %2253 = vmatprep.subr.bf16.mxu0 0
        %2254 = vmatpush1.bf16.msra.mxu0 0
        %2255 = vmatprep.subr.bf16.mxu0 0
        %2256 = vmatpush1.bf16.msra.mxu0 0
        %2257 = vmatprep.subr.bf16.mxu0 0
        %2258 = vmatpush1.bf16.msra.mxu0 0
        %2259 = vmatprep.subr.bf16.mxu0 0
        %2260 = vmatpush1.bf16.msra.mxu0 0
        %2261 = vmatprep.subr.bf16.mxu0 0
        %2262 = vmatpush1.bf16.msra.mxu0 0
        %2263 = vmatprep.subr.bf16.mxu0 0
        %2264 = vmatpush1.bf16.msra.mxu0 0
        %2265 = vmatprep.subr.bf16.mxu0 0
        %2266 = vmatpush1.bf16.msra.mxu0 0
        %2267 = vmatprep.subr.bf16.mxu0 0
        %2268 = vmatpush1.bf16.msra.mxu0 0
        %2269 = vmatprep.subr.bf16.mxu0 0
        %2270 = vmatpush1.bf16.msra.mxu0 0
        %2271 = vmatprep.subr.bf16.mxu0 0
        %2272 = vmatpush1.bf16.msra.mxu0 0
        %2273 = vmatprep.subr.bf16.mxu0 0
        %2274 = vmatpush1.bf16.msra.mxu0 0
        %2275 = vmatprep.subr.bf16.mxu0 0
        %2276 = vmatpush1.bf16.msra.mxu0 0
        %2277 = vmatprep.mubr.bf16.mxu0 0
        %2278 = vmatmul.mubr.bf16.gmra.mrb[0].mxu0 %v2243
        %v2279 = vpop.f32.mrb[0].mxu0
        %v2280 = vadd.f32 0.0, %v2279
        %v2281 = vpop.f32.mrb[0].mxu0
        %v2282 = vpop.f32.mrb[0].mxu0
        %v2283 = vpop.f32.mrb[0].mxu0
        %2284 = vdwg.mxu0
        %v2289 = vunpack.c.l.b16 %v2218
        %v2290 = vunpack.c.l.b16 %v2219
        %v2291 = vunpack.c.l.b16 %v2220
        %v2292 = vunpack.c.l.b16 %v2221
        %v2293 = vpack.c.b16 %v2290, %v2289
        %v2294 = vpack.c.b16 %v2292, %v2291
        %v2298 = vsel %vm1552, %v2222, 0
        %2300 = vmatprep.subr.bf16.mxu0 0
        %2301 = vmatpush1.bf16.msra.mxu0 %v2293
        %2302 = vmatprep.subr.bf16.mxu0 0
        %2303 = vmatpush1.bf16.msra.mxu0 %v2294
        %2304 = vmatprep.subr.bf16.mxu0 0
        %2305 = vmatpush1.bf16.msra.mxu0 0
        %2306 = vmatprep.subr.bf16.mxu0 0
        %2307 = vmatpush1.bf16.msra.mxu0 0
        %2308 = vmatprep.subr.bf16.mxu0 0
        %2309 = vmatpush1.bf16.msra.mxu0 0
        %2310 = vmatprep.subr.bf16.mxu0 0
        %2311 = vmatpush1.bf16.msra.mxu0 0
        %2312 = vmatprep.subr.bf16.mxu0 0
        %2313 = vmatpush1.bf16.msra.mxu0 0
        %2314 = vmatprep.subr.bf16.mxu0 0
        %2315 = vmatpush1.bf16.msra.mxu0 0
        %2316 = vmatprep.subr.bf16.mxu0 0
        %2317 = vmatpush1.bf16.msra.mxu0 0
        %2318 = vmatprep.subr.bf16.mxu0 0
        %2319 = vmatpush1.bf16.msra.mxu0 0
        %2320 = vmatprep.subr.bf16.mxu0 0
        %2321 = vmatpush1.bf16.msra.mxu0 0
        %2322 = vmatprep.subr.bf16.mxu0 0
        %2323 = vmatpush1.bf16.msra.mxu0 0
        %2324 = vmatprep.subr.bf16.mxu0 0
        %2325 = vmatpush1.bf16.msra.mxu0 0
        %2326 = vmatprep.subr.bf16.mxu0 0
        %2327 = vmatpush1.bf16.msra.mxu0 0
        %2328 = vmatprep.subr.bf16.mxu0 0
        %2329 = vmatpush1.bf16.msra.mxu0 0
        %2330 = vmatprep.subr.bf16.mxu0 0
        %2331 = vmatpush1.bf16.msra.mxu0 0
        %2332 = vmatprep.mubr.bf16.mxu0 0
        %2333 = vmatmul.mubr.bf16.gmra.mrb[0].mxu0 %v2298
        %v2334 = vpop.f32.mrb[0].mxu0
        %v2335 = vadd.f32 %v2280, %v2334
        %v2336 = vpop.f32.mrb[0].mxu0
        %v2337 = vpop.f32.mrb[0].mxu0
        %v2338 = vpop.f32.mrb[0].mxu0
        %2339 = vdwg.mxu0
        %v2340 = vld [vmem:[#allocation2 + $0x2] sm:$0xff]
        %s2341 = scalar_lea.vmem %s21, 32
        %v2342 = vld [vmem:[%s2341] sm:$0xf]
        %v2343 = vld [vmem:[%s2341 + $0x4] sm:$0xf]
        %v2344 = vld [vmem:[%s2341 + $0x8] sm:$0xf]
        %v2345 = vld [vmem:[%s2341 + $0xc] sm:$0xf]
        %v2346 = vpack.c.bf16 %v2340, %v2340
        %v2351 = vunpack.c.l.b16 %v2342
        %v2352 = vunpack.c.l.b16 %v2343
        %v2353 = vunpack.c.l.b16 %v2344
        %v2354 = vunpack.c.l.b16 %v2345
        %v2355 = vpack.c.b16 %v2352, %v2351
        %v2356 = vpack.c.b16 %v2354, %v2353
        %v2360 = vsel %vm1552, %v2346, 0
        %2362 = vmatprep.subr.bf16.mxu0 0
        %2363 = vmatpush1.bf16.msra.mxu0 %v2355
        %2364 = vmatprep.subr.bf16.mxu0 0
        %2365 = vmatpush1.bf16.msra.mxu0 %v2356
        %2366 = vmatprep.subr.bf16.mxu0 0
        %2367 = vmatpush1.bf16.msra.mxu0 0
        %2368 = vmatprep.subr.bf16.mxu0 0
        %2369 = vmatpush1.bf16.msra.mxu0 0
        %2370 = vmatprep.subr.bf16.mxu0 0
        %2371 = vmatpush1.bf16.msra.mxu0 0
        %2372 = vmatprep.subr.bf16.mxu0 0
        %2373 = vmatpush1.bf16.msra.mxu0 0
        %2374 = vmatprep.subr.bf16.mxu0 0
        %2375 = vmatpush1.bf16.msra.mxu0 0
        %2376 = vmatprep.subr.bf16.mxu0 0
        %2377 = vmatpush1.bf16.msra.mxu0 0
        %2378 = vmatprep.subr.bf16.mxu0 0
        %2379 = vmatpush1.bf16.msra.mxu0 0
        %2380 = vmatprep.subr.bf16.mxu0 0
        %2381 = vmatpush1.bf16.msra.mxu0 0
        %2382 = vmatprep.subr.bf16.mxu0 0
        %2383 = vmatpush1.bf16.msra.mxu0 0
        %2384 = vmatprep.subr.bf16.mxu0 0
        %2385 = vmatpush1.bf16.msra.mxu0 0
        %2386 = vmatprep.subr.bf16.mxu0 0
        %2387 = vmatpush1.bf16.msra.mxu0 0
        %2388 = vmatprep.subr.bf16.mxu0 0
        %2389 = vmatpush1.bf16.msra.mxu0 0
        %2390 = vmatprep.subr.bf16.mxu0 0
        %2391 = vmatpush1.bf16.msra.mxu0 0
        %2392 = vmatprep.subr.bf16.mxu0 0
        %2393 = vmatpush1.bf16.msra.mxu0 0
        %2394 = vmatprep.mubr.bf16.mxu0 0
        %2395 = vmatmul.mubr.bf16.gmra.mrb[0].mxu0 %v2360
        %v2396 = vpop.f32.mrb[0].mxu0
        %v2397 = vadd.f32 0.0, %v2396
        %v2398 = vpop.f32.mrb[0].mxu0
        %v2399 = vpop.f32.mrb[0].mxu0
        %v2400 = vpop.f32.mrb[0].mxu0
        %2401 = vdwg.mxu0
        %v2402 = vadd.f32 %v2335, %v2397
        %v2403 = vld [vmem:[#allocation2 + $0x3] sm:$0xff]
        %s2404 = scalar_lea.vmem %s21, 48
        %v2405 = vld [vmem:[%s2404] sm:$0xf]
        %v2406 = vld [vmem:[%s2404 + $0x4] sm:$0xf]
        %v2407 = vld [vmem:[%s2404 + $0x8] sm:$0xf]
        %v2408 = vld [vmem:[%s2404 + $0xc] sm:$0xf]
        %v2409 = vpack.c.bf16 %v2403, %v2403
        %v2414 = vunpack.c.l.b16 %v2405
        %v2415 = vunpack.c.l.b16 %v2406
        %v2416 = vunpack.c.l.b16 %v2407
        %v2417 = vunpack.c.l.b16 %v2408
        %v2418 = vpack.c.b16 %v2415, %v2414
        %v2419 = vpack.c.b16 %v2417, %v2416
        %v2423 = vsel %vm1552, %v2409, 0
        %2425 = vmatprep.subr.bf16.mxu0 0
        %2426 = vmatpush1.bf16.msra.mxu0 %v2418
        %2427 = vmatprep.subr.bf16.mxu0 0
        %2428 = vmatpush1.bf16.msra.mxu0 %v2419
        %2429 = vmatprep.subr.bf16.mxu0 0
        %2430 = vmatpush1.bf16.msra.mxu0 0
        %2431 = vmatprep.subr.bf16.mxu0 0
        %2432 = vmatpush1.bf16.msra.mxu0 0
        %2433 = vmatprep.subr.bf16.mxu0 0
        %2434 = vmatpush1.bf16.msra.mxu0 0
        %2435 = vmatprep.subr.bf16.mxu0 0
        %2436 = vmatpush1.bf16.msra.mxu0 0
        %2437 = vmatprep.subr.bf16.mxu0 0
        %2438 = vmatpush1.bf16.msra.mxu0 0
        %2439 = vmatprep.subr.bf16.mxu0 0
        %2440 = vmatpush1.bf16.msra.mxu0 0
        %2441 = vmatprep.subr.bf16.mxu0 0
        %2442 = vmatpush1.bf16.msra.mxu0 0
        %2443 = vmatprep.subr.bf16.mxu0 0
        %2444 = vmatpush1.bf16.msra.mxu0 0
        %2445 = vmatprep.subr.bf16.mxu0 0
        %2446 = vmatpush1.bf16.msra.mxu0 0
        %2447 = vmatprep.subr.bf16.mxu0 0
        %2448 = vmatpush1.bf16.msra.mxu0 0
        %2449 = vmatprep.subr.bf16.mxu0 0
        %2450 = vmatpush1.bf16.msra.mxu0 0
        %2451 = vmatprep.subr.bf16.mxu0 0
        %2452 = vmatpush1.bf16.msra.mxu0 0
        %2453 = vmatprep.subr.bf16.mxu0 0
        %2454 = vmatpush1.bf16.msra.mxu0 0
        %2455 = vmatprep.subr.bf16.mxu0 0
        %2456 = vmatpush1.bf16.msra.mxu0 0
        %2457 = vmatprep.mubr.bf16.mxu0 0
        %2458 = vmatmul.mubr.bf16.gmra.mrb[0].mxu0 %v2423
        %v2459 = vpop.f32.mrb[0].mxu0
        %v2460 = vadd.f32 0.0, %v2459
        %v2461 = vpop.f32.mrb[0].mxu0
        %v2462 = vpop.f32.mrb[0].mxu0
        %v2463 = vpop.f32.mrb[0].mxu0
        %2464 = vdwg.mxu0
        %v2465 = vadd.f32 %v2402, %v2460
        %v2466 = vld [vmem:[#allocation2 + $0x4] sm:$0xff]
        %s2467 = scalar_lea.vmem %s21, 64
        %v2468 = vld [vmem:[%s2467] sm:$0xf]
        %v2469 = vld [vmem:[%s2467 + $0x4] sm:$0xf]
        %v2470 = vld [vmem:[%s2467 + $0x8] sm:$0xf]
        %v2471 = vld [vmem:[%s2467 + $0xc] sm:$0xf]
        %v2472 = vpack.c.bf16 %v2466, %v2466
        %v2477 = vunpack.c.l.b16 %v2468
        %v2478 = vunpack.c.l.b16 %v2469
        %v2479 = vunpack.c.l.b16 %v2470
        %v2480 = vunpack.c.l.b16 %v2471
        %v2481 = vpack.c.b16 %v2478, %v2477
        %v2482 = vpack.c.b16 %v2480, %v2479
        %v2486 = vsel %vm1552, %v2472, 0
        %2488 = vmatprep.subr.bf16.mxu0 0
        %2489 = vmatpush1.bf16.msra.mxu0 %v2481
        %2490 = vmatprep.subr.bf16.mxu0 0
        %2491 = vmatpush1.bf16.msra.mxu0 %v2482
        %2492 = vmatprep.subr.bf16.mxu0 0
        %2493 = vmatpush1.bf16.msra.mxu0 0
        %2494 = vmatprep.subr.bf16.mxu0 0
        %2495 = vmatpush1.bf16.msra.mxu0 0
        %2496 = vmatprep.subr.bf16.mxu0 0
        %2497 = vmatpush1.bf16.msra.mxu0 0
        %2498 = vmatprep.subr.bf16.mxu0 0
        %2499 = vmatpush1.bf16.msra.mxu0 0
        %2500 = vmatprep.subr.bf16.mxu0 0
        %2501 = vmatpush1.bf16.msra.mxu0 0
        %2502 = vmatprep.subr.bf16.mxu0 0
        %2503 = vmatpush1.bf16.msra.mxu0 0
        %2504 = vmatprep.subr.bf16.mxu0 0
        %2505 = vmatpush1.bf16.msra.mxu0 0
        %2506 = vmatprep.subr.bf16.mxu0 0
        %2507 = vmatpush1.bf16.msra.mxu0 0
        %2508 = vmatprep.subr.bf16.mxu0 0
        %2509 = vmatpush1.bf16.msra.mxu0 0
        %2510 = vmatprep.subr.bf16.mxu0 0
        %2511 = vmatpush1.bf16.msra.mxu0 0
        %2512 = vmatprep.subr.bf16.mxu0 0
        %2513 = vmatpush1.bf16.msra.mxu0 0
        %2514 = vmatprep.subr.bf16.mxu0 0
        %2515 = vmatpush1.bf16.msra.mxu0 0
        %2516 = vmatprep.subr.bf16.mxu0 0
        %2517 = vmatpush1.bf16.msra.mxu0 0
        %2518 = vmatprep.subr.bf16.mxu0 0
        %2519 = vmatpush1.bf16.msra.mxu0 0
        %2520 = vmatprep.mubr.bf16.mxu0 0
        %2521 = vmatmul.mubr.bf16.gmra.mrb[0].mxu0 %v2486
        %v2522 = vpop.f32.mrb[0].mxu0
        %v2523 = vadd.f32 0.0, %v2522
        %v2524 = vpop.f32.mrb[0].mxu0
        %v2525 = vpop.f32.mrb[0].mxu0
        %v2526 = vpop.f32.mrb[0].mxu0
        %2527 = vdwg.mxu0
        %v2528 = vadd.f32 %v2465, %v2523
        %v2530 = vlaneseq
        %v2531 = vshrl.u32 %v2530, 7
        %v2532 = vsub.s32 0, %v2531
        %v2533 = vrot.slane %v2215, %v2532
        %v2535 = vadd.f32 %v2528, %v2533
        %v2536 = vmax.f32 %v2535, 0.0
        %v2537 = vld [vmem:[#allocation25] sm:$0x1]
        %v2538 = vld [vmem:[#allocation27] sm:$0x1]
        %v2539 = vsel %vm1630, %v2536, 0.0
        %2540 = vadd.xlane.f32.xlu0 %v2539
        %v2541 = vpop.xlane.xlu0 %2540
        %v2542 = vmul.f32 %v2541, %v2179
        %v2543 = vsub.f32 %v2536, %v2542
        %v2544 = vmul.f32 %v2543, %v2543
        %v2545 = vsel %vm1630, %v2544, 0.0
        %2546 = vadd.xlane.f32.xlu0 %v2545
        %v2547 = vpop.xlane.xlu0 %2546
        %v2548 = vmul.f32 %v2547, %v2179
        %v2549 = vadd.f32 %v2548, 1e-05
        %v2550 = vrsqrt.pop %v2549
        %v2551 = vmul.f32 %v2543, %v2550
        %v2552 = vlaneseq
        %v2553 = vshrl.u32 %v2552, 7
        %v2554 = vsub.s32 0, %v2553
        %v2555 = vrot.slane %v2537, %v2554
        %v2556 = vmul.f32 %v2551, %v2555
        %v2557 = vlaneseq
        %v2558 = vshrl.u32 %v2557, 7
        %v2559 = vsub.s32 0, %v2558
        %v2560 = vrot.slane %v2538, %v2559
        %v2561 = vadd.f32 %v2556, %v2560
        %v2562 = vld [vmem:[#allocation25 + $0x1] sm:$0x1]
        %v2563 = vld [vmem:[#allocation27 + $0x1] sm:$0x1]
        %2565 = vrot.lane.b32.xlu0 %v2536, 112
        %v2566 = vpop.permute.xlu0 %2565
        %v2568 = vsel %vm1630, %v2566, 0.0
        %2569 = vadd.xlane.f32.xlu0 %v2568
        %v2570 = vpop.xlane.xlu0 %2569
        %v2571 = vmul.f32 %v2570, %v2179
        %v2572 = vsub.f32 %v2536, %v2571
        %v2573 = vmul.f32 %v2572, %v2572
        %2575 = vrot.lane.b32.xlu0 %v2573, 112
        %v2576 = vpop.permute.xlu0 %2575
        %v2578 = vsel %vm1630, %v2576, 0.0
        %2579 = vadd.xlane.f32.xlu0 %v2578
        %v2580 = vpop.xlane.xlu0 %2579
        %v2581 = vmul.f32 %v2580, %v2179
        %v2582 = vadd.f32 %v2581, 1e-05
        %v2583 = vrsqrt.pop %v2582
        %v2584 = vmul.f32 %v2572, %v2583
        %v2585 = vlaneseq
        %v2586 = vshrl.u32 %v2585, 7
        %v2587 = vsub.s32 0, %v2586
        %v2588 = vrot.slane %v2562, %v2587
        %2590 = vrot.lane.b32.xlu0 %v2588, 16
        %v2591 = vpop.permute.xlu0 %2590
        %v2593 = vmul.f32 %v2584, %v2591
        %v2594 = vlaneseq
        %v2595 = vshrl.u32 %v2594, 7
        %v2596 = vsub.s32 0, %v2595
        %v2597 = vrot.slane %v2563, %v2596
        %2599 = vrot.lane.b32.xlu0 %v2597, 16
        %v2600 = vpop.permute.xlu0 %2599
        %v2602 = vadd.f32 %v2593, %v2600
        %v2603 = vld [vmem:[%s29] sm:$0xf]
        %v2604 = vld [vmem:[%s29 + $0x4] sm:$0xf]
        %v2605 = vpack.c.bf16 %v2561, %v2561
        %v2606 = vld [vmem:[#allocation28] sm:$0x1]
        %v2607 = vlaneseq
        %v2608 = vshrl.u32 %v2607, 7
        %v2609 = vsub.s32 0, %v2608
        %v2610 = vrot.slane %v2606, %v2609
        %v2613 = vunpack.c.l.b16 %v2603
        %v2614 = vunpack.c.l.b16 %v2604
        %v2615 = vpack.c.b16 %v2614, %v2613
        %v2618 = vsel %vm1630, %v2605, 0
        %2620 = vmatprep.subr.bf16.mxu0 0
        %2621 = vmatpush1.bf16.msra.mxu0 %v2615
        %2622 = vmatprep.subr.bf16.mxu0 0
        %2623 = vmatpush1.bf16.msra.mxu0 0
        %2624 = vmatprep.subr.bf16.mxu0 0
        %2625 = vmatpush1.bf16.msra.mxu0 0
        %2626 = vmatprep.subr.bf16.mxu0 0
        %2627 = vmatpush1.bf16.msra.mxu0 0
        %2628 = vmatprep.subr.bf16.mxu0 0
        %2629 = vmatpush1.bf16.msra.mxu0 0
        %2630 = vmatprep.subr.bf16.mxu0 0
        %2631 = vmatpush1.bf16.msra.mxu0 0
        %2632 = vmatprep.subr.bf16.mxu0 0
        %2633 = vmatpush1.bf16.msra.mxu0 0
        %2634 = vmatprep.subr.bf16.mxu0 0
        %2635 = vmatpush1.bf16.msra.mxu0 0
        %2636 = vmatprep.subr.bf16.mxu0 0
        %2637 = vmatpush1.bf16.msra.mxu0 0
        %2638 = vmatprep.subr.bf16.mxu0 0
        %2639 = vmatpush1.bf16.msra.mxu0 0
        %2640 = vmatprep.subr.bf16.mxu0 0
        %2641 = vmatpush1.bf16.msra.mxu0 0
        %2642 = vmatprep.subr.bf16.mxu0 0
        %2643 = vmatpush1.bf16.msra.mxu0 0
        %2644 = vmatprep.subr.bf16.mxu0 0
        %2645 = vmatpush1.bf16.msra.mxu0 0
        %2646 = vmatprep.subr.bf16.mxu0 0
        %2647 = vmatpush1.bf16.msra.mxu0 0
        %2648 = vmatprep.subr.bf16.mxu0 0
        %2649 = vmatpush1.bf16.msra.mxu0 0
        %2650 = vmatprep.subr.bf16.mxu0 0
        %2651 = vmatpush1.bf16.msra.mxu0 0
        %2652 = vmatprep.mubr.bf16.mxu0 0
        %2653 = vmatmul.mubr.bf16.gmra.mrb[0].mxu0 %v2618
        %v2654 = vpop.f32.mrb[0].mxu0
        %v2655 = vadd.f32 %v2610, %v2654
        %v2656 = vpop.f32.mrb[0].mxu0
        %v2657 = vpop.f32.mrb[0].mxu0
        %v2658 = vpop.f32.mrb[0].mxu0
        %2659 = vdwg.mxu0
        %v2660 = vmax.f32 %v2655, 0.0
        %v2661 = vld [vmem:[%s33] sm:$0xf]
        %v2662 = vld [vmem:[%s33 + $0x4] sm:$0xf]
        %v2663 = vpack.c.bf16 %v2660, %v2660
        %v2664 = vld [vmem:[#allocation30] sm:$0x1]
        %v2666 = vlaneseq
        %v2667 = vshrl.u32 %v2666, 7
        %v2668 = vsub.s32 0, %v2667
        %v2669 = vrot.slane %v2664, %v2668
        %v2673 = vunpack.c.l.b16 %v2661
        %v2674 = vunpack.c.l.b16 %v2662
        %v2675 = vpack.c.b16 %v2674, %v2673
        %v2678 = vsel %vm1630, %v2663, 0
        %2680 = vmatprep.subr.bf16.mxu0 0
        %2681 = vmatpush1.bf16.msra.mxu0 %v2675
        %2682 = vmatprep.subr.bf16.mxu0 0
        %2683 = vmatpush1.bf16.msra.mxu0 0
        %2684 = vmatprep.subr.bf16.mxu0 0
        %2685 = vmatpush1.bf16.msra.mxu0 0
        %2686 = vmatprep.subr.bf16.mxu0 0
        %2687 = vmatpush1.bf16.msra.mxu0 0
        %2688 = vmatprep.subr.bf16.mxu0 0
        %2689 = vmatpush1.bf16.msra.mxu0 0
        %2690 = vmatprep.subr.bf16.mxu0 0
        %2691 = vmatpush1.bf16.msra.mxu0 0
        %2692 = vmatprep.subr.bf16.mxu0 0
        %2693 = vmatpush1.bf16.msra.mxu0 0
        %2694 = vmatprep.subr.bf16.mxu0 0
        %2695 = vmatpush1.bf16.msra.mxu0 0
        %2696 = vmatprep.subr.bf16.mxu0 0
        %2697 = vmatpush1.bf16.msra.mxu0 0
        %2698 = vmatprep.subr.bf16.mxu0 0
        %2699 = vmatpush1.bf16.msra.mxu0 0
        %2700 = vmatprep.subr.bf16.mxu0 0
        %2701 = vmatpush1.bf16.msra.mxu0 0
        %2702 = vmatprep.subr.bf16.mxu0 0
        %2703 = vmatpush1.bf16.msra.mxu0 0
        %2704 = vmatprep.subr.bf16.mxu0 0
        %2705 = vmatpush1.bf16.msra.mxu0 0
        %2706 = vmatprep.subr.bf16.mxu0 0
        %2707 = vmatpush1.bf16.msra.mxu0 0
        %2708 = vmatprep.subr.bf16.mxu0 0
        %2709 = vmatpush1.bf16.msra.mxu0 0
        %2710 = vmatprep.subr.bf16.mxu0 0
        %2711 = vmatpush1.bf16.msra.mxu0 0
        %2712 = vmatprep.mubr.bf16.mxu0 0
        %2713 = vmatmul.mubr.bf16.gmra.mrb[0].mxu0 %v2678
        %v2714 = vpop.f32.mrb[0].mxu0
        %v2715 = vadd.f32 %v2669, %v2714
        %v2716 = vpop.f32.mrb[0].mxu0
        %v2717 = vpop.f32.mrb[0].mxu0
        %v2718 = vpop.f32.mrb[0].mxu0
        %2719 = vdwg.mxu0
        %s2720 = scalar_lea.vmem %s29, 8
        %v2721 = vld [vmem:[%s2720] sm:$0xf]
        %v2722 = vld [vmem:[%s2720 + $0x4] sm:$0xf]
        %v2723 = vpack.c.bf16 %v2602, %v2602
        %v2724 = vld [vmem:[#allocation28 + $0x1] sm:$0x1]
        %v2725 = vlaneseq
        %v2726 = vshrl.u32 %v2725, 7
        %v2727 = vsub.s32 0, %v2726
        %v2728 = vrot.slane %v2724, %v2727
        %2730 = vrot.lane.b32.xlu0 %v2723, 112
        %v2731 = vpop.permute.xlu0 %2730
        %v2734 = vunpack.c.l.b16 %v2721
        %v2735 = vunpack.c.l.b16 %v2722
        %v2736 = vpack.c.b16 %v2735, %v2734
        %v2739 = vsel %vm1630, %v2731, 0
        %2741 = vmatprep.subr.bf16.mxu0 0
        %2742 = vmatpush1.bf16.msra.mxu0 %v2736
        %2743 = vmatprep.subr.bf16.mxu0 0
        %2744 = vmatpush1.bf16.msra.mxu0 0
        %2745 = vmatprep.subr.bf16.mxu0 0
        %2746 = vmatpush1.bf16.msra.mxu0 0
        %2747 = vmatprep.subr.bf16.mxu0 0
        %2748 = vmatpush1.bf16.msra.mxu0 0
        %2749 = vmatprep.subr.bf16.mxu0 0
        %2750 = vmatpush1.bf16.msra.mxu0 0
        %2751 = vmatprep.subr.bf16.mxu0 0
        %2752 = vmatpush1.bf16.msra.mxu0 0
        %2753 = vmatprep.subr.bf16.mxu0 0
        %2754 = vmatpush1.bf16.msra.mxu0 0
        %2755 = vmatprep.subr.bf16.mxu0 0
        %2756 = vmatpush1.bf16.msra.mxu0 0
        %2757 = vmatprep.subr.bf16.mxu0 0
        %2758 = vmatpush1.bf16.msra.mxu0 0
        %2759 = vmatprep.subr.bf16.mxu0 0
        %2760 = vmatpush1.bf16.msra.mxu0 0
        %2761 = vmatprep.subr.bf16.mxu0 0
        %2762 = vmatpush1.bf16.msra.mxu0 0
        %2763 = vmatprep.subr.bf16.mxu0 0
        %2764 = vmatpush1.bf16.msra.mxu0 0
        %2765 = vmatprep.subr.bf16.mxu0 0
        %2766 = vmatpush1.bf16.msra.mxu0 0
        %2767 = vmatprep.subr.bf16.mxu0 0
        %2768 = vmatpush1.bf16.msra.mxu0 0
        %2769 = vmatprep.subr.bf16.mxu0 0
        %2770 = vmatpush1.bf16.msra.mxu0 0
        %2771 = vmatprep.subr.bf16.mxu0 0
        %2772 = vmatpush1.bf16.msra.mxu0 0
        %2773 = vmatprep.mubr.bf16.mxu0 0
        %2774 = vmatmul.mubr.bf16.gmra.mrb[0].mxu0 %v2739
        %v2775 = vpop.f32.mrb[0].mxu0
        %v2776 = vadd.f32 %v2728, %v2775
        %v2777 = vpop.f32.mrb[0].mxu0
        %v2778 = vpop.f32.mrb[0].mxu0
        %v2779 = vpop.f32.mrb[0].mxu0
        %2780 = vdwg.mxu0
        %v2781 = vmax.f32 %v2776, 0.0
        %v2782 = vld [vmem:[#allocation31] sm:$0x1]
        %v2784 = vlaneseq
        %v2785 = vshrl.u32 %v2784, 7
        %v2786 = vsub.s32 0, %v2785
        %v2787 = vrot.slane %v2782, %v2786
        %v2789 = vmul.f32 %v2781, %v2787
        %v2790 = vsel %vm1630, %v2789, 0.0
        %2791 = vadd.xlane.f32.xlu0 %v2790
        %v2792 = vpop.xlane.xlu0 %2791
        %v2793 = vld [vmem:[#allocation9] sm:$0x1]
        %v2795 = vlaneseq
        %v2796 = vshrl.u32 %v2795, 7
        %v2797 = vsub.s32 0, %v2796
        %v2798 = vrot.slane %v2793, %v2797
        %v2800 = vadd.f32 %v2792, %v2798
        %v2801 = vxor.u32 %v2800, 2147483648
        %v2802 = vmul.f32 %v2801, 1.442695
        %v2803 = vpow.pop %v2802
        %v2804 = vadd.f32 %v2803, 1.0
        %v2805 = vrcp.pop %v2804
        %v2806 = vmul.f32 1.0, %v2805
        %v2807 = vld [vmem:[%s1504] sm:$0xff]
        %v2808 = vld [vmem:[%s53] sm:$0x1]
        %2810 = vset.pattern.permute.xlu0 0
        %2811 = vperm.xlu0 %2810, %v2807
        %v2812 = vpop.permute.xlu0 %2811
        %v2815 = vlaneseq
        %v2816 = vshrl.u32 %v2815, 7
        %v2817 = vsub.s32 0, %v2816
        %v2818 = vrot.slane %v2808, %v2817
        %v2820 = vmul.f32 %v2812, %v2818
        %v2821 = vld [vmem:[%s55] sm:$0x1]
        %v2823 = vlaneseq
        %v2824 = vshrl.u32 %v2823, 7
        %v2825 = vsub.s32 0, %v2824
        %v2826 = vrot.slane %v2821, %v2825
        %v2828 = vadd.f32 %v2820, %v2826
        %v2829 = vtanh.pop %v2828
        %v2830 = vadd.f32 %v2829, %v1627
        %v2831 = vld [vmem:[%s1317] sm:$0x1]
        %v2833 = vlaneseq
        %v2834 = vshrl.u32 %v2833, 7
        %v2835 = vsub.s32 0, %v2834
        %v2836 = vrot.slane %v2831, %v2835
        %2838 = vrot.lane.b32.xlu0 %v2212, 32
        %v2839 = vpop.permute.xlu0 %2838
        %2841 = vrot.lane.b32.xlu0 %v2836, 48
        %v2842 = vpop.permute.xlu0 %2841
        %v2844 = vsel %vm1552, %v2830, %v2839
        %vm2845 = vcmask 392192
        %v2846 = vsel %vm2845, %v2844, %v2842
        %vm2847 = vcmask 523264
        %2848 = vst.msk [vmem:[#allocation5 + $0x1] sm:$0xff] %vm2847, %v2846
        %v2849 = vld [vmem:[#allocation37] sm:$0xf]
        %v2850 = vld [vmem:[#allocation37 + $0x4] sm:$0xf]
        %v2851 = vld [vmem:[#allocation37 + $0x8] sm:$0xf]
        %v2852 = vld [vmem:[#allocation37 + $0xc] sm:$0xf]
        %v2853 = vld [vmem:[#allocation37 + $0x10] sm:$0xf]
        %v2854 = vld [vmem:[#allocation37 + $0x14] sm:$0xf]
        %v2855 = vld [vmem:[#allocation37 + $0x18] sm:$0xf]
        %v2856 = vld [vmem:[#allocation37 + $0x1c] sm:$0xf]
        %v2857 = vld [vmem:[#allocation37 + $0x20] sm:$0xf]
        %v2858 = vld [vmem:[#allocation37 + $0x24] sm:$0xf]
        %v2859 = vld [vmem:[#allocation37 + $0x28] sm:$0xf]
        %v2860 = vld [vmem:[#allocation37 + $0x2c] sm:$0xf]
        %v2861 = vld [vmem:[#allocation37 + $0x30] sm:$0xf]
        %v2862 = vld [vmem:[#allocation37 + $0x34] sm:$0xf]
        %v2863 = vld [vmem:[#allocation37 + $0x38] sm:$0xf]
        %v2864 = vld [vmem:[#allocation37 + $0x3c] sm:$0xf]
        %v2865 = vld [vmem:[#allocation37 + $0x40] sm:$0xf]
        %v2866 = vld [vmem:[#allocation37 + $0x44] sm:$0xf]
        %v2867 = vld [vmem:[#allocation37 + $0x48] sm:$0xf]
        %v2868 = vld [vmem:[#allocation37 + $0x4c] sm:$0xf]
        %v2869 = vld [vmem:[#allocation37 + $0x50] sm:$0xf]
        %v2870 = vld [vmem:[#allocation37 + $0x54] sm:$0xf]
        %v2871 = vld [vmem:[#allocation37 + $0x58] sm:$0xf]
        %v2872 = vld [vmem:[#allocation37 + $0x5c] sm:$0xf]
        %v2873 = vld [vmem:[#allocation5] sm:$0xff]
        %v2874 = vpack.c.bf16 %v2873, %v2873
        %v2875 = vld [vmem:[#allocation5 + $0x1] sm:$0xff]
        %v2876 = vpack.c.bf16 %v2875, %v2875
        %v2885 = vunpack.c.l.b16 %v2857
        %v2886 = vunpack.c.l.b16 %v2858
        %v2887 = vunpack.c.l.b16 %v2859
        %v2888 = vunpack.c.l.b16 %v2860
        %v2889 = vunpack.c.l.b16 %v2861
        %v2890 = vunpack.c.l.b16 %v2862
        %v2891 = vunpack.c.l.b16 %v2863
        %v2892 = vunpack.c.l.b16 %v2864
        %v2893 = vpack.c.b16 %v2886, %v2885
        %v2894 = vpack.c.b16 %v2888, %v2887
        %v2895 = vpack.c.b16 %v2890, %v2889
        %v2896 = vpack.c.b16 %v2892, %v2891
        %v2902 = vsel %vm2847, %v2876, 0
        %2904 = vmatprep.subr.bf16.mxu0 0
        %2905 = vmatpush1.bf16.msra.mxu0 %v2893
        %2906 = vmatprep.subr.bf16.mxu0 0
        %2907 = vmatpush1.bf16.msra.mxu0 %v2894
        %2908 = vmatprep.subr.bf16.mxu0 0
        %2909 = vmatpush1.bf16.msra.mxu0 %v2895
        %2910 = vmatprep.subr.bf16.mxu0 0
        %2911 = vmatpush1.bf16.msra.mxu0 %v2896
        %2912 = vmatprep.subr.bf16.mxu0 0
        %2913 = vmatpush1.bf16.msra.mxu0 0
        %2914 = vmatprep.subr.bf16.mxu0 0
        %2915 = vmatpush1.bf16.msra.mxu0 0
        %2916 = vmatprep.subr.bf16.mxu0 0
        %2917 = vmatpush1.bf16.msra.mxu0 0
        %2918 = vmatprep.subr.bf16.mxu0 0
        %2919 = vmatpush1.bf16.msra.mxu0 0
        %2920 = vmatprep.subr.bf16.mxu0 0
        %2921 = vmatpush1.bf16.msra.mxu0 0
        %2922 = vmatprep.subr.bf16.mxu0 0
        %2923 = vmatpush1.bf16.msra.mxu0 0
        %2924 = vmatprep.subr.bf16.mxu0 0
        %2925 = vmatpush1.bf16.msra.mxu0 0
        %2926 = vmatprep.subr.bf16.mxu0 0
        %2927 = vmatpush1.bf16.msra.mxu0 0
        %2928 = vmatprep.subr.bf16.mxu0 0
        %2929 = vmatpush1.bf16.msra.mxu0 0
        %2930 = vmatprep.subr.bf16.mxu0 0
        %2931 = vmatpush1.bf16.msra.mxu0 0
        %2932 = vmatprep.subr.bf16.mxu0 0
        %2933 = vmatpush1.bf16.msra.mxu0 0
        %2934 = vmatprep.subr.bf16.mxu0 0
        %2935 = vmatpush1.bf16.msra.mxu0 0
        %2936 = vmatprep.mubr.bf16.mxu0 0
        %2937 = vmatmul.mubr.bf16.gmra.mrb[0].mxu0 %v2902
        %v2938 = vpop.f32.mrb[0].mxu0
        %v2939 = vadd.f32 0.0, %v2938
        %v2940 = vpop.f32.mrb[0].mxu0
        %v2941 = vpop.f32.mrb[0].mxu0
        %v2942 = vpop.f32.mrb[0].mxu0
        %2943 = vdwg.mxu0
        %v2952 = vunpack.c.l.b16 %v2849
        %v2953 = vunpack.c.l.b16 %v2850
        %v2954 = vunpack.c.l.b16 %v2851
        %v2955 = vunpack.c.l.b16 %v2852
        %v2956 = vunpack.c.l.b16 %v2853
        %v2957 = vunpack.c.l.b16 %v2854
        %v2958 = vunpack.c.l.b16 %v2855
        %v2959 = vunpack.c.l.b16 %v2856
        %v2960 = vpack.c.b16 %v2953, %v2952
        %v2961 = vpack.c.b16 %v2955, %v2954
        %v2962 = vpack.c.b16 %v2957, %v2956
        %v2963 = vpack.c.b16 %v2959, %v2958
        %v2969 = vsel %vm2847, %v2874, 0
        %2971 = vmatprep.subr.bf16.mxu0 0
        %2972 = vmatpush1.bf16.msra.mxu0 %v2960
        %2973 = vmatprep.subr.bf16.mxu0 0
        %2974 = vmatpush1.bf16.msra.mxu0 %v2961
        %2975 = vmatprep.subr.bf16.mxu0 0
        %2976 = vmatpush1.bf16.msra.mxu0 %v2962
        %2977 = vmatprep.subr.bf16.mxu0 0
        %2978 = vmatpush1.bf16.msra.mxu0 %v2963
        %2979 = vmatprep.subr.bf16.mxu0 0
        %2980 = vmatpush1.bf16.msra.mxu0 0
        %2981 = vmatprep.subr.bf16.mxu0 0
        %2982 = vmatpush1.bf16.msra.mxu0 0
        %2983 = vmatprep.subr.bf16.mxu0 0
        %2984 = vmatpush1.bf16.msra.mxu0 0
        %2985 = vmatprep.subr.bf16.mxu0 0
        %2986 = vmatpush1.bf16.msra.mxu0 0
        %2987 = vmatprep.subr.bf16.mxu0 0
        %2988 = vmatpush1.bf16.msra.mxu0 0
        %2989 = vmatprep.subr.bf16.mxu0 0
        %2990 = vmatpush1.bf16.msra.mxu0 0
        %2991 = vmatprep.subr.bf16.mxu0 0
        %2992 = vmatpush1.bf16.msra.mxu0 0
        %2993 = vmatprep.subr.bf16.mxu0 0
        %2994 = vmatpush1.bf16.msra.mxu0 0
        %2995 = vmatprep.subr.bf16.mxu0 0
        %2996 = vmatpush1.bf16.msra.mxu0 0
        %2997 = vmatprep.subr.bf16.mxu0 0
        %2998 = vmatpush1.bf16.msra.mxu0 0
        %2999 = vmatprep.subr.bf16.mxu0 0
        %3000 = vmatpush1.bf16.msra.mxu0 0
        %3001 = vmatprep.subr.bf16.mxu0 0
        %3002 = vmatpush1.bf16.msra.mxu0 0
        %3003 = vmatprep.mubr.bf16.mxu0 0
        %3004 = vmatmul.mubr.bf16.gmra.mrb[0].mxu0 %v2969
        %v3005 = vpop.f32.mrb[0].mxu0
        %v3006 = vadd.f32 %v2939, %v3005
        %v3007 = vpop.f32.mrb[0].mxu0
        %v3008 = vpop.f32.mrb[0].mxu0
        %v3009 = vpop.f32.mrb[0].mxu0
        %3010 = vdwg.mxu0
        %v3011 = vld [vmem:[#allocation5 + $0x2] sm:$0xff]
        %v3012 = vpack.c.bf16 %v3011, %v3011
        %v3021 = vunpack.c.l.b16 %v2865
        %v3022 = vunpack.c.l.b16 %v2866
        %v3023 = vunpack.c.l.b16 %v2867
        %v3024 = vunpack.c.l.b16 %v2868
        %v3025 = vunpack.c.l.b16 %v2869
        %v3026 = vunpack.c.l.b16 %v2870
        %v3027 = vunpack.c.l.b16 %v2871
        %v3028 = vunpack.c.l.b16 %v2872
        %v3029 = vpack.c.b16 %v3022, %v3021
        %v3030 = vpack.c.b16 %v3024, %v3023
        %v3031 = vpack.c.b16 %v3026, %v3025
        %v3032 = vpack.c.b16 %v3028, %v3027
        %v3038 = vsel %vm2847, %v3012, 0
        %3040 = vmatprep.subr.bf16.mxu0 0
        %3041 = vmatpush1.bf16.msra.mxu0 %v3029
        %3042 = vmatprep.subr.bf16.mxu0 0
        %3043 = vmatpush1.bf16.msra.mxu0 %v3030
        %3044 = vmatprep.subr.bf16.mxu0 0
        %3045 = vmatpush1.bf16.msra.mxu0 %v3031
        %3046 = vmatprep.subr.bf16.mxu0 0
        %3047 = vmatpush1.bf16.msra.mxu0 %v3032
        %3048 = vmatprep.subr.bf16.mxu0 0
        %3049 = vmatpush1.bf16.msra.mxu0 0
        %3050 = vmatprep.subr.bf16.mxu0 0
        %3051 = vmatpush1.bf16.msra.mxu0 0
        %3052 = vmatprep.subr.bf16.mxu0 0
        %3053 = vmatpush1.bf16.msra.mxu0 0
        %3054 = vmatprep.subr.bf16.mxu0 0
        %3055 = vmatpush1.bf16.msra.mxu0 0
        %3056 = vmatprep.subr.bf16.mxu0 0
        %3057 = vmatpush1.bf16.msra.mxu0 0
        %3058 = vmatprep.subr.bf16.mxu0 0
        %3059 = vmatpush1.bf16.msra.mxu0 0
        %3060 = vmatprep.subr.bf16.mxu0 0
        %3061 = vmatpush1.bf16.msra.mxu0 0
        %3062 = vmatprep.subr.bf16.mxu0 0
        %3063 = vmatpush1.bf16.msra.mxu0 0
        %3064 = vmatprep.subr.bf16.mxu0 0
        %3065 = vmatpush1.bf16.msra.mxu0 0
        %3066 = vmatprep.subr.bf16.mxu0 0
        %3067 = vmatpush1.bf16.msra.mxu0 0
        %3068 = vmatprep.subr.bf16.mxu0 0
        %3069 = vmatpush1.bf16.msra.mxu0 0
        %3070 = vmatprep.subr.bf16.mxu0 0
        %3071 = vmatpush1.bf16.msra.mxu0 0
        %3072 = vmatprep.mubr.bf16.mxu0 0
        %3073 = vmatmul.mubr.bf16.gmra.mrb[0].mxu0 %v3038
        %v3074 = vpop.f32.mrb[0].mxu0
        %v3075 = vadd.f32 0.0, %v3074
        %v3076 = vpop.f32.mrb[0].mxu0
        %v3077 = vpop.f32.mrb[0].mxu0
        %v3078 = vpop.f32.mrb[0].mxu0
        %3079 = vdwg.mxu0
        %v3080 = vadd.f32 %v3006, %v3075
        %v3081 = vld [vmem:[%s59] sm:$0x1]
        %v3082 = vlaneseq
        %v3083 = vshrl.u32 %v3082, 7
        %v3084 = vsub.s32 0, %v3083
        %v3085 = vrot.slane %v3081, %v3084
        %v3086 = vadd.f32 %v3080, %v3085
        %v3087 = vmax.f32 %v3086, 0.0
        %v3088 = vld [vmem:[%s61] sm:$0x1]
        %v3089 = vld [vmem:[%s63] sm:$0x1]
        %v3090 = vsel %vm2847, %v3087, 0.0
        %3091 = vadd.xlane.f32.xlu0 %v3090
        %v3092 = vpop.xlane.xlu0 %3091
        %v3093 = vrcp.pop 64.0
        %v3094 = vmul.f32 %v3092, %v3093
        %v3095 = vsub.f32 %v3087, %v3094
        %v3096 = vmul.f32 %v3095, %v3095
        %v3097 = vsel %vm2847, %v3096, 0.0
        %3098 = vadd.xlane.f32.xlu0 %v3097
        %v3099 = vpop.xlane.xlu0 %3098
        %v3100 = vmul.f32 %v3099, %v3093
        %v3101 = vadd.f32 %v3100, 1e-05
        %v3102 = vrsqrt.pop %v3101
        %v3103 = vmul.f32 %v3095, %v3102
        %v3104 = vlaneseq
        %v3105 = vshrl.u32 %v3104, 7
        %v3106 = vsub.s32 0, %v3105
        %v3107 = vrot.slane %v3088, %v3106
        %v3108 = vmul.f32 %v3103, %v3107
        %v3109 = vlaneseq
        %v3110 = vshrl.u32 %v3109, 7
        %v3111 = vsub.s32 0, %v3110
        %v3112 = vrot.slane %v3089, %v3111
        %v3113 = vadd.f32 %v3108, %v3112
        %v3114 = vld [vmem:[#allocation39] sm:$0xf]
        %v3115 = vld [vmem:[#allocation39 + $0x4] sm:$0xf]
        %v3116 = vld [vmem:[#allocation39 + $0x8] sm:$0xf]
        %v3117 = vld [vmem:[#allocation39 + $0xc] sm:$0xf]
        %v3118 = vld [vmem:[#allocation39 + $0x10] sm:$0xf]
        %v3119 = vld [vmem:[#allocation39 + $0x14] sm:$0xf]
        %v3120 = vld [vmem:[#allocation39 + $0x18] sm:$0xf]
        %v3121 = vld [vmem:[#allocation39 + $0x1c] sm:$0xf]
        %v3122 = vld [vmem:[#allocation39 + $0x20] sm:$0xf]
        %v3123 = vld [vmem:[#allocation39 + $0x24] sm:$0xf]
        %v3124 = vld [vmem:[#allocation39 + $0x28] sm:$0xf]
        %v3125 = vld [vmem:[#allocation39 + $0x2c] sm:$0xf]
        %v3126 = vld [vmem:[#allocation39 + $0x30] sm:$0xf]
        %v3127 = vld [vmem:[#allocation39 + $0x34] sm:$0xf]
        %v3128 = vld [vmem:[#allocation39 + $0x38] sm:$0xf]
        %v3129 = vld [vmem:[#allocation39 + $0x3c] sm:$0xf]
        %v3130 = vld [vmem:[#allocation39 + $0x40] sm:$0xf]
        %v3131 = vld [vmem:[#allocation39 + $0x44] sm:$0xf]
        %v3132 = vld [vmem:[#allocation39 + $0x48] sm:$0xf]
        %v3133 = vld [vmem:[#allocation39 + $0x4c] sm:$0xf]
        %v3134 = vld [vmem:[#allocation39 + $0x50] sm:$0xf]
        %v3135 = vld [vmem:[#allocation39 + $0x54] sm:$0xf]
        %v3136 = vld [vmem:[#allocation39 + $0x58] sm:$0xf]
        %v3137 = vld [vmem:[#allocation39 + $0x5c] sm:$0xf]
        %v3138 = vld [vmem:[%s67] sm:$0x1]
        %3139 = vst.msk [vmem:[#allocation6 + $0x1] sm:$0xff] %vm2847, %v3113
        %v3140 = vld [vmem:[#allocation6] sm:$0xff]
        %v3141 = vpack.c.bf16 %v3140, %v3140
        %v3142 = vld [vmem:[#allocation6 + $0x1] sm:$0xff]
        %v3143 = vpack.c.bf16 %v3142, %v3142
        %v3152 = vunpack.c.l.b16 %v3122
        %v3153 = vunpack.c.l.b16 %v3123
        %v3154 = vunpack.c.l.b16 %v3124
        %v3155 = vunpack.c.l.b16 %v3125
        %v3156 = vunpack.c.l.b16 %v3126
        %v3157 = vunpack.c.l.b16 %v3127
        %v3158 = vunpack.c.l.b16 %v3128
        %v3159 = vunpack.c.l.b16 %v3129
        %v3160 = vpack.c.b16 %v3153, %v3152
        %v3161 = vpack.c.b16 %v3155, %v3154
        %v3162 = vpack.c.b16 %v3157, %v3156
        %v3163 = vpack.c.b16 %v3159, %v3158
        %v3169 = vsel %vm2847, %v3143, 0
        %3171 = vmatprep.subr.bf16.mxu0 0
        %3172 = vmatpush1.bf16.msra.mxu0 %v3160
        %3173 = vmatprep.subr.bf16.mxu0 0
        %3174 = vmatpush1.bf16.msra.mxu0 %v3161
        %3175 = vmatprep.subr.bf16.mxu0 0
        %3176 = vmatpush1.bf16.msra.mxu0 %v3162
        %3177 = vmatprep.subr.bf16.mxu0 0
        %3178 = vmatpush1.bf16.msra.mxu0 %v3163
        %3179 = vmatprep.subr.bf16.mxu0 0
        %3180 = vmatpush1.bf16.msra.mxu0 0
        %3181 = vmatprep.subr.bf16.mxu0 0
        %3182 = vmatpush1.bf16.msra.mxu0 0
        %3183 = vmatprep.subr.bf16.mxu0 0
        %3184 = vmatpush1.bf16.msra.mxu0 0
        %3185 = vmatprep.subr.bf16.mxu0 0
        %3186 = vmatpush1.bf16.msra.mxu0 0
        %3187 = vmatprep.subr.bf16.mxu0 0
        %3188 = vmatpush1.bf16.msra.mxu0 0
        %3189 = vmatprep.subr.bf16.mxu0 0
        %3190 = vmatpush1.bf16.msra.mxu0 0
        %3191 = vmatprep.subr.bf16.mxu0 0
        %3192 = vmatpush1.bf16.msra.mxu0 0
        %3193 = vmatprep.subr.bf16.mxu0 0
        %3194 = vmatpush1.bf16.msra.mxu0 0
        %3195 = vmatprep.subr.bf16.mxu0 0
        %3196 = vmatpush1.bf16.msra.mxu0 0
        %3197 = vmatprep.subr.bf16.mxu0 0
        %3198 = vmatpush1.bf16.msra.mxu0 0
        %3199 = vmatprep.subr.bf16.mxu0 0
        %3200 = vmatpush1.bf16.msra.mxu0 0
        %3201 = vmatprep.subr.bf16.mxu0 0
        %3202 = vmatpush1.bf16.msra.mxu0 0
        %3203 = vmatprep.mubr.bf16.mxu0 0
        %3204 = vmatmul.mubr.bf16.gmra.mrb[0].mxu0 %v3169
        %v3205 = vpop.f32.mrb[0].mxu0
        %v3206 = vadd.f32 0.0, %v3205
        %v3207 = vpop.f32.mrb[0].mxu0
        %v3208 = vpop.f32.mrb[0].mxu0
        %v3209 = vpop.f32.mrb[0].mxu0
        %3210 = vdwg.mxu0
        %v3219 = vunpack.c.l.b16 %v3114
        %v3220 = vunpack.c.l.b16 %v3115
        %v3221 = vunpack.c.l.b16 %v3116
        %v3222 = vunpack.c.l.b16 %v3117
        %v3223 = vunpack.c.l.b16 %v3118
        %v3224 = vunpack.c.l.b16 %v3119
        %v3225 = vunpack.c.l.b16 %v3120
        %v3226 = vunpack.c.l.b16 %v3121
        %v3227 = vpack.c.b16 %v3220, %v3219
        %v3228 = vpack.c.b16 %v3222, %v3221
        %v3229 = vpack.c.b16 %v3224, %v3223
        %v3230 = vpack.c.b16 %v3226, %v3225
        %v3236 = vsel %vm2847, %v3141, 0
        %3238 = vmatprep.subr.bf16.mxu0 0
        %3239 = vmatpush1.bf16.msra.mxu0 %v3227
        %3240 = vmatprep.subr.bf16.mxu0 0
        %3241 = vmatpush1.bf16.msra.mxu0 %v3228
        %3242 = vmatprep.subr.bf16.mxu0 0
        %3243 = vmatpush1.bf16.msra.mxu0 %v3229
        %3244 = vmatprep.subr.bf16.mxu0 0
        %3245 = vmatpush1.bf16.msra.mxu0 %v3230
        %3246 = vmatprep.subr.bf16.mxu0 0
        %3247 = vmatpush1.bf16.msra.mxu0 0
        %3248 = vmatprep.subr.bf16.mxu0 0
        %3249 = vmatpush1.bf16.msra.mxu0 0
        %3250 = vmatprep.subr.bf16.mxu0 0
        %3251 = vmatpush1.bf16.msra.mxu0 0
        %3252 = vmatprep.subr.bf16.mxu0 0
        %3253 = vmatpush1.bf16.msra.mxu0 0
        %3254 = vmatprep.subr.bf16.mxu0 0
        %3255 = vmatpush1.bf16.msra.mxu0 0
        %3256 = vmatprep.subr.bf16.mxu0 0
        %3257 = vmatpush1.bf16.msra.mxu0 0
        %3258 = vmatprep.subr.bf16.mxu0 0
        %3259 = vmatpush1.bf16.msra.mxu0 0
        %3260 = vmatprep.subr.bf16.mxu0 0
        %3261 = vmatpush1.bf16.msra.mxu0 0
        %3262 = vmatprep.subr.bf16.mxu0 0
        %3263 = vmatpush1.bf16.msra.mxu0 0
        %3264 = vmatprep.subr.bf16.mxu0 0
        %3265 = vmatpush1.bf16.msra.mxu0 0
        %3266 = vmatprep.subr.bf16.mxu0 0
        %3267 = vmatpush1.bf16.msra.mxu0 0
        %3268 = vmatprep.subr.bf16.mxu0 0
        %3269 = vmatpush1.bf16.msra.mxu0 0
        %3270 = vmatprep.mubr.bf16.mxu0 0
        %3271 = vmatmul.mubr.bf16.gmra.mrb[0].mxu0 %v3236
        %v3272 = vpop.f32.mrb[0].mxu0
        %v3273 = vadd.f32 %v3206, %v3272
        %v3274 = vpop.f32.mrb[0].mxu0
        %v3275 = vpop.f32.mrb[0].mxu0
        %v3276 = vpop.f32.mrb[0].mxu0
        %3277 = vdwg.mxu0
        %v3278 = vld [vmem:[#allocation6 + $0x2] sm:$0xff]
        %v3279 = vpack.c.bf16 %v3278, %v3278
        %v3288 = vunpack.c.l.b16 %v3130
        %v3289 = vunpack.c.l.b16 %v3131
        %v3290 = vunpack.c.l.b16 %v3132
        %v3291 = vunpack.c.l.b16 %v3133
        %v3292 = vunpack.c.l.b16 %v3134
        %v3293 = vunpack.c.l.b16 %v3135
        %v3294 = vunpack.c.l.b16 %v3136
        %v3295 = vunpack.c.l.b16 %v3137
        %v3296 = vpack.c.b16 %v3289, %v3288
        %v3297 = vpack.c.b16 %v3291, %v3290
        %v3298 = vpack.c.b16 %v3293, %v3292
        %v3299 = vpack.c.b16 %v3295, %v3294
        %v3305 = vsel %vm2847, %v3279, 0
        %3307 = vmatprep.subr.bf16.mxu0 0
        %3308 = vmatpush1.bf16.msra.mxu0 %v3296
        %3309 = vmatprep.subr.bf16.mxu0 0
        %3310 = vmatpush1.bf16.msra.mxu0 %v3297
        %3311 = vmatprep.subr.bf16.mxu0 0
        %3312 = vmatpush1.bf16.msra.mxu0 %v3298
        %3313 = vmatprep.subr.bf16.mxu0 0
        %3314 = vmatpush1.bf16.msra.mxu0 %v3299
        %3315 = vmatprep.subr.bf16.mxu0 0
        %3316 = vmatpush1.bf16.msra.mxu0 0
        %3317 = vmatprep.subr.bf16.mxu0 0
        %3318 = vmatpush1.bf16.msra.mxu0 0
        %3319 = vmatprep.subr.bf16.mxu0 0
        %3320 = vmatpush1.bf16.msra.mxu0 0
        %3321 = vmatprep.subr.bf16.mxu0 0
        %3322 = vmatpush1.bf16.msra.mxu0 0
        %3323 = vmatprep.subr.bf16.mxu0 0
        %3324 = vmatpush1.bf16.msra.mxu0 0
        %3325 = vmatprep.subr.bf16.mxu0 0
        %3326 = vmatpush1.bf16.msra.mxu0 0
        %3327 = vmatprep.subr.bf16.mxu0 0
        %3328 = vmatpush1.bf16.msra.mxu0 0
        %3329 = vmatprep.subr.bf16.mxu0 0
        %3330 = vmatpush1.bf16.msra.mxu0 0
        %3331 = vmatprep.subr.bf16.mxu0 0
        %3332 = vmatpush1.bf16.msra.mxu0 0
        %3333 = vmatprep.subr.bf16.mxu0 0
        %3334 = vmatpush1.bf16.msra.mxu0 0
        %3335 = vmatprep.subr.bf16.mxu0 0
        %3336 = vmatpush1.bf16.msra.mxu0 0
        %3337 = vmatprep.subr.bf16.mxu0 0
        %3338 = vmatpush1.bf16.msra.mxu0 0
        %3339 = vmatprep.mubr.bf16.mxu0 0
        %3340 = vmatmul.mubr.bf16.gmra.mrb[0].mxu0 %v3305
        %v3341 = vpop.f32.mrb[0].mxu0
        %v3342 = vadd.f32 0.0, %v3341
        %v3343 = vpop.f32.mrb[0].mxu0
        %v3344 = vpop.f32.mrb[0].mxu0
        %v3345 = vpop.f32.mrb[0].mxu0
        %3346 = vdwg.mxu0
        %v3347 = vadd.f32 %v3273, %v3342
        %v3348 = vlaneseq
        %v3349 = vshrl.u32 %v3348, 7
        %v3350 = vsub.s32 0, %v3349
        %v3351 = vrot.slane %v3138, %v3350
        %v3352 = vadd.f32 %v3347, %v3351
        %v3353 = vmax.f32 %v3352, 0.0
        %v3354 = vld [vmem:[%s69] sm:$0x1]
        %v3355 = vld [vmem:[%s71] sm:$0x1]
        %v3356 = vsel %vm2847, %v3353, 0.0
        %3357 = vadd.xlane.f32.xlu0 %v3356
        %v3358 = vpop.xlane.xlu0 %3357
        %v3359 = vmul.f32 %v3358, %v3093
        %v3360 = vsub.f32 %v3353, %v3359
        %v3361 = vmul.f32 %v3360, %v3360
        %v3362 = vsel %vm2847, %v3361, 0.0
        %3363 = vadd.xlane.f32.xlu0 %v3362
        %v3364 = vpop.xlane.xlu0 %3363
        %v3365 = vmul.f32 %v3364, %v3093
        %v3366 = vadd.f32 %v3365, 1e-05
        %v3367 = vrsqrt.pop %v3366
        %v3368 = vmul.f32 %v3360, %v3367
        %v3369 = vlaneseq
        %v3370 = vshrl.u32 %v3369, 7
        %v3371 = vsub.s32 0, %v3370
        %v3372 = vrot.slane %v3354, %v3371
        %v3373 = vmul.f32 %v3368, %v3372
        %v3374 = vlaneseq
        %v3375 = vshrl.u32 %v3374, 7
        %v3376 = vsub.s32 0, %v3375
        %v3377 = vrot.slane %v3355, %v3376
        %v3378 = vadd.f32 %v3373, %v3377
        %v3379 = vld [vmem:[%s73] sm:$0x1]
        %v3380 = vlaneseq
        %v3381 = vshrl.u32 %v3380, 7
        %v3382 = vsub.s32 0, %v3381
        %v3383 = vrot.slane %v3379, %v3382
        %v3384 = vmul.f32 %v3378, %v3383
        %v3385 = vsel %vm2847, %v3384, 0.0
        %3386 = vadd.xlane.f32.xlu0 %v3385
        %v3387 = vpop.xlane.xlu0 %3386
        %v3388 = vld [vmem:[%s75] sm:$0x1]
        %v3389 = vlaneseq
        %v3390 = vshrl.u32 %v3389, 7
        %v3391 = vsub.s32 0, %v3390
        %v3392 = vrot.slane %v3388, %v3391
        %v3393 = vadd.f32 %v3387, %v3392
        %v3394 = vmul.f32 %v3393, %v1526
        %s3395 = scalar_lea.vmem [#allocation37], 96
        %v3396 = vld [vmem:[%s3395] sm:$0xf]
        %v3397 = vld [vmem:[%s3395 + $0x4] sm:$0xf]
        %v3398 = vld [vmem:[%s3395 + $0x8] sm:$0xf]
        %v3399 = vld [vmem:[%s3395 + $0xc] sm:$0xf]
        %v3400 = vld [vmem:[%s3395 + $0x10] sm:$0xf]
        %v3401 = vld [vmem:[%s3395 + $0x14] sm:$0xf]
        %v3402 = vld [vmem:[%s3395 + $0x18] sm:$0xf]
        %v3403 = vld [vmem:[%s3395 + $0x1c] sm:$0xf]
        %v3404 = vld [vmem:[%s3395 + $0x20] sm:$0xf]
        %v3405 = vld [vmem:[%s3395 + $0x24] sm:$0xf]
        %v3406 = vld [vmem:[%s3395 + $0x28] sm:$0xf]
        %v3407 = vld [vmem:[%s3395 + $0x2c] sm:$0xf]
        %v3408 = vld [vmem:[%s3395 + $0x30] sm:$0xf]
        %v3409 = vld [vmem:[%s3395 + $0x34] sm:$0xf]
        %v3410 = vld [vmem:[%s3395 + $0x38] sm:$0xf]
        %v3411 = vld [vmem:[%s3395 + $0x3c] sm:$0xf]
        %v3412 = vld [vmem:[%s3395 + $0x40] sm:$0xf]
        %v3413 = vld [vmem:[%s3395 + $0x44] sm:$0xf]
        %v3414 = vld [vmem:[%s3395 + $0x48] sm:$0xf]
        %v3415 = vld [vmem:[%s3395 + $0x4c] sm:$0xf]
        %v3416 = vld [vmem:[%s3395 + $0x50] sm:$0xf]
        %v3417 = vld [vmem:[%s3395 + $0x54] sm:$0xf]
        %v3418 = vld [vmem:[%s3395 + $0x58] sm:$0xf]
        %v3419 = vld [vmem:[%s3395 + $0x5c] sm:$0xf]
        %v3420 = vld [vmem:[#allocation5] sm:$0xff]
        %v3421 = vpack.c.bf16 %v3420, %v3420
        %v3422 = vld [vmem:[#allocation5 + $0x1] sm:$0xff]
        %v3423 = vpack.c.bf16 %v3422, %v3422
        %v3432 = vunpack.c.l.b16 %v3404
        %v3433 = vunpack.c.l.b16 %v3405
        %v3434 = vunpack.c.l.b16 %v3406
        %v3435 = vunpack.c.l.b16 %v3407
        %v3436 = vunpack.c.l.b16 %v3408
        %v3437 = vunpack.c.l.b16 %v3409
        %v3438 = vunpack.c.l.b16 %v3410
        %v3439 = vunpack.c.l.b16 %v3411
        %v3440 = vpack.c.b16 %v3433, %v3432
        %v3441 = vpack.c.b16 %v3435, %v3434
        %v3442 = vpack.c.b16 %v3437, %v3436
        %v3443 = vpack.c.b16 %v3439, %v3438
        %v3449 = vsel %vm2847, %v3423, 0
        %3451 = vmatprep.subr.bf16.mxu0 0
        %3452 = vmatpush1.bf16.msra.mxu0 %v3440
        %3453 = vmatprep.subr.bf16.mxu0 0
        %3454 = vmatpush1.bf16.msra.mxu0 %v3441
        %3455 = vmatprep.subr.bf16.mxu0 0
        %3456 = vmatpush1.bf16.msra.mxu0 %v3442
        %3457 = vmatprep.subr.bf16.mxu0 0
        %3458 = vmatpush1.bf16.msra.mxu0 %v3443
        %3459 = vmatprep.subr.bf16.mxu0 0
        %3460 = vmatpush1.bf16.msra.mxu0 0
        %3461 = vmatprep.subr.bf16.mxu0 0
        %3462 = vmatpush1.bf16.msra.mxu0 0
        %3463 = vmatprep.subr.bf16.mxu0 0
        %3464 = vmatpush1.bf16.msra.mxu0 0
        %3465 = vmatprep.subr.bf16.mxu0 0
        %3466 = vmatpush1.bf16.msra.mxu0 0
        %3467 = vmatprep.subr.bf16.mxu0 0
        %3468 = vmatpush1.bf16.msra.mxu0 0
        %3469 = vmatprep.subr.bf16.mxu0 0
        %3470 = vmatpush1.bf16.msra.mxu0 0
        %3471 = vmatprep.subr.bf16.mxu0 0
        %3472 = vmatpush1.bf16.msra.mxu0 0
        %3473 = vmatprep.subr.bf16.mxu0 0
        %3474 = vmatpush1.bf16.msra.mxu0 0
        %3475 = vmatprep.subr.bf16.mxu0 0
        %3476 = vmatpush1.bf16.msra.mxu0 0
        %3477 = vmatprep.subr.bf16.mxu0 0
        %3478 = vmatpush1.bf16.msra.mxu0 0
        %3479 = vmatprep.subr.bf16.mxu0 0
        %3480 = vmatpush1.bf16.msra.mxu0 0
        %3481 = vmatprep.subr.bf16.mxu0 0
        %3482 = vmatpush1.bf16.msra.mxu0 0
        %3483 = vmatprep.mubr.bf16.mxu0 0
        %3484 = vmatmul.mubr.bf16.gmra.mrb[0].mxu0 %v3449
        %v3485 = vpop.f32.mrb[0].mxu0
        %v3486 = vadd.f32 0.0, %v3485
        %v3487 = vpop.f32.mrb[0].mxu0
        %v3488 = vpop.f32.mrb[0].mxu0
        %v3489 = vpop.f32.mrb[0].mxu0
        %3490 = vdwg.mxu0
        %v3499 = vunpack.c.l.b16 %v3396
        %v3500 = vunpack.c.l.b16 %v3397
        %v3501 = vunpack.c.l.b16 %v3398
        %v3502 = vunpack.c.l.b16 %v3399
        %v3503 = vunpack.c.l.b16 %v3400
        %v3504 = vunpack.c.l.b16 %v3401
        %v3505 = vunpack.c.l.b16 %v3402
        %v3506 = vunpack.c.l.b16 %v3403
        %v3507 = vpack.c.b16 %v3500, %v3499
        %v3508 = vpack.c.b16 %v3502, %v3501
        %v3509 = vpack.c.b16 %v3504, %v3503
        %v3510 = vpack.c.b16 %v3506, %v3505
        %v3516 = vsel %vm2847, %v3421, 0
        %3518 = vmatprep.subr.bf16.mxu0 0
        %3519 = vmatpush1.bf16.msra.mxu0 %v3507
        %3520 = vmatprep.subr.bf16.mxu0 0
        %3521 = vmatpush1.bf16.msra.mxu0 %v3508
        %3522 = vmatprep.subr.bf16.mxu0 0
        %3523 = vmatpush1.bf16.msra.mxu0 %v3509
        %3524 = vmatprep.subr.bf16.mxu0 0
        %3525 = vmatpush1.bf16.msra.mxu0 %v3510
        %3526 = vmatprep.subr.bf16.mxu0 0
        %3527 = vmatpush1.bf16.msra.mxu0 0
        %3528 = vmatprep.subr.bf16.mxu0 0
        %3529 = vmatpush1.bf16.msra.mxu0 0
        %3530 = vmatprep.subr.bf16.mxu0 0
        %3531 = vmatpush1.bf16.msra.mxu0 0
        %3532 = vmatprep.subr.bf16.mxu0 0
        %3533 = vmatpush1.bf16.msra.mxu0 0
        %3534 = vmatprep.subr.bf16.mxu0 0
        %3535 = vmatpush1.bf16.msra.mxu0 0
        %3536 = vmatprep.subr.bf16.mxu0 0
        %3537 = vmatpush1.bf16.msra.mxu0 0
        %3538 = vmatprep.subr.bf16.mxu0 0
        %3539 = vmatpush1.bf16.msra.mxu0 0
        %3540 = vmatprep.subr.bf16.mxu0 0
        %3541 = vmatpush1.bf16.msra.mxu0 0
        %3542 = vmatprep.subr.bf16.mxu0 0
        %3543 = vmatpush1.bf16.msra.mxu0 0
        %3544 = vmatprep.subr.bf16.mxu0 0
        %3545 = vmatpush1.bf16.msra.mxu0 0
        %3546 = vmatprep.subr.bf16.mxu0 0
        %3547 = vmatpush1.bf16.msra.mxu0 0
        %3548 = vmatprep.subr.bf16.mxu0 0
        %3549 = vmatpush1.bf16.msra.mxu0 0
        %3550 = vmatprep.mubr.bf16.mxu0 0
        %3551 = vmatmul.mubr.bf16.gmra.mrb[0].mxu0 %v3516
        %v3552 = vpop.f32.mrb[0].mxu0
        %v3553 = vadd.f32 %v3486, %v3552
        %v3554 = vpop.f32.mrb[0].mxu0
        %v3555 = vpop.f32.mrb[0].mxu0
        %v3556 = vpop.f32.mrb[0].mxu0
        %3557 = vdwg.mxu0
        %v3558 = vld [vmem:[#allocation5 + $0x2] sm:$0xff]
        %v3559 = vpack.c.bf16 %v3558, %v3558
        %v3568 = vunpack.c.l.b16 %v3412
        %v3569 = vunpack.c.l.b16 %v3413
        %v3570 = vunpack.c.l.b16 %v3414
        %v3571 = vunpack.c.l.b16 %v3415
        %v3572 = vunpack.c.l.b16 %v3416
        %v3573 = vunpack.c.l.b16 %v3417
        %v3574 = vunpack.c.l.b16 %v3418
        %v3575 = vunpack.c.l.b16 %v3419
        %v3576 = vpack.c.b16 %v3569, %v3568
        %v3577 = vpack.c.b16 %v3571, %v3570
        %v3578 = vpack.c.b16 %v3573, %v3572
        %v3579 = vpack.c.b16 %v3575, %v3574
        %v3585 = vsel %vm2847, %v3559, 0
        %3587 = vmatprep.subr.bf16.mxu0 0
        %3588 = vmatpush1.bf16.msra.mxu0 %v3576
        %3589 = vmatprep.subr.bf16.mxu0 0
        %3590 = vmatpush1.bf16.msra.mxu0 %v3577
        %3591 = vmatprep.subr.bf16.mxu0 0
        %3592 = vmatpush1.bf16.msra.mxu0 %v3578
        %3593 = vmatprep.subr.bf16.mxu0 0
        %3594 = vmatpush1.bf16.msra.mxu0 %v3579
        %3595 = vmatprep.subr.bf16.mxu0 0
        %3596 = vmatpush1.bf16.msra.mxu0 0
        %3597 = vmatprep.subr.bf16.mxu0 0
        %3598 = vmatpush1.bf16.msra.mxu0 0
        %3599 = vmatprep.subr.bf16.mxu0 0
        %3600 = vmatpush1.bf16.msra.mxu0 0
        %3601 = vmatprep.subr.bf16.mxu0 0
        %3602 = vmatpush1.bf16.msra.mxu0 0
        %3603 = vmatprep.subr.bf16.mxu0 0
        %3604 = vmatpush1.bf16.msra.mxu0 0
        %3605 = vmatprep.subr.bf16.mxu0 0
        %3606 = vmatpush1.bf16.msra.mxu0 0
        %3607 = vmatprep.subr.bf16.mxu0 0
        %3608 = vmatpush1.bf16.msra.mxu0 0
        %3609 = vmatprep.subr.bf16.mxu0 0
        %3610 = vmatpush1.bf16.msra.mxu0 0
        %3611 = vmatprep.subr.bf16.mxu0 0
        %3612 = vmatpush1.bf16.msra.mxu0 0
        %3613 = vmatprep.subr.bf16.mxu0 0
        %3614 = vmatpush1.bf16.msra.mxu0 0
        %3615 = vmatprep.subr.bf16.mxu0 0
        %3616 = vmatpush1.bf16.msra.mxu0 0
        %3617 = vmatprep.subr.bf16.mxu0 0
        %3618 = vmatpush1.bf16.msra.mxu0 0
        %3619 = vmatprep.mubr.bf16.mxu0 0
        %3620 = vmatmul.mubr.bf16.gmra.mrb[0].mxu0 %v3585
        %v3621 = vpop.f32.mrb[0].mxu0
        %v3622 = vadd.f32 0.0, %v3621
        %v3623 = vpop.f32.mrb[0].mxu0
        %v3624 = vpop.f32.mrb[0].mxu0
        %v3625 = vpop.f32.mrb[0].mxu0
        %3626 = vdwg.mxu0
        %v3627 = vadd.f32 %v3553, %v3622
        %v3628 = vld [vmem:[%s59 + $0x1] sm:$0x1]
        %v3629 = vlaneseq
        %v3630 = vshrl.u32 %v3629, 7
        %v3631 = vsub.s32 0, %v3630
        %v3632 = vrot.slane %v3628, %v3631
        %v3633 = vadd.f32 %v3627, %v3632
        %v3634 = vmax.f32 %v3633, 0.0
        %v3635 = vld [vmem:[%s61 + $0x1] sm:$0x1]
        %v3636 = vld [vmem:[%s63 + $0x1] sm:$0x1]
        %v3637 = vsel %vm2847, %v3634, 0.0
        %3638 = vadd.xlane.f32.xlu0 %v3637
        %v3639 = vpop.xlane.xlu0 %3638
        %v3640 = vmul.f32 %v3639, %v3093
        %v3641 = vsub.f32 %v3634, %v3640
        %v3642 = vmul.f32 %v3641, %v3641
        %v3643 = vsel %vm2847, %v3642, 0.0
        %3644 = vadd.xlane.f32.xlu0 %v3643
        %v3645 = vpop.xlane.xlu0 %3644
        %v3646 = vmul.f32 %v3645, %v3093
        %v3647 = vadd.f32 %v3646, 1e-05
        %v3648 = vrsqrt.pop %v3647
        %v3649 = vmul.f32 %v3641, %v3648
        %v3650 = vlaneseq
        %v3651 = vshrl.u32 %v3650, 7
        %v3652 = vsub.s32 0, %v3651
        %v3653 = vrot.slane %v3635, %v3652
        %v3654 = vmul.f32 %v3649, %v3653
        %v3655 = vlaneseq
        %v3656 = vshrl.u32 %v3655, 7
        %v3657 = vsub.s32 0, %v3656
        %v3658 = vrot.slane %v3636, %v3657
        %v3659 = vadd.f32 %v3654, %v3658
        %s3660 = scalar_lea.vmem [#allocation39], 96
        %v3661 = vld [vmem:[%s3660] sm:$0xf]
        %v3662 = vld [vmem:[%s3660 + $0x4] sm:$0xf]
        %v3663 = vld [vmem:[%s3660 + $0x8] sm:$0xf]
        %v3664 = vld [vmem:[%s3660 + $0xc] sm:$0xf]
        %v3665 = vld [vmem:[%s3660 + $0x10] sm:$0xf]
        %v3666 = vld [vmem:[%s3660 + $0x14] sm:$0xf]
        %v3667 = vld [vmem:[%s3660 + $0x18] sm:$0xf]
        %v3668 = vld [vmem:[%s3660 + $0x1c] sm:$0xf]
        %v3669 = vld [vmem:[%s3660 + $0x20] sm:$0xf]
        %v3670 = vld [vmem:[%s3660 + $0x24] sm:$0xf]
        %v3671 = vld [vmem:[%s3660 + $0x28] sm:$0xf]
        %v3672 = vld [vmem:[%s3660 + $0x2c] sm:$0xf]
        %v3673 = vld [vmem:[%s3660 + $0x30] sm:$0xf]
        %v3674 = vld [vmem:[%s3660 + $0x34] sm:$0xf]
        %v3675 = vld [vmem:[%s3660 + $0x38] sm:$0xf]
        %v3676 = vld [vmem:[%s3660 + $0x3c] sm:$0xf]
        %v3677 = vld [vmem:[%s3660 + $0x40] sm:$0xf]
        %v3678 = vld [vmem:[%s3660 + $0x44] sm:$0xf]
        %v3679 = vld [vmem:[%s3660 + $0x48] sm:$0xf]
        %v3680 = vld [vmem:[%s3660 + $0x4c] sm:$0xf]
        %v3681 = vld [vmem:[%s3660 + $0x50] sm:$0xf]
        %v3682 = vld [vmem:[%s3660 + $0x54] sm:$0xf]
        %v3683 = vld [vmem:[%s3660 + $0x58] sm:$0xf]
        %v3684 = vld [vmem:[%s3660 + $0x5c] sm:$0xf]
        %v3685 = vld [vmem:[%s67 + $0x1] sm:$0x1]
        %3686 = vst.msk [vmem:[#allocation6 + $0x1] sm:$0xff] %vm2847, %v3659
        %v3687 = vld [vmem:[#allocation6] sm:$0xff]
        %v3688 = vpack.c.bf16 %v3687, %v3687
        %v3689 = vld [vmem:[#allocation6 + $0x1] sm:$0xff]
        %v3690 = vpack.c.bf16 %v3689, %v3689
        %v3699 = vunpack.c.l.b16 %v3669
        %v3700 = vunpack.c.l.b16 %v3670
        %v3701 = vunpack.c.l.b16 %v3671
        %v3702 = vunpack.c.l.b16 %v3672
        %v3703 = vunpack.c.l.b16 %v3673
        %v3704 = vunpack.c.l.b16 %v3674
        %v3705 = vunpack.c.l.b16 %v3675
        %v3706 = vunpack.c.l.b16 %v3676
        %v3707 = vpack.c.b16 %v3700, %v3699
        %v3708 = vpack.c.b16 %v3702, %v3701
        %v3709 = vpack.c.b16 %v3704, %v3703
        %v3710 = vpack.c.b16 %v3706, %v3705
        %v3716 = vsel %vm2847, %v3690, 0
        %3718 = vmatprep.subr.bf16.mxu0 0
        %3719 = vmatpush1.bf16.msra.mxu0 %v3707
        %3720 = vmatprep.subr.bf16.mxu0 0
        %3721 = vmatpush1.bf16.msra.mxu0 %v3708
        %3722 = vmatprep.subr.bf16.mxu0 0
        %3723 = vmatpush1.bf16.msra.mxu0 %v3709
        %3724 = vmatprep.subr.bf16.mxu0 0
        %3725 = vmatpush1.bf16.msra.mxu0 %v3710
        %3726 = vmatprep.subr.bf16.mxu0 0
        %3727 = vmatpush1.bf16.msra.mxu0 0
        %3728 = vmatprep.subr.bf16.mxu0 0
        %3729 = vmatpush1.bf16.msra.mxu0 0
        %3730 = vmatprep.subr.bf16.mxu0 0
        %3731 = vmatpush1.bf16.msra.mxu0 0
        %3732 = vmatprep.subr.bf16.mxu0 0
        %3733 = vmatpush1.bf16.msra.mxu0 0
        %3734 = vmatprep.subr.bf16.mxu0 0
        %3735 = vmatpush1.bf16.msra.mxu0 0
        %3736 = vmatprep.subr.bf16.mxu0 0
        %3737 = vmatpush1.bf16.msra.mxu0 0
        %3738 = vmatprep.subr.bf16.mxu0 0
        %3739 = vmatpush1.bf16.msra.mxu0 0
        %3740 = vmatprep.subr.bf16.mxu0 0
        %3741 = vmatpush1.bf16.msra.mxu0 0
        %3742 = vmatprep.subr.bf16.mxu0 0
        %3743 = vmatpush1.bf16.msra.mxu0 0
        %3744 = vmatprep.subr.bf16.mxu0 0
        %3745 = vmatpush1.bf16.msra.mxu0 0
        %3746 = vmatprep.subr.bf16.mxu0 0
        %3747 = vmatpush1.bf16.msra.mxu0 0
        %3748 = vmatprep.subr.bf16.mxu0 0
        %3749 = vmatpush1.bf16.msra.mxu0 0
        %3750 = vmatprep.mubr.bf16.mxu0 0
        %3751 = vmatmul.mubr.bf16.gmra.mrb[0].mxu0 %v3716
        %v3752 = vpop.f32.mrb[0].mxu0
        %v3753 = vadd.f32 0.0, %v3752
        %v3754 = vpop.f32.mrb[0].mxu0
        %v3755 = vpop.f32.mrb[0].mxu0
        %v3756 = vpop.f32.mrb[0].mxu0
        %3757 = vdwg.mxu0
        %v3766 = vunpack.c.l.b16 %v3661
        %v3767 = vunpack.c.l.b16 %v3662
        %v3768 = vunpack.c.l.b16 %v3663
        %v3769 = vunpack.c.l.b16 %v3664
        %v3770 = vunpack.c.l.b16 %v3665
        %v3771 = vunpack.c.l.b16 %v3666
        %v3772 = vunpack.c.l.b16 %v3667
        %v3773 = vunpack.c.l.b16 %v3668
        %v3774 = vpack.c.b16 %v3767, %v3766
        %v3775 = vpack.c.b16 %v3769, %v3768
        %v3776 = vpack.c.b16 %v3771, %v3770
        %v3777 = vpack.c.b16 %v3773, %v3772
        %v3783 = vsel %vm2847, %v3688, 0
        %3785 = vmatprep.subr.bf16.mxu0 0
        %3786 = vmatpush1.bf16.msra.mxu0 %v3774
        %3787 = vmatprep.subr.bf16.mxu0 0
        %3788 = vmatpush1.bf16.msra.mxu0 %v3775
        %3789 = vmatprep.subr.bf16.mxu0 0
        %3790 = vmatpush1.bf16.msra.mxu0 %v3776
        %3791 = vmatprep.subr.bf16.mxu0 0
        %3792 = vmatpush1.bf16.msra.mxu0 %v3777
        %3793 = vmatprep.subr.bf16.mxu0 0
        %3794 = vmatpush1.bf16.msra.mxu0 0
        %3795 = vmatprep.subr.bf16.mxu0 0
        %3796 = vmatpush1.bf16.msra.mxu0 0
        %3797 = vmatprep.subr.bf16.mxu0 0
        %3798 = vmatpush1.bf16.msra.mxu0 0
        %3799 = vmatprep.subr.bf16.mxu0 0
        %3800 = vmatpush1.bf16.msra.mxu0 0
        %3801 = vmatprep.subr.bf16.mxu0 0
        %3802 = vmatpush1.bf16.msra.mxu0 0
        %3803 = vmatprep.subr.bf16.mxu0 0
        %3804 = vmatpush1.bf16.msra.mxu0 0
        %3805 = vmatprep.subr.bf16.mxu0 0
        %3806 = vmatpush1.bf16.msra.mxu0 0
        %3807 = vmatprep.subr.bf16.mxu0 0
        %3808 = vmatpush1.bf16.msra.mxu0 0
        %3809 = vmatprep.subr.bf16.mxu0 0
        %3810 = vmatpush1.bf16.msra.mxu0 0
        %3811 = vmatprep.subr.bf16.mxu0 0
        %3812 = vmatpush1.bf16.msra.mxu0 0
        %3813 = vmatprep.subr.bf16.mxu0 0
        %3814 = vmatpush1.bf16.msra.mxu0 0
        %3815 = vmatprep.subr.bf16.mxu0 0
        %3816 = vmatpush1.bf16.msra.mxu0 0
        %3817 = vmatprep.mubr.bf16.mxu0 0
        %3818 = vmatmul.mubr.bf16.gmra.mrb[0].mxu0 %v3783
        %v3819 = vpop.f32.mrb[0].mxu0
        %v3820 = vadd.f32 %v3753, %v3819
        %v3821 = vpop.f32.mrb[0].mxu0
        %v3822 = vpop.f32.mrb[0].mxu0
        %v3823 = vpop.f32.mrb[0].mxu0
        %3824 = vdwg.mxu0
        %v3825 = vld [vmem:[#allocation6 + $0x2] sm:$0xff]
        %v3826 = vpack.c.bf16 %v3825, %v3825
        %v3835 = vunpack.c.l.b16 %v3677
        %v3836 = vunpack.c.l.b16 %v3678
        %v3837 = vunpack.c.l.b16 %v3679
        %v3838 = vunpack.c.l.b16 %v3680
        %v3839 = vunpack.c.l.b16 %v3681
        %v3840 = vunpack.c.l.b16 %v3682
        %v3841 = vunpack.c.l.b16 %v3683
        %v3842 = vunpack.c.l.b16 %v3684
        %v3843 = vpack.c.b16 %v3836, %v3835
        %v3844 = vpack.c.b16 %v3838, %v3837
        %v3845 = vpack.c.b16 %v3840, %v3839
        %v3846 = vpack.c.b16 %v3842, %v3841
        %v3852 = vsel %vm2847, %v3826, 0
        %3854 = vmatprep.subr.bf16.mxu0 0
        %3855 = vmatpush1.bf16.msra.mxu0 %v3843
        %3856 = vmatprep.subr.bf16.mxu0 0
        %3857 = vmatpush1.bf16.msra.mxu0 %v3844
        %3858 = vmatprep.subr.bf16.mxu0 0
        %3859 = vmatpush1.bf16.msra.mxu0 %v3845
        %3860 = vmatprep.subr.bf16.mxu0 0
        %3861 = vmatpush1.bf16.msra.mxu0 %v3846
        %3862 = vmatprep.subr.bf16.mxu0 0
        %3863 = vmatpush1.bf16.msra.mxu0 0
        %3864 = vmatprep.subr.bf16.mxu0 0
        %3865 = vmatpush1.bf16.msra.mxu0 0
        %3866 = vmatprep.subr.bf16.mxu0 0
        %3867 = vmatpush1.bf16.msra.mxu0 0
        %3868 = vmatprep.subr.bf16.mxu0 0
        %3869 = vmatpush1.bf16.msra.mxu0 0
        %3870 = vmatprep.subr.bf16.mxu0 0
        %3871 = vmatpush1.bf16.msra.mxu0 0
        %3872 = vmatprep.subr.bf16.mxu0 0
        %3873 = vmatpush1.bf16.msra.mxu0 0
        %3874 = vmatprep.subr.bf16.mxu0 0
        %3875 = vmatpush1.bf16.msra.mxu0 0
        %3876 = vmatprep.subr.bf16.mxu0 0
        %3877 = vmatpush1.bf16.msra.mxu0 0
        %3878 = vmatprep.subr.bf16.mxu0 0
        %3879 = vmatpush1.bf16.msra.mxu0 0
        %3880 = vmatprep.subr.bf16.mxu0 0
        %3881 = vmatpush1.bf16.msra.mxu0 0
        %3882 = vmatprep.subr.bf16.mxu0 0
        %3883 = vmatpush1.bf16.msra.mxu0 0
        %3884 = vmatprep.subr.bf16.mxu0 0
        %3885 = vmatpush1.bf16.msra.mxu0 0
        %3886 = vmatprep.mubr.bf16.mxu0 0
        %3887 = vmatmul.mubr.bf16.gmra.mrb[0].mxu0 %v3852
        %v3888 = vpop.f32.mrb[0].mxu0
        %v3889 = vadd.f32 0.0, %v3888
        %v3890 = vpop.f32.mrb[0].mxu0
        %v3891 = vpop.f32.mrb[0].mxu0
        %v3892 = vpop.f32.mrb[0].mxu0
        %3893 = vdwg.mxu0
        %v3894 = vadd.f32 %v3820, %v3889
        %v3895 = vlaneseq
        %v3896 = vshrl.u32 %v3895, 7
        %v3897 = vsub.s32 0, %v3896
        %v3898 = vrot.slane %v3685, %v3897
        %v3899 = vadd.f32 %v3894, %v3898
        %v3900 = vmax.f32 %v3899, 0.0
        %v3901 = vld [vmem:[%s69 + $0x1] sm:$0x1]
        %v3902 = vld [vmem:[%s71 + $0x1] sm:$0x1]
        %v3903 = vsel %vm2847, %v3900, 0.0
        %3904 = vadd.xlane.f32.xlu0 %v3903
        %v3905 = vpop.xlane.xlu0 %3904
        %v3906 = vmul.f32 %v3905, %v3093
        %v3907 = vsub.f32 %v3900, %v3906
        %v3908 = vmul.f32 %v3907, %v3907
        %v3909 = vsel %vm2847, %v3908, 0.0
        %3910 = vadd.xlane.f32.xlu0 %v3909
        %v3911 = vpop.xlane.xlu0 %3910
        %v3912 = vmul.f32 %v3911, %v3093
        %v3913 = vadd.f32 %v3912, 1e-05
        %v3914 = vrsqrt.pop %v3913
        %v3915 = vmul.f32 %v3907, %v3914
        %v3916 = vlaneseq
        %v3917 = vshrl.u32 %v3916, 7
        %v3918 = vsub.s32 0, %v3917
        %v3919 = vrot.slane %v3901, %v3918
        %v3920 = vmul.f32 %v3915, %v3919
        %v3921 = vlaneseq
        %v3922 = vshrl.u32 %v3921, 7
        %v3923 = vsub.s32 0, %v3922
        %v3924 = vrot.slane %v3902, %v3923
        %v3925 = vadd.f32 %v3920, %v3924
        %v3926 = vld [vmem:[%s73 + $0x1] sm:$0x1]
        %v3927 = vlaneseq
        %v3928 = vshrl.u32 %v3927, 7
        %v3929 = vsub.s32 0, %v3928
        %v3930 = vrot.slane %v3926, %v3929
        %v3931 = vmul.f32 %v3925, %v3930
        %v3932 = vsel %vm2847, %v3931, 0.0
        %3933 = vadd.xlane.f32.xlu0 %v3932
        %v3934 = vpop.xlane.xlu0 %3933
        %v3935 = vld [vmem:[%s75 + $0x1] sm:$0x1]
        %v3936 = vlaneseq
        %v3937 = vshrl.u32 %v3936, 7
        %v3938 = vsub.s32 0, %v3937
        %v3939 = vrot.slane %v3935, %v3938
        %v3940 = vadd.f32 %v3934, %v3939
        %v3941 = vmul.f32 %v3940, %v1526
        %s3942 = scalar_lea.vmem [#allocation37], 192
        %v3943 = vld [vmem:[%s3942] sm:$0xf]
        %v3944 = vld [vmem:[%s3942 + $0x4] sm:$0xf]
        %v3945 = vld [vmem:[%s3942 + $0x8] sm:$0xf]
        %v3946 = vld [vmem:[%s3942 + $0xc] sm:$0xf]
        %v3947 = vld [vmem:[%s3942 + $0x10] sm:$0xf]
        %v3948 = vld [vmem:[%s3942 + $0x14] sm:$0xf]
        %v3949 = vld [vmem:[%s3942 + $0x18] sm:$0xf]
        %v3950 = vld [vmem:[%s3942 + $0x1c] sm:$0xf]
        %v3951 = vld [vmem:[%s3942 + $0x20] sm:$0xf]
        %v3952 = vld [vmem:[%s3942 + $0x24] sm:$0xf]
        %v3953 = vld [vmem:[%s3942 + $0x28] sm:$0xf]
        %v3954 = vld [vmem:[%s3942 + $0x2c] sm:$0xf]
        %v3955 = vld [vmem:[%s3942 + $0x30] sm:$0xf]
        %v3956 = vld [vmem:[%s3942 + $0x34] sm:$0xf]
        %v3957 = vld [vmem:[%s3942 + $0x38] sm:$0xf]
        %v3958 = vld [vmem:[%s3942 + $0x3c] sm:$0xf]
        %v3959 = vld [vmem:[%s3942 + $0x40] sm:$0xf]
        %v3960 = vld [vmem:[%s3942 + $0x44] sm:$0xf]
        %v3961 = vld [vmem:[%s3942 + $0x48] sm:$0xf]
        %v3962 = vld [vmem:[%s3942 + $0x4c] sm:$0xf]
        %v3963 = vld [vmem:[%s3942 + $0x50] sm:$0xf]
        %v3964 = vld [vmem:[%s3942 + $0x54] sm:$0xf]
        %v3965 = vld [vmem:[%s3942 + $0x58] sm:$0xf]
        %v3966 = vld [vmem:[%s3942 + $0x5c] sm:$0xf]
        %v3967 = vld [vmem:[#allocation5] sm:$0xff]
        %v3968 = vpack.c.bf16 %v3967, %v3967
        %v3969 = vld [vmem:[#allocation5 + $0x1] sm:$0xff]
        %v3970 = vpack.c.bf16 %v3969, %v3969
        %v3979 = vunpack.c.l.b16 %v3951
        %v3980 = vunpack.c.l.b16 %v3952
        %v3981 = vunpack.c.l.b16 %v3953
        %v3982 = vunpack.c.l.b16 %v3954
        %v3983 = vunpack.c.l.b16 %v3955
        %v3984 = vunpack.c.l.b16 %v3956
        %v3985 = vunpack.c.l.b16 %v3957
        %v3986 = vunpack.c.l.b16 %v3958
        %v3987 = vpack.c.b16 %v3980, %v3979
        %v3988 = vpack.c.b16 %v3982, %v3981
        %v3989 = vpack.c.b16 %v3984, %v3983
        %v3990 = vpack.c.b16 %v3986, %v3985
        %v3996 = vsel %vm2847, %v3970, 0
        %3998 = vmatprep.subr.bf16.mxu0 0
        %3999 = vmatpush1.bf16.msra.mxu0 %v3987
        %4000 = vmatprep.subr.bf16.mxu0 0
        %4001 = vmatpush1.bf16.msra.mxu0 %v3988
        %4002 = vmatprep.subr.bf16.mxu0 0
        %4003 = vmatpush1.bf16.msra.mxu0 %v3989
        %4004 = vmatprep.subr.bf16.mxu0 0
        %4005 = vmatpush1.bf16.msra.mxu0 %v3990
        %4006 = vmatprep.subr.bf16.mxu0 0
        %4007 = vmatpush1.bf16.msra.mxu0 0
        %4008 = vmatprep.subr.bf16.mxu0 0
        %4009 = vmatpush1.bf16.msra.mxu0 0
        %4010 = vmatprep.subr.bf16.mxu0 0
        %4011 = vmatpush1.bf16.msra.mxu0 0
        %4012 = vmatprep.subr.bf16.mxu0 0
        %4013 = vmatpush1.bf16.msra.mxu0 0
        %4014 = vmatprep.subr.bf16.mxu0 0
        %4015 = vmatpush1.bf16.msra.mxu0 0
        %4016 = vmatprep.subr.bf16.mxu0 0
        %4017 = vmatpush1.bf16.msra.mxu0 0
        %4018 = vmatprep.subr.bf16.mxu0 0
        %4019 = vmatpush1.bf16.msra.mxu0 0
        %4020 = vmatprep.subr.bf16.mxu0 0
        %4021 = vmatpush1.bf16.msra.mxu0 0
        %4022 = vmatprep.subr.bf16.mxu0 0
        %4023 = vmatpush1.bf16.msra.mxu0 0
        %4024 = vmatprep.subr.bf16.mxu0 0
        %4025 = vmatpush1.bf16.msra.mxu0 0
        %4026 = vmatprep.subr.bf16.mxu0 0
        %4027 = vmatpush1.bf16.msra.mxu0 0
        %4028 = vmatprep.subr.bf16.mxu0 0
        %4029 = vmatpush1.bf16.msra.mxu0 0
        %4030 = vmatprep.mubr.bf16.mxu0 0
        %4031 = vmatmul.mubr.bf16.gmra.mrb[0].mxu0 %v3996
        %v4032 = vpop.f32.mrb[0].mxu0
        %v4033 = vadd.f32 0.0, %v4032
        %v4034 = vpop.f32.mrb[0].mxu0
        %v4035 = vpop.f32.mrb[0].mxu0
        %v4036 = vpop.f32.mrb[0].mxu0
        %4037 = vdwg.mxu0
        %v4046 = vunpack.c.l.b16 %v3943
        %v4047 = vunpack.c.l.b16 %v3944
        %v4048 = vunpack.c.l.b16 %v3945
        %v4049 = vunpack.c.l.b16 %v3946
        %v4050 = vunpack.c.l.b16 %v3947
        %v4051 = vunpack.c.l.b16 %v3948
        %v4052 = vunpack.c.l.b16 %v3949
        %v4053 = vunpack.c.l.b16 %v3950
        %v4054 = vpack.c.b16 %v4047, %v4046
        %v4055 = vpack.c.b16 %v4049, %v4048
        %v4056 = vpack.c.b16 %v4051, %v4050
        %v4057 = vpack.c.b16 %v4053, %v4052
        %v4063 = vsel %vm2847, %v3968, 0
        %4065 = vmatprep.subr.bf16.mxu0 0
        %4066 = vmatpush1.bf16.msra.mxu0 %v4054
        %4067 = vmatprep.subr.bf16.mxu0 0
        %4068 = vmatpush1.bf16.msra.mxu0 %v4055
        %4069 = vmatprep.subr.bf16.mxu0 0
        %4070 = vmatpush1.bf16.msra.mxu0 %v4056
        %4071 = vmatprep.subr.bf16.mxu0 0
        %4072 = vmatpush1.bf16.msra.mxu0 %v4057
        %4073 = vmatprep.subr.bf16.mxu0 0
        %4074 = vmatpush1.bf16.msra.mxu0 0
        %4075 = vmatprep.subr.bf16.mxu0 0
        %4076 = vmatpush1.bf16.msra.mxu0 0
        %4077 = vmatprep.subr.bf16.mxu0 0
        %4078 = vmatpush1.bf16.msra.mxu0 0
        %4079 = vmatprep.subr.bf16.mxu0 0
        %4080 = vmatpush1.bf16.msra.mxu0 0
        %4081 = vmatprep.subr.bf16.mxu0 0
        %4082 = vmatpush1.bf16.msra.mxu0 0
        %4083 = vmatprep.subr.bf16.mxu0 0
        %4084 = vmatpush1.bf16.msra.mxu0 0
        %4085 = vmatprep.subr.bf16.mxu0 0
        %4086 = vmatpush1.bf16.msra.mxu0 0
        %4087 = vmatprep.subr.bf16.mxu0 0
        %4088 = vmatpush1.bf16.msra.mxu0 0
        %4089 = vmatprep.subr.bf16.mxu0 0
        %4090 = vmatpush1.bf16.msra.mxu0 0
        %4091 = vmatprep.subr.bf16.mxu0 0
        %4092 = vmatpush1.bf16.msra.mxu0 0
        %4093 = vmatprep.subr.bf16.mxu0 0
        %4094 = vmatpush1.bf16.msra.mxu0 0
        %4095 = vmatprep.subr.bf16.mxu0 0
        %4096 = vmatpush1.bf16.msra.mxu0 0
        %4097 = vmatprep.mubr.bf16.mxu0 0
        %4098 = vmatmul.mubr.bf16.gmra.mrb[0].mxu0 %v4063
        %v4099 = vpop.f32.mrb[0].mxu0
        %v4100 = vadd.f32 %v4033, %v4099
        %v4101 = vpop.f32.mrb[0].mxu0
        %v4102 = vpop.f32.mrb[0].mxu0
        %v4103 = vpop.f32.mrb[0].mxu0
        %4104 = vdwg.mxu0
        %v4105 = vld [vmem:[#allocation5 + $0x2] sm:$0xff]
        %v4106 = vpack.c.bf16 %v4105, %v4105
        %v4115 = vunpack.c.l.b16 %v3959
        %v4116 = vunpack.c.l.b16 %v3960
        %v4117 = vunpack.c.l.b16 %v3961
        %v4118 = vunpack.c.l.b16 %v3962
        %v4119 = vunpack.c.l.b16 %v3963
        %v4120 = vunpack.c.l.b16 %v3964
        %v4121 = vunpack.c.l.b16 %v3965
        %v4122 = vunpack.c.l.b16 %v3966
        %v4123 = vpack.c.b16 %v4116, %v4115
        %v4124 = vpack.c.b16 %v4118, %v4117
        %v4125 = vpack.c.b16 %v4120, %v4119
        %v4126 = vpack.c.b16 %v4122, %v4121
        %v4132 = vsel %vm2847, %v4106, 0
        %4134 = vmatprep.subr.bf16.mxu0 0
        %4135 = vmatpush1.bf16.msra.mxu0 %v4123
        %4136 = vmatprep.subr.bf16.mxu0 0
        %4137 = vmatpush1.bf16.msra.mxu0 %v4124
        %4138 = vmatprep.subr.bf16.mxu0 0
        %4139 = vmatpush1.bf16.msra.mxu0 %v4125
        %4140 = vmatprep.subr.bf16.mxu0 0
        %4141 = vmatpush1.bf16.msra.mxu0 %v4126
        %4142 = vmatprep.subr.bf16.mxu0 0
        %4143 = vmatpush1.bf16.msra.mxu0 0
        %4144 = vmatprep.subr.bf16.mxu0 0
        %4145 = vmatpush1.bf16.msra.mxu0 0
        %4146 = vmatprep.subr.bf16.mxu0 0
        %4147 = vmatpush1.bf16.msra.mxu0 0
        %4148 = vmatprep.subr.bf16.mxu0 0
        %4149 = vmatpush1.bf16.msra.mxu0 0
        %4150 = vmatprep.subr.bf16.mxu0 0
        %4151 = vmatpush1.bf16.msra.mxu0 0
        %4152 = vmatprep.subr.bf16.mxu0 0
        %4153 = vmatpush1.bf16.msra.mxu0 0
        %4154 = vmatprep.subr.bf16.mxu0 0
        %4155 = vmatpush1.bf16.msra.mxu0 0
        %4156 = vmatprep.subr.bf16.mxu0 0
        %4157 = vmatpush1.bf16.msra.mxu0 0
        %4158 = vmatprep.subr.bf16.mxu0 0
        %4159 = vmatpush1.bf16.msra.mxu0 0
        %4160 = vmatprep.subr.bf16.mxu0 0
        %4161 = vmatpush1.bf16.msra.mxu0 0
        %4162 = vmatprep.subr.bf16.mxu0 0
        %4163 = vmatpush1.bf16.msra.mxu0 0
        %4164 = vmatprep.subr.bf16.mxu0 0
        %4165 = vmatpush1.bf16.msra.mxu0 0
        %4166 = vmatprep.mubr.bf16.mxu0 0
        %4167 = vmatmul.mubr.bf16.gmra.mrb[0].mxu0 %v4132
        %v4168 = vpop.f32.mrb[0].mxu0
        %v4169 = vadd.f32 0.0, %v4168
        %v4170 = vpop.f32.mrb[0].mxu0
        %v4171 = vpop.f32.mrb[0].mxu0
        %v4172 = vpop.f32.mrb[0].mxu0
        %4173 = vdwg.mxu0
        %v4174 = vadd.f32 %v4100, %v4169
        %v4175 = vld [vmem:[%s59 + $0x2] sm:$0x1]
        %v4176 = vlaneseq
        %v4177 = vshrl.u32 %v4176, 7
        %v4178 = vsub.s32 0, %v4177
        %v4179 = vrot.slane %v4175, %v4178
        %v4180 = vadd.f32 %v4174, %v4179
        %v4181 = vmax.f32 %v4180, 0.0
        %v4182 = vld [vmem:[%s61 + $0x2] sm:$0x1]
        %v4183 = vld [vmem:[%s63 + $0x2] sm:$0x1]
        %v4184 = vsel %vm2847, %v4181, 0.0
        %4185 = vadd.xlane.f32.xlu0 %v4184
        %v4186 = vpop.xlane.xlu0 %4185
        %v4187 = vmul.f32 %v4186, %v3093
        %v4188 = vsub.f32 %v4181, %v4187
        %v4189 = vmul.f32 %v4188, %v4188
        %v4190 = vsel %vm2847, %v4189, 0.0
        %4191 = vadd.xlane.f32.xlu0 %v4190
        %v4192 = vpop.xlane.xlu0 %4191
        %v4193 = vmul.f32 %v4192, %v3093
        %v4194 = vadd.f32 %v4193, 1e-05
        %v4195 = vrsqrt.pop %v4194
        %v4196 = vmul.f32 %v4188, %v4195
        %v4197 = vlaneseq
        %v4198 = vshrl.u32 %v4197, 7
        %v4199 = vsub.s32 0, %v4198
        %v4200 = vrot.slane %v4182, %v4199
        %v4201 = vmul.f32 %v4196, %v4200
        %v4202 = vlaneseq
        %v4203 = vshrl.u32 %v4202, 7
        %v4204 = vsub.s32 0, %v4203
        %v4205 = vrot.slane %v4183, %v4204
        %v4206 = vadd.f32 %v4201, %v4205
        %s4207 = scalar_lea.vmem [#allocation39], 192
        %v4208 = vld [vmem:[%s4207] sm:$0xf]
        %v4209 = vld [vmem:[%s4207 + $0x4] sm:$0xf]
        %v4210 = vld [vmem:[%s4207 + $0x8] sm:$0xf]
        %v4211 = vld [vmem:[%s4207 + $0xc] sm:$0xf]
        %v4212 = vld [vmem:[%s4207 + $0x10] sm:$0xf]
        %v4213 = vld [vmem:[%s4207 + $0x14] sm:$0xf]
        %v4214 = vld [vmem:[%s4207 + $0x18] sm:$0xf]
        %v4215 = vld [vmem:[%s4207 + $0x1c] sm:$0xf]
        %v4216 = vld [vmem:[%s4207 + $0x20] sm:$0xf]
        %v4217 = vld [vmem:[%s4207 + $0x24] sm:$0xf]
        %v4218 = vld [vmem:[%s4207 + $0x28] sm:$0xf]
        %v4219 = vld [vmem:[%s4207 + $0x2c] sm:$0xf]
        %v4220 = vld [vmem:[%s4207 + $0x30] sm:$0xf]
        %v4221 = vld [vmem:[%s4207 + $0x34] sm:$0xf]
        %v4222 = vld [vmem:[%s4207 + $0x38] sm:$0xf]
        %v4223 = vld [vmem:[%s4207 + $0x3c] sm:$0xf]
        %v4224 = vld [vmem:[%s4207 + $0x40] sm:$0xf]
        %v4225 = vld [vmem:[%s4207 + $0x44] sm:$0xf]
        %v4226 = vld [vmem:[%s4207 + $0x48] sm:$0xf]
        %v4227 = vld [vmem:[%s4207 + $0x4c] sm:$0xf]
        %v4228 = vld [vmem:[%s4207 + $0x50] sm:$0xf]
        %v4229 = vld [vmem:[%s4207 + $0x54] sm:$0xf]
        %v4230 = vld [vmem:[%s4207 + $0x58] sm:$0xf]
        %v4231 = vld [vmem:[%s4207 + $0x5c] sm:$0xf]
        %v4232 = vld [vmem:[%s67 + $0x2] sm:$0x1]
        %4233 = vst.msk [vmem:[#allocation6 + $0x1] sm:$0xff] %vm2847, %v4206
        %v4234 = vld [vmem:[#allocation6] sm:$0xff]
        %v4235 = vpack.c.bf16 %v4234, %v4234
        %v4236 = vld [vmem:[#allocation6 + $0x1] sm:$0xff]
        %v4237 = vpack.c.bf16 %v4236, %v4236
        %v4246 = vunpack.c.l.b16 %v4216
        %v4247 = vunpack.c.l.b16 %v4217
        %v4248 = vunpack.c.l.b16 %v4218
        %v4249 = vunpack.c.l.b16 %v4219
        %v4250 = vunpack.c.l.b16 %v4220
        %v4251 = vunpack.c.l.b16 %v4221
        %v4252 = vunpack.c.l.b16 %v4222
        %v4253 = vunpack.c.l.b16 %v4223
        %v4254 = vpack.c.b16 %v4247, %v4246
        %v4255 = vpack.c.b16 %v4249, %v4248
        %v4256 = vpack.c.b16 %v4251, %v4250
        %v4257 = vpack.c.b16 %v4253, %v4252
        %v4263 = vsel %vm2847, %v4237, 0
        %4265 = vmatprep.subr.bf16.mxu0 0
        %4266 = vmatpush1.bf16.msra.mxu0 %v4254
        %4267 = vmatprep.subr.bf16.mxu0 0
        %4268 = vmatpush1.bf16.msra.mxu0 %v4255
        %4269 = vmatprep.subr.bf16.mxu0 0
        %4270 = vmatpush1.bf16.msra.mxu0 %v4256
        %4271 = vmatprep.subr.bf16.mxu0 0
        %4272 = vmatpush1.bf16.msra.mxu0 %v4257
        %4273 = vmatprep.subr.bf16.mxu0 0
        %4274 = vmatpush1.bf16.msra.mxu0 0
        %4275 = vmatprep.subr.bf16.mxu0 0
        %4276 = vmatpush1.bf16.msra.mxu0 0
        %4277 = vmatprep.subr.bf16.mxu0 0
        %4278 = vmatpush1.bf16.msra.mxu0 0
        %4279 = vmatprep.subr.bf16.mxu0 0
        %4280 = vmatpush1.bf16.msra.mxu0 0
        %4281 = vmatprep.subr.bf16.mxu0 0
        %4282 = vmatpush1.bf16.msra.mxu0 0
        %4283 = vmatprep.subr.bf16.mxu0 0
        %4284 = vmatpush1.bf16.msra.mxu0 0
        %4285 = vmatprep.subr.bf16.mxu0 0
        %4286 = vmatpush1.bf16.msra.mxu0 0
        %4287 = vmatprep.subr.bf16.mxu0 0
        %4288 = vmatpush1.bf16.msra.mxu0 0
        %4289 = vmatprep.subr.bf16.mxu0 0
        %4290 = vmatpush1.bf16.msra.mxu0 0
        %4291 = vmatprep.subr.bf16.mxu0 0
        %4292 = vmatpush1.bf16.msra.mxu0 0
        %4293 = vmatprep.subr.bf16.mxu0 0
        %4294 = vmatpush1.bf16.msra.mxu0 0
        %4295 = vmatprep.subr.bf16.mxu0 0
        %4296 = vmatpush1.bf16.msra.mxu0 0
        %4297 = vmatprep.mubr.bf16.mxu0 0
        %4298 = vmatmul.mubr.bf16.gmra.mrb[0].mxu0 %v4263
        %v4299 = vpop.f32.mrb[0].mxu0
        %v4300 = vadd.f32 0.0, %v4299
        %v4301 = vpop.f32.mrb[0].mxu0
        %v4302 = vpop.f32.mrb[0].mxu0
        %v4303 = vpop.f32.mrb[0].mxu0
        %4304 = vdwg.mxu0
        %v4313 = vunpack.c.l.b16 %v4208
        %v4314 = vunpack.c.l.b16 %v4209
        %v4315 = vunpack.c.l.b16 %v4210
        %v4316 = vunpack.c.l.b16 %v4211
        %v4317 = vunpack.c.l.b16 %v4212
        %v4318 = vunpack.c.l.b16 %v4213
        %v4319 = vunpack.c.l.b16 %v4214
        %v4320 = vunpack.c.l.b16 %v4215
        %v4321 = vpack.c.b16 %v4314, %v4313
        %v4322 = vpack.c.b16 %v4316, %v4315
        %v4323 = vpack.c.b16 %v4318, %v4317
        %v4324 = vpack.c.b16 %v4320, %v4319
        %v4330 = vsel %vm2847, %v4235, 0
        %4332 = vmatprep.subr.bf16.mxu0 0
        %4333 = vmatpush1.bf16.msra.mxu0 %v4321
        %4334 = vmatprep.subr.bf16.mxu0 0
        %4335 = vmatpush1.bf16.msra.mxu0 %v4322
        %4336 = vmatprep.subr.bf16.mxu0 0
        %4337 = vmatpush1.bf16.msra.mxu0 %v4323
        %4338 = vmatprep.subr.bf16.mxu0 0
        %4339 = vmatpush1.bf16.msra.mxu0 %v4324
        %4340 = vmatprep.subr.bf16.mxu0 0
        %4341 = vmatpush1.bf16.msra.mxu0 0
        %4342 = vmatprep.subr.bf16.mxu0 0
        %4343 = vmatpush1.bf16.msra.mxu0 0
        %4344 = vmatprep.subr.bf16.mxu0 0
        %4345 = vmatpush1.bf16.msra.mxu0 0
        %4346 = vmatprep.subr.bf16.mxu0 0
        %4347 = vmatpush1.bf16.msra.mxu0 0
        %4348 = vmatprep.subr.bf16.mxu0 0
        %4349 = vmatpush1.bf16.msra.mxu0 0
        %4350 = vmatprep.subr.bf16.mxu0 0
        %4351 = vmatpush1.bf16.msra.mxu0 0
        %4352 = vmatprep.subr.bf16.mxu0 0
        %4353 = vmatpush1.bf16.msra.mxu0 0
        %4354 = vmatprep.subr.bf16.mxu0 0
        %4355 = vmatpush1.bf16.msra.mxu0 0
        %4356 = vmatprep.subr.bf16.mxu0 0
        %4357 = vmatpush1.bf16.msra.mxu0 0
        %4358 = vmatprep.subr.bf16.mxu0 0
        %4359 = vmatpush1.bf16.msra.mxu0 0
        %4360 = vmatprep.subr.bf16.mxu0 0
        %4361 = vmatpush1.bf16.msra.mxu0 0
        %4362 = vmatprep.subr.bf16.mxu0 0
        %4363 = vmatpush1.bf16.msra.mxu0 0
        %4364 = vmatprep.mubr.bf16.mxu0 0
        %4365 = vmatmul.mubr.bf16.gmra.mrb[0].mxu0 %v4330
        %v4366 = vpop.f32.mrb[0].mxu0
        %v4367 = vadd.f32 %v4300, %v4366
        %v4368 = vpop.f32.mrb[0].mxu0
        %v4369 = vpop.f32.mrb[0].mxu0
        %v4370 = vpop.f32.mrb[0].mxu0
        %4371 = vdwg.mxu0
        %v4372 = vld [vmem:[#allocation6 + $0x2] sm:$0xff]
        %v4373 = vpack.c.bf16 %v4372, %v4372
        %v4382 = vunpack.c.l.b16 %v4224
        %v4383 = vunpack.c.l.b16 %v4225
        %v4384 = vunpack.c.l.b16 %v4226
        %v4385 = vunpack.c.l.b16 %v4227
        %v4386 = vunpack.c.l.b16 %v4228
        %v4387 = vunpack.c.l.b16 %v4229
        %v4388 = vunpack.c.l.b16 %v4230
        %v4389 = vunpack.c.l.b16 %v4231
        %v4390 = vpack.c.b16 %v4383, %v4382
        %v4391 = vpack.c.b16 %v4385, %v4384
        %v4392 = vpack.c.b16 %v4387, %v4386
        %v4393 = vpack.c.b16 %v4389, %v4388
        %v4399 = vsel %vm2847, %v4373, 0
        %4401 = vmatprep.subr.bf16.mxu0 0
        %4402 = vmatpush1.bf16.msra.mxu0 %v4390
        %4403 = vmatprep.subr.bf16.mxu0 0
        %4404 = vmatpush1.bf16.msra.mxu0 %v4391
        %4405 = vmatprep.subr.bf16.mxu0 0
        %4406 = vmatpush1.bf16.msra.mxu0 %v4392
        %4407 = vmatprep.subr.bf16.mxu0 0
        %4408 = vmatpush1.bf16.msra.mxu0 %v4393
        %4409 = vmatprep.subr.bf16.mxu0 0
        %4410 = vmatpush1.bf16.msra.mxu0 0
        %4411 = vmatprep.subr.bf16.mxu0 0
        %4412 = vmatpush1.bf16.msra.mxu0 0
        %4413 = vmatprep.subr.bf16.mxu0 0
        %4414 = vmatpush1.bf16.msra.mxu0 0
        %4415 = vmatprep.subr.bf16.mxu0 0
        %4416 = vmatpush1.bf16.msra.mxu0 0
        %4417 = vmatprep.subr.bf16.mxu0 0
        %4418 = vmatpush1.bf16.msra.mxu0 0
        %4419 = vmatprep.subr.bf16.mxu0 0
        %4420 = vmatpush1.bf16.msra.mxu0 0
        %4421 = vmatprep.subr.bf16.mxu0 0
        %4422 = vmatpush1.bf16.msra.mxu0 0
        %4423 = vmatprep.subr.bf16.mxu0 0
        %4424 = vmatpush1.bf16.msra.mxu0 0
        %4425 = vmatprep.subr.bf16.mxu0 0
        %4426 = vmatpush1.bf16.msra.mxu0 0
        %4427 = vmatprep.subr.bf16.mxu0 0
        %4428 = vmatpush1.bf16.msra.mxu0 0
        %4429 = vmatprep.subr.bf16.mxu0 0
        %4430 = vmatpush1.bf16.msra.mxu0 0
        %4431 = vmatprep.subr.bf16.mxu0 0
        %4432 = vmatpush1.bf16.msra.mxu0 0
        %4433 = vmatprep.mubr.bf16.mxu0 0
        %4434 = vmatmul.mubr.bf16.gmra.mrb[0].mxu0 %v4399
        %v4435 = vpop.f32.mrb[0].mxu0
        %v4436 = vadd.f32 0.0, %v4435
        %v4437 = vpop.f32.mrb[0].mxu0
        %v4438 = vpop.f32.mrb[0].mxu0
        %v4439 = vpop.f32.mrb[0].mxu0
        %4440 = vdwg.mxu0
        %v4441 = vadd.f32 %v4367, %v4436
        %v4442 = vlaneseq
        %v4443 = vshrl.u32 %v4442, 7
        %v4444 = vsub.s32 0, %v4443
        %v4445 = vrot.slane %v4232, %v4444
        %v4446 = vadd.f32 %v4441, %v4445
        %v4447 = vmax.f32 %v4446, 0.0
        %v4448 = vld [vmem:[%s69 + $0x2] sm:$0x1]
        %v4449 = vld [vmem:[%s71 + $0x2] sm:$0x1]
        %v4450 = vsel %vm2847, %v4447, 0.0
        %4451 = vadd.xlane.f32.xlu0 %v4450
        %v4452 = vpop.xlane.xlu0 %4451
        %v4453 = vmul.f32 %v4452, %v3093
        %v4454 = vsub.f32 %v4447, %v4453
        %v4455 = vmul.f32 %v4454, %v4454
        %v4456 = vsel %vm2847, %v4455, 0.0
        %4457 = vadd.xlane.f32.xlu0 %v4456
        %v4458 = vpop.xlane.xlu0 %4457
        %v4459 = vmul.f32 %v4458, %v3093
        %v4460 = vadd.f32 %v4459, 1e-05
        %v4461 = vrsqrt.pop %v4460
        %v4462 = vmul.f32 %v4454, %v4461
        %v4463 = vlaneseq
        %v4464 = vshrl.u32 %v4463, 7
        %v4465 = vsub.s32 0, %v4464
        %v4466 = vrot.slane %v4448, %v4465
        %v4467 = vmul.f32 %v4462, %v4466
        %v4468 = vlaneseq
        %v4469 = vshrl.u32 %v4468, 7
        %v4470 = vsub.s32 0, %v4469
        %v4471 = vrot.slane %v4449, %v4470
        %v4472 = vadd.f32 %v4467, %v4471
        %v4473 = vld [vmem:[%s73 + $0x2] sm:$0x1]
        %v4474 = vlaneseq
        %v4475 = vshrl.u32 %v4474, 7
        %v4476 = vsub.s32 0, %v4475
        %v4477 = vrot.slane %v4473, %v4476
        %v4478 = vmul.f32 %v4472, %v4477
        %v4479 = vsel %vm2847, %v4478, 0.0
        %4480 = vadd.xlane.f32.xlu0 %v4479
        %v4481 = vpop.xlane.xlu0 %4480
        %v4482 = vld [vmem:[%s75 + $0x2] sm:$0x1]
        %v4483 = vlaneseq
        %v4484 = vshrl.u32 %v4483, 7
        %v4485 = vsub.s32 0, %v4484
        %v4486 = vrot.slane %v4482, %v4485
        %v4487 = vadd.f32 %v4481, %v4486
        %v4488 = vmul.f32 %v4487, %v1526
        %v4489 = vld [vmem:[%s1326] sm:$0xff]
        %v4490 = vadd.f32 %v2846, %v4489
        %4492 = vrot.lane.b32.xlu0 %v2829, 64
        %v4493 = vpop.permute.xlu0 %4492
        %4496 = vrot.lane.b32.xlu0 %v2715, 96
        %v4497 = vpop.permute.xlu0 %4496
        %4500 = vrot.lane.b32.xlu0 %v2806, 112
        %v4501 = vpop.permute.xlu0 %4500
        %4504 = vrot.lane.b32.xlu0 %v3394, 113
        %v4505 = vpop.permute.xlu0 %4504
        %4508 = vrot.lane.b32.xlu0 %v3941, 114
        %v4509 = vpop.permute.xlu0 %4508
        %4512 = vrot.lane.b32.xlu0 %v4488, 115
        %v4513 = vpop.permute.xlu0 %4512
        %v4515 = vsel %vm2847, %v4490, %v4493
        %vm4516 = vcmask 785408
        %v4517 = vsel %vm4516, %v4515, %v4497
        %vm4518 = vcmask 916480
        %v4519 = vsel %vm4518, %v4517, %v4501
        %vm4520 = vcmask 924672
        %v4521 = vsel %vm4520, %v4519, %v4505
        %vm4522 = vcmask 932864
        %v4523 = vsel %vm4522, %v4521, %v4509
        %vm4524 = vcmask 941056
        %v4525 = vsel %vm4524, %v4523, %v4513
        %vm4526 = vcmask 949248
        %v4527 = vsel %vm4526, %v4525, 0.0
        %4528 = vst [vmem:[%s1494] sm:$0xff] %v4527
        %s4529 = sand.u32 %s931, 1
        %s4530 = scalar_lea.sflag [#allocation12], %s4529
        %s4531 = sand.u32 %s931, 1
        %s4532 = smul.addr %s4531, 8
        %s4533 = scalar_lea.vmem [#allocation40], %s4532
        %s4534 = sand.u32 %s957, 1
        %s4535 = scalar_lea.sflag [#allocation42], %s4534
        %s4536 = sand.u32 %s957, 1
        %s4537 = scalar_lea.vmem [#allocation41], %s4536
        // Predicated region
        $region245: #{tpu_custom_call.1} parent=167 // pred_check
          %p4538 = pneg %p941
        $region246: #{tpu_custom_call.1} parent=167 // pred_check_branch
          %4540 = sbr.rel (%p4538) target = $region248
        $region247: #{tpu_custom_call.1} parent=167 // pred_region
          %s4542 = ssub.s32 128, 128
          %4543 = vsyncadd %s4530, %s4542
          %s4544 = smul.addr %s121, 128
          %s4545 = scalar_lea.hbm %s77, %s4544
          %s4547 = sshll.u32 %s4533, 4
          %s4548 = int_to_ptr.vmem [resolvable:$true] %s4547
          %4550 = dma.vmem_to_hbm [thread:$0]  %s4548, 128, %s4545, %s4530
        $region248: #{tpu_custom_call.1} parent=167 // pred_fallthru
          _
        // Predicated region
        $region249: #{tpu_custom_call.1} parent=167 // pred_check
          %p4551 = pneg %p967
        $region250: #{tpu_custom_call.1} parent=167 // pred_check_branch
          %4553 = sbr.rel (%p4551) target = $region252
        $region251: #{tpu_custom_call.1} parent=167 // pred_region
          %s4555 = ssub.s32 16, 16
          %4556 = vsyncadd %s4535, %s4555
          %s4557 = smul.addr %s121, 16
          %s4558 = scalar_lea.hbm %s79, %s4557
          %s4560 = sshll.u32 %s4537, 4
          %s4561 = int_to_ptr.vmem [resolvable:$true] %s4560
          %4563 = dma.vmem_to_hbm [thread:$0]  %s4561, 16, %s4558, %s4535
        $region252: #{tpu_custom_call.1} parent=167 // pred_fallthru
          _
      $region168: #{tpu_custom_call.1} parent=5 // pred_fallthru
        _
      %p4564 = scmp.le.s32.totalorder 2, %s116
      // Predicated region
      $region253: #{tpu_custom_call.1} parent=5 // pred_check
        %p4565 = pneg %p4564
      $region254: #{tpu_custom_call.1} parent=5 // pred_check_branch
        %4567 = sbr.rel (%p4565) target = $region256
      $region255: #{tpu_custom_call.1} parent=5 // pred_region
        %s4568 = ssub.s32 %s116, 2
        // Predicated region
        $region257: #{tpu_custom_call.1} parent=255 // pred_check
          %p4569 = pneg %p947
        $region258: #{tpu_custom_call.1} parent=255 // pred_check_branch
          %4571 = sbr.rel (%p4569) target = $region260
        $region259: #{tpu_custom_call.1} parent=255 // pred_region
          %s4572 = sand.u32 %s932, 1
          %s4573 = scalar_lea.sflag [#allocation12], %s4572
          %s4574 = sand.u32 %s932, 1
          %s4575 = smul.addr %s4574, 8
          %s4576 = scalar_lea.vmem [#allocation40], %s4575
          %4577 = dma.done %s4573, 128
        $region260: #{tpu_custom_call.1} parent=255 // pred_fallthru
          _
        // Predicated region
        $region261: #{tpu_custom_call.1} parent=255 // pred_check
          %p4578 = pneg %p973
        $region262: #{tpu_custom_call.1} parent=255 // pred_check_branch
          %4580 = sbr.rel (%p4578) target = $region264
        $region263: #{tpu_custom_call.1} parent=255 // pred_region
          %s4581 = sand.u32 %s958, 1
          %s4582 = scalar_lea.sflag [#allocation42], %s4581
          %s4583 = sand.u32 %s958, 1
          %s4584 = scalar_lea.vmem [#allocation41], %s4583
          %4585 = dma.done %s4582, 16
        $region264: #{tpu_custom_call.1} parent=255 // pred_fallthru
          _
      $region256: #{tpu_custom_call.1} parent=5 // pred_fallthru
        _
    $region6: #{tpu_custom_call.1} parent=1 // loop_footer
      %s120 = sadd.s32 1, %s116
    $region7: #{tpu_custom_call.1} parent=1 // loop_footer_branch
      %115 = sbr.rel target = $region3
    $region8: #{tpu_custom_call.1} parent=1 // loop_exit
      _
    %4586 = vsyncpa [#allocation11], 1
    %s4587 = scalar_lea.sflag [#allocation11], 1
    %4588 = vsyncpa %s4587, 1
    %4589 = vsyncpa [#allocation14], 1
    %s4590 = scalar_lea.sflag [#allocation14], 1
    %4591 = vsyncpa %s4590, 1
    %4592 = vsyncpa [#allocation17], 1
    %s4593 = scalar_lea.sflag [#allocation17], 1
    %4594 = vsyncpa %s4593, 1
    %4595 = vsyncpa [#allocation20], 1
    %4596 = vsyncpa [#allocation23], 1
    %4597 = vsyncpa [#allocation26], 1
    %4598 = vsyncpa [#allocation29], 1
    %4599 = vsyncpa [#allocation32], 1
    %4600 = vsyncpa [#allocation35], 1
    %4601 = vsyncpa [#allocation38], 1
    %4602 = vsyncpa [#allocation12], 1
    %s4603 = scalar_lea.sflag [#allocation12], 1
    %4604 = vsyncpa %s4603, 1
    %4605 = vsyncpa [#allocation42], 1
    %s4606 = scalar_lea.sflag [#allocation42], 1
    %4607 = vsyncpa %s4606, 1

</llo_original>
